<compile_context>
chip_gen: v6e
topology: v6e:2x2x1
jax: 0.10.0
libtpu: 0.0.40
codegen_flags: <defaults>
</compile_context>

<pallas_src>
import functools
import math

import jax
import jax.numpy as jnp
from jax.experimental import pallas as pl
from jax.experimental.pallas import tpu as pltpu

# ----------------------------- small config -----------------------------
# Scaled-down, shape-consistent stand-in for (img=384, patch=16, D=768, depth=12, h=12).
BATCH = 2
IMG_C, IMG_H, IMG_W = 3, 32, 32
PATCH = 16
NUM_PATCHES = (IMG_H // PATCH) * (IMG_W // PATCH)       # 4
HIDDEN = 128                                            # lane-dense (multiple of 128)
NUM_HEADS = 4
HEAD_DIM = HIDDEN // NUM_HEADS                          # 32
MLP_DIM = 4 * HIDDEN
VIT_DEPTH = 2
BERT_LAYERS = 2
SEQ_LEN = 8
VOCAB = 64
MAX_POS = 32
NUM_CLASSES = 2                                         # itm_head: Linear(D, 2)
ATT_SCALE = HEAD_DIM ** -0.5


# --------------------- in-kernel math helpers ---------------------
def _gelu(x):
    # tanh-approx GELU: the transcendental goes to the EUP slot (cheap next to MXU/VPU).
    c = 0.7978845608028654
    return 0.5 * x * (1.0 + jnp.tanh(c * (x + 0.044715 * x * x * x)))


def _matmul_bias(x, w_bf16, b):
    """bf16 MXU matmul with f32 accumulation + f32 bias."""
    y = jnp.dot(x.astype(jnp.bfloat16), w_bf16, preferred_element_type=jnp.float32)
    return y + b


def _layernorm(x, g, b, eps):
    mu = jnp.mean(x, axis=-1, keepdims=True)
    xc = x - mu
    var = jnp.mean(xc * xc, axis=-1, keepdims=True)
    return xc * jax.lax.rsqrt(var + eps) * g + b


def _mha_project(q, k, v, add_mask, scale, num_heads, wo_bf16):
    """Multi-head attention with head-merge + output projection folded in.

    q: (Lq, D) f32, k/v: (Lk, D) f32, wo: (D, Do) bf16, add_mask: (1, Lk) or None.
    concat_h(softmax(q_h k_h^T) v_h) @ Wo == sum_h (softmax(.) v_h) @ Wo[h*dh:(h+1)*dh]
    Returns (Lq, Do) f32 (bias not included).
    """
    D = q.shape[-1]
    dh = D // num_heads
    out = None
    for h in range(num_heads):
        lo = h * dh
        qh = q[:, lo:lo + dh].astype(jnp.bfloat16)
        kh = k[:, lo:lo + dh].astype(jnp.bfloat16)
        vh = v[:, lo:lo + dh].astype(jnp.bfloat16)
        s = jax.lax.dot_general(qh, kh, (((1,), (1,)), ((), ())),
                                preferred_element_type=jnp.float32) * scale
        if add_mask is not None:
            s = s + add_mask                               # (1, Lk) broadcast over rows
        s = s - jnp.max(s, axis=-1, keepdims=True)
        p = jnp.exp(s)
        inv = pl.reciprocal(jnp.sum(p, axis=-1, keepdims=True), approx=True)
        oh = jnp.dot(p.astype(jnp.bfloat16), vh,
                     preferred_element_type=jnp.float32) * inv
        contrib = jnp.dot(oh.astype(jnp.bfloat16), wo_bf16[lo:lo + dh, :],
                          preferred_element_type=jnp.float32)
        out = contrib if out is None else out + contrib
    return out


# ----------------------------- Pallas kernels -----------------------------
def _linear_kernel(x_ref, w_ref, b_ref, o_ref):
    o_ref[...] = _matmul_bias(x_ref[...], w_ref[...], b_ref[...]).astype(o_ref.dtype)


def _layernorm_kernel(x_ref, g_ref, b_ref, o_ref, *, eps):
    x = x_ref[...].astype(jnp.float32)
    o_ref[...] = _layernorm(x, g_ref[...], b_ref[...], eps).astype(o_ref.dtype)


def _vit_block_kernel(x_ref, ln1_g, ln1_b, qkv_w, qkv_b, proj_w, proj_b,
                      ln2_g, ln2_b, fc1_w, fc1_b, fc2_w, fc2_b, o_ref,
                      *, num_heads, scale):
    x = x_ref[0].astype(jnp.float32)                        # (L, D)
    D = x.shape[-1]

    # ---- attention (pre-LN, residual) ----
    h = _layernorm(x, ln1_g[...], ln1_b[...], 1e-6)
    qkv = _matmul_bias(h, qkv_w[...], qkv_b[...])           # (L, 3D)
    q, k, v = qkv[:, :D], qkv[:, D:2 * D], qkv[:, 2 * D:]
    att = _mha_project(q, k, v, None, scale, num_heads, proj_w[...]) + proj_b[...]
    x = x + att

    # ---- MLP (pre-LN, residual) ----
    h = _layernorm(x, ln2_g[...], ln2_b[...], 1e-6)
    h = _gelu(_matmul_bias(h, fc1_w[...], fc1_b[...]))
    h = _matmul_bias(h, fc2_w[...], fc2_b[...])
    x = x + h

    o_ref[0] = x.astype(o_ref.dtype)


def _bert_layer_kernel(x_ref, enc_ref, mask_ref,
                       sqkv_w, sqkv_b, so_w, so_b, so_g, so_bb,
                       cq_w, cq_b, ckv_w, ckv_b, co_w, co_b, co_g, co_bb,
                       i_w, i_b, ow_w, ow_b, o_g, o_bb,
                       out_ref, *, num_heads, scale):
    x = x_ref[0].astype(jnp.float32)                        # (L, D)
    enc = enc_ref[0].astype(jnp.float32)                    # (Lk, D)
    # HF extended mask built in-kernel from the raw 0/1 mask: (1 - m) * -10000.
    add_mask = (1.0 - mask_ref[0]) * -10000.0               # (1, L)
    D = x.shape[-1]

    # ---- self attention (post-LN residual, HF BERT) ----
    qkv = _matmul_bias(x, sqkv_w[...], sqkv_b[...])         # fused q/k/v
    q, k, v = qkv[:, :D], qkv[:, D:2 * D], qkv[:, 2 * D:]
    att = _mha_project(q, k, v, add_mask, scale, num_heads, so_w[...]) + so_b[...]
    x = _layernorm(att + x, so_g[...], so_bb[...], 1e-12)

    # ---- cross attention over image embeddings (image mask is all ones -> no mask) ----
    q = _matmul_bias(x, cq_w[...], cq_b[...])
    kv = _matmul_bias(enc, ckv_w[...], ckv_b[...])          # fused k/v, (Lk, 2D)
    k, v = kv[:, :D], kv[:, D:]
    att = _mha_project(q, k, v, None, scale, num_heads, co_w[...]) + co_b[...]
    x = _layernorm(att + x, co_g[...], co_bb[...], 1e-12)

    # ---- feed-forward ----
    h = _gelu(_matmul_bias(x, i_w[...], i_b[...]))
    h = _matmul_bias(h, ow_w[...], ow_b[...])
    x = _layernorm(h + x, o_g[...], o_bb[...], 1e-12)

    out_ref[0] = x.astype(out_ref.dtype)


# ----------------------------- pallas_call wrappers -----------------------------
def pallas_linear(x, w_bf16, b):
    M, K = x.shape
    N = w_bf16.shape[1]
    return pl.pallas_call(
        _linear_kernel,
        out_shape=jax.ShapeDtypeStruct((M, N), jnp.float32),
        grid=(1,),
        in_specs=[pl.BlockSpec((M, K), lambda i: (0, 0)),
                  pl.BlockSpec((K, N), lambda i: (0, 0)),
                  pl.BlockSpec((1, N), lambda i: (0, 0))],
        out_specs=pl.BlockSpec((M, N), lambda i: (0, 0)),
    )(x, w_bf16, b)


def pallas_layernorm(x, g, b, eps):
    M, D = x.shape
    return pl.pallas_call(
        functools.partial(_layernorm_kernel, eps=eps),
        out_shape=jax.ShapeDtypeStruct((M, D), jnp.float32),
        grid=(1,),
        in_specs=[pl.BlockSpec((M, D), lambda i: (0, 0)),
                  pl.BlockSpec((1, D), lambda i: (0, 0)),
                  pl.BlockSpec((1, D), lambda i: (0, 0))],
        out_specs=pl.BlockSpec((M, D), lambda i: (0, 0)),
    )(x, g, b)


_VIT_BLOCK_KEYS = ("ln1_g", "ln1_b", "qkv_w", "qkv_b", "proj_w", "proj_b",
                   "ln2_g", "ln2_b", "fc1_w", "fc1_b", "fc2_w", "fc2_b")


def vit_block_forward(x, blk):
    B, L, D = x.shape
    weights = [blk[k] for k in _VIT_BLOCK_KEYS]
    tok_spec = pl.BlockSpec((1, L, D), lambda b: (b, 0, 0))
    in_specs = [tok_spec] + [pl.BlockSpec(w.shape, lambda b: (0, 0)) for w in weights]
    return pl.pallas_call(
        functools.partial(_vit_block_kernel, num_heads=NUM_HEADS, scale=ATT_SCALE),
        out_shape=jax.ShapeDtypeStruct((B, L, D), jnp.float32),
        grid=(B,),
        in_specs=in_specs,
        out_specs=tok_spec,
        compiler_params=pltpu.CompilerParams(dimension_semantics=("parallel",)),
    )(x, *weights)


_BERT_LAYER_KEYS = ("sqkv_w", "sqkv_b", "so_w", "so_b", "so_ln_g", "so_ln_b",
                    "cq_w", "cq_b", "ckv_w", "ckv_b", "co_w", "co_b",
                    "co_ln_g", "co_ln_b", "i_w", "i_b", "o_w", "o_b",
                    "o_ln_g", "o_ln_b")


def bert_layer_forward(x, enc, mask3, lyr):
    B, L, D = x.shape
    Lk = enc.shape[1]
    weights = [lyr[k] for k in _BERT_LAYER_KEYS]
    x_spec = pl.BlockSpec((1, L, D), lambda b: (b, 0, 0))
    enc_spec = pl.BlockSpec((1, Lk, D), lambda b: (b, 0, 0))
    m_spec = pl.BlockSpec((1, 1, L), lambda b: (b, 0, 0))
    in_specs = ([x_spec, enc_spec, m_spec]
                + [pl.BlockSpec(w.shape, lambda b: (0, 0)) for w in weights])
    return pl.pallas_call(
        functools.partial(_bert_layer_kernel, num_heads=NUM_HEADS, scale=ATT_SCALE),
        out_shape=jax.ShapeDtypeStruct((B, L, D), jnp.float32),
        grid=(B,),
        in_specs=in_specs,
        out_specs=x_spec,
        compiler_params=pltpu.CompilerParams(dimension_semantics=("parallel",)),
    )(x, enc, mask3, *weights)


# ----------------------------- parameter init -----------------------------
class KeyGen:
    def __init__(self, key):
        self.key = key

    def __call__(self):
        self.key, sub = jax.random.split(self.key)
        return sub


def dense(kg, din, dout):
    # matmul weights stored bf16 (halves weight DMA; f32 accumulation in-kernel)
    w = (jax.random.normal(kg(), (din, dout), jnp.float32) * 0.02).astype(jnp.bfloat16)
    return w, jnp.zeros((1, dout), jnp.float32)


def ln_params(d):
    return jnp.ones((1, d), jnp.float32), jnp.zeros((1, d), jnp.float32)


def init_params(key):
    kg = KeyGen(key)
    D = HIDDEN
    # ----- ViT -----
    vit = {}
    vit["patch_w"], vit["patch_b"] = dense(kg, IMG_C * PATCH * PATCH, D)
    vit["cls_token"] = jax.random.normal(kg(), (1, 1, D), jnp.float32) * 0.02
    vit["pos_embed"] = jax.random.normal(kg(), (1, 1 + NUM_PATCHES, D), jnp.float32) * 0.02
    vit["norm_g"], vit["norm_b"] = ln_params(D)
    blocks = []
    for _ in range(VIT_DEPTH):
        blk = {}
        blk["ln1_g"], blk["ln1_b"] = ln_params(D)
        blk["qkv_w"], blk["qkv_b"] = dense(kg, D, 3 * D)
        blk["proj_w"], blk["proj_b"] = dense(kg, D, D)
        blk["ln2_g"], blk["ln2_b"] = ln_params(D)
        blk["fc1_w"], blk["fc1_b"] = dense(kg, D, MLP_DIM)
        blk["fc2_w"], blk["fc2_b"] = dense(kg, MLP_DIM, D)
        blocks.append(blk)
    vit["blocks"] = blocks
    # ----- BERT text encoder (with cross-attention) -----
    bert = {}
    bert["word_emb"] = jax.random.normal(kg(), (VOCAB, D), jnp.float32) * 0.02
    bert["pos_emb"] = jax.random.normal(kg(), (MAX_POS, D), jnp.float32) * 0.02
    bert["type_emb"] = jax.random.normal(kg(), (2, D), jnp.float32) * 0.02
    bert["emb_ln_g"], bert["emb_ln_b"] = ln_params(D)
    layers = []
    for _ in range(BERT_LAYERS):
        lyr = {}
        lyr["sqkv_w"], lyr["sqkv_b"] = dense(kg, D, 3 * D)      # fused self q/k/v
        lyr["so_w"], lyr["so_b"] = dense(kg, D, D)
        lyr["so_ln_g"], lyr["so_ln_b"] = ln_params(D)
        lyr["cq_w"], lyr["cq_b"] = dense(kg, D, D)
        lyr["ckv_w"], lyr["ckv_b"] = dense(kg, D, 2 * D)        # fused cross k/v
        lyr["co_w"], lyr["co_b"] = dense(kg, D, D)
        lyr["co_ln_g"], lyr["co_ln_b"] = ln_params(D)
        lyr["i_w"], lyr["i_b"] = dense(kg, D, MLP_DIM)
        lyr["o_w"], lyr["o_b"] = dense(kg, MLP_DIM, D)
        lyr["o_ln_g"], lyr["o_ln_b"] = ln_params(D)
        layers.append(lyr)
    bert["layers"] = layers
    # ----- ITM head (plain JAX, f32) -----
    itm_w = jax.random.normal(kg(), (D, NUM_CLASSES), jnp.float32) * 0.02
    itm_b = jnp.zeros((NUM_CLASSES,), jnp.float32)
    return {"vit": vit, "bert": bert, "itm_w": itm_w, "itm_b": itm_b}


# ----------------------------- model forward -----------------------------
def vit_forward(p, image):
    B, C, H, W = image.shape
    D = HIDDEN
    Hp, Wp = H // PATCH, W // PATCH
    # NCHW -> [B*N, C*P*P] patches (matches Conv2d(kernel=stride=PATCH) flattening).
    patches = image.reshape(B, C, Hp, PATCH, Wp, PATCH).transpose(0, 2, 4, 1, 3, 5)
    patches = patches.reshape(B * Hp * Wp, C * PATCH * PATCH)
    x = pallas_linear(patches, p["patch_w"], p["patch_b"]).reshape(B, Hp * Wp, D)

    cls = jnp.broadcast_to(p["cls_token"], (B, 1, D))
    x = jnp.concatenate([cls, x], axis=1)
    L = x.shape[1]
    x = x + p["pos_embed"][:, :L]

    for blk in p["blocks"]:
        x = vit_block_forward(x, blk)      # one fused kernel per block

    x = pallas_layernorm(x.reshape(B * L, D), p["norm_g"], p["norm_b"], 1e-6)
    return x.reshape(B, L, D)


def bert_forward(p, input_ids, attention_mask, enc_hidden):
    B, L = input_ids.shape
    D = HIDDEN
    # TODO(synk): embedding gathers (word/pos/type) stay in plain JAX glue — no
    # clean small-table gather kernel; everything downstream is fused in Pallas.
    emb = (p["word_emb"][input_ids]
           + p["pos_emb"][jnp.arange(L)][None]
           + p["type_emb"][0][None, None])
    x = pallas_layernorm(emb.reshape(B * L, D), p["emb_ln_g"], p["emb_ln_b"], 1e-12)
    x = x.reshape(B, L, D)

    # raw 0/1 mask; the -10000 additive term is built inside the fused layer kernel.
    mask3 = attention_mask.astype(jnp.float32).reshape(B, 1, L)
    for lyr in p["layers"]:
        x = bert_layer_forward(x, enc_hidden, mask3, lyr)   # one fused kernel per layer
    return x  # last_hidden_state


def vl_transformer_itm_forward(params, image, input_ids, attention_mask):
    image_embeds = vit_forward(params["vit"], image)            # [B, 1+N, D]
    # image_atts = ones  ->  cross-attention additive mask is identically zero,
    # so it is dropped inside the fused BERT layer kernel (same semantics).
    last_hidden = bert_forward(params["bert"], input_ids, attention_mask,
                               image_embeds)                    # [B, L, D]
    vl_embeddings = last_hidden[:, 0, :]                        # CLS token
    # ITM head (B x D -> B x 2) in plain JAX: launch/DMA overhead >> compute.
    vl_output = vl_embeddings @ params["itm_w"] + params["itm_b"]
    return vl_output


# ----------------------------- main -----------------------------
if __name__ == "__main__":
    root = jax.random.PRNGKey(0)
    k_param, k_img, k_ids = jax.random.split(root, 3)

    params = init_params(k_param)
    image = jax.random.normal(k_img, (BATCH, IMG_C, IMG_H, IMG_W), jnp.float32)
    input_ids = jax.random.randint(k_ids, (BATCH, SEQ_LEN), 0, VOCAB, dtype=jnp.int32)
    attention_mask = jnp.array([[1, 1, 1, 1, 1, 1, 1, 1],
                                [1, 1, 1, 1, 1, 0, 0, 0]], dtype=jnp.int32)

    fwd = jax.jit(vl_transformer_itm_forward)
    logits = fwd(params, image, input_ids, attention_mask)
    jax.block_until_ready(logits)
    assert logits.shape == (BATCH, NUM_CLASSES)
    assert bool(jnp.all(jnp.isfinite(logits)))
    print("KERNEL_OK")
</pallas_src>

<mosaic_0001>
module attributes {stable_mosaic.version = 11 : i64} {
  func.func @_linear_kernel(%arg0: i32, %arg1: memref<8x768xf32, #tpu.memory_space<vmem>>, %arg2: memref<768x128xbf16, #tpu.memory_space<vmem>>, %arg3: memref<1x128xf32, #tpu.memory_space<vmem>>, %arg4: memref<8x128xf32, #tpu.memory_space<vmem>>) attributes {dimension_semantics = [#tpu.dimension_semantics<arbitrary>], iteration_bounds = array<i64: 1>, scalar_prefetch = 0 : i64, scratch_operands = 0 : i64, tpu.core_type = #tpu.core_type<tc>, window_params = [{pipeline_mode = #tpu.pipeline_mode<synchronous>, transform_indices = @transform_0, window_bounds = array<i64: 8, 768>}, {pipeline_mode = #tpu.pipeline_mode<synchronous>, transform_indices = @transform_1, window_bounds = array<i64: 768, 128>}, {pipeline_mode = #tpu.pipeline_mode<synchronous>, transform_indices = @transform_2, window_bounds = array<i64: 1, 128>}, {pipeline_mode = #tpu.pipeline_mode<synchronous>, transform_indices = @transform_3, window_bounds = array<i64: 8, 128>}]} {
    %c0 = arith.constant 0 : index
    %c0_0 = arith.constant 0 : index
    %0 = vector.load %arg1[%c0, %c0_0] : memref<8x768xf32, #tpu.memory_space<vmem>>, vector<8x768xf32>
    %c0_1 = arith.constant 0 : index
    %c0_2 = arith.constant 0 : index
    %1 = vector.load %arg2[%c0_1, %c0_2] : memref<768x128xbf16, #tpu.memory_space<vmem>>, vector<768x128xbf16>
    %c0_3 = arith.constant 0 : index
    %c0_4 = arith.constant 0 : index
    %2 = vector.load %arg3[%c0_3, %c0_4] : memref<1x128xf32, #tpu.memory_space<vmem>>, vector<1x128xf32>
    %3 = arith.truncf %0 : vector<8x768xf32> to vector<8x768xbf16>
    %cst = arith.constant dense<0.000000e+00> : vector<8x128xf32>
    %4 = tpu.matmul %3, %1, %cst {dimension_numbers = #tpu.dot_dimension_numbers<[1], [0], [0], [1], [0, 0, 1, 1], [], []>} : vector<8x768xbf16>, vector<768x128xbf16>, vector<8x128xf32> -> vector<8x128xf32>
    %5 = vector.broadcast %2 : vector<1x128xf32> to vector<8x128xf32>
    %6 = arith.addf %4, %5 : vector<8x128xf32>
    %c0_5 = arith.constant 0 : index
    %c0_6 = arith.constant 0 : index
    %7 = vector.load %arg4[%c0_5, %c0_6] : memref<8x128xf32, #tpu.memory_space<vmem>>, vector<8x128xf32>
    tpu.vector_store %arg4[%c0_5, %c0_6], %6 {strides = array<i32>} : memref<8x128xf32, #tpu.memory_space<vmem>>, vector<8x128xf32>,
    return
  }
  func.func @transform_0(%arg0: i32) -> (i32, i32) {
    %c0_i32 = arith.constant 0 : i32
    %c0_i32_0 = arith.constant 0 : i32
    %c0_i32_1 = arith.constant 0 : i32
    return %c0_i32, %c0_i32_0 : i32, i32
  }
  func.func @transform_1(%arg0: i32) -> (i32, i32) {
    %c0_i32 = arith.constant 0 : i32
    %c0_i32_0 = arith.constant 0 : i32
    %c0_i32_1 = arith.constant 0 : i32
    return %c0_i32, %c0_i32_0 : i32, i32
  }
  func.func @transform_2(%arg0: i32) -> (i32, i32) {
    %c0_i32 = arith.constant 0 : i32
    %c0_i32_0 = arith.constant 0 : i32
    %c0_i32_1 = arith.constant 0 : i32
    return %c0_i32, %c0_i32_0 : i32, i32
  }
  func.func @transform_3(%arg0: i32) -> (i32, i32) {
    %c0_i32 = arith.constant 0 : i32
    %c0_i32_0 = arith.constant 0 : i32
    %c0_i32_1 = arith.constant 0 : i32
    return %c0_i32, %c0_i32_0 : i32, i32
  }
}

module attributes {stable_mosaic.version = 11 : i64} {
  func.func @_layernorm_kernel(%arg0: i32, %arg1: memref<10x128xf32, #tpu.memory_space<vmem>>, %arg2: memref<1x128xf32, #tpu.memory_space<vmem>>, %arg3: memref<1x128xf32, #tpu.memory_space<vmem>>, %arg4: memref<10x128xf32, #tpu.memory_space<vmem>>) attributes {dimension_semantics = [#tpu.dimension_semantics<arbitrary>], iteration_bounds = array<i64: 1>, scalar_prefetch = 0 : i64, scratch_operands = 0 : i64, tpu.core_type = #tpu.core_type<tc>, window_params = [{pipeline_mode = #tpu.pipeline_mode<synchronous>, transform_indices = @transform_0, window_bounds = array<i64: 10, 128>}, {pipeline_mode = #tpu.pipeline_mode<synchronous>, transform_indices = @transform_1, window_bounds = array<i64: 1, 128>}, {pipeline_mode = #tpu.pipeline_mode<synchronous>, transform_indices = @transform_2, window_bounds = array<i64: 1, 128>}, {pipeline_mode = #tpu.pipeline_mode<synchronous>, transform_indices = @transform_3, window_bounds = array<i64: 10, 128>}]} {
    %c0 = arith.constant 0 : index
    %c0_0 = arith.constant 0 : index
    %0 = vector.load %arg1[%c0, %c0_0] : memref<10x128xf32, #tpu.memory_space<vmem>>, vector<10x128xf32>
    %c0_1 = arith.constant 0 : index
    %c0_2 = arith.constant 0 : index
    %1 = vector.load %arg2[%c0_1, %c0_2] : memref<1x128xf32, #tpu.memory_space<vmem>>, vector<1x128xf32>
    %c0_3 = arith.constant 0 : index
    %c0_4 = arith.constant 0 : index
    %2 = vector.load %arg3[%c0_3, %c0_4] : memref<1x128xf32, #tpu.memory_space<vmem>>, vector<1x128xf32>
    %cst = arith.constant dense<0.000000e+00> : vector<10xf32>
    %3 = vector.multi_reduction <add>, %0, %cst [1] : vector<10x128xf32> to vector<10xf32>
    %4 = vector.shape_cast %3 : vector<10xf32> to vector<10x1xf32>
    %cst_5 = arith.constant 1.280000e+02 : f32
    %5 = vector.broadcast %cst_5 : f32 to vector<10x1xf32>
    %6 = arith.divf %4, %5 : vector<10x1xf32>
    %7 = vector.broadcast %6 : vector<10x1xf32> to vector<10x128xf32>
    %8 = arith.subf %0, %7 : vector<10x128xf32>
    %9 = arith.mulf %8, %8 : vector<10x128xf32>
    %cst_6 = arith.constant dense<0.000000e+00> : vector<10xf32>
    %10 = vector.multi_reduction <add>, %9, %cst_6 [1] : vector<10x128xf32> to vector<10xf32>
    %11 = vector.shape_cast %10 : vector<10xf32> to vector<10x1xf32>
    %cst_7 = arith.constant 1.280000e+02 : f32
    %12 = vector.broadcast %cst_7 : f32 to vector<10x1xf32>
    %13 = arith.divf %11, %12 : vector<10x1xf32>
    %cst_8 = arith.constant 9.99999997E-7 : f32
    %14 = vector.broadcast %cst_8 : f32 to vector<10x1xf32>
    %15 = arith.addf %13, %14 : vector<10x1xf32>
    %16 = math.rsqrt %15 : vector<10x1xf32>
    %17 = vector.broadcast %16 : vector<10x1xf32> to vector<10x128xf32>
    %18 = arith.mulf %8, %17 : vector<10x128xf32>
    %19 = vector.broadcast %1 : vector<1x128xf32> to vector<10x128xf32>
    %20 = arith.mulf %18, %19 : vector<10x128xf32>
    %21 = vector.broadcast %2 : vector<1x128xf32> to vector<10x128xf32>
    %22 = arith.addf %20, %21 : vector<10x128xf32>
    %c0_9 = arith.constant 0 : index
    %c0_10 = arith.constant 0 : index
    %23 = vector.load %arg4[%c0_9, %c0_10] : memref<10x128xf32, #tpu.memory_space<vmem>>, vector<10x128xf32>
    tpu.vector_store %arg4[%c0_9, %c0_10], %22 {strides = array<i32>} : memref<10x128xf32, #tpu.memory_space<vmem>>, vector<10x128xf32>,
    return
  }
  func.func @transform_0(%arg0: i32) -> (i32, i32) {
    %c0_i32 = arith.constant 0 : i32
    %c0_i32_0 = arith.constant 0 : i32
    %c0_i32_1 = arith.constant 0 : i32
    return %c0_i32, %c0_i32_0 : i32, i32
  }
  func.func @transform_1(%arg0: i32) -> (i32, i32) {
    %c0_i32 = arith.constant 0 : i32
    %c0_i32_0 = arith.constant 0 : i32
    %c0_i32_1 = arith.constant 0 : i32
    return %c0_i32, %c0_i32_0 : i32, i32
  }
  func.func @transform_2(%arg0: i32) -> (i32, i32) {
    %c0_i32 = arith.constant 0 : i32
    %c0_i32_0 = arith.constant 0 : i32
    %c0_i32_1 = arith.constant 0 : i32
    return %c0_i32, %c0_i32_0 : i32, i32
  }
  func.func @transform_3(%arg0: i32) -> (i32, i32) {
    %c0_i32 = arith.constant 0 : i32
    %c0_i32_0 = arith.constant 0 : i32
    %c0_i32_1 = arith.constant 0 : i32
    return %c0_i32, %c0_i32_0 : i32, i32
  }
}

module attributes {stable_mosaic.version = 11 : i64} {
  func.func @_vit_block_kernel(%arg0: i32, %arg1: memref<1x5x128xf32, #tpu.memory_space<vmem>>, %arg2: memref<1x128xf32, #tpu.memory_space<vmem>>, %arg3: memref<1x128xf32, #tpu.memory_space<vmem>>, %arg4: memref<128x384xbf16, #tpu.memory_space<vmem>>, %arg5: memref<1x384xf32, #tpu.memory_space<vmem>>, %arg6: memref<128x128xbf16, #tpu.memory_space<vmem>>, %arg7: memref<1x128xf32, #tpu.memory_space<vmem>>, %arg8: memref<1x128xf32, #tpu.memory_space<vmem>>, %arg9: memref<1x128xf32, #tpu.memory_space<vmem>>, %arg10: memref<128x512xbf16, #tpu.memory_space<vmem>>, %arg11: memref<1x512xf32, #tpu.memory_space<vmem>>, %arg12: memref<512x128xbf16, #tpu.memory_space<vmem>>, %arg13: memref<1x128xf32, #tpu.memory_space<vmem>>, %arg14: memref<1x5x128xf32, #tpu.memory_space<vmem>>) attributes {dimension_semantics = [#tpu.dimension_semantics<parallel>], iteration_bounds = array<i64: 2>, scalar_prefetch = 0 : i64, scratch_operands = 0 : i64, tpu.core_type = #tpu.core_type<tc>, window_params = [{transform_indices = @transform_0, window_bounds = array<i64: 1, 5, 128>}, {pipeline_mode = #tpu.pipeline_mode<synchronous>, transform_indices = @transform_1, window_bounds = array<i64: 1, 128>}, {pipeline_mode = #tpu.pipeline_mode<synchronous>, transform_indices = @transform_2, window_bounds = array<i64: 1, 128>}, {pipeline_mode = #tpu.pipeline_mode<synchronous>, transform_indices = @transform_3, window_bounds = array<i64: 128, 384>}, {pipeline_mode = #tpu.pipeline_mode<synchronous>, transform_indices = @transform_4, window_bounds = array<i64: 1, 384>}, {pipeline_mode = #tpu.pipeline_mode<synchronous>, transform_indices = @transform_5, window_bounds = array<i64: 128, 128>}, {pipeline_mode = #tpu.pipeline_mode<synchronous>, transform_indices = @transform_6, window_bounds = array<i64: 1, 128>}, {pipeline_mode = #tpu.pipeline_mode<synchronous>, transform_indices = @transform_7, window_bounds = array<i64: 1, 128>}, {pipeline_mode = #tpu.pipeline_mode<synchronous>, transform_indices = @transform_8, window_bounds = array<i64: 1, 128>}, {pipeline_mode = #tpu.pipeline_mode<synchronous>, transform_indices = @transform_9, window_bounds = array<i64: 128, 512>}, {pipeline_mode = #tpu.pipeline_mode<synchronous>, transform_indices = @transform_10, window_bounds = array<i64: 1, 512>}, {pipeline_mode = #tpu.pipeline_mode<synchronous>, transform_indices = @transform_11, window_bounds = array<i64: 512, 128>}, {pipeline_mode = #tpu.pipeline_mode<synchronous>, transform_indices = @transform_12, window_bounds = array<i64: 1, 128>}, {transform_indices = @transform_13, window_bounds = array<i64: 1, 5, 128>}]} {
    %c0 = arith.constant 0 : index
    %c0_0 = arith.constant 0 : index
    %c0_1 = arith.constant 0 : index
    %0 = vector.load %arg1[%c0, %c0_0, %c0_1] : memref<1x5x128xf32, #tpu.memory_space<vmem>>, vector<1x5x128xf32>
    %1 = vector.shape_cast %0 : vector<1x5x128xf32> to vector<5x128xf32>
    %c0_2 = arith.constant 0 : index
    %c0_3 = arith.constant 0 : index
    %2 = vector.load %arg2[%c0_2, %c0_3] : memref<1x128xf32, #tpu.memory_space<vmem>>, vector<1x128xf32>
    %c0_4 = arith.constant 0 : index
    %c0_5 = arith.constant 0 : index
    %3 = vector.load %arg3[%c0_4, %c0_5] : memref<1x128xf32, #tpu.memory_space<vmem>>, vector<1x128xf32>
    %cst = arith.constant dense<0.000000e+00> : vector<5xf32>
    %4 = vector.multi_reduction <add>, %1, %cst [1] : vector<5x128xf32> to vector<5xf32>
    %5 = vector.shape_cast %4 : vector<5xf32> to vector<5x1xf32>
    %cst_6 = arith.constant 1.280000e+02 : f32
    %6 = vector.broadcast %cst_6 : f32 to vector<5x1xf32>
    %7 = arith.divf %5, %6 : vector<5x1xf32>
    %8 = vector.broadcast %7 : vector<5x1xf32> to vector<5x128xf32>
    %9 = arith.subf %1, %8 : vector<5x128xf32>
    %10 = arith.mulf %9, %9 : vector<5x128xf32>
    %cst_7 = arith.constant dense<0.000000e+00> : vector<5xf32>
    %11 = vector.multi_reduction <add>, %10, %cst_7 [1] : vector<5x128xf32> to vector<5xf32>
    %12 = vector.shape_cast %11 : vector<5xf32> to vector<5x1xf32>
    %cst_8 = arith.constant 1.280000e+02 : f32
    %13 = vector.broadcast %cst_8 : f32 to vector<5x1xf32>
    %14 = arith.divf %12, %13 : vector<5x1xf32>
    %cst_9 = arith.constant 9.99999997E-7 : f32
    %15 = vector.broadcast %cst_9 : f32 to vector<5x1xf32>
    %16 = arith.addf %14, %15 : vector<5x1xf32>
    %17 = math.rsqrt %16 : vector<5x1xf32>
    %18 = vector.broadcast %17 : vector<5x1xf32> to vector<5x128xf32>
    %19 = arith.mulf %9, %18 : vector<5x128xf32>
    %20 = vector.broadcast %2 : vector<1x128xf32> to vector<5x128xf32>
    %21 = arith.mulf %19, %20 : vector<5x128xf32>
    %22 = vector.broadcast %3 : vector<1x128xf32> to vector<5x128xf32>
    %23 = arith.addf %21, %22 : vector<5x128xf32>
    %c0_10 = arith.constant 0 : index
    %c0_11 = arith.constant 0 : index
    %24 = vector.load %arg4[%c0_10, %c0_11] : memref<128x384xbf16, #tpu.memory_space<vmem>>, vector<128x384xbf16>
    %c0_12 = arith.constant 0 : index
    %c0_13 = arith.constant 0 : index
    %25 = vector.load %arg5[%c0_12, %c0_13] : memref<1x384xf32, #tpu.memory_space<vmem>>, vector<1x384xf32>
    %26 = arith.truncf %23 : vector<5x128xf32> to vector<5x128xbf16>
    %cst_14 = arith.constant dense<0.000000e+00> : vector<5x384xf32>
    %27 = tpu.matmul %26, %24, %cst_14 {dimension_numbers = #tpu.dot_dimension_numbers<[1], [0], [0], [1], [0, 0, 1, 1], [], []>} : vector<5x128xbf16>, vector<128x384xbf16>, vector<5x384xf32> -> vector<5x384xf32>
    %28 = vector.broadcast %25 : vector<1x384xf32> to vector<5x384xf32>
    %29 = arith.addf %27, %28 : vector<5x384xf32>
    %30 = vector.extract_strided_slice %29 {offsets = [0, 0], sizes = [5, 128], strides = [1, 1]} : vector<5x384xf32> to vector<5x128xf32>
    %31 = vector.extract_strided_slice %29 {offsets = [0, 128], sizes = [5, 128], strides = [1, 1]} : vector<5x384xf32> to vector<5x128xf32>
    %32 = vector.extract_strided_slice %29 {offsets = [0, 256], sizes = [5, 128], strides = [1, 1]} : vector<5x384xf32> to vector<5x128xf32>
    %c0_15 = arith.constant 0 : index
    %c0_16 = arith.constant 0 : index
    %33 = vector.load %arg6[%c0_15, %c0_16] : memref<128x128xbf16, #tpu.memory_space<vmem>>, vector<128x128xbf16>
    %34 = vector.extract_strided_slice %30 {offsets = [0, 0], sizes = [5, 32], strides = [1, 1]} : vector<5x128xf32> to vector<5x32xf32>
    %35 = arith.truncf %34 : vector<5x32xf32> to vector<5x32xbf16>
    %36 = vector.extract_strided_slice %31 {offsets = [0, 0], sizes = [5, 32], strides = [1, 1]} : vector<5x128xf32> to vector<5x32xf32>
    %37 = arith.truncf %36 : vector<5x32xf32> to vector<5x32xbf16>
    %38 = vector.extract_strided_slice %32 {offsets = [0, 0], sizes = [5, 32], strides = [1, 1]} : vector<5x128xf32> to vector<5x32xf32>
    %39 = arith.truncf %38 : vector<5x32xf32> to vector<5x32xbf16>
    %cst_17 = arith.constant dense<0.000000e+00> : vector<5x5xf32>
    %40 = tpu.matmul %35, %37, %cst_17 {dimension_numbers = #tpu.dot_dimension_numbers<[1], [1], [0], [0], [0, 0, 1, 0], [], []>} : vector<5x32xbf16>, vector<5x32xbf16>, vector<5x5xf32> -> vector<5x5xf32>
    %cst_18 = arith.constant 0.176776692 : f32
    %41 = vector.broadcast %cst_18 : f32 to vector<5x5xf32>
    %42 = arith.mulf %40, %41 : vector<5x5xf32>
    %cst_19 = arith.constant dense<0xFF800000> : vector<5xf32>
    %43 = vector.multi_reduction <maximumf>, %42, %cst_19 [1] : vector<5x5xf32> to vector<5xf32>
    %44 = vector.shape_cast %43 : vector<5xf32> to vector<5x1xf32>
    %45 = vector.broadcast %44 : vector<5x1xf32> to vector<5x5xf32>
    %46 = arith.subf %42, %45 : vector<5x5xf32>
    %47 = math.exp %46 : vector<5x5xf32>
    %cst_20 = arith.constant dense<0.000000e+00> : vector<5xf32>
    %48 = vector.multi_reduction <add>, %47, %cst_20 [1] : vector<5x5xf32> to vector<5xf32>
    %49 = vector.shape_cast %48 : vector<5xf32> to vector<5x1xf32>
    %50 = tpu.reciprocal %49 {approx = true} : vector<5x1xf32> -> vector<5x1xf32>
    %51 = arith.truncf %47 : vector<5x5xf32> to vector<5x5xbf16>
    %cst_21 = arith.constant dense<0.000000e+00> : vector<5x32xf32>
    %52 = tpu.matmul %51, %39, %cst_21 {dimension_numbers = #tpu.dot_dimension_numbers<[1], [0], [0], [1], [0, 0, 1, 1], [], []>} : vector<5x5xbf16>, vector<5x32xbf16>, vector<5x32xf32> -> vector<5x32xf32>
    %53 = vector.broadcast %50 : vector<5x1xf32> to vector<5x32xf32>
    %54 = arith.mulf %52, %53 : vector<5x32xf32>
    %55 = arith.truncf %54 : vector<5x32xf32> to vector<5x32xbf16>
    %56 = vector.extract_strided_slice %33 {offsets = [0, 0], sizes = [32, 128], strides = [1, 1]} : vector<128x128xbf16> to vector<32x128xbf16>
    %cst_22 = arith.constant dense<0.000000e+00> : vector<5x128xf32>
    %57 = tpu.matmul %55, %56, %cst_22 {dimension_numbers = #tpu.dot_dimension_numbers<[1], [0], [0], [1], [0, 0, 1, 1], [], []>} : vector<5x32xbf16>, vector<32x128xbf16>, vector<5x128xf32> -> vector<5x128xf32>
    %58 = vector.extract_strided_slice %30 {offsets = [0, 32], sizes = [5, 32], strides = [1, 1]} : vector<5x128xf32> to vector<5x32xf32>
    %59 = arith.truncf %58 : vector<5x32xf32> to vector<5x32xbf16>
    %60 = vector.extract_strided_slice %31 {offsets = [0, 32], sizes = [5, 32], strides = [1, 1]} : vector<5x128xf32> to vector<5x32xf32>
    %61 = arith.truncf %60 : vector<5x32xf32> to vector<5x32xbf16>
    %62 = vector.extract_strided_slice %32 {offsets = [0, 32], sizes = [5, 32], strides = [1, 1]} : vector<5x128xf32> to vector<5x32xf32>
    %63 = arith.truncf %62 : vector<5x32xf32> to vector<5x32xbf16>
    %cst_23 = arith.constant dense<0.000000e+00> : vector<5x5xf32>
    %64 = tpu.matmul %59, %61, %cst_23 {dimension_numbers = #tpu.dot_dimension_numbers<[1], [1], [0], [0], [0, 0, 1, 0], [], []>} : vector<5x32xbf16>, vector<5x32xbf16>, vector<5x5xf32> -> vector<5x5xf32>
    %cst_24 = arith.constant 0.176776692 : f32
    %65 = vector.broadcast %cst_24 : f32 to vector<5x5xf32>
    %66 = arith.mulf %64, %65 : vector<5x5xf32>
    %cst_25 = arith.constant dense<0xFF800000> : vector<5xf32>
    %67 = vector.multi_reduction <maximumf>, %66, %cst_25 [1] : vector<5x5xf32> to vector<5xf32>
    %68 = vector.shape_cast %67 : vector<5xf32> to vector<5x1xf32>
    %69 = vector.broadcast %68 : vector<5x1xf32> to vector<5x5xf32>
    %70 = arith.subf %66, %69 : vector<5x5xf32>
    %71 = math.exp %70 : vector<5x5xf32>
    %cst_26 = arith.constant dense<0.000000e+00> : vector<5xf32>
    %72 = vector.multi_reduction <add>, %71, %cst_26 [1] : vector<5x5xf32> to vector<5xf32>
    %73 = vector.shape_cast %72 : vector<5xf32> to vector<5x1xf32>
    %74 = tpu.reciprocal %73 {approx = true} : vector<5x1xf32> -> vector<5x1xf32>
    %75 = arith.truncf %71 : vector<5x5xf32> to vector<5x5xbf16>
    %cst_27 = arith.constant dense<0.000000e+00> : vector<5x32xf32>
    %76 = tpu.matmul %75, %63, %cst_27 {dimension_numbers = #tpu.dot_dimension_numbers<[1], [0], [0], [1], [0, 0, 1, 1], [], []>} : vector<5x5xbf16>, vector<5x32xbf16>, vector<5x32xf32> -> vector<5x32xf32>
    %77 = vector.broadcast %74 : vector<5x1xf32> to vector<5x32xf32>
    %78 = arith.mulf %76, %77 : vector<5x32xf32>
    %79 = arith.truncf %78 : vector<5x32xf32> to vector<5x32xbf16>
    %80 = vector.extract_strided_slice %33 {offsets = [32, 0], sizes = [32, 128], strides = [1, 1]} : vector<128x128xbf16> to vector<32x128xbf16>
    %cst_28 = arith.constant dense<0.000000e+00> : vector<5x128xf32>
    %81 = tpu.matmul %79, %80, %cst_28 {dimension_numbers = #tpu.dot_dimension_numbers<[1], [0], [0], [1], [0, 0, 1, 1], [], []>} : vector<5x32xbf16>, vector<32x128xbf16>, vector<5x128xf32> -> vector<5x128xf32>
    %82 = arith.addf %57, %81 : vector<5x128xf32>
    %83 = vector.extract_strided_slice %30 {offsets = [0, 64], sizes = [5, 32], strides = [1, 1]} : vector<5x128xf32> to vector<5x32xf32>
    %84 = arith.truncf %83 : vector<5x32xf32> to vector<5x32xbf16>
    %85 = vector.extract_strided_slice %31 {offsets = [0, 64], sizes = [5, 32], strides = [1, 1]} : vector<5x128xf32> to vector<5x32xf32>
    %86 = arith.truncf %85 : vector<5x32xf32> to vector<5x32xbf16>
    %87 = vector.extract_strided_slice %32 {offsets = [0, 64], sizes = [5, 32], strides = [1, 1]} : vector<5x128xf32> to vector<5x32xf32>
    %88 = arith.truncf %87 : vector<5x32xf32> to vector<5x32xbf16>
    %cst_29 = arith.constant dense<0.000000e+00> : vector<5x5xf32>
    %89 = tpu.matmul %84, %86, %cst_29 {dimension_numbers = #tpu.dot_dimension_numbers<[1], [1], [0], [0], [0, 0, 1, 0], [], []>} : vector<5x32xbf16>, vector<5x32xbf16>, vector<5x5xf32> -> vector<5x5xf32>
    %cst_30 = arith.constant 0.176776692 : f32
    %90 = vector.broadcast %cst_30 : f32 to vector<5x5xf32>
    %91 = arith.mulf %89, %90 : vector<5x5xf32>
    %cst_31 = arith.constant dense<0xFF800000> : vector<5xf32>
    %92 = vector.multi_reduction <maximumf>, %91, %cst_31 [1] : vector<5x5xf32> to vector<5xf32>
    %93 = vector.shape_cast %92 : vector<5xf32> to vector<5x1xf32>
    %94 = vector.broadcast %93 : vector<5x1xf32> to vector<5x5xf32>
    %95 = arith.subf %91, %94 : vector<5x5xf32>
    %96 = math.exp %95 : vector<5x5xf32>
    %cst_32 = arith.constant dense<0.000000e+00> : vector<5xf32>
    %97 = vector.multi_reduction <add>, %96, %cst_32 [1] : vector<5x5xf32> to vector<5xf32>
    %98 = vector.shape_cast %97 : vector<5xf32> to vector<5x1xf32>
    %99 = tpu.reciprocal %98 {approx = true} : vector<5x1xf32> -> vector<5x1xf32>
    %100 = arith.truncf %96 : vector<5x5xf32> to vector<5x5xbf16>
    %cst_33 = arith.constant dense<0.000000e+00> : vector<5x32xf32>
    %101 = tpu.matmul %100, %88, %cst_33 {dimension_numbers = #tpu.dot_dimension_numbers<[1], [0], [0], [1], [0, 0, 1, 1], [], []>} : vector<5x5xbf16>, vector<5x32xbf16>, vector<5x32xf32> -> vector<5x32xf32>
    %102 = vector.broadcast %99 : vector<5x1xf32> to vector<5x32xf32>
    %103 = arith.mulf %101, %102 : vector<5x32xf32>
    %104 = arith.truncf %103 : vector<5x32xf32> to vector<5x32xbf16>
    %105 = vector.extract_strided_slice %33 {offsets = [64, 0], sizes = [32, 128], strides = [1, 1]} : vector<128x128xbf16> to vector<32x128xbf16>
    %cst_34 = arith.constant dense<0.000000e+00> : vector<5x128xf32>
    %106 = tpu.matmul %104, %105, %cst_34 {dimension_numbers = #tpu.dot_dimension_numbers<[1], [0], [0], [1], [0, 0, 1, 1], [], []>} : vector<5x32xbf16>, vector<32x128xbf16>, vector<5x128xf32> -> vector<5x128xf32>
    %107 = arith.addf %82, %106 : vector<5x128xf32>
    %108 = vector.extract_strided_slice %30 {offsets = [0, 96], sizes = [5, 32], strides = [1, 1]} : vector<5x128xf32> to vector<5x32xf32>
    %109 = arith.truncf %108 : vector<5x32xf32> to vector<5x32xbf16>
    %110 = vector.extract_strided_slice %31 {offsets = [0, 96], sizes = [5, 32], strides = [1, 1]} : vector<5x128xf32> to vector<5x32xf32>
    %111 = arith.truncf %110 : vector<5x32xf32> to vector<5x32xbf16>
    %112 = vector.extract_strided_slice %32 {offsets = [0, 96], sizes = [5, 32], strides = [1, 1]} : vector<5x128xf32> to vector<5x32xf32>
    %113 = arith.truncf %112 : vector<5x32xf32> to vector<5x32xbf16>
    %cst_35 = arith.constant dense<0.000000e+00> : vector<5x5xf32>
    %114 = tpu.matmul %109, %111, %cst_35 {dimension_numbers = #tpu.dot_dimension_numbers<[1], [1], [0], [0], [0, 0, 1, 0], [], []>} : vector<5x32xbf16>, vector<5x32xbf16>, vector<5x5xf32> -> vector<5x5xf32>
    %cst_36 = arith.constant 0.176776692 : f32
    %115 = vector.broadcast %cst_36 : f32 to vector<5x5xf32>
    %116 = arith.mulf %114, %115 : vector<5x5xf32>
    %cst_37 = arith.constant dense<0xFF800000> : vector<5xf32>
    %117 = vector.multi_reduction <maximumf>, %116, %cst_37 [1] : vector<5x5xf32> to vector<5xf32>
    %118 = vector.shape_cast %117 : vector<5xf32> to vector<5x1xf32>
    %119 = vector.broadcast %118 : vector<5x1xf32> to vector<5x5xf32>
    %120 = arith.subf %116, %119 : vector<5x5xf32>
    %121 = math.exp %120 : vector<5x5xf32>
    %cst_38 = arith.constant dense<0.000000e+00> : vector<5xf32>
    %122 = vector.multi_reduction <add>, %121, %cst_38 [1] : vector<5x5xf32> to vector<5xf32>
    %123 = vector.shape_cast %122 : vector<5xf32> to vector<5x1xf32>
    %124 = tpu.reciprocal %123 {approx = true} : vector<5x1xf32> -> vector<5x1xf32>
    %125 = arith.truncf %121 : vector<5x5xf32> to vector<5x5xbf16>
    %cst_39 = arith.constant dense<0.000000e+00> : vector<5x32xf32>
    %126 = tpu.matmul %125, %113, %cst_39 {dimension_numbers = #tpu.dot_dimension_numbers<[1], [0], [0], [1], [0, 0, 1, 1], [], []>} : vector<5x5xbf16>, vector<5x32xbf16>, vector<5x32xf32> -> vector<5x32xf32>
    %127 = vector.broadcast %124 : vector<5x1xf32> to vector<5x32xf32>
    %128 = arith.mulf %126, %127 : vector<5x32xf32>
    %129 = arith.truncf %128 : vector<5x32xf32> to vector<5x32xbf16>
    %130 = vector.extract_strided_slice %33 {offsets = [96, 0], sizes = [32, 128], strides = [1, 1]} : vector<128x128xbf16> to vector<32x128xbf16>
    %cst_40 = arith.constant dense<0.000000e+00> : vector<5x128xf32>
    %131 = tpu.matmul %129, %130, %cst_40 {dimension_numbers = #tpu.dot_dimension_numbers<[1], [0], [0], [1], [0, 0, 1, 1], [], []>} : vector<5x32xbf16>, vector<32x128xbf16>, vector<5x128xf32> -> vector<5x128xf32>
    %132 = arith.addf %107, %131 : vector<5x128xf32>
    %c0_41 = arith.constant 0 : index
    %c0_42 = arith.constant 0 : index
    %133 = vector.load %arg7[%c0_41, %c0_42] : memref<1x128xf32, #tpu.memory_space<vmem>>, vector<1x128xf32>
    %134 = vector.broadcast %133 : vector<1x128xf32> to vector<5x128xf32>
    %135 = arith.addf %132, %134 : vector<5x128xf32>
    %136 = arith.addf %1, %135 : vector<5x128xf32>
    %c0_43 = arith.constant 0 : index
    %c0_44 = arith.constant 0 : index
    %137 = vector.load %arg8[%c0_43, %c0_44] : memref<1x128xf32, #tpu.memory_space<vmem>>, vector<1x128xf32>
    %c0_45 = arith.constant 0 : index
    %c0_46 = arith.constant 0 : index
    %138 = vector.load %arg9[%c0_45, %c0_46] : memref<1x128xf32, #tpu.memory_space<vmem>>, vector<1x128xf32>
    %cst_47 = arith.constant dense<0.000000e+00> : vector<5xf32>
    %139 = vector.multi_reduction <add>, %136, %cst_47 [1] : vector<5x128xf32> to vector<5xf32>
    %140 = vector.shape_cast %139 : vector<5xf32> to vector<5x1xf32>
    %cst_48 = arith.constant 1.280000e+02 : f32
    %141 = vector.broadcast %cst_48 : f32 to vector<5x1xf32>
    %142 = arith.divf %140, %141 : vector<5x1xf32>
    %143 = vector.broadcast %142 : vector<5x1xf32> to vector<5x128xf32>
    %144 = arith.subf %136, %143 : vector<5x128xf32>
    %145 = arith.mulf %144, %144 : vector<5x128xf32>
    %cst_49 = arith.constant dense<0.000000e+00> : vector<5xf32>
    %146 = vector.multi_reduction <add>, %145, %cst_49 [1] : vector<5x128xf32> to vector<5xf32>
    %147 = vector.shape_cast %146 : vector<5xf32> to vector<5x1xf32>
    %cst_50 = arith.constant 1.280000e+02 : f32
    %148 = vector.broadcast %cst_50 : f32 to vector<5x1xf32>
    %149 = arith.divf %147, %148 : vector<5x1xf32>
    %cst_51 = arith.constant 9.99999997E-7 : f32
    %150 = vector.broadcast %cst_51 : f32 to vector<5x1xf32>
    %151 = arith.addf %149, %150 : vector<5x1xf32>
    %152 = math.rsqrt %151 : vector<5x1xf32>
    %153 = vector.broadcast %152 : vector<5x1xf32> to vector<5x128xf32>
    %154 = arith.mulf %144, %153 : vector<5x128xf32>
    %155 = vector.broadcast %137 : vector<1x128xf32> to vector<5x128xf32>
    %156 = arith.mulf %154, %155 : vector<5x128xf32>
    %157 = vector.broadcast %138 : vector<1x128xf32> to vector<5x128xf32>
    %158 = arith.addf %156, %157 : vector<5x128xf32>
    %c0_52 = arith.constant 0 : index
    %c0_53 = arith.constant 0 : index
    %159 = vector.load %arg10[%c0_52, %c0_53] : memref<128x512xbf16, #tpu.memory_space<vmem>>, vector<128x512xbf16>
    %c0_54 = arith.constant 0 : index
    %c0_55 = arith.constant 0 : index
    %160 = vector.load %arg11[%c0_54, %c0_55] : memref<1x512xf32, #tpu.memory_space<vmem>>, vector<1x512xf32>
    %161 = arith.truncf %158 : vector<5x128xf32> to vector<5x128xbf16>
    %cst_56 = arith.constant dense<0.000000e+00> : vector<5x512xf32>
    %162 = tpu.matmul %161, %159, %cst_56 {dimension_numbers = #tpu.dot_dimension_numbers<[1], [0], [0], [1], [0, 0, 1, 1], [], []>} : vector<5x128xbf16>, vector<128x512xbf16>, vector<5x512xf32> -> vector<5x512xf32>
    %163 = vector.broadcast %160 : vector<1x512xf32> to vector<5x512xf32>
    %164 = arith.addf %162, %163 : vector<5x512xf32>
    %cst_57 = arith.constant 5.000000e-01 : f32
    %165 = vector.broadcast %cst_57 : f32 to vector<5x512xf32>
    %166 = arith.mulf %165, %164 : vector<5x512xf32>
    %cst_58 = arith.constant 4.471500e-02 : f32
    %167 = vector.broadcast %cst_58 : f32 to vector<5x512xf32>
    %168 = arith.mulf %167, %164 : vector<5x512xf32>
    %169 = arith.mulf %168, %164 : vector<5x512xf32>
    %170 = arith.mulf %169, %164 : vector<5x512xf32>
    %171 = arith.addf %164, %170 : vector<5x512xf32>
    %cst_59 = arith.constant 0.797884583 : f32
    %172 = vector.broadcast %cst_59 : f32 to vector<5x512xf32>
    %173 = arith.mulf %172, %171 : vector<5x512xf32>
    %174 = math.tanh %173 : vector<5x512xf32>
    %cst_60 = arith.constant 1.000000e+00 : f32
    %175 = vector.broadcast %cst_60 : f32 to vector<5x512xf32>
    %176 = arith.addf %175, %174 : vector<5x512xf32>
    %177 = arith.mulf %166, %176 : vector<5x512xf32>
    %c0_61 = arith.constant 0 : index
    %c0_62 = arith.constant 0 : index
    %178 = vector.load %arg12[%c0_61, %c0_62] : memref<512x128xbf16, #tpu.memory_space<vmem>>, vector<512x128xbf16>
    %c0_63 = arith.constant 0 : index
    %c0_64 = arith.constant 0 : index
    %179 = vector.load %arg13[%c0_63, %c0_64] : memref<1x128xf32, #tpu.memory_space<vmem>>, vector<1x128xf32>
    %180 = arith.truncf %177 : vector<5x512xf32> to vector<5x512xbf16>
    %cst_65 = arith.constant dense<0.000000e+00> : vector<5x128xf32>
    %181 = tpu.matmul %180, %178, %cst_65 {dimension_numbers = #tpu.dot_dimension_numbers<[1], [0], [0], [1], [0, 0, 1, 1], [], []>} : vector<5x512xbf16>, vector<512x128xbf16>, vector<5x128xf32> -> vector<5x128xf32>
    %182 = vector.broadcast %179 : vector<1x128xf32> to vector<5x128xf32>
    %183 = arith.addf %181, %182 : vector<5x128xf32>
    %184 = arith.addf %136, %183 : vector<5x128xf32>
    %c0_66 = arith.constant 0 : index
    %c0_67 = arith.constant 0 : index
    %c0_68 = arith.constant 0 : index
    %185 = vector.load %arg14[%c0_66, %c0_67, %c0_68] : memref<1x5x128xf32, #tpu.memory_space<vmem>>, vector<1x5x128xf32>
    %186 = vector.shape_cast %185 : vector<1x5x128xf32> to vector<5x128xf32>
    %187 = vector.shape_cast %184 : vector<5x128xf32> to vector<1x5x128xf32>
    tpu.vector_store %arg14[%c0_66, %c0_67, %c0_68], %187 {strides = array<i32>} : memref<1x5x128xf32, #tpu.memory_space<vmem>>, vector<1x5x128xf32>,
    return
  }
  func.func @transform_0(%arg0: i32) -> (i32, i32, i32) {
    %c0_i32 = arith.constant 0 : i32
    %c0_i32_0 = arith.constant 0 : i32
    %c0_i32_1 = arith.constant 0 : i32
    return %arg0, %c0_i32, %c0_i32_0 : i32, i32, i32
  }
  func.func @transform_1(%arg0: i32) -> (i32, i32) {
    %c0_i32 = arith.constant 0 : i32
    %c0_i32_0 = arith.constant 0 : i32
    %c0_i32_1 = arith.constant 0 : i32
    return %c0_i32, %c0_i32_0 : i32, i32
  }
  func.func @transform_2(%arg0: i32) -> (i32, i32) {
    %c0_i32 = arith.constant 0 : i32
    %c0_i32_0 = arith.constant 0 : i32
    %c0_i32_1 = arith.constant 0 : i32
    return %c0_i32, %c0_i32_0 : i32, i32
  }
  func.func @transform_3(%arg0: i32) -> (i32, i32) {
    %c0_i32 = arith.constant 0 : i32
    %c0_i32_0 = arith.constant 0 : i32
    %c0_i32_1 = arith.constant 0 : i32
    return %c0_i32, %c0_i32_0 : i32, i32
  }
  func.func @transform_4(%arg0: i32) -> (i32, i32) {
    %c0_i32 = arith.constant 0 : i32
    %c0_i32_0 = arith.constant 0 : i32
    %c0_i32_1 = arith.constant 0 : i32
    return %c0_i32, %c0_i32_0 : i32, i32
  }
  func.func @transform_5(%arg0: i32) -> (i32, i32) {
    %c0_i32 = arith.constant 0 : i32
    %c0_i32_0 = arith.constant 0 : i32
    %c0_i32_1 = arith.constant 0 : i32
    return %c0_i32, %c0_i32_0 : i32, i32
  }
  func.func @transform_6(%arg0: i32) -> (i32, i32) {
    %c0_i32 = arith.constant 0 : i32
    %c0_i32_0 = arith.constant 0 : i32
    %c0_i32_1 = arith.constant 0 : i32
    return %c0_i32, %c0_i32_0 : i32, i32
  }
  func.func @transform_7(%arg0: i32) -> (i32, i32) {
    %c0_i32 = arith.constant 0 : i32
    %c0_i32_0 = arith.constant 0 : i32
    %c0_i32_1 = arith.constant 0 : i32
    return %c0_i32, %c0_i32_0 : i32, i32
  }
  func.func @transform_8(%arg0: i32) -> (i32, i32) {
    %c0_i32 = arith.constant 0 : i32
    %c0_i32_0 = arith.constant 0 : i32
    %c0_i32_1 = arith.constant 0 : i32
    return %c0_i32, %c0_i32_0 : i32, i32
  }
  func.func @transform_9(%arg0: i32) -> (i32, i32) {
    %c0_i32 = arith.constant 0 : i32
    %c0_i32_0 = arith.constant 0 : i32
    %c0_i32_1 = arith.constant 0 : i32
    return %c0_i32, %c0_i32_0 : i32, i32
  }
  func.func @transform_10(%arg0: i32) -> (i32, i32) {
    %c0_i32 = arith.constant 0 : i32
    %c0_i32_0 = arith.constant 0 : i32
    %c0_i32_1 = arith.constant 0 : i32
    return %c0_i32, %c0_i32_0 : i32, i32
  }
  func.func @transform_11(%arg0: i32) -> (i32, i32) {
    %c0_i32 = arith.constant 0 : i32
    %c0_i32_0 = arith.constant 0 : i32
    %c0_i32_1 = arith.constant 0 : i32
    return %c0_i32, %c0_i32_0 : i32, i32
  }
  func.func @transform_12(%arg0: i32) -> (i32, i32) {
    %c0_i32 = arith.constant 0 : i32
    %c0_i32_0 = arith.constant 0 : i32
    %c0_i32_1 = arith.constant 0 : i32
    return %c0_i32, %c0_i32_0 : i32, i32
  }
  func.func @transform_13(%arg0: i32) -> (i32, i32, i32) {
    %c0_i32 = arith.constant 0 : i32
    %c0_i32_0 = arith.constant 0 : i32
    %c0_i32_1 = arith.constant 0 : i32
    return %arg0, %c0_i32, %c0_i32_0 : i32, i32, i32
  }
}

module attributes {stable_mosaic.version = 11 : i64} {
  func.func @_layernorm_kernel(%arg0: i32, %arg1: memref<16x128xf32, #tpu.memory_space<vmem>>, %arg2: memref<1x128xf32, #tpu.memory_space<vmem>>, %arg3: memref<1x128xf32, #tpu.memory_space<vmem>>, %arg4: memref<16x128xf32, #tpu.memory_space<vmem>>) attributes {dimension_semantics = [#tpu.dimension_semantics<arbitrary>], iteration_bounds = array<i64: 1>, scalar_prefetch = 0 : i64, scratch_operands = 0 : i64, tpu.core_type = #tpu.core_type<tc>, window_params = [{pipeline_mode = #tpu.pipeline_mode<synchronous>, transform_indices = @transform_0, window_bounds = array<i64: 16, 128>}, {pipeline_mode = #tpu.pipeline_mode<synchronous>, transform_indices = @transform_1, window_bounds = array<i64: 1, 128>}, {pipeline_mode = #tpu.pipeline_mode<synchronous>, transform_indices = @transform_2, window_bounds = array<i64: 1, 128>}, {pipeline_mode = #tpu.pipeline_mode<synchronous>, transform_indices = @transform_3, window_bounds = array<i64: 16, 128>}]} {
    %c0 = arith.constant 0 : index
    %c0_0 = arith.constant 0 : index
    %0 = vector.load %arg1[%c0, %c0_0] : memref<16x128xf32, #tpu.memory_space<vmem>>, vector<16x128xf32>
    %c0_1 = arith.constant 0 : index
    %c0_2 = arith.constant 0 : index
    %1 = vector.load %arg2[%c0_1, %c0_2] : memref<1x128xf32, #tpu.memory_space<vmem>>, vector<1x128xf32>
    %c0_3 = arith.constant 0 : index
    %c0_4 = arith.constant 0 : index
    %2 = vector.load %arg3[%c0_3, %c0_4] : memref<1x128xf32, #tpu.memory_space<vmem>>, vector<1x128xf32>
    %cst = arith.constant dense<0.000000e+00> : vector<16xf32>
    %3 = vector.multi_reduction <add>, %0, %cst [1] : vector<16x128xf32> to vector<16xf32>
    %4 = vector.shape_cast %3 : vector<16xf32> to vector<16x1xf32>
    %cst_5 = arith.constant 1.280000e+02 : f32
    %5 = vector.broadcast %cst_5 : f32 to vector<16x1xf32>
    %6 = arith.divf %4, %5 : vector<16x1xf32>
    %7 = vector.broadcast %6 : vector<16x1xf32> to vector<16x128xf32>
    %8 = arith.subf %0, %7 : vector<16x128xf32>
    %9 = arith.mulf %8, %8 : vector<16x128xf32>
    %cst_6 = arith.constant dense<0.000000e+00> : vector<16xf32>
    %10 = vector.multi_reduction <add>, %9, %cst_6 [1] : vector<16x128xf32> to vector<16xf32>
    %11 = vector.shape_cast %10 : vector<16xf32> to vector<16x1xf32>
    %cst_7 = arith.constant 1.280000e+02 : f32
    %12 = vector.broadcast %cst_7 : f32 to vector<16x1xf32>
    %13 = arith.divf %11, %12 : vector<16x1xf32>
    %cst_8 = arith.constant 9.99999996E-13 : f32
    %14 = vector.broadcast %cst_8 : f32 to vector<16x1xf32>
    %15 = arith.addf %13, %14 : vector<16x1xf32>
    %16 = math.rsqrt %15 : vector<16x1xf32>
    %17 = vector.broadcast %16 : vector<16x1xf32> to vector<16x128xf32>
    %18 = arith.mulf %8, %17 : vector<16x128xf32>
    %19 = vector.broadcast %1 : vector<1x128xf32> to vector<16x128xf32>
    %20 = arith.mulf %18, %19 : vector<16x128xf32>
    %21 = vector.broadcast %2 : vector<1x128xf32> to vector<16x128xf32>
    %22 = arith.addf %20, %21 : vector<16x128xf32>
    %c0_9 = arith.constant 0 : index
    %c0_10 = arith.constant 0 : index
    %23 = vector.load %arg4[%c0_9, %c0_10] : memref<16x128xf32, #tpu.memory_space<vmem>>, vector<16x128xf32>
    tpu.vector_store %arg4[%c0_9, %c0_10], %22 {strides = array<i32>} : memref<16x128xf32, #tpu.memory_space<vmem>>, vector<16x128xf32>,
    return
  }
  func.func @transform_0(%arg0: i32) -> (i32, i32) {
    %c0_i32 = arith.constant 0 : i32
    %c0_i32_0 = arith.constant 0 : i32
    %c0_i32_1 = arith.constant 0 : i32
    return %c0_i32, %c0_i32_0 : i32, i32
  }
  func.func @transform_1(%arg0: i32) -> (i32, i32) {
    %c0_i32 = arith.constant 0 : i32
    %c0_i32_0 = arith.constant 0 : i32
    %c0_i32_1 = arith.constant 0 : i32
    return %c0_i32, %c0_i32_0 : i32, i32
  }
  func.func @transform_2(%arg0: i32) -> (i32, i32) {
    %c0_i32 = arith.constant 0 : i32
    %c0_i32_0 = arith.constant 0 : i32
    %c0_i32_1 = arith.constant 0 : i32
    return %c0_i32, %c0_i32_0 : i32, i32
  }
  func.func @transform_3(%arg0: i32) -> (i32, i32) {
    %c0_i32 = arith.constant 0 : i32
    %c0_i32_0 = arith.constant 0 : i32
    %c0_i32_1 = arith.constant 0 : i32
    return %c0_i32, %c0_i32_0 : i32, i32
  }
}

module attributes {stable_mosaic.version = 11 : i64} {
  func.func @_bert_layer_kernel(%arg0: i32, %arg1: memref<1x8x128xf32, #tpu.memory_space<vmem>>, %arg2: memref<1x5x128xf32, #tpu.memory_space<vmem>>, %arg3: memref<1x1x8xf32, #tpu.memory_space<vmem>>, %arg4: memref<128x384xbf16, #tpu.memory_space<vmem>>, %arg5: memref<1x384xf32, #tpu.memory_space<vmem>>, %arg6: memref<128x128xbf16, #tpu.memory_space<vmem>>, %arg7: memref<1x128xf32, #tpu.memory_space<vmem>>, %arg8: memref<1x128xf32, #tpu.memory_space<vmem>>, %arg9: memref<1x128xf32, #tpu.memory_space<vmem>>, %arg10: memref<128x128xbf16, #tpu.memory_space<vmem>>, %arg11: memref<1x128xf32, #tpu.memory_space<vmem>>, %arg12: memref<128x256xbf16, #tpu.memory_space<vmem>>, %arg13: memref<1x256xf32, #tpu.memory_space<vmem>>, %arg14: memref<128x128xbf16, #tpu.memory_space<vmem>>, %arg15: memref<1x128xf32, #tpu.memory_space<vmem>>, %arg16: memref<1x128xf32, #tpu.memory_space<vmem>>, %arg17: memref<1x128xf32, #tpu.memory_space<vmem>>, %arg18: memref<128x512xbf16, #tpu.memory_space<vmem>>, %arg19: memref<1x512xf32, #tpu.memory_space<vmem>>, %arg20: memref<512x128xbf16, #tpu.memory_space<vmem>>, %arg21: memref<1x128xf32, #tpu.memory_space<vmem>>, %arg22: memref<1x128xf32, #tpu.memory_space<vmem>>, %arg23: memref<1x128xf32, #tpu.memory_space<vmem>>, %arg24: memref<1x8x128xf32, #tpu.memory_space<vmem>>) attributes {dimension_semantics = [#tpu.dimension_semantics<parallel>], iteration_bounds = array<i64: 2>, scalar_prefetch = 0 : i64, scratch_operands = 0 : i64, tpu.core_type = #tpu.core_type<tc>, window_params = [{transform_indices = @transform_0, window_bounds = array<i64: 1, 8, 128>}, {transform_indices = @transform_1, window_bounds = array<i64: 1, 5, 128>}, {transform_indices = @transform_2, window_bounds = array<i64: 1, 1, 8>}, {pipeline_mode = #tpu.pipeline_mode<synchronous>, transform_indices = @transform_3, window_bounds = array<i64: 128, 384>}, {pipeline_mode = #tpu.pipeline_mode<synchronous>, transform_indices = @transform_4, window_bounds = array<i64: 1, 384>}, {pipeline_mode = #tpu.pipeline_mode<synchronous>, transform_indices = @transform_5, window_bounds = array<i64: 128, 128>}, {pipeline_mode = #tpu.pipeline_mode<synchronous>, transform_indices = @transform_6, window_bounds = array<i64: 1, 128>}, {pipeline_mode = #tpu.pipeline_mode<synchronous>, transform_indices = @transform_7, window_bounds = array<i64: 1, 128>}, {pipeline_mode = #tpu.pipeline_mode<synchronous>, transform_indices = @transform_8, window_bounds = array<i64: 1, 128>}, {pipeline_mode = #tpu.pipeline_mode<synchronous>, transform_indices = @transform_9, window_bounds = array<i64: 128, 128>}, {pipeline_mode = #tpu.pipeline_mode<synchronous>, transform_indices = @transform_10, window_bounds = array<i64: 1, 128>}, {pipeline_mode = #tpu.pipeline_mode<synchronous>, transform_indices = @transform_11, window_bounds = array<i64: 128, 256>}, {pipeline_mode = #tpu.pipeline_mode<synchronous>, transform_indices = @transform_12, window_bounds = array<i64: 1, 256>}, {pipeline_mode = #tpu.pipeline_mode<synchronous>, transform_indices = @transform_13, window_bounds = array<i64: 128, 128>}, {pipeline_mode = #tpu.pipeline_mode<synchronous>, transform_indices = @transform_14, window_bounds = array<i64: 1, 128>}, {pipeline_mode = #tpu.pipeline_mode<synchronous>, transform_indices = @transform_15, window_bounds = array<i64: 1, 128>}, {pipeline_mode = #tpu.pipeline_mode<synchronous>, transform_indices = @transform_16, window_bounds = array<i64: 1, 128>}, {pipeline_mode = #tpu.pipeline_mode<synchronous>, transform_indices = @transform_17, window_bounds = array<i64: 128, 512>}, {pipeline_mode = #tpu.pipeline_mode<synchronous>, transform_indices = @transform_18, window_bounds = array<i64: 1, 512>}, {pipeline_mode = #tpu.pipeline_mode<synchronous>, transform_indices = @transform_19, window_bounds = array<i64: 512, 128>}, {pipeline_mode = #tpu.pipeline_mode<synchronous>, transform_indices = @transform_20, window_bounds = array<i64: 1, 128>}, {pipeline_mode = #tpu.pipeline_mode<synchronous>, transform_indices = @transform_21, window_bounds = array<i64: 1, 128>}, {pipeline_mode = #tpu.pipeline_mode<synchronous>, transform_indices = @transform_22, window_bounds = array<i64: 1, 128>}, {transform_indices = @transform_23, window_bounds = array<i64: 1, 8, 128>}]} {
    %c0 = arith.constant 0 : index
    %c0_0 = arith.constant 0 : index
    %c0_1 = arith.constant 0 : index
    %0 = vector.load %arg1[%c0, %c0_0, %c0_1] : memref<1x8x128xf32, #tpu.memory_space<vmem>>, vector<1x8x128xf32>
    %1 = vector.shape_cast %0 : vector<1x8x128xf32> to vector<8x128xf32>
    %c0_2 = arith.constant 0 : index
    %c0_3 = arith.constant 0 : index
    %c0_4 = arith.constant 0 : index
    %2 = vector.load %arg2[%c0_2, %c0_3, %c0_4] : memref<1x5x128xf32, #tpu.memory_space<vmem>>, vector<1x5x128xf32>
    %3 = vector.shape_cast %2 : vector<1x5x128xf32> to vector<5x128xf32>
    %c0_5 = arith.constant 0 : index
    %c0_6 = arith.constant 0 : index
    %c0_7 = arith.constant 0 : index
    %4 = vector.load %arg3[%c0_5, %c0_6, %c0_7] : memref<1x1x8xf32, #tpu.memory_space<vmem>>, vector<1x1x8xf32>
    %5 = vector.shape_cast %4 : vector<1x1x8xf32> to vector<1x8xf32>
    %cst = arith.constant 1.000000e+00 : f32
    %6 = vector.broadcast %cst : f32 to vector<1x8xf32>
    %7 = arith.subf %6, %5 : vector<1x8xf32>
    %cst_8 = arith.constant -1.000000e+04 : f32
    %8 = vector.broadcast %cst_8 : f32 to vector<1x8xf32>
    %9 = arith.mulf %7, %8 : vector<1x8xf32>
    %c0_9 = arith.constant 0 : index
    %c0_10 = arith.constant 0 : index
    %10 = vector.load %arg4[%c0_9, %c0_10] : memref<128x384xbf16, #tpu.memory_space<vmem>>, vector<128x384xbf16>
    %c0_11 = arith.constant 0 : index
    %c0_12 = arith.constant 0 : index
    %11 = vector.load %arg5[%c0_11, %c0_12] : memref<1x384xf32, #tpu.memory_space<vmem>>, vector<1x384xf32>
    %12 = arith.truncf %1 : vector<8x128xf32> to vector<8x128xbf16>
    %cst_13 = arith.constant dense<0.000000e+00> : vector<8x384xf32>
    %13 = tpu.matmul %12, %10, %cst_13 {dimension_numbers = #tpu.dot_dimension_numbers<[1], [0], [0], [1], [0, 0, 1, 1], [], []>} : vector<8x128xbf16>, vector<128x384xbf16>, vector<8x384xf32> -> vector<8x384xf32>
    %14 = vector.broadcast %11 : vector<1x384xf32> to vector<8x384xf32>
    %15 = arith.addf %13, %14 : vector<8x384xf32>
    %16 = vector.extract_strided_slice %15 {offsets = [0, 0], sizes = [8, 128], strides = [1, 1]} : vector<8x384xf32> to vector<8x128xf32>
    %17 = vector.extract_strided_slice %15 {offsets = [0, 128], sizes = [8, 128], strides = [1, 1]} : vector<8x384xf32> to vector<8x128xf32>
    %18 = vector.extract_strided_slice %15 {offsets = [0, 256], sizes = [8, 128], strides = [1, 1]} : vector<8x384xf32> to vector<8x128xf32>
    %c0_14 = arith.constant 0 : index
    %c0_15 = arith.constant 0 : index
    %19 = vector.load %arg6[%c0_14, %c0_15] : memref<128x128xbf16, #tpu.memory_space<vmem>>, vector<128x128xbf16>
    %20 = vector.extract_strided_slice %16 {offsets = [0, 0], sizes = [8, 32], strides = [1, 1]} : vector<8x128xf32> to vector<8x32xf32>
    %21 = arith.truncf %20 : vector<8x32xf32> to vector<8x32xbf16>
    %22 = vector.extract_strided_slice %17 {offsets = [0, 0], sizes = [8, 32], strides = [1, 1]} : vector<8x128xf32> to vector<8x32xf32>
    %23 = arith.truncf %22 : vector<8x32xf32> to vector<8x32xbf16>
    %24 = vector.extract_strided_slice %18 {offsets = [0, 0], sizes = [8, 32], strides = [1, 1]} : vector<8x128xf32> to vector<8x32xf32>
    %25 = arith.truncf %24 : vector<8x32xf32> to vector<8x32xbf16>
    %cst_16 = arith.constant dense<0.000000e+00> : vector<8x8xf32>
    %26 = tpu.matmul %21, %23, %cst_16 {dimension_numbers = #tpu.dot_dimension_numbers<[1], [1], [0], [0], [0, 0, 1, 0], [], []>} : vector<8x32xbf16>, vector<8x32xbf16>, vector<8x8xf32> -> vector<8x8xf32>
    %cst_17 = arith.constant 0.176776692 : f32
    %27 = vector.broadcast %cst_17 : f32 to vector<8x8xf32>
    %28 = arith.mulf %26, %27 : vector<8x8xf32>
    %29 = vector.broadcast %9 : vector<1x8xf32> to vector<8x8xf32>
    %30 = arith.addf %28, %29 : vector<8x8xf32>
    %cst_18 = arith.constant dense<0xFF800000> : vector<8xf32>
    %31 = vector.multi_reduction <maximumf>, %30, %cst_18 [1] : vector<8x8xf32> to vector<8xf32>
    %32 = vector.shape_cast %31 : vector<8xf32> to vector<8x1xf32>
    %33 = vector.broadcast %32 : vector<8x1xf32> to vector<8x8xf32>
    %34 = arith.subf %30, %33 : vector<8x8xf32>
    %35 = math.exp %34 : vector<8x8xf32>
    %cst_19 = arith.constant dense<0.000000e+00> : vector<8xf32>
    %36 = vector.multi_reduction <add>, %35, %cst_19 [1] : vector<8x8xf32> to vector<8xf32>
    %37 = vector.shape_cast %36 : vector<8xf32> to vector<8x1xf32>
    %38 = tpu.reciprocal %37 {approx = true} : vector<8x1xf32> -> vector<8x1xf32>
    %39 = arith.truncf %35 : vector<8x8xf32> to vector<8x8xbf16>
    %cst_20 = arith.constant dense<0.000000e+00> : vector<8x32xf32>
    %40 = tpu.matmul %39, %25, %cst_20 {dimension_numbers = #tpu.dot_dimension_numbers<[1], [0], [0], [1], [0, 0, 1, 1], [], []>} : vector<8x8xbf16>, vector<8x32xbf16>, vector<8x32xf32> -> vector<8x32xf32>
    %41 = vector.broadcast %38 : vector<8x1xf32> to vector<8x32xf32>
    %42 = arith.mulf %40, %41 : vector<8x32xf32>
    %43 = arith.truncf %42 : vector<8x32xf32> to vector<8x32xbf16>
    %44 = vector.extract_strided_slice %19 {offsets = [0, 0], sizes = [32, 128], strides = [1, 1]} : vector<128x128xbf16> to vector<32x128xbf16>
    %cst_21 = arith.constant dense<0.000000e+00> : vector<8x128xf32>
    %45 = tpu.matmul %43, %44, %cst_21 {dimension_numbers = #tpu.dot_dimension_numbers<[1], [0], [0], [1], [0, 0, 1, 1], [], []>} : vector<8x32xbf16>, vector<32x128xbf16>, vector<8x128xf32> -> vector<8x128xf32>
    %46 = vector.extract_strided_slice %16 {offsets = [0, 32], sizes = [8, 32], strides = [1, 1]} : vector<8x128xf32> to vector<8x32xf32>
    %47 = arith.truncf %46 : vector<8x32xf32> to vector<8x32xbf16>
    %48 = vector.extract_strided_slice %17 {offsets = [0, 32], sizes = [8, 32], strides = [1, 1]} : vector<8x128xf32> to vector<8x32xf32>
    %49 = arith.truncf %48 : vector<8x32xf32> to vector<8x32xbf16>
    %50 = vector.extract_strided_slice %18 {offsets = [0, 32], sizes = [8, 32], strides = [1, 1]} : vector<8x128xf32> to vector<8x32xf32>
    %51 = arith.truncf %50 : vector<8x32xf32> to vector<8x32xbf16>
    %cst_22 = arith.constant dense<0.000000e+00> : vector<8x8xf32>
    %52 = tpu.matmul %47, %49, %cst_22 {dimension_numbers = #tpu.dot_dimension_numbers<[1], [1], [0], [0], [0, 0, 1, 0], [], []>} : vector<8x32xbf16>, vector<8x32xbf16>, vector<8x8xf32> -> vector<8x8xf32>
    %cst_23 = arith.constant 0.176776692 : f32
    %53 = vector.broadcast %cst_23 : f32 to vector<8x8xf32>
    %54 = arith.mulf %52, %53 : vector<8x8xf32>
    %55 = vector.broadcast %9 : vector<1x8xf32> to vector<8x8xf32>
    %56 = arith.addf %54, %55 : vector<8x8xf32>
    %cst_24 = arith.constant dense<0xFF800000> : vector<8xf32>
    %57 = vector.multi_reduction <maximumf>, %56, %cst_24 [1] : vector<8x8xf32> to vector<8xf32>
    %58 = vector.shape_cast %57 : vector<8xf32> to vector<8x1xf32>
    %59 = vector.broadcast %58 : vector<8x1xf32> to vector<8x8xf32>
    %60 = arith.subf %56, %59 : vector<8x8xf32>
    %61 = math.exp %60 : vector<8x8xf32>
    %cst_25 = arith.constant dense<0.000000e+00> : vector<8xf32>
    %62 = vector.multi_reduction <add>, %61, %cst_25 [1] : vector<8x8xf32> to vector<8xf32>
    %63 = vector.shape_cast %62 : vector<8xf32> to vector<8x1xf32>
    %64 = tpu.reciprocal %63 {approx = true} : vector<8x1xf32> -> vector<8x1xf32>
    %65 = arith.truncf %61 : vector<8x8xf32> to vector<8x8xbf16>
    %cst_26 = arith.constant dense<0.000000e+00> : vector<8x32xf32>
    %66 = tpu.matmul %65, %51, %cst_26 {dimension_numbers = #tpu.dot_dimension_numbers<[1], [0], [0], [1], [0, 0, 1, 1], [], []>} : vector<8x8xbf16>, vector<8x32xbf16>, vector<8x32xf32> -> vector<8x32xf32>
    %67 = vector.broadcast %64 : vector<8x1xf32> to vector<8x32xf32>
    %68 = arith.mulf %66, %67 : vector<8x32xf32>
    %69 = arith.truncf %68 : vector<8x32xf32> to vector<8x32xbf16>
    %70 = vector.extract_strided_slice %19 {offsets = [32, 0], sizes = [32, 128], strides = [1, 1]} : vector<128x128xbf16> to vector<32x128xbf16>
    %cst_27 = arith.constant dense<0.000000e+00> : vector<8x128xf32>
    %71 = tpu.matmul %69, %70, %cst_27 {dimension_numbers = #tpu.dot_dimension_numbers<[1], [0], [0], [1], [0, 0, 1, 1], [], []>} : vector<8x32xbf16>, vector<32x128xbf16>, vector<8x128xf32> -> vector<8x128xf32>
    %72 = arith.addf %45, %71 : vector<8x128xf32>
    %73 = vector.extract_strided_slice %16 {offsets = [0, 64], sizes = [8, 32], strides = [1, 1]} : vector<8x128xf32> to vector<8x32xf32>
    %74 = arith.truncf %73 : vector<8x32xf32> to vector<8x32xbf16>
    %75 = vector.extract_strided_slice %17 {offsets = [0, 64], sizes = [8, 32], strides = [1, 1]} : vector<8x128xf32> to vector<8x32xf32>
    %76 = arith.truncf %75 : vector<8x32xf32> to vector<8x32xbf16>
    %77 = vector.extract_strided_slice %18 {offsets = [0, 64], sizes = [8, 32], strides = [1, 1]} : vector<8x128xf32> to vector<8x32xf32>
    %78 = arith.truncf %77 : vector<8x32xf32> to vector<8x32xbf16>
    %cst_28 = arith.constant dense<0.000000e+00> : vector<8x8xf32>
    %79 = tpu.matmul %74, %76, %cst_28 {dimension_numbers = #tpu.dot_dimension_numbers<[1], [1], [0], [0], [0, 0, 1, 0], [], []>} : vector<8x32xbf16>, vector<8x32xbf16>, vector<8x8xf32> -> vector<8x8xf32>
    %cst_29 = arith.constant 0.176776692 : f32
    %80 = vector.broadcast %cst_29 : f32 to vector<8x8xf32>
    %81 = arith.mulf %79, %80 : vector<8x8xf32>
    %82 = vector.broadcast %9 : vector<1x8xf32> to vector<8x8xf32>
    %83 = arith.addf %81, %82 : vector<8x8xf32>
    %cst_30 = arith.constant dense<0xFF800000> : vector<8xf32>
    %84 = vector.multi_reduction <maximumf>, %83, %cst_30 [1] : vector<8x8xf32> to vector<8xf32>
    %85 = vector.shape_cast %84 : vector<8xf32> to vector<8x1xf32>
    %86 = vector.broadcast %85 : vector<8x1xf32> to vector<8x8xf32>
    %87 = arith.subf %83, %86 : vector<8x8xf32>
    %88 = math.exp %87 : vector<8x8xf32>
    %cst_31 = arith.constant dense<0.000000e+00> : vector<8xf32>
    %89 = vector.multi_reduction <add>, %88, %cst_31 [1] : vector<8x8xf32> to vector<8xf32>
    %90 = vector.shape_cast %89 : vector<8xf32> to vector<8x1xf32>
    %91 = tpu.reciprocal %90 {approx = true} : vector<8x1xf32> -> vector<8x1xf32>
    %92 = arith.truncf %88 : vector<8x8xf32> to vector<8x8xbf16>
    %cst_32 = arith.constant dense<0.000000e+00> : vector<8x32xf32>
    %93 = tpu.matmul %92, %78, %cst_32 {dimension_numbers = #tpu.dot_dimension_numbers<[1], [0], [0], [1], [0, 0, 1, 1], [], []>} : vector<8x8xbf16>, vector<8x32xbf16>, vector<8x32xf32> -> vector<8x32xf32>
    %94 = vector.broadcast %91 : vector<8x1xf32> to vector<8x32xf32>
    %95 = arith.mulf %93, %94 : vector<8x32xf32>
    %96 = arith.truncf %95 : vector<8x32xf32> to vector<8x32xbf16>
    %97 = vector.extract_strided_slice %19 {offsets = [64, 0], sizes = [32, 128], strides = [1, 1]} : vector<128x128xbf16> to vector<32x128xbf16>
    %cst_33 = arith.constant dense<0.000000e+00> : vector<8x128xf32>
    %98 = tpu.matmul %96, %97, %cst_33 {dimension_numbers = #tpu.dot_dimension_numbers<[1], [0], [0], [1], [0, 0, 1, 1], [], []>} : vector<8x32xbf16>, vector<32x128xbf16>, vector<8x128xf32> -> vector<8x128xf32>
    %99 = arith.addf %72, %98 : vector<8x128xf32>
    %100 = vector.extract_strided_slice %16 {offsets = [0, 96], sizes = [8, 32], strides = [1, 1]} : vector<8x128xf32> to vector<8x32xf32>
    %101 = arith.truncf %100 : vector<8x32xf32> to vector<8x32xbf16>
    %102 = vector.extract_strided_slice %17 {offsets = [0, 96], sizes = [8, 32], strides = [1, 1]} : vector<8x128xf32> to vector<8x32xf32>
    %103 = arith.truncf %102 : vector<8x32xf32> to vector<8x32xbf16>
    %104 = vector.extract_strided_slice %18 {offsets = [0, 96], sizes = [8, 32], strides = [1, 1]} : vector<8x128xf32> to vector<8x32xf32>
    %105 = arith.truncf %104 : vector<8x32xf32> to vector<8x32xbf16>
    %cst_34 = arith.constant dense<0.000000e+00> : vector<8x8xf32>
    %106 = tpu.matmul %101, %103, %cst_34 {dimension_numbers = #tpu.dot_dimension_numbers<[1], [1], [0], [0], [0, 0, 1, 0], [], []>} : vector<8x32xbf16>, vector<8x32xbf16>, vector<8x8xf32> -> vector<8x8xf32>
    %cst_35 = arith.constant 0.176776692 : f32
    %107 = vector.broadcast %cst_35 : f32 to vector<8x8xf32>
    %108 = arith.mulf %106, %107 : vector<8x8xf32>
    %109 = vector.broadcast %9 : vector<1x8xf32> to vector<8x8xf32>
    %110 = arith.addf %108, %109 : vector<8x8xf32>
    %cst_36 = arith.constant dense<0xFF800000> : vector<8xf32>
    %111 = vector.multi_reduction <maximumf>, %110, %cst_36 [1] : vector<8x8xf32> to vector<8xf32>
    %112 = vector.shape_cast %111 : vector<8xf32> to vector<8x1xf32>
    %113 = vector.broadcast %112 : vector<8x1xf32> to vector<8x8xf32>
    %114 = arith.subf %110, %113 : vector<8x8xf32>
    %115 = math.exp %114 : vector<8x8xf32>
    %cst_37 = arith.constant dense<0.000000e+00> : vector<8xf32>
    %116 = vector.multi_reduction <add>, %115, %cst_37 [1] : vector<8x8xf32> to vector<8xf32>
    %117 = vector.shape_cast %116 : vector<8xf32> to vector<8x1xf32>
    %118 = tpu.reciprocal %117 {approx = true} : vector<8x1xf32> -> vector<8x1xf32>
    %119 = arith.truncf %115 : vector<8x8xf32> to vector<8x8xbf16>
    %cst_38 = arith.constant dense<0.000000e+00> : vector<8x32xf32>
    %120 = tpu.matmul %119, %105, %cst_38 {dimension_numbers = #tpu.dot_dimension_numbers<[1], [0], [0], [1], [0, 0, 1, 1], [], []>} : vector<8x8xbf16>, vector<8x32xbf16>, vector<8x32xf32> -> vector<8x32xf32>
    %121 = vector.broadcast %118 : vector<8x1xf32> to vector<8x32xf32>
    %122 = arith.mulf %120, %121 : vector<8x32xf32>
    %123 = arith.truncf %122 : vector<8x32xf32> to vector<8x32xbf16>
    %124 = vector.extract_strided_slice %19 {offsets = [96, 0], sizes = [32, 128], strides = [1, 1]} : vector<128x128xbf16> to vector<32x128xbf16>
    %cst_39 = arith.constant dense<0.000000e+00> : vector<8x128xf32>
    %125 = tpu.matmul %123, %124, %cst_39 {dimension_numbers = #tpu.dot_dimension_numbers<[1], [0], [0], [1], [0, 0, 1, 1], [], []>} : vector<8x32xbf16>, vector<32x128xbf16>, vector<8x128xf32> -> vector<8x128xf32>
    %126 = arith.addf %99, %125 : vector<8x128xf32>
    %c0_40 = arith.constant 0 : index
    %c0_41 = arith.constant 0 : index
    %127 = vector.load %arg7[%c0_40, %c0_41] : memref<1x128xf32, #tpu.memory_space<vmem>>, vector<1x128xf32>
    %128 = vector.broadcast %127 : vector<1x128xf32> to vector<8x128xf32>
    %129 = arith.addf %126, %128 : vector<8x128xf32>
    %130 = arith.addf %129, %1 : vector<8x128xf32>
    %c0_42 = arith.constant 0 : index
    %c0_43 = arith.constant 0 : index
    %131 = vector.load %arg8[%c0_42, %c0_43] : memref<1x128xf32, #tpu.memory_space<vmem>>, vector<1x128xf32>
    %c0_44 = arith.constant 0 : index
    %c0_45 = arith.constant 0 : index
    %132 = vector.load %arg9[%c0_44, %c0_45] : memref<1x128xf32, #tpu.memory_space<vmem>>, vector<1x128xf32>
    %cst_46 = arith.constant dense<0.000000e+00> : vector<8xf32>
    %133 = vector.multi_reduction <add>, %130, %cst_46 [1] : vector<8x128xf32> to vector<8xf32>
    %134 = vector.shape_cast %133 : vector<8xf32> to vector<8x1xf32>
    %cst_47 = arith.constant 1.280000e+02 : f32
    %135 = vector.broadcast %cst_47 : f32 to vector<8x1xf32>
    %136 = arith.divf %134, %135 : vector<8x1xf32>
    %137 = vector.broadcast %136 : vector<8x1xf32> to vector<8x128xf32>
    %138 = arith.subf %130, %137 : vector<8x128xf32>
    %139 = arith.mulf %138, %138 : vector<8x128xf32>
    %cst_48 = arith.constant dense<0.000000e+00> : vector<8xf32>
    %140 = vector.multi_reduction <add>, %139, %cst_48 [1] : vector<8x128xf32> to vector<8xf32>
    %141 = vector.shape_cast %140 : vector<8xf32> to vector<8x1xf32>
    %cst_49 = arith.constant 1.280000e+02 : f32
    %142 = vector.broadcast %cst_49 : f32 to vector<8x1xf32>
    %143 = arith.divf %141, %142 : vector<8x1xf32>
    %cst_50 = arith.constant 9.99999996E-13 : f32
    %144 = vector.broadcast %cst_50 : f32 to vector<8x1xf32>
    %145 = arith.addf %143, %144 : vector<8x1xf32>
    %146 = math.rsqrt %145 : vector<8x1xf32>
    %147 = vector.broadcast %146 : vector<8x1xf32> to vector<8x128xf32>
    %148 = arith.mulf %138, %147 : vector<8x128xf32>
    %149 = vector.broadcast %131 : vector<1x128xf32> to vector<8x128xf32>
    %150 = arith.mulf %148, %149 : vector<8x128xf32>
    %151 = vector.broadcast %132 : vector<1x128xf32> to vector<8x128xf32>
    %152 = arith.addf %150, %151 : vector<8x128xf32>
    %c0_51 = arith.constant 0 : index
    %c0_52 = arith.constant 0 : index
    %153 = vector.load %arg10[%c0_51, %c0_52] : memref<128x128xbf16, #tpu.memory_space<vmem>>, vector<128x128xbf16>
    %c0_53 = arith.constant 0 : index
    %c0_54 = arith.constant 0 : index
    %154 = vector.load %arg11[%c0_53, %c0_54] : memref<1x128xf32, #tpu.memory_space<vmem>>, vector<1x128xf32>
    %155 = arith.truncf %152 : vector<8x128xf32> to vector<8x128xbf16>
    %cst_55 = arith.constant dense<0.000000e+00> : vector<8x128xf32>
    %156 = tpu.matmul %155, %153, %cst_55 {dimension_numbers = #tpu.dot_dimension_numbers<[1], [0], [0], [1], [0, 0, 1, 1], [], []>} : vector<8x128xbf16>, vector<128x128xbf16>, vector<8x128xf32> -> vector<8x128xf32>
    %157 = vector.broadcast %154 : vector<1x128xf32> to vector<8x128xf32>
    %158 = arith.addf %156, %157 : vector<8x128xf32>
    %c0_56 = arith.constant 0 : index
    %c0_57 = arith.constant 0 : index
    %159 = vector.load %arg12[%c0_56, %c0_57] : memref<128x256xbf16, #tpu.memory_space<vmem>>, vector<128x256xbf16>
    %c0_58 = arith.constant 0 : index
    %c0_59 = arith.constant 0 : index
    %160 = vector.load %arg13[%c0_58, %c0_59] : memref<1x256xf32, #tpu.memory_space<vmem>>, vector<1x256xf32>
    %161 = arith.truncf %3 : vector<5x128xf32> to vector<5x128xbf16>
    %cst_60 = arith.constant dense<0.000000e+00> : vector<5x256xf32>
    %162 = tpu.matmul %161, %159, %cst_60 {dimension_numbers = #tpu.dot_dimension_numbers<[1], [0], [0], [1], [0, 0, 1, 1], [], []>} : vector<5x128xbf16>, vector<128x256xbf16>, vector<5x256xf32> -> vector<5x256xf32>
    %163 = vector.broadcast %160 : vector<1x256xf32> to vector<5x256xf32>
    %164 = arith.addf %162, %163 : vector<5x256xf32>
    %165 = vector.extract_strided_slice %164 {offsets = [0, 0], sizes = [5, 128], strides = [1, 1]} : vector<5x256xf32> to vector<5x128xf32>
    %166 = vector.extract_strided_slice %164 {offsets = [0, 128], sizes = [5, 128], strides = [1, 1]} : vector<5x256xf32> to vector<5x128xf32>
    %c0_61 = arith.constant 0 : index
    %c0_62 = arith.constant 0 : index
    %167 = vector.load %arg14[%c0_61, %c0_62] : memref<128x128xbf16, #tpu.memory_space<vmem>>, vector<128x128xbf16>
    %168 = vector.extract_strided_slice %158 {offsets = [0, 0], sizes = [8, 32], strides = [1, 1]} : vector<8x128xf32> to vector<8x32xf32>
    %169 = arith.truncf %168 : vector<8x32xf32> to vector<8x32xbf16>
    %170 = vector.extract_strided_slice %165 {offsets = [0, 0], sizes = [5, 32], strides = [1, 1]} : vector<5x128xf32> to vector<5x32xf32>
    %171 = arith.truncf %170 : vector<5x32xf32> to vector<5x32xbf16>
    %172 = vector.extract_strided_slice %166 {offsets = [0, 0], sizes = [5, 32], strides = [1, 1]} : vector<5x128xf32> to vector<5x32xf32>
    %173 = arith.truncf %172 : vector<5x32xf32> to vector<5x32xbf16>
    %cst_63 = arith.constant dense<0.000000e+00> : vector<8x5xf32>
    %174 = tpu.matmul %169, %171, %cst_63 {dimension_numbers = #tpu.dot_dimension_numbers<[1], [1], [0], [0], [0, 0, 1, 0], [], []>} : vector<8x32xbf16>, vector<5x32xbf16>, vector<8x5xf32> -> vector<8x5xf32>
    %cst_64 = arith.constant 0.176776692 : f32
    %175 = vector.broadcast %cst_64 : f32 to vector<8x5xf32>
    %176 = arith.mulf %174, %175 : vector<8x5xf32>
    %cst_65 = arith.constant dense<0xFF800000> : vector<8xf32>
    %177 = vector.multi_reduction <maximumf>, %176, %cst_65 [1] : vector<8x5xf32> to vector<8xf32>
    %178 = vector.shape_cast %177 : vector<8xf32> to vector<8x1xf32>
    %179 = vector.broadcast %178 : vector<8x1xf32> to vector<8x5xf32>
    %180 = arith.subf %176, %179 : vector<8x5xf32>
    %181 = math.exp %180 : vector<8x5xf32>
    %cst_66 = arith.constant dense<0.000000e+00> : vector<8xf32>
    %182 = vector.multi_reduction <add>, %181, %cst_66 [1] : vector<8x5xf32> to vector<8xf32>
    %183 = vector.shape_cast %182 : vector<8xf32> to vector<8x1xf32>
    %184 = tpu.reciprocal %183 {approx = true} : vector<8x1xf32> -> vector<8x1xf32>
    %185 = arith.truncf %181 : vector<8x5xf32> to vector<8x5xbf16>
    %cst_67 = arith.constant dense<0.000000e+00> : vector<8x32xf32>
    %186 = tpu.matmul %185, %173, %cst_67 {dimension_numbers = #tpu.dot_dimension_numbers<[1], [0], [0], [1], [0, 0, 1, 1], [], []>} : vector<8x5xbf16>, vector<5x32xbf16>, vector<8x32xf32> -> vector<8x32xf32>
    %187 = vector.broadcast %184 : vector<8x1xf32> to vector<8x32xf32>
    %188 = arith.mulf %186, %187 : vector<8x32xf32>
    %189 = arith.truncf %188 : vector<8x32xf32> to vector<8x32xbf16>
    %190 = vector.extract_strided_slice %167 {offsets = [0, 0], sizes = [32, 128], strides = [1, 1]} : vector<128x128xbf16> to vector<32x128xbf16>
    %cst_68 = arith.constant dense<0.000000e+00> : vector<8x128xf32>
    %191 = tpu.matmul %189, %190, %cst_68 {dimension_numbers = #tpu.dot_dimension_numbers<[1], [0], [0], [1], [0, 0, 1, 1], [], []>} : vector<8x32xbf16>, vector<32x128xbf16>, vector<8x128xf32> -> vector<8x128xf32>
    %192 = vector.extract_strided_slice %158 {offsets = [0, 32], sizes = [8, 32], strides = [1, 1]} : vector<8x128xf32> to vector<8x32xf32>
    %193 = arith.truncf %192 : vector<8x32xf32> to vector<8x32xbf16>
    %194 = vector.extract_strided_slice %165 {offsets = [0, 32], sizes = [5, 32], strides = [1, 1]} : vector<5x128xf32> to vector<5x32xf32>
    %195 = arith.truncf %194 : vector<5x32xf32> to vector<5x32xbf16>
    %196 = vector.extract_strided_slice %166 {offsets = [0, 32], sizes = [5, 32], strides = [1, 1]} : vector<5x128xf32> to vector<5x32xf32>
    %197 = arith.truncf %196 : vector<5x32xf32> to vector<5x32xbf16>
    %cst_69 = arith.constant dense<0.000000e+00> : vector<8x5xf32>
    %198 = tpu.matmul %193, %195, %cst_69 {dimension_numbers = #tpu.dot_dimension_numbers<[1], [1], [0], [0], [0, 0, 1, 0], [], []>} : vector<8x32xbf16>, vector<5x32xbf16>, vector<8x5xf32> -> vector<8x5xf32>
    %cst_70 = arith.constant 0.176776692 : f32
    %199 = vector.broadcast %cst_70 : f32 to vector<8x5xf32>
    %200 = arith.mulf %198, %199 : vector<8x5xf32>
    %cst_71 = arith.constant dense<0xFF800000> : vector<8xf32>
    %201 = vector.multi_reduction <maximumf>, %200, %cst_71 [1] : vector<8x5xf32> to vector<8xf32>
    %202 = vector.shape_cast %201 : vector<8xf32> to vector<8x1xf32>
    %203 = vector.broadcast %202 : vector<8x1xf32> to vector<8x5xf32>
    %204 = arith.subf %200, %203 : vector<8x5xf32>
    %205 = math.exp %204 : vector<8x5xf32>
    %cst_72 = arith.constant dense<0.000000e+00> : vector<8xf32>
    %206 = vector.multi_reduction <add>, %205, %cst_72 [1] : vector<8x5xf32> to vector<8xf32>
    %207 = vector.shape_cast %206 : vector<8xf32> to vector<8x1xf32>
    %208 = tpu.reciprocal %207 {approx = true} : vector<8x1xf32> -> vector<8x1xf32>
    %209 = arith.truncf %205 : vector<8x5xf32> to vector<8x5xbf16>
    %cst_73 = arith.constant dense<0.000000e+00> : vector<8x32xf32>
    %210 = tpu.matmul %209, %197, %cst_73 {dimension_numbers = #tpu.dot_dimension_numbers<[1], [0], [0], [1], [0, 0, 1, 1], [], []>} : vector<8x5xbf16>, vector<5x32xbf16>, vector<8x32xf32> -> vector<8x32xf32>
    %211 = vector.broadcast %208 : vector<8x1xf32> to vector<8x32xf32>
    %212 = arith.mulf %210, %211 : vector<8x32xf32>
    %213 = arith.truncf %212 : vector<8x32xf32> to vector<8x32xbf16>
    %214 = vector.extract_strided_slice %167 {offsets = [32, 0], sizes = [32, 128], strides = [1, 1]} : vector<128x128xbf16> to vector<32x128xbf16>
    %cst_74 = arith.constant dense<0.000000e+00> : vector<8x128xf32>
    %215 = tpu.matmul %213, %214, %cst_74 {dimension_numbers = #tpu.dot_dimension_numbers<[1], [0], [0], [1], [0, 0, 1, 1], [], []>} : vector<8x32xbf16>, vector<32x128xbf16>, vector<8x128xf32> -> vector<8x128xf32>
    %216 = arith.addf %191, %215 : vector<8x128xf32>
    %217 = vector.extract_strided_slice %158 {offsets = [0, 64], sizes = [8, 32], strides = [1, 1]} : vector<8x128xf32> to vector<8x32xf32>
    %218 = arith.truncf %217 : vector<8x32xf32> to vector<8x32xbf16>
    %219 = vector.extract_strided_slice %165 {offsets = [0, 64], sizes = [5, 32], strides = [1, 1]} : vector<5x128xf32> to vector<5x32xf32>
    %220 = arith.truncf %219 : vector<5x32xf32> to vector<5x32xbf16>
    %221 = vector.extract_strided_slice %166 {offsets = [0, 64], sizes = [5, 32], strides = [1, 1]} : vector<5x128xf32> to vector<5x32xf32>
    %222 = arith.truncf %221 : vector<5x32xf32> to vector<5x32xbf16>
    %cst_75 = arith.constant dense<0.000000e+00> : vector<8x5xf32>
    %223 = tpu.matmul %218, %220, %cst_75 {dimension_numbers = #tpu.dot_dimension_numbers<[1], [1], [0], [0], [0, 0, 1, 0], [], []>} : vector<8x32xbf16>, vector<5x32xbf16>, vector<8x5xf32> -> vector<8x5xf32>
    %cst_76 = arith.constant 0.176776692 : f32
    %224 = vector.broadcast %cst_76 : f32 to vector<8x5xf32>
    %225 = arith.mulf %223, %224 : vector<8x5xf32>
    %cst_77 = arith.constant dense<0xFF800000> : vector<8xf32>
    %226 = vector.multi_reduction <maximumf>, %225, %cst_77 [1] : vector<8x5xf32> to vector<8xf32>
    %227 = vector.shape_cast %226 : vector<8xf32> to vector<8x1xf32>
    %228 = vector.broadcast %227 : vector<8x1xf32> to vector<8x5xf32>
    %229 = arith.subf %225, %228 : vector<8x5xf32>
    %230 = math.exp %229 : vector<8x5xf32>
    %cst_78 = arith.constant dense<0.000000e+00> : vector<8xf32>
    %231 = vector.multi_reduction <add>, %230, %cst_78 [1] : vector<8x5xf32> to vector<8xf32>
    %232 = vector.shape_cast %231 : vector<8xf32> to vector<8x1xf32>
    %233 = tpu.reciprocal %232 {approx = true} : vector<8x1xf32> -> vector<8x1xf32>
    %234 = arith.truncf %230 : vector<8x5xf32> to vector<8x5xbf16>
    %cst_79 = arith.constant dense<0.000000e+00> : vector<8x32xf32>
    %235 = tpu.matmul %234, %222, %cst_79 {dimension_numbers = #tpu.dot_dimension_numbers<[1], [0], [0], [1], [0, 0, 1, 1], [], []>} : vector<8x5xbf16>, vector<5x32xbf16>, vector<8x32xf32> -> vector<8x32xf32>
    %236 = vector.broadcast %233 : vector<8x1xf32> to vector<8x32xf32>
    %237 = arith.mulf %235, %236 : vector<8x32xf32>
    %238 = arith.truncf %237 : vector<8x32xf32> to vector<8x32xbf16>
    %239 = vector.extract_strided_slice %167 {offsets = [64, 0], sizes = [32, 128], strides = [1, 1]} : vector<128x128xbf16> to vector<32x128xbf16>
    %cst_80 = arith.constant dense<0.000000e+00> : vector<8x128xf32>
    %240 = tpu.matmul %238, %239, %cst_80 {dimension_numbers = #tpu.dot_dimension_numbers<[1], [0], [0], [1], [0, 0, 1, 1], [], []>} : vector<8x32xbf16>, vector<32x128xbf16>, vector<8x128xf32> -> vector<8x128xf32>
    %241 = arith.addf %216, %240 : vector<8x128xf32>
    %242 = vector.extract_strided_slice %158 {offsets = [0, 96], sizes = [8, 32], strides = [1, 1]} : vector<8x128xf32> to vector<8x32xf32>
    %243 = arith.truncf %242 : vector<8x32xf32> to vector<8x32xbf16>
    %244 = vector.extract_strided_slice %165 {offsets = [0, 96], sizes = [5, 32], strides = [1, 1]} : vector<5x128xf32> to vector<5x32xf32>
    %245 = arith.truncf %244 : vector<5x32xf32> to vector<5x32xbf16>
    %246 = vector.extract_strided_slice %166 {offsets = [0, 96], sizes = [5, 32], strides = [1, 1]} : vector<5x128xf32> to vector<5x32xf32>
    %247 = arith.truncf %246 : vector<5x32xf32> to vector<5x32xbf16>
    %cst_81 = arith.constant dense<0.000000e+00> : vector<8x5xf32>
    %248 = tpu.matmul %243, %245, %cst_81 {dimension_numbers = #tpu.dot_dimension_numbers<[1], [1], [0], [0], [0, 0, 1, 0], [], []>} : vector<8x32xbf16>, vector<5x32xbf16>, vector<8x5xf32> -> vector<8x5xf32>
    %cst_82 = arith.constant 0.176776692 : f32
    %249 = vector.broadcast %cst_82 : f32 to vector<8x5xf32>
    %250 = arith.mulf %248, %249 : vector<8x5xf32>
    %cst_83 = arith.constant dense<0xFF800000> : vector<8xf32>
    %251 = vector.multi_reduction <maximumf>, %250, %cst_83 [1] : vector<8x5xf32> to vector<8xf32>
    %252 = vector.shape_cast %251 : vector<8xf32> to vector<8x1xf32>
    %253 = vector.broadcast %252 : vector<8x1xf32> to vector<8x5xf32>
    %254 = arith.subf %250, %253 : vector<8x5xf32>
    %255 = math.exp %254 : vector<8x5xf32>
    %cst_84 = arith.constant dense<0.000000e+00> : vector<8xf32>
    %256 = vector.multi_reduction <add>, %255, %cst_84 [1] : vector<8x5xf32> to vector<8xf32>
    %257 = vector.shape_cast %256 : vector<8xf32> to vector<8x1xf32>
    %258 = tpu.reciprocal %257 {approx = true} : vector<8x1xf32> -> vector<8x1xf32>
    %259 = arith.truncf %255 : vector<8x5xf32> to vector<8x5xbf16>
    %cst_85 = arith.constant dense<0.000000e+00> : vector<8x32xf32>
    %260 = tpu.matmul %259, %247, %cst_85 {dimension_numbers = #tpu.dot_dimension_numbers<[1], [0], [0], [1], [0, 0, 1, 1], [], []>} : vector<8x5xbf16>, vector<5x32xbf16>, vector<8x32xf32> -> vector<8x32xf32>
    %261 = vector.broadcast %258 : vector<8x1xf32> to vector<8x32xf32>
    %262 = arith.mulf %260, %261 : vector<8x32xf32>
    %263 = arith.truncf %262 : vector<8x32xf32> to vector<8x32xbf16>
    %264 = vector.extract_strided_slice %167 {offsets = [96, 0], sizes = [32, 128], strides = [1, 1]} : vector<128x128xbf16> to vector<32x128xbf16>
    %cst_86 = arith.constant dense<0.000000e+00> : vector<8x128xf32>
    %265 = tpu.matmul %263, %264, %cst_86 {dimension_numbers = #tpu.dot_dimension_numbers<[1], [0], [0], [1], [0, 0, 1, 1], [], []>} : vector<8x32xbf16>, vector<32x128xbf16>, vector<8x128xf32> -> vector<8x128xf32>
    %266 = arith.addf %241, %265 : vector<8x128xf32>
    %c0_87 = arith.constant 0 : index
    %c0_88 = arith.constant 0 : index
    %267 = vector.load %arg15[%c0_87, %c0_88] : memref<1x128xf32, #tpu.memory_space<vmem>>, vector<1x128xf32>
    %268 = vector.broadcast %267 : vector<1x128xf32> to vector<8x128xf32>
    %269 = arith.addf %266, %268 : vector<8x128xf32>
    %270 = arith.addf %269, %152 : vector<8x128xf32>
    %c0_89 = arith.constant 0 : index
    %c0_90 = arith.constant 0 : index
    %271 = vector.load %arg16[%c0_89, %c0_90] : memref<1x128xf32, #tpu.memory_space<vmem>>, vector<1x128xf32>
    %c0_91 = arith.constant 0 : index
    %c0_92 = arith.constant 0 : index
    %272 = vector.load %arg17[%c0_91, %c0_92] : memref<1x128xf32, #tpu.memory_space<vmem>>, vector<1x128xf32>
    %cst_93 = arith.constant dense<0.000000e+00> : vector<8xf32>
    %273 = vector.multi_reduction <add>, %270, %cst_93 [1] : vector<8x128xf32> to vector<8xf32>
    %274 = vector.shape_cast %273 : vector<8xf32> to vector<8x1xf32>
    %cst_94 = arith.constant 1.280000e+02 : f32
    %275 = vector.broadcast %cst_94 : f32 to vector<8x1xf32>
    %276 = arith.divf %274, %275 : vector<8x1xf32>
    %277 = vector.broadcast %276 : vector<8x1xf32> to vector<8x128xf32>
    %278 = arith.subf %270, %277 : vector<8x128xf32>
    %279 = arith.mulf %278, %278 : vector<8x128xf32>
    %cst_95 = arith.constant dense<0.000000e+00> : vector<8xf32>
    %280 = vector.multi_reduction <add>, %279, %cst_95 [1] : vector<8x128xf32> to vector<8xf32>
    %281 = vector.shape_cast %280 : vector<8xf32> to vector<8x1xf32>
    %cst_96 = arith.constant 1.280000e+02 : f32
    %282 = vector.broadcast %cst_96 : f32 to vector<8x1xf32>
    %283 = arith.divf %281, %282 : vector<8x1xf32>
    %cst_97 = arith.constant 9.99999996E-13 : f32
    %284 = vector.broadcast %cst_97 : f32 to vector<8x1xf32>
    %285 = arith.addf %283, %284 : vector<8x1xf32>
    %286 = math.rsqrt %285 : vector<8x1xf32>
    %287 = vector.broadcast %286 : vector<8x1xf32> to vector<8x128xf32>
    %288 = arith.mulf %278, %287 : vector<8x128xf32>
    %289 = vector.broadcast %271 : vector<1x128xf32> to vector<8x128xf32>
    %290 = arith.mulf %288, %289 : vector<8x128xf32>
    %291 = vector.broadcast %272 : vector<1x128xf32> to vector<8x128xf32>
    %292 = arith.addf %290, %291 : vector<8x128xf32>
    %c0_98 = arith.constant 0 : index
    %c0_99 = arith.constant 0 : index
    %293 = vector.load %arg18[%c0_98, %c0_99] : memref<128x512xbf16, #tpu.memory_space<vmem>>, vector<128x512xbf16>
    %c0_100 = arith.constant 0 : index
    %c0_101 = arith.constant 0 : index
    %294 = vector.load %arg19[%c0_100, %c0_101] : memref<1x512xf32, #tpu.memory_space<vmem>>, vector<1x512xf32>
    %295 = arith.truncf %292 : vector<8x128xf32> to vector<8x128xbf16>
    %cst_102 = arith.constant dense<0.000000e+00> : vector<8x512xf32>
    %296 = tpu.matmul %295, %293, %cst_102 {dimension_numbers = #tpu.dot_dimension_numbers<[1], [0], [0], [1], [0, 0, 1, 1], [], []>} : vector<8x128xbf16>, vector<128x512xbf16>, vector<8x512xf32> -> vector<8x512xf32>
    %297 = vector.broadcast %294 : vector<1x512xf32> to vector<8x512xf32>
    %298 = arith.addf %296, %297 : vector<8x512xf32>
    %cst_103 = arith.constant 5.000000e-01 : f32
    %299 = vector.broadcast %cst_103 : f32 to vector<8x512xf32>
    %300 = arith.mulf %299, %298 : vector<8x512xf32>
    %cst_104 = arith.constant 4.471500e-02 : f32
    %301 = vector.broadcast %cst_104 : f32 to vector<8x512xf32>
    %302 = arith.mulf %301, %298 : vector<8x512xf32>
    %303 = arith.mulf %302, %298 : vector<8x512xf32>
    %304 = arith.mulf %303, %298 : vector<8x512xf32>
    %305 = arith.addf %298, %304 : vector<8x512xf32>
    %cst_105 = arith.constant 0.797884583 : f32
    %306 = vector.broadcast %cst_105 : f32 to vector<8x512xf32>
    %307 = arith.mulf %306, %305 : vector<8x512xf32>
    %308 = math.tanh %307 : vector<8x512xf32>
    %cst_106 = arith.constant 1.000000e+00 : f32
    %309 = vector.broadcast %cst_106 : f32 to vector<8x512xf32>
    %310 = arith.addf %309, %308 : vector<8x512xf32>
    %311 = arith.mulf %300, %310 : vector<8x512xf32>
    %c0_107 = arith.constant 0 : index
    %c0_108 = arith.constant 0 : index
    %312 = vector.load %arg20[%c0_107, %c0_108] : memref<512x128xbf16, #tpu.memory_space<vmem>>, vector<512x128xbf16>
    %c0_109 = arith.constant 0 : index
    %c0_110 = arith.constant 0 : index
    %313 = vector.load %arg21[%c0_109, %c0_110] : memref<1x128xf32, #tpu.memory_space<vmem>>, vector<1x128xf32>
    %314 = arith.truncf %311 : vector<8x512xf32> to vector<8x512xbf16>
    %cst_111 = arith.constant dense<0.000000e+00> : vector<8x128xf32>
    %315 = tpu.matmul %314, %312, %cst_111 {dimension_numbers = #tpu.dot_dimension_numbers<[1], [0], [0], [1], [0, 0, 1, 1], [], []>} : vector<8x512xbf16>, vector<512x128xbf16>, vector<8x128xf32> -> vector<8x128xf32>
    %316 = vector.broadcast %313 : vector<1x128xf32> to vector<8x128xf32>
    %317 = arith.addf %315, %316 : vector<8x128xf32>
    %318 = arith.addf %317, %292 : vector<8x128xf32>
    %c0_112 = arith.constant 0 : index
    %c0_113 = arith.constant 0 : index
    %319 = vector.load %arg22[%c0_112, %c0_113] : memref<1x128xf32, #tpu.memory_space<vmem>>, vector<1x128xf32>
    %c0_114 = arith.constant 0 : index
    %c0_115 = arith.constant 0 : index
    %320 = vector.load %arg23[%c0_114, %c0_115] : memref<1x128xf32, #tpu.memory_space<vmem>>, vector<1x128xf32>
    %cst_116 = arith.constant dense<0.000000e+00> : vector<8xf32>
    %321 = vector.multi_reduction <add>, %318, %cst_116 [1] : vector<8x128xf32> to vector<8xf32>
    %322 = vector.shape_cast %321 : vector<8xf32> to vector<8x1xf32>
    %cst_117 = arith.constant 1.280000e+02 : f32
    %323 = vector.broadcast %cst_117 : f32 to vector<8x1xf32>
    %324 = arith.divf %322, %323 : vector<8x1xf32>
    %325 = vector.broadcast %324 : vector<8x1xf32> to vector<8x128xf32>
    %326 = arith.subf %318, %325 : vector<8x128xf32>
    %327 = arith.mulf %326, %326 : vector<8x128xf32>
    %cst_118 = arith.constant dense<0.000000e+00> : vector<8xf32>
    %328 = vector.multi_reduction <add>, %327, %cst_118 [1] : vector<8x128xf32> to vector<8xf32>
    %329 = vector.shape_cast %328 : vector<8xf32> to vector<8x1xf32>
    %cst_119 = arith.constant 1.280000e+02 : f32
    %330 = vector.broadcast %cst_119 : f32 to vector<8x1xf32>
    %331 = arith.divf %329, %330 : vector<8x1xf32>
    %cst_120 = arith.constant 9.99999996E-13 : f32
    %332 = vector.broadcast %cst_120 : f32 to vector<8x1xf32>
    %333 = arith.addf %331, %332 : vector<8x1xf32>
    %334 = math.rsqrt %333 : vector<8x1xf32>
    %335 = vector.broadcast %334 : vector<8x1xf32> to vector<8x128xf32>
    %336 = arith.mulf %326, %335 : vector<8x128xf32>
    %337 = vector.broadcast %319 : vector<1x128xf32> to vector<8x128xf32>
    %338 = arith.mulf %336, %337 : vector<8x128xf32>
    %339 = vector.broadcast %320 : vector<1x128xf32> to vector<8x128xf32>
    %340 = arith.addf %338, %339 : vector<8x128xf32>
    %c0_121 = arith.constant 0 : index
    %c0_122 = arith.constant 0 : index
    %c0_123 = arith.constant 0 : index
    %341 = vector.load %arg24[%c0_121, %c0_122, %c0_123] : memref<1x8x128xf32, #tpu.memory_space<vmem>>, vector<1x8x128xf32>
    %342 = vector.shape_cast %341 : vector<1x8x128xf32> to vector<8x128xf32>
    %343 = vector.shape_cast %340 : vector<8x128xf32> to vector<1x8x128xf32>
    tpu.vector_store %arg24[%c0_121, %c0_122, %c0_123], %343 {strides = array<i32>} : memref<1x8x128xf32, #tpu.memory_space<vmem>>, vector<1x8x128xf32>,
    return
  }
  func.func @transform_0(%arg0: i32) -> (i32, i32, i32) {
    %c0_i32 = arith.constant 0 : i32
    %c0_i32_0 = arith.constant 0 : i32
    %c0_i32_1 = arith.constant 0 : i32
    return %arg0, %c0_i32, %c0_i32_0 : i32, i32, i32
  }
  func.func @transform_1(%arg0: i32) -> (i32, i32, i32) {
    %c0_i32 = arith.constant 0 : i32
    %c0_i32_0 = arith.constant 0 : i32
    %c0_i32_1 = arith.constant 0 : i32
    return %arg0, %c0_i32, %c0_i32_0 : i32, i32, i32
  }
  func.func @transform_2(%arg0: i32) -> (i32, i32, i32) {
    %c0_i32 = arith.constant 0 : i32
    %c0_i32_0 = arith.constant 0 : i32
    %c0_i32_1 = arith.constant 0 : i32
    return %arg0, %c0_i32, %c0_i32_0 : i32, i32, i32
  }
  func.func @transform_3(%arg0: i32) -> (i32, i32) {
    %c0_i32 = arith.constant 0 : i32
    %c0_i32_0 = arith.constant 0 : i32
    %c0_i32_1 = arith.constant 0 : i32
    return %c0_i32, %c0_i32_0 : i32, i32
  }
  func.func @transform_4(%arg0: i32) -> (i32, i32) {
    %c0_i32 = arith.constant 0 : i32
    %c0_i32_0 = arith.constant 0 : i32
    %c0_i32_1 = arith.constant 0 : i32
    return %c0_i32, %c0_i32_0 : i32, i32
  }
  func.func @transform_5(%arg0: i32) -> (i32, i32) {
    %c0_i32 = arith.constant 0 : i32
    %c0_i32_0 = arith.constant 0 : i32
    %c0_i32_1 = arith.constant 0 : i32
    return %c0_i32, %c0_i32_0 : i32, i32
  }
  func.func @transform_6(%arg0: i32) -> (i32, i32) {
    %c0_i32 = arith.constant 0 : i32
    %c0_i32_0 = arith.constant 0 : i32
    %c0_i32_1 = arith.constant 0 : i32
    return %c0_i32, %c0_i32_0 : i32, i32
  }
  func.func @transform_7(%arg0: i32) -> (i32, i32) {
    %c0_i32 = arith.constant 0 : i32
    %c0_i32_0 = arith.constant 0 : i32
    %c0_i32_1 = arith.constant 0 : i32
    return %c0_i32, %c0_i32_0 : i32, i32
  }
  func.func @transform_8(%arg0: i32) -> (i32, i32) {
    %c0_i32 = arith.constant 0 : i32
    %c0_i32_0 = arith.constant 0 : i32
    %c0_i32_1 = arith.constant 0 : i32
    return %c0_i32, %c0_i32_0 : i32, i32
  }
  func.func @transform_9(%arg0: i32) -> (i32, i32) {
    %c0_i32 = arith.constant 0 : i32
    %c0_i32_0 = arith.constant 0 : i32
    %c0_i32_1 = arith.constant 0 : i32
    return %c0_i32, %c0_i32_0 : i32, i32
  }
  func.func @transform_10(%arg0: i32) -> (i32, i32) {
    %c0_i32 = arith.constant 0 : i32
    %c0_i32_0 = arith.constant 0 : i32
    %c0_i32_1 = arith.constant 0 : i32
    return %c0_i32, %c0_i32_0 : i32, i32
  }
  func.func @transform_11(%arg0: i32) -> (i32, i32) {
    %c0_i32 = arith.constant 0 : i32
    %c0_i32_0 = arith.constant 0 : i32
    %c0_i32_1 = arith.constant 0 : i32
    return %c0_i32, %c0_i32_0 : i32, i32
  }
  func.func @transform_12(%arg0: i32) -> (i32, i32) {
    %c0_i32 = arith.constant 0 : i32
    %c0_i32_0 = arith.constant 0 : i32
    %c0_i32_1 = arith.constant 0 : i32
    return %c0_i32, %c0_i32_0 : i32, i32
  }
  func.func @transform_13(%arg0: i32) -> (i32, i32) {
    %c0_i32 = arith.constant 0 : i32
    %c0_i32_0 = arith.constant 0 : i32
    %c0_i32_1 = arith.constant 0 : i32
    return %c0_i32, %c0_i32_0 : i32, i32
  }
  func.func @transform_14(%arg0: i32) -> (i32, i32) {
    %c0_i32 = arith.constant 0 : i32
    %c0_i32_0 = arith.constant 0 : i32
    %c0_i32_1 = arith.constant 0 : i32
    return %c0_i32, %c0_i32_0 : i32, i32
  }
  func.func @transform_15(%arg0: i32) -> (i32, i32) {
    %c0_i32 = arith.constant 0 : i32
    %c0_i32_0 = arith.constant 0 : i32
    %c0_i32_1 = arith.constant 0 : i32
    return %c0_i32, %c0_i32_0 : i32, i32
  }
  func.func @transform_16(%arg0: i32) -> (i32, i32) {
    %c0_i32 = arith.constant 0 : i32
    %c0_i32_0 = arith.constant 0 : i32
    %c0_i32_1 = arith.constant 0 : i32
    return %c0_i32, %c0_i32_0 : i32, i32
  }
  func.func @transform_17(%arg0: i32) -> (i32, i32) {
    %c0_i32 = arith.constant 0 : i32
    %c0_i32_0 = arith.constant 0 : i32
    %c0_i32_1 = arith.constant 0 : i32
    return %c0_i32, %c0_i32_0 : i32, i32
  }
  func.func @transform_18(%arg0: i32) -> (i32, i32) {
    %c0_i32 = arith.constant 0 : i32
    %c0_i32_0 = arith.constant 0 : i32
    %c0_i32_1 = arith.constant 0 : i32
    return %c0_i32, %c0_i32_0 : i32, i32
  }
  func.func @transform_19(%arg0: i32) -> (i32, i32) {
    %c0_i32 = arith.constant 0 : i32
    %c0_i32_0 = arith.constant 0 : i32
    %c0_i32_1 = arith.constant 0 : i32
    return %c0_i32, %c0_i32_0 : i32, i32
  }
  func.func @transform_20(%arg0: i32) -> (i32, i32) {
    %c0_i32 = arith.constant 0 : i32
    %c0_i32_0 = arith.constant 0 : i32
    %c0_i32_1 = arith.constant 0 : i32
    return %c0_i32, %c0_i32_0 : i32, i32
  }
  func.func @transform_21(%arg0: i32) -> (i32, i32) {
    %c0_i32 = arith.constant 0 : i32
    %c0_i32_0 = arith.constant 0 : i32
    %c0_i32_1 = arith.constant 0 : i32
    return %c0_i32, %c0_i32_0 : i32, i32
  }
  func.func @transform_22(%arg0: i32) -> (i32, i32) {
    %c0_i32 = arith.constant 0 : i32
    %c0_i32_0 = arith.constant 0 : i32
    %c0_i32_1 = arith.constant 0 : i32
    return %c0_i32, %c0_i32_0 : i32, i32
  }
  func.func @transform_23(%arg0: i32) -> (i32, i32, i32) {
    %c0_i32 = arith.constant 0 : i32
    %c0_i32_0 = arith.constant 0 : i32
    %c0_i32_1 = arith.constant 0 : i32
    return %arg0, %c0_i32, %c0_i32_0 : i32, i32, i32
  }
}

</mosaic_0001>

<llo_original>
// kernel: vl_transformer_itm_forward.10
$region0: #{vl_transformer_itm_forward.10}
  #allocation0 [shape = 'u32[]', space=smem, size = 0x4, offset = 0x4, fixed_abs, tag = 'smem constant byte address 0x4 - core index']
  #allocation1 [shape = 'u32[144,128]{1,0:T(1,128)}', space=vmem, size = 0x12000, scoped, tag = 'internal scratch']
  %s0 = inlined_call_operand.vmem [shape: f32[10,128], index: 0, kind: input, shape index: {}]
  %s1 = inlined_call_operand.vmem [shape: f32[1,128], index: 1, kind: input, shape index: {}]
  %s2 = inlined_call_operand.vmem [shape: f32[1,128], index: 2, kind: input, shape index: {}]
  %s3 = inlined_call_operand.vmem [shape: f32[10,128], index: 3, kind: output, shape index: {}]
  %s4 = sld [smem:[#allocation0]]
  $region22: #{vl_transformer_itm_forward.10} parent=0
    _
  %s6 = ssub.s32 1, %s4
  %s7 = scalar_select 0, %s6, %s4
  // Predicated region
  $region2: #{vl_transformer_itm_forward.10} parent=0 // pred_check
    _
  $region3: #{vl_transformer_itm_forward.10} parent=0 // pred_check_branch
    %9 = sbr.rel (0) target = $region5
  $region4: #{vl_transformer_itm_forward.10} parent=0 // pred_region
    _
  $region5: #{vl_transformer_itm_forward.10} parent=0 // pred_fallthru
    _
  // Predicated region
  $region6: #{vl_transformer_itm_forward.10} parent=0 // pred_check
    _
  $region7: #{vl_transformer_itm_forward.10} parent=0 // pred_check_branch
    %11 = sbr.rel (0) target = $region9
  $region8: #{vl_transformer_itm_forward.10} parent=0 // pred_region
    _
  $region9: #{vl_transformer_itm_forward.10} parent=0 // pred_fallthru
    _
  // Predicated region
  $region10: #{vl_transformer_itm_forward.10} parent=0 // pred_check
    _
  $region11: #{vl_transformer_itm_forward.10} parent=0 // pred_check_branch
    %13 = sbr.rel (0) target = $region13
  $region12: #{vl_transformer_itm_forward.10} parent=0 // pred_region
    _
  $region13: #{vl_transformer_itm_forward.10} parent=0 // pred_fallthru
    _
  %v14 = vld [vmem:[%s0] sm:$0xff]
  %v15 = vld [vmem:[%s0 + $0x8] sm:$0x3]
  %v16 = vld [vmem:[%s1] sm:$0x1]
  %v17 = vld [vmem:[%s2] sm:$0x1]
  %18 = vadd.xlane.f32.xlu0 %v14
  %v19 = vpop.xlane.xlu0 %18
  %vm20 = vcmask 1041408
  %v21 = vsel %vm20, %v15, 0.0
  %22 = vadd.xlane.f32.xlu0 %v21
  %v23 = vpop.xlane.xlu0 %22
  %v24 = vrcp.pop 128.0
  %v25 = vmul.f32 %v19, %v24
  %v26 = vmul.f32 %v23, %v24
  %v27 = vsub.f32 %v14, %v25
  %v28 = vsub.f32 %v15, %v26
  %v29 = vmul.f32 %v27, %v27
  %v30 = vmul.f32 %v28, %v28
  %31 = vadd.xlane.f32.xlu0 %v29
  %v32 = vpop.xlane.xlu0 %31
  %v33 = vsel %vm20, %v30, 0.0
  %34 = vadd.xlane.f32.xlu0 %v33
  %v35 = vpop.xlane.xlu0 %34
  %v36 = vmul.f32 %v32, %v24
  %v37 = vmul.f32 %v35, %v24
  %v38 = vadd.f32 %v36, 1e-06
  %v39 = vadd.f32 %v37, 1e-06
  %v40 = vrsqrt.pop %v38
  %v41 = vrsqrt.pop %v39
  %v42 = vmul.f32 %v27, %v40
  %v43 = vmul.f32 %v28, %v41
  %v45 = vlaneseq
  %v46 = vshrl.u32 %v45, 7
  %v47 = vsub.s32 0, %v46
  %v48 = vrot.slane %v16, %v47
  %v50 = vmul.f32 %v42, %v48
  %v51 = vmul.f32 %v43, %v48
  %v53 = vlaneseq
  %v54 = vshrl.u32 %v53, 7
  %v55 = vsub.s32 0, %v54
  %v56 = vrot.slane %v17, %v55
  %v58 = vadd.f32 %v50, %v56
  %v59 = vadd.f32 %v51, %v56
  %60 = vst [vmem:[%s3] sm:$0xff] %v58
  %61 = vst [vmem:[%s3 + $0x8] sm:$0x3] %v59
  // Predicated region
  $region14: #{vl_transformer_itm_forward.10} parent=0 // pred_check
    _
  $region15: #{vl_transformer_itm_forward.10} parent=0 // pred_check_branch
    %63 = sbr.rel (0) target = $region17
  $region16: #{vl_transformer_itm_forward.10} parent=0 // pred_region
    _
  $region17: #{vl_transformer_itm_forward.10} parent=0 // pred_fallthru
    _
  // Predicated region
  $region18: #{vl_transformer_itm_forward.10} parent=0 // pred_check
    _
  $region19: #{vl_transformer_itm_forward.10} parent=0 // pred_check_branch
    %65 = sbr.rel (0) target = $region21
  $region20: #{vl_transformer_itm_forward.10} parent=0 // pred_region
    _
  $region21: #{vl_transformer_itm_forward.10} parent=0 // pred_fallthru
    _

// kernel: vl_transformer_itm_forward.7
$region0: #{vl_transformer_itm_forward.7}
  #allocation0 [shape = 'u32[]', space=smem, size = 0x4, offset = 0x4, fixed_abs, tag = 'smem constant byte address 0x4 - core index']
  #allocation1 [shape = 'u32[144,128]{1,0:T(1,128)}', space=vmem, size = 0x12000, scoped, tag = 'internal scratch']
  %s0 = inlined_call_operand.vmem [shape: f32[8,768], index: 0, kind: input, shape index: {}]
  %s1 = inlined_call_operand.vmem [shape: bf16[768,128], index: 1, kind: input, shape index: {}]
  %s2 = inlined_call_operand.vmem [shape: f32[1,128], index: 2, kind: input, shape index: {}]
  %s3 = inlined_call_operand.vmem [shape: f32[8,128], index: 3, kind: output, shape index: {}]
  %s4 = sld [smem:[#allocation0]]
  $region22: #{vl_transformer_itm_forward.7} parent=0
    _
  %s6 = ssub.s32 1, %s4
  %s7 = scalar_select 0, %s6, %s4
  // Predicated region
  $region2: #{vl_transformer_itm_forward.7} parent=0 // pred_check
    _
  $region3: #{vl_transformer_itm_forward.7} parent=0 // pred_check_branch
    %9 = sbr.rel (0) target = $region5
  $region4: #{vl_transformer_itm_forward.7} parent=0 // pred_region
    _
  $region5: #{vl_transformer_itm_forward.7} parent=0 // pred_fallthru
    _
  // Predicated region
  $region6: #{vl_transformer_itm_forward.7} parent=0 // pred_check
    _
  $region7: #{vl_transformer_itm_forward.7} parent=0 // pred_check_branch
    %11 = sbr.rel (0) target = $region9
  $region8: #{vl_transformer_itm_forward.7} parent=0 // pred_region
    _
  $region9: #{vl_transformer_itm_forward.7} parent=0 // pred_fallthru
    _
  // Predicated region
  $region10: #{vl_transformer_itm_forward.7} parent=0 // pred_check
    _
  $region11: #{vl_transformer_itm_forward.7} parent=0 // pred_check_branch
    %13 = sbr.rel (0) target = $region13
  $region12: #{vl_transformer_itm_forward.7} parent=0 // pred_region
    _
  $region13: #{vl_transformer_itm_forward.7} parent=0 // pred_fallthru
    _
  %v15 = vld [vmem:[%s0] sm:$0xff]
  %v16 = vld [vmem:[%s0 + $0x8] sm:$0xff]
  %v17 = vld [vmem:[%s0 + $0x10] sm:$0xff]
  %v18 = vld [vmem:[%s0 + $0x18] sm:$0xff]
  %v19 = vld [vmem:[%s0 + $0x20] sm:$0xff]
  %v20 = vld [vmem:[%s0 + $0x28] sm:$0xff]
  %v21 = vld [vmem:[%s1] sm:$0xf]
  %v22 = vld [vmem:[%s1 + $0x4] sm:$0xf]
  %v23 = vld [vmem:[%s1 + $0x8] sm:$0xf]
  %v24 = vld [vmem:[%s1 + $0xc] sm:$0xf]
  %v25 = vld [vmem:[%s1 + $0x10] sm:$0xf]
  %v26 = vld [vmem:[%s1 + $0x14] sm:$0xf]
  %v27 = vld [vmem:[%s1 + $0x18] sm:$0xf]
  %v28 = vld [vmem:[%s1 + $0x1c] sm:$0xf]
  %v29 = vld [vmem:[%s1 + $0x20] sm:$0xf]
  %v30 = vld [vmem:[%s1 + $0x24] sm:$0xf]
  %v31 = vld [vmem:[%s1 + $0x28] sm:$0xf]
  %v32 = vld [vmem:[%s1 + $0x2c] sm:$0xf]
  %v33 = vld [vmem:[%s1 + $0x30] sm:$0xf]
  %v34 = vld [vmem:[%s1 + $0x34] sm:$0xf]
  %v35 = vld [vmem:[%s1 + $0x38] sm:$0xf]
  %v36 = vld [vmem:[%s1 + $0x3c] sm:$0xf]
  %v37 = vld [vmem:[%s1 + $0x40] sm:$0xf]
  %v38 = vld [vmem:[%s1 + $0x44] sm:$0xf]
  %v39 = vld [vmem:[%s1 + $0x48] sm:$0xf]
  %v40 = vld [vmem:[%s1 + $0x4c] sm:$0xf]
  %v41 = vld [vmem:[%s1 + $0x50] sm:$0xf]
  %v42 = vld [vmem:[%s1 + $0x54] sm:$0xf]
  %v43 = vld [vmem:[%s1 + $0x58] sm:$0xf]
  %v44 = vld [vmem:[%s1 + $0x5c] sm:$0xf]
  %v45 = vld [vmem:[%s1 + $0x60] sm:$0xf]
  %v46 = vld [vmem:[%s1 + $0x64] sm:$0xf]
  %v47 = vld [vmem:[%s1 + $0x68] sm:$0xf]
  %v48 = vld [vmem:[%s1 + $0x6c] sm:$0xf]
  %v49 = vld [vmem:[%s1 + $0x70] sm:$0xf]
  %v50 = vld [vmem:[%s1 + $0x74] sm:$0xf]
  %v51 = vld [vmem:[%s1 + $0x78] sm:$0xf]
  %v52 = vld [vmem:[%s1 + $0x7c] sm:$0xf]
  %v53 = vld [vmem:[%s1 + $0x80] sm:$0xf]
  %v54 = vld [vmem:[%s1 + $0x84] sm:$0xf]
  %v55 = vld [vmem:[%s1 + $0x88] sm:$0xf]
  %v56 = vld [vmem:[%s1 + $0x8c] sm:$0xf]
  %v57 = vld [vmem:[%s1 + $0x90] sm:$0xf]
  %v58 = vld [vmem:[%s1 + $0x94] sm:$0xf]
  %v59 = vld [vmem:[%s1 + $0x98] sm:$0xf]
  %v60 = vld [vmem:[%s1 + $0x9c] sm:$0xf]
  %v61 = vld [vmem:[%s1 + $0xa0] sm:$0xf]
  %v62 = vld [vmem:[%s1 + $0xa4] sm:$0xf]
  %v63 = vld [vmem:[%s1 + $0xa8] sm:$0xf]
  %v64 = vld [vmem:[%s1 + $0xac] sm:$0xf]
  %v65 = vld [vmem:[%s1 + $0xb0] sm:$0xf]
  %v66 = vld [vmem:[%s1 + $0xb4] sm:$0xf]
  %v67 = vld [vmem:[%s1 + $0xb8] sm:$0xf]
  %v68 = vld [vmem:[%s1 + $0xbc] sm:$0xf]
  %v69 = vld [vmem:[%s1 + $0xc0] sm:$0xf]
  %v70 = vld [vmem:[%s1 + $0xc4] sm:$0xf]
  %v71 = vld [vmem:[%s1 + $0xc8] sm:$0xf]
  %v72 = vld [vmem:[%s1 + $0xcc] sm:$0xf]
  %v73 = vld [vmem:[%s1 + $0xd0] sm:$0xf]
  %v74 = vld [vmem:[%s1 + $0xd4] sm:$0xf]
  %v75 = vld [vmem:[%s1 + $0xd8] sm:$0xf]
  %v76 = vld [vmem:[%s1 + $0xdc] sm:$0xf]
  %v77 = vld [vmem:[%s1 + $0xe0] sm:$0xf]
  %v78 = vld [vmem:[%s1 + $0xe4] sm:$0xf]
  %v79 = vld [vmem:[%s1 + $0xe8] sm:$0xf]
  %v80 = vld [vmem:[%s1 + $0xec] sm:$0xf]
  %v81 = vld [vmem:[%s1 + $0xf0] sm:$0xf]
  %v82 = vld [vmem:[%s1 + $0xf4] sm:$0xf]
  %v83 = vld [vmem:[%s1 + $0xf8] sm:$0xf]
  %v84 = vld [vmem:[%s1 + $0xfc] sm:$0xf]
  %v85 = vld [vmem:[%s1 + $0x100] sm:$0xf]
  %v86 = vld [vmem:[%s1 + $0x104] sm:$0xf]
  %v87 = vld [vmem:[%s1 + $0x108] sm:$0xf]
  %v88 = vld [vmem:[%s1 + $0x10c] sm:$0xf]
  %v89 = vld [vmem:[%s1 + $0x110] sm:$0xf]
  %v90 = vld [vmem:[%s1 + $0x114] sm:$0xf]
  %v91 = vld [vmem:[%s1 + $0x118] sm:$0xf]
  %v92 = vld [vmem:[%s1 + $0x11c] sm:$0xf]
  %v93 = vld [vmem:[%s1 + $0x120] sm:$0xf]
  %v94 = vld [vmem:[%s1 + $0x124] sm:$0xf]
  %v95 = vld [vmem:[%s1 + $0x128] sm:$0xf]
  %v96 = vld [vmem:[%s1 + $0x12c] sm:$0xf]
  %v97 = vld [vmem:[%s1 + $0x130] sm:$0xf]
  %v98 = vld [vmem:[%s1 + $0x134] sm:$0xf]
  %v99 = vld [vmem:[%s1 + $0x138] sm:$0xf]
  %v100 = vld [vmem:[%s1 + $0x13c] sm:$0xf]
  %v101 = vld [vmem:[%s1 + $0x140] sm:$0xf]
  %v102 = vld [vmem:[%s1 + $0x144] sm:$0xf]
  %v103 = vld [vmem:[%s1 + $0x148] sm:$0xf]
  %v104 = vld [vmem:[%s1 + $0x14c] sm:$0xf]
  %v105 = vld [vmem:[%s1 + $0x150] sm:$0xf]
  %v106 = vld [vmem:[%s1 + $0x154] sm:$0xf]
  %v107 = vld [vmem:[%s1 + $0x158] sm:$0xf]
  %v108 = vld [vmem:[%s1 + $0x15c] sm:$0xf]
  %v109 = vld [vmem:[%s1 + $0x160] sm:$0xf]
  %v110 = vld [vmem:[%s1 + $0x164] sm:$0xf]
  %v111 = vld [vmem:[%s1 + $0x168] sm:$0xf]
  %v112 = vld [vmem:[%s1 + $0x16c] sm:$0xf]
  %v113 = vld [vmem:[%s1 + $0x170] sm:$0xf]
  %v114 = vld [vmem:[%s1 + $0x174] sm:$0xf]
  %v115 = vld [vmem:[%s1 + $0x178] sm:$0xf]
  %v116 = vld [vmem:[%s1 + $0x17c] sm:$0xf]
  %v117 = vld [vmem:[%s2] sm:$0x1]
  %v118 = vpack.c.bf16 %v15, %v15
  %v119 = vpack.c.bf16 %v16, %v16
  %v120 = vpack.c.bf16 %v17, %v17
  %v121 = vpack.c.bf16 %v18, %v18
  %v122 = vpack.c.bf16 %v19, %v19
  %v123 = vpack.c.bf16 %v20, %v20
  %v125 = vlaneseq
  %v126 = vshrl.u32 %v125, 7
  %v127 = vsub.s32 0, %v126
  %v128 = vrot.slane %v117, %v127
  %v226 = vunpack.c.l.b16 %v21
  %v227 = vunpack.c.l.b16 %v22
  %v228 = vunpack.c.l.b16 %v23
  %v229 = vunpack.c.l.b16 %v24
  %v230 = vunpack.c.l.b16 %v25
  %v231 = vunpack.c.l.b16 %v26
  %v232 = vunpack.c.l.b16 %v27
  %v233 = vunpack.c.l.b16 %v28
  %v234 = vunpack.c.l.b16 %v29
  %v235 = vunpack.c.l.b16 %v30
  %v236 = vunpack.c.l.b16 %v31
  %v237 = vunpack.c.l.b16 %v32
  %v238 = vunpack.c.l.b16 %v33
  %v239 = vunpack.c.l.b16 %v34
  %v240 = vunpack.c.l.b16 %v35
  %v241 = vunpack.c.l.b16 %v36
  %v242 = vunpack.c.l.b16 %v37
  %v243 = vunpack.c.l.b16 %v38
  %v244 = vunpack.c.l.b16 %v39
  %v245 = vunpack.c.l.b16 %v40
  %v246 = vunpack.c.l.b16 %v41
  %v247 = vunpack.c.l.b16 %v42
  %v248 = vunpack.c.l.b16 %v43
  %v249 = vunpack.c.l.b16 %v44
  %v250 = vunpack.c.l.b16 %v45
  %v251 = vunpack.c.l.b16 %v46
  %v252 = vunpack.c.l.b16 %v47
  %v253 = vunpack.c.l.b16 %v48
  %v254 = vunpack.c.l.b16 %v49
  %v255 = vunpack.c.l.b16 %v50
  %v256 = vunpack.c.l.b16 %v51
  %v257 = vunpack.c.l.b16 %v52
  %v258 = vunpack.c.l.b16 %v53
  %v259 = vunpack.c.l.b16 %v54
  %v260 = vunpack.c.l.b16 %v55
  %v261 = vunpack.c.l.b16 %v56
  %v262 = vunpack.c.l.b16 %v57
  %v263 = vunpack.c.l.b16 %v58
  %v264 = vunpack.c.l.b16 %v59
  %v265 = vunpack.c.l.b16 %v60
  %v266 = vunpack.c.l.b16 %v61
  %v267 = vunpack.c.l.b16 %v62
  %v268 = vunpack.c.l.b16 %v63
  %v269 = vunpack.c.l.b16 %v64
  %v270 = vunpack.c.l.b16 %v65
  %v271 = vunpack.c.l.b16 %v66
  %v272 = vunpack.c.l.b16 %v67
  %v273 = vunpack.c.l.b16 %v68
  %v274 = vunpack.c.l.b16 %v69
  %v275 = vunpack.c.l.b16 %v70
  %v276 = vunpack.c.l.b16 %v71
  %v277 = vunpack.c.l.b16 %v72
  %v278 = vunpack.c.l.b16 %v73
  %v279 = vunpack.c.l.b16 %v74
  %v280 = vunpack.c.l.b16 %v75
  %v281 = vunpack.c.l.b16 %v76
  %v282 = vunpack.c.l.b16 %v77
  %v283 = vunpack.c.l.b16 %v78
  %v284 = vunpack.c.l.b16 %v79
  %v285 = vunpack.c.l.b16 %v80
  %v286 = vunpack.c.l.b16 %v81
  %v287 = vunpack.c.l.b16 %v82
  %v288 = vunpack.c.l.b16 %v83
  %v289 = vunpack.c.l.b16 %v84
  %v290 = vunpack.c.l.b16 %v85
  %v291 = vunpack.c.l.b16 %v86
  %v292 = vunpack.c.l.b16 %v87
  %v293 = vunpack.c.l.b16 %v88
  %v294 = vunpack.c.l.b16 %v89
  %v295 = vunpack.c.l.b16 %v90
  %v296 = vunpack.c.l.b16 %v91
  %v297 = vunpack.c.l.b16 %v92
  %v298 = vunpack.c.l.b16 %v93
  %v299 = vunpack.c.l.b16 %v94
  %v300 = vunpack.c.l.b16 %v95
  %v301 = vunpack.c.l.b16 %v96
  %v302 = vunpack.c.l.b16 %v97
  %v303 = vunpack.c.l.b16 %v98
  %v304 = vunpack.c.l.b16 %v99
  %v305 = vunpack.c.l.b16 %v100
  %v306 = vunpack.c.l.b16 %v101
  %v307 = vunpack.c.l.b16 %v102
  %v308 = vunpack.c.l.b16 %v103
  %v309 = vunpack.c.l.b16 %v104
  %v310 = vunpack.c.l.b16 %v105
  %v311 = vunpack.c.l.b16 %v106
  %v312 = vunpack.c.l.b16 %v107
  %v313 = vunpack.c.l.b16 %v108
  %v314 = vunpack.c.l.b16 %v109
  %v315 = vunpack.c.l.b16 %v110
  %v316 = vunpack.c.l.b16 %v111
  %v317 = vunpack.c.l.b16 %v112
  %v318 = vunpack.c.l.b16 %v113
  %v319 = vunpack.c.l.b16 %v114
  %v320 = vunpack.c.l.b16 %v115
  %v321 = vunpack.c.l.b16 %v116
  %v322 = vpack.c.b16 %v227, %v226
  %v323 = vpack.c.b16 %v229, %v228
  %v324 = vpack.c.b16 %v231, %v230
  %v325 = vpack.c.b16 %v233, %v232
  %v326 = vpack.c.b16 %v235, %v234
  %v327 = vpack.c.b16 %v237, %v236
  %v328 = vpack.c.b16 %v239, %v238
  %v329 = vpack.c.b16 %v241, %v240
  %v330 = vpack.c.b16 %v243, %v242
  %v331 = vpack.c.b16 %v245, %v244
  %v332 = vpack.c.b16 %v247, %v246
  %v333 = vpack.c.b16 %v249, %v248
  %v334 = vpack.c.b16 %v251, %v250
  %v335 = vpack.c.b16 %v253, %v252
  %v336 = vpack.c.b16 %v255, %v254
  %v337 = vpack.c.b16 %v257, %v256
  %v338 = vpack.c.b16 %v259, %v258
  %v339 = vpack.c.b16 %v261, %v260
  %v340 = vpack.c.b16 %v263, %v262
  %v341 = vpack.c.b16 %v265, %v264
  %v342 = vpack.c.b16 %v267, %v266
  %v343 = vpack.c.b16 %v269, %v268
  %v344 = vpack.c.b16 %v271, %v270
  %v345 = vpack.c.b16 %v273, %v272
  %v346 = vpack.c.b16 %v275, %v274
  %v347 = vpack.c.b16 %v277, %v276
  %v348 = vpack.c.b16 %v279, %v278
  %v349 = vpack.c.b16 %v281, %v280
  %v350 = vpack.c.b16 %v283, %v282
  %v351 = vpack.c.b16 %v285, %v284
  %v352 = vpack.c.b16 %v287, %v286
  %v353 = vpack.c.b16 %v289, %v288
  %v354 = vpack.c.b16 %v291, %v290
  %v355 = vpack.c.b16 %v293, %v292
  %v356 = vpack.c.b16 %v295, %v294
  %v357 = vpack.c.b16 %v297, %v296
  %v358 = vpack.c.b16 %v299, %v298
  %v359 = vpack.c.b16 %v301, %v300
  %v360 = vpack.c.b16 %v303, %v302
  %v361 = vpack.c.b16 %v305, %v304
  %v362 = vpack.c.b16 %v307, %v306
  %v363 = vpack.c.b16 %v309, %v308
  %v364 = vpack.c.b16 %v311, %v310
  %v365 = vpack.c.b16 %v313, %v312
  %v366 = vpack.c.b16 %v315, %v314
  %v367 = vpack.c.b16 %v317, %v316
  %v368 = vpack.c.b16 %v319, %v318
  %v369 = vpack.c.b16 %v321, %v320
  %418 = vmatprep.subr.bf16.mxu0 0
  %419 = vmatpush1.bf16.msra.mxu0 %v329
  %420 = vmatprep.subr.bf16.mxu0 0
  %421 = vmatpush1.bf16.msra.mxu0 %v328
  %422 = vmatprep.subr.bf16.mxu0 0
  %423 = vmatpush1.bf16.msra.mxu0 %v327
  %424 = vmatprep.subr.bf16.mxu0 0
  %425 = vmatpush1.bf16.msra.mxu0 %v326
  %426 = vmatprep.subr.bf16.mxu0 0
  %427 = vmatpush1.bf16.msra.mxu0 %v325
  %428 = vmatprep.subr.bf16.mxu0 0
  %429 = vmatpush1.bf16.msra.mxu0 %v324
  %430 = vmatprep.subr.bf16.mxu0 0
  %431 = vmatpush1.bf16.msra.mxu0 %v323
  %432 = vmatprep.subr.bf16.mxu0 0
  %433 = vmatpush1.bf16.msra.mxu0 %v322
  %434 = vmatprep.subr.bf16.mxu0 0
  %435 = vmatpush2.bf16.msra.mxu0 %v337
  %436 = vmatprep.subr.bf16.mxu0 0
  %437 = vmatpush2.bf16.msra.mxu0 %v336
  %438 = vmatprep.subr.bf16.mxu0 0
  %439 = vmatpush2.bf16.msra.mxu0 %v335
  %440 = vmatprep.subr.bf16.mxu0 0
  %441 = vmatpush2.bf16.msra.mxu0 %v334
  %442 = vmatprep.subr.bf16.mxu0 0
  %443 = vmatpush2.bf16.msra.mxu0 %v333
  %444 = vmatprep.subr.bf16.mxu0 0
  %445 = vmatpush2.bf16.msra.mxu0 %v332
  %446 = vmatprep.subr.bf16.mxu0 0
  %447 = vmatpush2.bf16.msra.mxu0 %v331
  %448 = vmatprep.subr.bf16.mxu0 0
  %449 = vmatpush2.bf16.msra.mxu0 %v330
  %450 = vmatprep.mubr.bf16.mxu0 %v119
  %451 = vmatmul.mubr.bf16.gmra.mxu0 %v118
  %v452 = vpop.f32.mrf.mxu0
  %v453 = vadd.f32 %v128, %v452
  %v454 = vpop.f32.mrf.mxu0
  %v455 = vpop.f32.mrf.mxu0
  %v456 = vpop.f32.mrf.mxu0
  %457 = vdwg.mxu0
  %458 = vmatprep.subr.bf16.mxu0 0
  %459 = vmatpush1.bf16.msra.mxu0 %v345
  %460 = vmatprep.subr.bf16.mxu0 0
  %461 = vmatpush1.bf16.msra.mxu0 %v344
  %462 = vmatprep.subr.bf16.mxu0 0
  %463 = vmatpush1.bf16.msra.mxu0 %v343
  %464 = vmatprep.subr.bf16.mxu0 0
  %465 = vmatpush1.bf16.msra.mxu0 %v342
  %466 = vmatprep.subr.bf16.mxu0 0
  %467 = vmatpush1.bf16.msra.mxu0 %v341
  %468 = vmatprep.subr.bf16.mxu0 0
  %469 = vmatpush1.bf16.msra.mxu0 %v340
  %470 = vmatprep.subr.bf16.mxu0 0
  %471 = vmatpush1.bf16.msra.mxu0 %v339
  %472 = vmatprep.subr.bf16.mxu0 0
  %473 = vmatpush1.bf16.msra.mxu0 %v338
  %474 = vmatprep.subr.bf16.mxu0 0
  %475 = vmatpush2.bf16.msra.mxu0 %v353
  %476 = vmatprep.subr.bf16.mxu0 0
  %477 = vmatpush2.bf16.msra.mxu0 %v352
  %478 = vmatprep.subr.bf16.mxu0 0
  %479 = vmatpush2.bf16.msra.mxu0 %v351
  %480 = vmatprep.subr.bf16.mxu0 0
  %481 = vmatpush2.bf16.msra.mxu0 %v350
  %482 = vmatprep.subr.bf16.mxu0 0
  %483 = vmatpush2.bf16.msra.mxu0 %v349
  %484 = vmatprep.subr.bf16.mxu0 0
  %485 = vmatpush2.bf16.msra.mxu0 %v348
  %486 = vmatprep.subr.bf16.mxu0 0
  %487 = vmatpush2.bf16.msra.mxu0 %v347
  %488 = vmatprep.subr.bf16.mxu0 0
  %489 = vmatpush2.bf16.msra.mxu0 %v346
  %490 = vmatprep.mubr.bf16.mxu0 %v121
  %491 = vmatmul.mubr.bf16.gmra.mxu0 %v120
  %v492 = vpop.f32.mrf.mxu0
  %v493 = vadd.f32 %v453, %v492
  %v494 = vpop.f32.mrf.mxu0
  %v495 = vpop.f32.mrf.mxu0
  %v496 = vpop.f32.mrf.mxu0
  %497 = vdwg.mxu0
  %498 = vmatprep.subr.bf16.mxu0 0
  %499 = vmatpush1.bf16.msra.mxu0 %v361
  %500 = vmatprep.subr.bf16.mxu0 0
  %501 = vmatpush1.bf16.msra.mxu0 %v360
  %502 = vmatprep.subr.bf16.mxu0 0
  %503 = vmatpush1.bf16.msra.mxu0 %v359
  %504 = vmatprep.subr.bf16.mxu0 0
  %505 = vmatpush1.bf16.msra.mxu0 %v358
  %506 = vmatprep.subr.bf16.mxu0 0
  %507 = vmatpush1.bf16.msra.mxu0 %v357
  %508 = vmatprep.subr.bf16.mxu0 0
  %509 = vmatpush1.bf16.msra.mxu0 %v356
  %510 = vmatprep.subr.bf16.mxu0 0
  %511 = vmatpush1.bf16.msra.mxu0 %v355
  %512 = vmatprep.subr.bf16.mxu0 0
  %513 = vmatpush1.bf16.msra.mxu0 %v354
  %514 = vmatprep.subr.bf16.mxu0 0
  %515 = vmatpush2.bf16.msra.mxu0 %v369
  %516 = vmatprep.subr.bf16.mxu0 0
  %517 = vmatpush2.bf16.msra.mxu0 %v368
  %518 = vmatprep.subr.bf16.mxu0 0
  %519 = vmatpush2.bf16.msra.mxu0 %v367
  %520 = vmatprep.subr.bf16.mxu0 0
  %521 = vmatpush2.bf16.msra.mxu0 %v366
  %522 = vmatprep.subr.bf16.mxu0 0
  %523 = vmatpush2.bf16.msra.mxu0 %v365
  %524 = vmatprep.subr.bf16.mxu0 0
  %525 = vmatpush2.bf16.msra.mxu0 %v364
  %526 = vmatprep.subr.bf16.mxu0 0
  %527 = vmatpush2.bf16.msra.mxu0 %v363
  %528 = vmatprep.subr.bf16.mxu0 0
  %529 = vmatpush2.bf16.msra.mxu0 %v362
  %530 = vmatprep.mubr.bf16.mxu0 %v123
  %531 = vmatmul.mubr.bf16.gmra.mxu0 %v122
  %v532 = vpop.f32.mrf.mxu0
  %v533 = vadd.f32 %v493, %v532
  %v534 = vpop.f32.mrf.mxu0
  %v535 = vpop.f32.mrf.mxu0
  %v536 = vpop.f32.mrf.mxu0
  %537 = vdwg.mxu0
  %538 = vst [vmem:[%s3] sm:$0xff] %v533
  // Predicated region
  $region14: #{vl_transformer_itm_forward.7} parent=0 // pred_check
    _
  $region15: #{vl_transformer_itm_forward.7} parent=0 // pred_check_branch
    %540 = sbr.rel (0) target = $region17
  $region16: #{vl_transformer_itm_forward.7} parent=0 // pred_region
    _
  $region17: #{vl_transformer_itm_forward.7} parent=0 // pred_fallthru
    _
  // Predicated region
  $region18: #{vl_transformer_itm_forward.7} parent=0 // pred_check
    _
  $region19: #{vl_transformer_itm_forward.7} parent=0 // pred_check_branch
    %542 = sbr.rel (0) target = $region21
  $region20: #{vl_transformer_itm_forward.7} parent=0 // pred_region
    _
  $region21: #{vl_transformer_itm_forward.7} parent=0 // pred_fallthru
    _

// kernel: vl_transformer_itm_forward.11
$region0: #{vl_transformer_itm_forward.11}
  #allocation0 [shape = 'u32[]', space=smem, size = 0x4, offset = 0x4, fixed_abs, tag = 'smem constant byte address 0x4 - core index']
  #allocation1 [shape = 'u32[144,128]{1,0:T(1,128)}', space=vmem, size = 0x12000, scoped, tag = 'internal scratch']
  %s0 = inlined_call_operand.vmem [shape: f32[16,128], index: 0, kind: input, shape index: {}]
  %s1 = inlined_call_operand.vmem [shape: f32[1,128], index: 1, kind: input, shape index: {}]
  %s2 = inlined_call_operand.vmem [shape: f32[1,128], index: 2, kind: input, shape index: {}]
  %s3 = inlined_call_operand.vmem [shape: f32[16,128], index: 3, kind: output, shape index: {}]
  %s4 = sld [smem:[#allocation0]]
  $region22: #{vl_transformer_itm_forward.11} parent=0
    _
  %s6 = ssub.s32 1, %s4
  %s7 = scalar_select 0, %s6, %s4
  // Predicated region
  $region2: #{vl_transformer_itm_forward.11} parent=0 // pred_check
    _
  $region3: #{vl_transformer_itm_forward.11} parent=0 // pred_check_branch
    %9 = sbr.rel (0) target = $region5
  $region4: #{vl_transformer_itm_forward.11} parent=0 // pred_region
    _
  $region5: #{vl_transformer_itm_forward.11} parent=0 // pred_fallthru
    _
  // Predicated region
  $region6: #{vl_transformer_itm_forward.11} parent=0 // pred_check
    _
  $region7: #{vl_transformer_itm_forward.11} parent=0 // pred_check_branch
    %11 = sbr.rel (0) target = $region9
  $region8: #{vl_transformer_itm_forward.11} parent=0 // pred_region
    _
  $region9: #{vl_transformer_itm_forward.11} parent=0 // pred_fallthru
    _
  // Predicated region
  $region10: #{vl_transformer_itm_forward.11} parent=0 // pred_check
    _
  $region11: #{vl_transformer_itm_forward.11} parent=0 // pred_check_branch
    %13 = sbr.rel (0) target = $region13
  $region12: #{vl_transformer_itm_forward.11} parent=0 // pred_region
    _
  $region13: #{vl_transformer_itm_forward.11} parent=0 // pred_fallthru
    _
  %v14 = vld [vmem:[%s0] sm:$0xff]
  %v15 = vld [vmem:[%s0 + $0x8] sm:$0xff]
  %v16 = vld [vmem:[%s1] sm:$0x1]
  %v17 = vld [vmem:[%s2] sm:$0x1]
  %18 = vadd.xlane.f32.xlu0 %v14
  %v19 = vpop.xlane.xlu0 %18
  %20 = vadd.xlane.f32.xlu0 %v15
  %v21 = vpop.xlane.xlu0 %20
  %v22 = vrcp.pop 128.0
  %v23 = vmul.f32 %v19, %v22
  %v24 = vmul.f32 %v21, %v22
  %v25 = vsub.f32 %v14, %v23
  %v26 = vsub.f32 %v15, %v24
  %v27 = vmul.f32 %v25, %v25
  %v28 = vmul.f32 %v26, %v26
  %29 = vadd.xlane.f32.xlu0 %v27
  %v30 = vpop.xlane.xlu0 %29
  %31 = vadd.xlane.f32.xlu0 %v28
  %v32 = vpop.xlane.xlu0 %31
  %v33 = vmul.f32 %v30, %v22
  %v34 = vmul.f32 %v32, %v22
  %v35 = vadd.f32 %v33, 1e-12
  %v36 = vadd.f32 %v34, 1e-12
  %v37 = vrsqrt.pop %v35
  %v38 = vrsqrt.pop %v36
  %v39 = vmul.f32 %v25, %v37
  %v40 = vmul.f32 %v26, %v38
  %v42 = vlaneseq
  %v43 = vshrl.u32 %v42, 7
  %v44 = vsub.s32 0, %v43
  %v45 = vrot.slane %v16, %v44
  %v47 = vmul.f32 %v39, %v45
  %v48 = vmul.f32 %v40, %v45
  %v50 = vlaneseq
  %v51 = vshrl.u32 %v50, 7
  %v52 = vsub.s32 0, %v51
  %v53 = vrot.slane %v17, %v52
  %v55 = vadd.f32 %v47, %v53
  %v56 = vadd.f32 %v48, %v53
  %57 = vst [vmem:[%s3] sm:$0xff] %v55
  %58 = vst [vmem:[%s3 + $0x8] sm:$0xff] %v56
  // Predicated region
  $region14: #{vl_transformer_itm_forward.11} parent=0 // pred_check
    _
  $region15: #{vl_transformer_itm_forward.11} parent=0 // pred_check_branch
    %60 = sbr.rel (0) target = $region17
  $region16: #{vl_transformer_itm_forward.11} parent=0 // pred_region
    _
  $region17: #{vl_transformer_itm_forward.11} parent=0 // pred_fallthru
    _
  // Predicated region
  $region18: #{vl_transformer_itm_forward.11} parent=0 // pred_check
    _
  $region19: #{vl_transformer_itm_forward.11} parent=0 // pred_check_branch
    %62 = sbr.rel (0) target = $region21
  $region20: #{vl_transformer_itm_forward.11} parent=0 // pred_region
    _
  $region21: #{vl_transformer_itm_forward.11} parent=0 // pred_fallthru
    _

// kernel: vl_transformer_itm_forward.8
$region0: #{vl_transformer_itm_forward.8}
  #allocation0 [shape = 'u32[]', space=smem, size = 0x4, offset = 0x4, fixed_abs, tag = 'smem constant byte address 0x4 - core index']
  #allocation1 [shape = 'u32[144,128]{1,0:T(1,128)}', space=vmem, size = 0x12000, scoped, tag = 'internal scratch']
  %s0 = inlined_call_operand.vmem [shape: f32[2,5,128], index: 0, kind: input, shape index: {}]
  %s1 = inlined_call_operand.vmem [shape: f32[1,128], index: 1, kind: input, shape index: {}]
  %s2 = inlined_call_operand.vmem [shape: f32[1,128], index: 2, kind: input, shape index: {}]
  %s3 = inlined_call_operand.vmem [shape: bf16[128,384], index: 3, kind: input, shape index: {}]
  %s4 = inlined_call_operand.vmem [shape: f32[1,384], index: 4, kind: input, shape index: {}]
  %s5 = inlined_call_operand.vmem [shape: bf16[128,128], index: 5, kind: input, shape index: {}]
  %s6 = inlined_call_operand.vmem [shape: f32[1,128], index: 6, kind: input, shape index: {}]
  %s7 = inlined_call_operand.vmem [shape: f32[1,128], index: 7, kind: input, shape index: {}]
  %s8 = inlined_call_operand.vmem [shape: f32[1,128], index: 8, kind: input, shape index: {}]
  %s9 = inlined_call_operand.vmem [shape: bf16[128,512], index: 9, kind: input, shape index: {}]
  %s10 = inlined_call_operand.vmem [shape: f32[1,512], index: 10, kind: input, shape index: {}]
  %s11 = inlined_call_operand.vmem [shape: bf16[512,128], index: 11, kind: input, shape index: {}]
  %s12 = inlined_call_operand.vmem [shape: f32[1,128], index: 12, kind: input, shape index: {}]
  %s13 = inlined_call_operand.vmem [shape: f32[2,5,128], index: 13, kind: output, shape index: {}]
  %s14 = sld [smem:[#allocation0]]
  $region85: #{vl_transformer_itm_forward.8} parent=0
    _
  %s16 = ssub.s32 1, %s14
  %s17 = scalar_select 0, %s16, %s14
  loop: start=0, step=1, limit=4
  $region2: #{vl_transformer_itm_forward.8} parent=0 // loop_pre_header
    _
  $region3: #{vl_transformer_itm_forward.8} parent=0 // loop_header
    %s19 = sphi 0, %s23
    %p20 = scmp.ge.s32.totalorder %s19, 4
    %s29 = sphi 0, %s31
    %s32 = sphi 0, %s29
    %s33 = sphi 0, %s32
    %s49 = sphi 0, %s33
    %s53 = sphi 0, %s53
    %s55 = sphi 0, %s53
    %s56 = sphi 0, %s55
    %s70 = sphi 0, %s56
    %s74 = sphi 0, %s74
    %s76 = sphi 0, %s74
    %s77 = sphi 0, %s76
    %s91 = sphi 0, %s77
    %s95 = sphi 0, %s95
    %s97 = sphi 0, %s95
    %s98 = sphi 0, %s97
    %s112 = sphi 0, %s98
    %s116 = sphi 0, %s116
    %s118 = sphi 0, %s116
    %s119 = sphi 0, %s118
    %s133 = sphi 0, %s119
    %s137 = sphi 0, %s137
    %s139 = sphi 0, %s137
    %s140 = sphi 0, %s139
    %s154 = sphi 0, %s140
    %s158 = sphi 0, %s158
    %s160 = sphi 0, %s158
    %s161 = sphi 0, %s160
    %s175 = sphi 0, %s161
    %s179 = sphi 0, %s179
    %s181 = sphi 0, %s179
    %s182 = sphi 0, %s181
    %s196 = sphi 0, %s182
    %s200 = sphi 0, %s200
    %s202 = sphi 0, %s200
    %s203 = sphi 0, %s202
    %s217 = sphi 0, %s203
    %s221 = sphi 0, %s221
    %s223 = sphi 0, %s221
    %s224 = sphi 0, %s223
    %s238 = sphi 0, %s224
    %s242 = sphi 0, %s242
    %s244 = sphi 0, %s242
    %s245 = sphi 0, %s244
    %s259 = sphi 0, %s245
    %s263 = sphi 0, %s263
    %s265 = sphi 0, %s263
    %s266 = sphi 0, %s265
    %s280 = sphi 0, %s266
    %s284 = sphi 0, %s284
    %s286 = sphi 0, %s284
    %s287 = sphi 0, %s286
    %s301 = sphi 0, %s287
    %s307 = sphi 0, %s309
    %s310 = sphi 0, %s307
    %s311 = sphi 0, %s310
    %s327 = sphi 0, %s311
  $region4: #{vl_transformer_itm_forward.8} parent=0 // loop_header_branch
    %22 = sbr.rel (%p20) target = $region8
  $region5: #{vl_transformer_itm_forward.8} parent=0 // loop_body
    %s24 = ssub.s32 %s19, 1
    %s25 = ssub.s32 %s19, 2
    %s26 = sadd.s32 %s19, 1
    %s27 = ssub.s32 %s19, %s26
    %p28 = scmp.eq.s32.totalorder %s27, 0
    %s30 = sadd.s32 %s29, 1
    %s31 = scalar_select %p28, %s29, %s30
    %p34 = pneg %p28
    %p35 = scmp.eq.s32.totalorder %s19, 1
    %p36 = por %p34, %p35
    %p37 = scmp.ne.s32.totalorder %s29, %s32
    %p38 = scmp.eq.s32.totalorder %s19, 0
    %p39 = por %p37, %p38
    %p40 = scmp.ne.s32.totalorder %s29, %s32
    %p41 = scmp.eq.s32.totalorder %s24, 1
    %p42 = por %p40, %p41
    %p43 = scmp.ne.s32.totalorder %s32, %s33
    %p44 = scmp.eq.s32.totalorder %s24, 0
    %p45 = por %p43, %p44
    %p46 = scmp.ne.s32.totalorder %s32, %s33
    %p47 = scmp.eq.s32.totalorder %s25, 1
    %p48 = por %p46, %p47
    %p50 = scmp.ne.s32.totalorder %s33, %s49
    %p51 = scmp.eq.s32.totalorder %s25, 0
    %p52 = por %p50, %p51
    %s54 = sadd.s32 %s53, 1
    %p57 = scmp.eq.s32.totalorder %s19, 1
    %p58 = scmp.ne.s32.totalorder %s53, %s55
    %p59 = scmp.eq.s32.totalorder %s19, 0
    %p60 = por %p58, %p59
    %p61 = scmp.ne.s32.totalorder %s53, %s55
    %p62 = scmp.eq.s32.totalorder %s24, 1
    %p63 = por %p61, %p62
    %p64 = scmp.ne.s32.totalorder %s55, %s56
    %p65 = scmp.eq.s32.totalorder %s24, 0
    %p66 = por %p64, %p65
    %p67 = scmp.ne.s32.totalorder %s55, %s56
    %p68 = scmp.eq.s32.totalorder %s25, 1
    %p69 = por %p67, %p68
    %p71 = scmp.ne.s32.totalorder %s56, %s70
    %p72 = scmp.eq.s32.totalorder %s25, 0
    %p73 = por %p71, %p72
    %s75 = sadd.s32 %s74, 1
    %p78 = scmp.eq.s32.totalorder %s19, 1
    %p79 = scmp.ne.s32.totalorder %s74, %s76
    %p80 = scmp.eq.s32.totalorder %s19, 0
    %p81 = por %p79, %p80
    %p82 = scmp.ne.s32.totalorder %s74, %s76
    %p83 = scmp.eq.s32.totalorder %s24, 1
    %p84 = por %p82, %p83
    %p85 = scmp.ne.s32.totalorder %s76, %s77
    %p86 = scmp.eq.s32.totalorder %s24, 0
    %p87 = por %p85, %p86
    %p88 = scmp.ne.s32.totalorder %s76, %s77
    %p89 = scmp.eq.s32.totalorder %s25, 1
    %p90 = por %p88, %p89
    %p92 = scmp.ne.s32.totalorder %s77, %s91
    %p93 = scmp.eq.s32.totalorder %s25, 0
    %p94 = por %p92, %p93
    %s96 = sadd.s32 %s95, 1
    %p99 = scmp.eq.s32.totalorder %s19, 1
    %p100 = scmp.ne.s32.totalorder %s95, %s97
    %p101 = scmp.eq.s32.totalorder %s19, 0
    %p102 = por %p100, %p101
    %p103 = scmp.ne.s32.totalorder %s95, %s97
    %p104 = scmp.eq.s32.totalorder %s24, 1
    %p105 = por %p103, %p104
    %p106 = scmp.ne.s32.totalorder %s97, %s98
    %p107 = scmp.eq.s32.totalorder %s24, 0
    %p108 = por %p106, %p107
    %p109 = scmp.ne.s32.totalorder %s97, %s98
    %p110 = scmp.eq.s32.totalorder %s25, 1
    %p111 = por %p109, %p110
    %p113 = scmp.ne.s32.totalorder %s98, %s112
    %p114 = scmp.eq.s32.totalorder %s25, 0
    %p115 = por %p113, %p114
    %s117 = sadd.s32 %s116, 1
    %p120 = scmp.eq.s32.totalorder %s19, 1
    %p121 = scmp.ne.s32.totalorder %s116, %s118
    %p122 = scmp.eq.s32.totalorder %s19, 0
    %p123 = por %p121, %p122
    %p124 = scmp.ne.s32.totalorder %s116, %s118
    %p125 = scmp.eq.s32.totalorder %s24, 1
    %p126 = por %p124, %p125
    %p127 = scmp.ne.s32.totalorder %s118, %s119
    %p128 = scmp.eq.s32.totalorder %s24, 0
    %p129 = por %p127, %p128
    %p130 = scmp.ne.s32.totalorder %s118, %s119
    %p131 = scmp.eq.s32.totalorder %s25, 1
    %p132 = por %p130, %p131
    %p134 = scmp.ne.s32.totalorder %s119, %s133
    %p135 = scmp.eq.s32.totalorder %s25, 0
    %p136 = por %p134, %p135
    %s138 = sadd.s32 %s137, 1
    %p141 = scmp.eq.s32.totalorder %s19, 1
    %p142 = scmp.ne.s32.totalorder %s137, %s139
    %p143 = scmp.eq.s32.totalorder %s19, 0
    %p144 = por %p142, %p143
    %p145 = scmp.ne.s32.totalorder %s137, %s139
    %p146 = scmp.eq.s32.totalorder %s24, 1
    %p147 = por %p145, %p146
    %p148 = scmp.ne.s32.totalorder %s139, %s140
    %p149 = scmp.eq.s32.totalorder %s24, 0
    %p150 = por %p148, %p149
    %p151 = scmp.ne.s32.totalorder %s139, %s140
    %p152 = scmp.eq.s32.totalorder %s25, 1
    %p153 = por %p151, %p152
    %p155 = scmp.ne.s32.totalorder %s140, %s154
    %p156 = scmp.eq.s32.totalorder %s25, 0
    %p157 = por %p155, %p156
    %s159 = sadd.s32 %s158, 1
    %p162 = scmp.eq.s32.totalorder %s19, 1
    %p163 = scmp.ne.s32.totalorder %s158, %s160
    %p164 = scmp.eq.s32.totalorder %s19, 0
    %p165 = por %p163, %p164
    %p166 = scmp.ne.s32.totalorder %s158, %s160
    %p167 = scmp.eq.s32.totalorder %s24, 1
    %p168 = por %p166, %p167
    %p169 = scmp.ne.s32.totalorder %s160, %s161
    %p170 = scmp.eq.s32.totalorder %s24, 0
    %p171 = por %p169, %p170
    %p172 = scmp.ne.s32.totalorder %s160, %s161
    %p173 = scmp.eq.s32.totalorder %s25, 1
    %p174 = por %p172, %p173
    %p176 = scmp.ne.s32.totalorder %s161, %s175
    %p177 = scmp.eq.s32.totalorder %s25, 0
    %p178 = por %p176, %p177
    %s180 = sadd.s32 %s179, 1
    %p183 = scmp.eq.s32.totalorder %s19, 1
    %p184 = scmp.ne.s32.totalorder %s179, %s181
    %p185 = scmp.eq.s32.totalorder %s19, 0
    %p186 = por %p184, %p185
    %p187 = scmp.ne.s32.totalorder %s179, %s181
    %p188 = scmp.eq.s32.totalorder %s24, 1
    %p189 = por %p187, %p188
    %p190 = scmp.ne.s32.totalorder %s181, %s182
    %p191 = scmp.eq.s32.totalorder %s24, 0
    %p192 = por %p190, %p191
    %p193 = scmp.ne.s32.totalorder %s181, %s182
    %p194 = scmp.eq.s32.totalorder %s25, 1
    %p195 = por %p193, %p194
    %p197 = scmp.ne.s32.totalorder %s182, %s196
    %p198 = scmp.eq.s32.totalorder %s25, 0
    %p199 = por %p197, %p198
    %s201 = sadd.s32 %s200, 1
    %p204 = scmp.eq.s32.totalorder %s19, 1
    %p205 = scmp.ne.s32.totalorder %s200, %s202
    %p206 = scmp.eq.s32.totalorder %s19, 0
    %p207 = por %p205, %p206
    %p208 = scmp.ne.s32.totalorder %s200, %s202
    %p209 = scmp.eq.s32.totalorder %s24, 1
    %p210 = por %p208, %p209
    %p211 = scmp.ne.s32.totalorder %s202, %s203
    %p212 = scmp.eq.s32.totalorder %s24, 0
    %p213 = por %p211, %p212
    %p214 = scmp.ne.s32.totalorder %s202, %s203
    %p215 = scmp.eq.s32.totalorder %s25, 1
    %p216 = por %p214, %p215
    %p218 = scmp.ne.s32.totalorder %s203, %s217
    %p219 = scmp.eq.s32.totalorder %s25, 0
    %p220 = por %p218, %p219
    %s222 = sadd.s32 %s221, 1
    %p225 = scmp.eq.s32.totalorder %s19, 1
    %p226 = scmp.ne.s32.totalorder %s221, %s223
    %p227 = scmp.eq.s32.totalorder %s19, 0
    %p228 = por %p226, %p227
    %p229 = scmp.ne.s32.totalorder %s221, %s223
    %p230 = scmp.eq.s32.totalorder %s24, 1
    %p231 = por %p229, %p230
    %p232 = scmp.ne.s32.totalorder %s223, %s224
    %p233 = scmp.eq.s32.totalorder %s24, 0
    %p234 = por %p232, %p233
    %p235 = scmp.ne.s32.totalorder %s223, %s224
    %p236 = scmp.eq.s32.totalorder %s25, 1
    %p237 = por %p235, %p236
    %p239 = scmp.ne.s32.totalorder %s224, %s238
    %p240 = scmp.eq.s32.totalorder %s25, 0
    %p241 = por %p239, %p240
    %s243 = sadd.s32 %s242, 1
    %p246 = scmp.eq.s32.totalorder %s19, 1
    %p247 = scmp.ne.s32.totalorder %s242, %s244
    %p248 = scmp.eq.s32.totalorder %s19, 0
    %p249 = por %p247, %p248
    %p250 = scmp.ne.s32.totalorder %s242, %s244
    %p251 = scmp.eq.s32.totalorder %s24, 1
    %p252 = por %p250, %p251
    %p253 = scmp.ne.s32.totalorder %s244, %s245
    %p254 = scmp.eq.s32.totalorder %s24, 0
    %p255 = por %p253, %p254
    %p256 = scmp.ne.s32.totalorder %s244, %s245
    %p257 = scmp.eq.s32.totalorder %s25, 1
    %p258 = por %p256, %p257
    %p260 = scmp.ne.s32.totalorder %s245, %s259
    %p261 = scmp.eq.s32.totalorder %s25, 0
    %p262 = por %p260, %p261
    %s264 = sadd.s32 %s263, 1
    %p267 = scmp.eq.s32.totalorder %s19, 1
    %p268 = scmp.ne.s32.totalorder %s263, %s265
    %p269 = scmp.eq.s32.totalorder %s19, 0
    %p270 = por %p268, %p269
    %p271 = scmp.ne.s32.totalorder %s263, %s265
    %p272 = scmp.eq.s32.totalorder %s24, 1
    %p273 = por %p271, %p272
    %p274 = scmp.ne.s32.totalorder %s265, %s266
    %p275 = scmp.eq.s32.totalorder %s24, 0
    %p276 = por %p274, %p275
    %p277 = scmp.ne.s32.totalorder %s265, %s266
    %p278 = scmp.eq.s32.totalorder %s25, 1
    %p279 = por %p277, %p278
    %p281 = scmp.ne.s32.totalorder %s266, %s280
    %p282 = scmp.eq.s32.totalorder %s25, 0
    %p283 = por %p281, %p282
    %s285 = sadd.s32 %s284, 1
    %p288 = scmp.eq.s32.totalorder %s19, 1
    %p289 = scmp.ne.s32.totalorder %s284, %s286
    %p290 = scmp.eq.s32.totalorder %s19, 0
    %p291 = por %p289, %p290
    %p292 = scmp.ne.s32.totalorder %s284, %s286
    %p293 = scmp.eq.s32.totalorder %s24, 1
    %p294 = por %p292, %p293
    %p295 = scmp.ne.s32.totalorder %s286, %s287
    %p296 = scmp.eq.s32.totalorder %s24, 0
    %p297 = por %p295, %p296
    %p298 = scmp.ne.s32.totalorder %s286, %s287
    %p299 = scmp.eq.s32.totalorder %s25, 1
    %p300 = por %p298, %p299
    %p302 = scmp.ne.s32.totalorder %s287, %s301
    %p303 = scmp.eq.s32.totalorder %s25, 0
    %p304 = por %p302, %p303
    %s305 = ssub.s32 %s19, %s26
    %p306 = scmp.eq.s32.totalorder %s305, 0
    %s308 = sadd.s32 %s307, 1
    %s309 = scalar_select %p306, %s307, %s308
    %p312 = pneg %p306
    %p313 = scmp.eq.s32.totalorder %s19, 1
    %p314 = por %p312, %p313
    %p315 = scmp.ne.s32.totalorder %s307, %s310
    %p316 = scmp.eq.s32.totalorder %s19, 0
    %p317 = por %p315, %p316
    %p318 = scmp.ne.s32.totalorder %s307, %s310
    %p319 = scmp.eq.s32.totalorder %s24, 1
    %p320 = por %p318, %p319
    %p321 = scmp.ne.s32.totalorder %s310, %s311
    %p322 = scmp.eq.s32.totalorder %s24, 0
    %p323 = por %p321, %p322
    %p324 = scmp.ne.s32.totalorder %s310, %s311
    %p325 = scmp.eq.s32.totalorder %s25, 1
    %p326 = por %p324, %p325
    %p328 = scmp.ne.s32.totalorder %s311, %s327
    %p329 = scmp.eq.s32.totalorder %s25, 0
    %p330 = por %p328, %p329
    %p331 = scmp.le.s32.totalorder 1, %s19
    %p332 = scmp.lt.s32.totalorder %s19, 3
    %p333 = pnand %p331, %p332
    %p334 = pneg %p333
    // Predicated region
    $region9: #{vl_transformer_itm_forward.8} parent=5 // pred_check
      _
    $region10: #{vl_transformer_itm_forward.8} parent=5 // pred_check_branch
      %336 = sbr.rel (%p333) target = $region12
    $region11: #{vl_transformer_itm_forward.8} parent=5 // pred_region
      %s337 = ssub.s32 %s19, 1
      // Predicated region
      $region13: #{vl_transformer_itm_forward.8} parent=11 // pred_check
        %p338 = pneg %p66
      $region14: #{vl_transformer_itm_forward.8} parent=11 // pred_check_branch
        %340 = sbr.rel (%p338) target = $region16
      $region15: #{vl_transformer_itm_forward.8} parent=11 // pred_region
        _
      $region16: #{vl_transformer_itm_forward.8} parent=11 // pred_fallthru
        _
      // Predicated region
      $region17: #{vl_transformer_itm_forward.8} parent=11 // pred_check
        %p341 = pneg %p87
      $region18: #{vl_transformer_itm_forward.8} parent=11 // pred_check_branch
        %343 = sbr.rel (%p341) target = $region20
      $region19: #{vl_transformer_itm_forward.8} parent=11 // pred_region
        _
      $region20: #{vl_transformer_itm_forward.8} parent=11 // pred_fallthru
        _
      // Predicated region
      $region21: #{vl_transformer_itm_forward.8} parent=11 // pred_check
        %p344 = pneg %p108
      $region22: #{vl_transformer_itm_forward.8} parent=11 // pred_check_branch
        %346 = sbr.rel (%p344) target = $region24
      $region23: #{vl_transformer_itm_forward.8} parent=11 // pred_region
        _
      $region24: #{vl_transformer_itm_forward.8} parent=11 // pred_fallthru
        _
      // Predicated region
      $region25: #{vl_transformer_itm_forward.8} parent=11 // pred_check
        %p347 = pneg %p129
      $region26: #{vl_transformer_itm_forward.8} parent=11 // pred_check_branch
        %349 = sbr.rel (%p347) target = $region28
      $region27: #{vl_transformer_itm_forward.8} parent=11 // pred_region
        _
      $region28: #{vl_transformer_itm_forward.8} parent=11 // pred_fallthru
        _
      // Predicated region
      $region29: #{vl_transformer_itm_forward.8} parent=11 // pred_check
        %p350 = pneg %p150
      $region30: #{vl_transformer_itm_forward.8} parent=11 // pred_check_branch
        %352 = sbr.rel (%p350) target = $region32
      $region31: #{vl_transformer_itm_forward.8} parent=11 // pred_region
        _
      $region32: #{vl_transformer_itm_forward.8} parent=11 // pred_fallthru
        _
      // Predicated region
      $region33: #{vl_transformer_itm_forward.8} parent=11 // pred_check
        %p353 = pneg %p171
      $region34: #{vl_transformer_itm_forward.8} parent=11 // pred_check_branch
        %355 = sbr.rel (%p353) target = $region36
      $region35: #{vl_transformer_itm_forward.8} parent=11 // pred_region
        _
      $region36: #{vl_transformer_itm_forward.8} parent=11 // pred_fallthru
        _
      // Predicated region
      $region37: #{vl_transformer_itm_forward.8} parent=11 // pred_check
        %p356 = pneg %p192
      $region38: #{vl_transformer_itm_forward.8} parent=11 // pred_check_branch
        %358 = sbr.rel (%p356) target = $region40
      $region39: #{vl_transformer_itm_forward.8} parent=11 // pred_region
        _
      $region40: #{vl_transformer_itm_forward.8} parent=11 // pred_fallthru
        _
      // Predicated region
      $region41: #{vl_transformer_itm_forward.8} parent=11 // pred_check
        %p359 = pneg %p213
      $region42: #{vl_transformer_itm_forward.8} parent=11 // pred_check_branch
        %361 = sbr.rel (%p359) target = $region44
      $region43: #{vl_transformer_itm_forward.8} parent=11 // pred_region
        _
      $region44: #{vl_transformer_itm_forward.8} parent=11 // pred_fallthru
        _
      // Predicated region
      $region45: #{vl_transformer_itm_forward.8} parent=11 // pred_check
        %p362 = pneg %p234
      $region46: #{vl_transformer_itm_forward.8} parent=11 // pred_check_branch
        %364 = sbr.rel (%p362) target = $region48
      $region47: #{vl_transformer_itm_forward.8} parent=11 // pred_region
        _
      $region48: #{vl_transformer_itm_forward.8} parent=11 // pred_fallthru
        _
      // Predicated region
      $region49: #{vl_transformer_itm_forward.8} parent=11 // pred_check
        %p365 = pneg %p255
      $region50: #{vl_transformer_itm_forward.8} parent=11 // pred_check_branch
        %367 = sbr.rel (%p365) target = $region52
      $region51: #{vl_transformer_itm_forward.8} parent=11 // pred_region
        _
      $region52: #{vl_transformer_itm_forward.8} parent=11 // pred_fallthru
        _
      // Predicated region
      $region53: #{vl_transformer_itm_forward.8} parent=11 // pred_check
        %p368 = pneg %p276
      $region54: #{vl_transformer_itm_forward.8} parent=11 // pred_check_branch
        %370 = sbr.rel (%p368) target = $region56
      $region55: #{vl_transformer_itm_forward.8} parent=11 // pred_region
        _
      $region56: #{vl_transformer_itm_forward.8} parent=11 // pred_fallthru
        _
      // Predicated region
      $region57: #{vl_transformer_itm_forward.8} parent=11 // pred_check
        %p371 = pneg %p297
      $region58: #{vl_transformer_itm_forward.8} parent=11 // pred_check_branch
        %373 = sbr.rel (%p371) target = $region60
      $region59: #{vl_transformer_itm_forward.8} parent=11 // pred_region
        _
      $region60: #{vl_transformer_itm_forward.8} parent=11 // pred_fallthru
        _
    $region12: #{vl_transformer_itm_forward.8} parent=5 // pred_fallthru
      _
    %p374 = scmp.lt.s32.totalorder %s19, 2
    // Predicated region
    $region61: #{vl_transformer_itm_forward.8} parent=5 // pred_check
      %p375 = pneg %p374
    $region62: #{vl_transformer_itm_forward.8} parent=5 // pred_check_branch
      %377 = sbr.rel (%p375) target = $region64
    $region63: #{vl_transformer_itm_forward.8} parent=5 // pred_region
      // Predicated region
      $region65: #{vl_transformer_itm_forward.8} parent=63 // pred_check
        %p378 = pneg %p39
      $region66: #{vl_transformer_itm_forward.8} parent=63 // pred_check_branch
        %380 = sbr.rel (%p378) target = $region68
      $region67: #{vl_transformer_itm_forward.8} parent=63 // pred_region
        %p381 = scmp.lt.s32.totalorder %s19, 1
        %s382 = scalar_select %p381, %s19, 1
        %s383 = smul.addr %s382, 8
        %s384 = scalar_lea.vmem %s0, %s383
      $region68: #{vl_transformer_itm_forward.8} parent=63 // pred_fallthru
        _
    $region64: #{vl_transformer_itm_forward.8} parent=5 // pred_fallthru
      _
    %p385 = scmp.le.s32.totalorder 1, %s19
    %p386 = scmp.lt.s32.totalorder %s19, 3
    %p387 = pnand %p385, %p386
    %p388 = pneg %p387
    // Predicated region
    $region69: #{vl_transformer_itm_forward.8} parent=5 // pred_check
      _
    $region70: #{vl_transformer_itm_forward.8} parent=5 // pred_check_branch
      %390 = sbr.rel (%p387) target = $region72
    $region71: #{vl_transformer_itm_forward.8} parent=5 // pred_region
      %s391 = ssub.s32 %s19, 1
      %p392 = scmp.lt.s32.totalorder %s24, 1
      %s393 = scalar_select %p392, %s24, 1
      %s394 = smul.addr %s393, 8
      %s395 = scalar_lea.vmem %s0, %s394
      %p396 = pneg %p45
      %p397 = pneg %p42
      %p398 = pneg %p66
      %p399 = pneg %p63
      %p400 = pneg %p87
      %p401 = pneg %p84
      %p402 = pneg %p108
      %p403 = pneg %p105
      %p404 = pneg %p129
      %p405 = pneg %p126
      %p406 = pneg %p150
      %p407 = pneg %p147
      %p408 = pneg %p171
      %p409 = pneg %p168
      %p410 = pneg %p192
      %p411 = pneg %p189
      %p412 = pneg %p213
      %p413 = pneg %p210
      %p414 = pneg %p234
      %p415 = pneg %p231
      %p416 = pneg %p255
      %p417 = pneg %p252
      %p418 = pneg %p276
      %p419 = pneg %p273
      %p420 = pneg %p297
      %p421 = pneg %p294
      %p422 = pneg %p323
      %p423 = pneg %p320
      %p424 = scmp.lt.s32.totalorder %s24, 1
      %s425 = scalar_select %p424, %s24, 1
      %s426 = smul.addr %s425, 8
      %s427 = scalar_lea.vmem %s13, %s426
      %p428 = scmp.lt.s32.totalorder %s24, 1
      %s429 = scalar_select %p428, %s24, 1
      %s430 = smul.addr %s429, 8
      %s431 = scalar_lea.vmem %s0, %s430
      %p432 = scmp.lt.s32.totalorder %s24, 1
      %s433 = scalar_select %p432, %s24, 1
      %s434 = smul.addr %s433, 8
      %s435 = scalar_lea.vmem %s13, %s434
      %v437 = vld [vmem:[%s431] sm:$0x1f]
      %v438 = vld [vmem:[%s1] sm:$0x1]
      %v439 = vld [vmem:[%s2] sm:$0x1]
      %vm440 = vcmask 1044480
      %v441 = vsel %vm440, %v437, 0.0
      %442 = vadd.xlane.f32.xlu0 %v441
      %v443 = vpop.xlane.xlu0 %442
      %v444 = vrcp.pop 128.0
      %v445 = vmul.f32 %v443, %v444
      %v446 = vsub.f32 %v437, %v445
      %v447 = vmul.f32 %v446, %v446
      %v448 = vsel %vm440, %v447, 0.0
      %449 = vadd.xlane.f32.xlu0 %v448
      %v450 = vpop.xlane.xlu0 %449
      %v451 = vmul.f32 %v450, %v444
      %v452 = vadd.f32 %v451, 1e-06
      %v453 = vrsqrt.pop %v452
      %v454 = vmul.f32 %v446, %v453
      %v456 = vlaneseq
      %v457 = vshrl.u32 %v456, 7
      %v458 = vsub.s32 0, %v457
      %v459 = vrot.slane %v438, %v458
      %v461 = vmul.f32 %v454, %v459
      %v463 = vlaneseq
      %v464 = vshrl.u32 %v463, 7
      %v465 = vsub.s32 0, %v464
      %v466 = vrot.slane %v439, %v465
      %v468 = vadd.f32 %v461, %v466
      %v469 = vld [vmem:[%s3] sm:$0xff]
      %v470 = vld [vmem:[%s3 + $0x8] sm:$0xf]
      %v471 = vld [vmem:[%s3 + $0xc] sm:$0xff]
      %v472 = vld [vmem:[%s3 + $0x14] sm:$0xf]
      %v473 = vld [vmem:[%s3 + $0x18] sm:$0xff]
      %v474 = vld [vmem:[%s3 + $0x20] sm:$0xf]
      %v475 = vld [vmem:[%s3 + $0x24] sm:$0xff]
      %v476 = vld [vmem:[%s3 + $0x2c] sm:$0xf]
      %v477 = vld [vmem:[%s3 + $0x30] sm:$0xff]
      %v478 = vld [vmem:[%s3 + $0x38] sm:$0xf]
      %v479 = vld [vmem:[%s3 + $0x3c] sm:$0xff]
      %v480 = vld [vmem:[%s3 + $0x44] sm:$0xf]
      %v481 = vld [vmem:[%s3 + $0x48] sm:$0xff]
      %v482 = vld [vmem:[%s3 + $0x50] sm:$0xf]
      %v483 = vld [vmem:[%s3 + $0x54] sm:$0xff]
      %v484 = vld [vmem:[%s3 + $0x5c] sm:$0xf]
      %v485 = vld [vmem:[%s3 + $0x60] sm:$0xff]
      %v486 = vld [vmem:[%s3 + $0x68] sm:$0xf]
      %v487 = vld [vmem:[%s3 + $0x6c] sm:$0xff]
      %v488 = vld [vmem:[%s3 + $0x74] sm:$0xf]
      %v489 = vld [vmem:[%s3 + $0x78] sm:$0xff]
      %v490 = vld [vmem:[%s3 + $0x80] sm:$0xf]
      %v491 = vld [vmem:[%s3 + $0x84] sm:$0xff]
      %v492 = vld [vmem:[%s3 + $0x8c] sm:$0xf]
      %v493 = vld [vmem:[%s3 + $0x90] sm:$0xff]
      %v494 = vld [vmem:[%s3 + $0x98] sm:$0xf]
      %v495 = vld [vmem:[%s3 + $0x9c] sm:$0xff]
      %v496 = vld [vmem:[%s3 + $0xa4] sm:$0xf]
      %v497 = vld [vmem:[%s3 + $0xa8] sm:$0xff]
      %v498 = vld [vmem:[%s3 + $0xb0] sm:$0xf]
      %v499 = vld [vmem:[%s3 + $0xb4] sm:$0xff]
      %v500 = vld [vmem:[%s3 + $0xbc] sm:$0xf]
      %v501 = vld [vmem:[%s4] sm:$0x7]
      %v502 = vpack.c.bf16 %v468, %v468
      %v504 = vlaneseq
      %v505 = vshrl.u32 %v504, 7
      %v506 = vsub.s32 0, %v505
      %v507 = vrot.slane %v501, %v506
      %v508 = vlaneseq
      %v509 = vshrl.u32 %v508, 7
      %v510 = vsub.s32 1, %v509
      %v511 = vrot.slane %v501, %v510
      %v512 = vlaneseq
      %v513 = vshrl.u32 %v512, 7
      %v514 = vsub.s32 2, %v513
      %v515 = vrot.slane %v501, %v514
      %v551 = vunpack.c.l.b16 %v469
      %v552 = vunpack.c.h.b16 %v469
      %v553 = vunpack.c.l.b16 %v470
      %v554 = vunpack.c.l.b16 %v471
      %v555 = vunpack.c.h.b16 %v471
      %v556 = vunpack.c.l.b16 %v472
      %v557 = vunpack.c.l.b16 %v473
      %v558 = vunpack.c.h.b16 %v473
      %v559 = vunpack.c.l.b16 %v474
      %v560 = vunpack.c.l.b16 %v475
      %v561 = vunpack.c.h.b16 %v475
      %v562 = vunpack.c.l.b16 %v476
      %v563 = vunpack.c.l.b16 %v477
      %v564 = vunpack.c.h.b16 %v477
      %v565 = vunpack.c.l.b16 %v478
      %v566 = vunpack.c.l.b16 %v479
      %v567 = vunpack.c.h.b16 %v479
      %v568 = vunpack.c.l.b16 %v480
      %v569 = vunpack.c.l.b16 %v481
      %v570 = vunpack.c.h.b16 %v481
      %v571 = vunpack.c.l.b16 %v482
      %v572 = vunpack.c.l.b16 %v483
      %v573 = vunpack.c.h.b16 %v483
      %v574 = vunpack.c.l.b16 %v484
      %v575 = vunpack.c.l.b16 %v485
      %v576 = vunpack.c.h.b16 %v485
      %v577 = vunpack.c.l.b16 %v486
      %v578 = vunpack.c.l.b16 %v487
      %v579 = vunpack.c.h.b16 %v487
      %v580 = vunpack.c.l.b16 %v488
      %v581 = vunpack.c.l.b16 %v489
      %v582 = vunpack.c.h.b16 %v489
      %v583 = vunpack.c.l.b16 %v490
      %v584 = vunpack.c.l.b16 %v491
      %v585 = vunpack.c.h.b16 %v491
      %v586 = vunpack.c.l.b16 %v492
      %v587 = vunpack.c.l.b16 %v493
      %v588 = vunpack.c.h.b16 %v493
      %v589 = vunpack.c.l.b16 %v494
      %v590 = vunpack.c.l.b16 %v495
      %v591 = vunpack.c.h.b16 %v495
      %v592 = vunpack.c.l.b16 %v496
      %v593 = vunpack.c.l.b16 %v497
      %v594 = vunpack.c.h.b16 %v497
      %v595 = vunpack.c.l.b16 %v498
      %v596 = vunpack.c.l.b16 %v499
      %v597 = vunpack.c.h.b16 %v499
      %v598 = vunpack.c.l.b16 %v500
      %v599 = vpack.c.b16 %v554, %v551
      %v600 = vpack.c.b16 %v555, %v552
      %v601 = vpack.c.b16 %v556, %v553
      %v602 = vpack.c.b16 %v560, %v557
      %v603 = vpack.c.b16 %v561, %v558
      %v604 = vpack.c.b16 %v562, %v559
      %v605 = vpack.c.b16 %v566, %v563
      %v606 = vpack.c.b16 %v567, %v564
      %v607 = vpack.c.b16 %v568, %v565
      %v608 = vpack.c.b16 %v572, %v569
      %v609 = vpack.c.b16 %v573, %v570
      %v610 = vpack.c.b16 %v574, %v571
      %v611 = vpack.c.b16 %v578, %v575
      %v612 = vpack.c.b16 %v579, %v576
      %v613 = vpack.c.b16 %v580, %v577
      %v614 = vpack.c.b16 %v584, %v581
      %v615 = vpack.c.b16 %v585, %v582
      %v616 = vpack.c.b16 %v586, %v583
      %v617 = vpack.c.b16 %v590, %v587
      %v618 = vpack.c.b16 %v591, %v588
      %v619 = vpack.c.b16 %v592, %v589
      %v620 = vpack.c.b16 %v596, %v593
      %v621 = vpack.c.b16 %v597, %v594
      %v622 = vpack.c.b16 %v598, %v595
      %647 = vmatprep.subr.bf16.mxu0 %v621
      %648 = vmatpush1.bf16.msra.mxu0 %v620
      %649 = vmatprep.subr.bf16.mxu0 %v618
      %650 = vmatpush1.bf16.msra.mxu0 %v617
      %651 = vmatprep.subr.bf16.mxu0 %v615
      %652 = vmatpush1.bf16.msra.mxu0 %v614
      %653 = vmatprep.subr.bf16.mxu0 %v612
      %654 = vmatpush1.bf16.msra.mxu0 %v611
      %655 = vmatprep.subr.bf16.mxu0 %v609
      %656 = vmatpush1.bf16.msra.mxu0 %v608
      %657 = vmatprep.subr.bf16.mxu0 %v606
      %658 = vmatpush1.bf16.msra.mxu0 %v605
      %659 = vmatprep.subr.bf16.mxu0 %v603
      %660 = vmatpush1.bf16.msra.mxu0 %v602
      %661 = vmatprep.subr.bf16.mxu0 %v600
      %662 = vmatpush1.bf16.msra.mxu0 %v599
      %663 = vmatprep.subr.bf16.mxu0 0
      %664 = vmatpush2.bf16.msra.mxu0 0
      %665 = vmatprep.subr.bf16.mxu0 0
      %666 = vmatpush2.bf16.msra.mxu0 0
      %667 = vmatprep.subr.bf16.mxu0 0
      %668 = vmatpush2.bf16.msra.mxu0 0
      %669 = vmatprep.subr.bf16.mxu0 0
      %670 = vmatpush2.bf16.msra.mxu0 0
      %671 = vmatprep.subr.bf16.mxu0 0
      %672 = vmatpush2.bf16.msra.mxu0 0
      %673 = vmatprep.subr.bf16.mxu0 0
      %674 = vmatpush2.bf16.msra.mxu0 0
      %675 = vmatprep.subr.bf16.mxu0 0
      %676 = vmatpush2.bf16.msra.mxu0 0
      %677 = vmatprep.subr.bf16.mxu0 0
      %678 = vmatpush2.bf16.msra.mxu0 0
      %679 = vmatprep.mubr.bf16.mxu0 0
      %680 = vmatmul.mubr.bf16.gmra.mxu0 %v502
      %v681 = vpop.f32.mrf.mxu0
      %v682 = vadd.f32 %v507, %v681
      %v683 = vpop.f32.mrf.mxu0
      %v684 = vadd.f32 %v511, %v683
      %v685 = vpop.f32.mrf.mxu0
      %v686 = vpop.f32.mrf.mxu0
      %687 = vdwg.mxu0
      %688 = vmatprep.subr.bf16.mxu0 0
      %689 = vmatpush1.bf16.msra.mxu0 %v622
      %690 = vmatprep.subr.bf16.mxu0 0
      %691 = vmatpush1.bf16.msra.mxu0 %v619
      %692 = vmatprep.subr.bf16.mxu0 0
      %693 = vmatpush1.bf16.msra.mxu0 %v616
      %694 = vmatprep.subr.bf16.mxu0 0
      %695 = vmatpush1.bf16.msra.mxu0 %v613
      %696 = vmatprep.subr.bf16.mxu0 0
      %697 = vmatpush1.bf16.msra.mxu0 %v610
      %698 = vmatprep.subr.bf16.mxu0 0
      %699 = vmatpush1.bf16.msra.mxu0 %v607
      %700 = vmatprep.subr.bf16.mxu0 0
      %701 = vmatpush1.bf16.msra.mxu0 %v604
      %702 = vmatprep.subr.bf16.mxu0 0
      %703 = vmatpush1.bf16.msra.mxu0 %v601
      %704 = vmatprep.subr.bf16.mxu0 0
      %705 = vmatpush2.bf16.msra.mxu0 0
      %706 = vmatprep.subr.bf16.mxu0 0
      %707 = vmatpush2.bf16.msra.mxu0 0
      %708 = vmatprep.subr.bf16.mxu0 0
      %709 = vmatpush2.bf16.msra.mxu0 0
      %710 = vmatprep.subr.bf16.mxu0 0
      %711 = vmatpush2.bf16.msra.mxu0 0
      %712 = vmatprep.subr.bf16.mxu0 0
      %713 = vmatpush2.bf16.msra.mxu0 0
      %714 = vmatprep.subr.bf16.mxu0 0
      %715 = vmatpush2.bf16.msra.mxu0 0
      %716 = vmatprep.subr.bf16.mxu0 0
      %717 = vmatpush2.bf16.msra.mxu0 0
      %718 = vmatprep.subr.bf16.mxu0 0
      %719 = vmatpush2.bf16.msra.mxu0 0
      %720 = vmatprep.mubr.bf16.mxu0 0
      %721 = vmatmul.mubr.bf16.gmra.mxu0 %v502
      %v722 = vpop.f32.mrf.mxu0
      %v723 = vadd.f32 %v515, %v722
      %v724 = vpop.f32.mrf.mxu0
      %v725 = vpop.f32.mrf.mxu0
      %v726 = vpop.f32.mrf.mxu0
      %727 = vdwg.mxu0
      %v728 = vld [vmem:[%s5] sm:$0xf]
      %v729 = vld [vmem:[%s5 + $0x4] sm:$0xf]
      %v730 = vld [vmem:[%s5 + $0x8] sm:$0xf]
      %v731 = vld [vmem:[%s5 + $0xc] sm:$0xf]
      %v732 = vld [vmem:[%s5 + $0x10] sm:$0xf]
      %v733 = vld [vmem:[%s5 + $0x14] sm:$0xf]
      %v734 = vld [vmem:[%s5 + $0x18] sm:$0xf]
      %v735 = vld [vmem:[%s5 + $0x1c] sm:$0xf]
      %v736 = vld [vmem:[%s5 + $0x20] sm:$0xf]
      %v737 = vld [vmem:[%s5 + $0x24] sm:$0xf]
      %v738 = vld [vmem:[%s5 + $0x28] sm:$0xf]
      %v739 = vld [vmem:[%s5 + $0x2c] sm:$0xf]
      %v740 = vld [vmem:[%s5 + $0x30] sm:$0xf]
      %v741 = vld [vmem:[%s5 + $0x34] sm:$0xf]
      %v742 = vld [vmem:[%s5 + $0x38] sm:$0xf]
      %v743 = vld [vmem:[%s5 + $0x3c] sm:$0xf]
      %v744 = vpack.c.bf16 %v682, %v682
      %v745 = vpack.c.bf16 %v684, %v684
      %v746 = vpack.c.bf16 %v723, %v723
      %vm747 = vcmask 261120
      %v749 = vsel %vm747, %v744, 0
      %v752 = vsel %vm747, %v745, 0
      %754 = vmatprep.subr.bf16.mxu0 0
      %755 = vmatpush1.bf16.xpose.msra.mxu0 0
      %756 = vmatprep.subr.bf16.mxu0 0
      %757 = vmatpush1.bf16.xpose.msra.mxu0 0
      %758 = vmatprep.subr.bf16.mxu0 0
      %759 = vmatpush1.bf16.xpose.msra.mxu0 0
      %760 = vmatprep.subr.bf16.mxu0 0
      %761 = vmatpush1.bf16.xpose.msra.mxu0 0
      %762 = vmatprep.subr.bf16.mxu0 0
      %763 = vmatpush1.bf16.xpose.msra.mxu0 0
      %764 = vmatprep.subr.bf16.mxu0 0
      %765 = vmatpush1.bf16.xpose.msra.mxu0 0
      %766 = vmatprep.subr.bf16.mxu0 0
      %767 = vmatpush1.bf16.xpose.msra.mxu0 0
      %768 = vmatprep.subr.bf16.mxu0 0
      %769 = vmatpush1.bf16.xpose.msra.mxu0 %v752
      %770 = vmatprep.subr.bf16.mxu0 0
      %771 = vmatpush2.bf16.xpose.msra.mxu0 0
      %772 = vmatprep.subr.bf16.mxu0 0
      %773 = vmatpush2.bf16.xpose.msra.mxu0 0
      %774 = vmatprep.subr.bf16.mxu0 0
      %775 = vmatpush2.bf16.xpose.msra.mxu0 0
      %776 = vmatprep.subr.bf16.mxu0 0
      %777 = vmatpush2.bf16.xpose.msra.mxu0 0
      %778 = vmatprep.subr.bf16.mxu0 0
      %779 = vmatpush2.bf16.xpose.msra.mxu0 0
      %780 = vmatprep.subr.bf16.mxu0 0
      %781 = vmatpush2.bf16.xpose.msra.mxu0 0
      %782 = vmatprep.subr.bf16.mxu0 0
      %783 = vmatpush2.bf16.xpose.msra.mxu0 0
      %784 = vmatprep.subr.bf16.mxu0 0
      %785 = vmatpush2.bf16.xpose.msra.mxu0 0
      %786 = vmatprep.mubr.bf16.mxu0 0
      %787 = vmatmul.mubr.bf16.gmra.mxu0 %v749
      %v788 = vpop.f32.mrf.mxu0
      %v789 = vadd.f32 0.0, %v788
      %v790 = vpop.f32.mrf.mxu0
      %v791 = vpop.f32.mrf.mxu0
      %v792 = vpop.f32.mrf.mxu0
      %793 = vdwg.mxu0
      %v794 = vmul.f32 %v789, 0.17677669
      %vm795 = vcmask 36864
      %v796 = vsel %vm795, %v794, -inf
      %797 = vmax.xlane.f32.xlu0 %v796
      %v798 = vpop.xlane.xlu0 %797
      %v799 = vsub.f32 %v794, %v798
      %v800 = vmul.f32 %v799, 1.442695
      %v801 = vpow.pop %v800
      %v802 = vsel %vm795, %v801, 0.0
      %803 = vadd.xlane.f32.xlu0 %v802
      %v804 = vpop.xlane.xlu0 %803
      %v805 = vrcp.pop %v804
      %v806 = vpack.c.bf16 %v801, %v801
      %vm807 = vcmask 39936
      %v809 = vsel %vm807, %v806, 0
      %vm811 = vcmask 1041408
      %vm812 = vcmask 1042432
      %v813 = vsel %vm811, 4294967295, 65535
      %v814 = vsel %vm812, %v813, 0
      %v816 = vand.u32 %v746, %v814
      %818 = vmatprep.subr.bf16.mxu0 0
      %819 = vmatpush1.bf16.msra.mxu0 0
      %820 = vmatprep.subr.bf16.mxu0 0
      %821 = vmatpush1.bf16.msra.mxu0 0
      %822 = vmatprep.subr.bf16.mxu0 0
      %823 = vmatpush1.bf16.msra.mxu0 0
      %824 = vmatprep.subr.bf16.mxu0 0
      %825 = vmatpush1.bf16.msra.mxu0 0
      %826 = vmatprep.subr.bf16.mxu0 0
      %827 = vmatpush1.bf16.msra.mxu0 0
      %828 = vmatprep.subr.bf16.mxu0 0
      %829 = vmatpush1.bf16.msra.mxu0 0
      %830 = vmatprep.subr.bf16.mxu0 0
      %831 = vmatpush1.bf16.msra.mxu0 0
      %832 = vmatprep.subr.bf16.mxu0 0
      %833 = vmatpush1.bf16.msra.mxu0 %v816
      %834 = vmatprep.subr.bf16.mxu0 0
      %835 = vmatpush2.bf16.msra.mxu0 0
      %836 = vmatprep.subr.bf16.mxu0 0
      %837 = vmatpush2.bf16.msra.mxu0 0
      %838 = vmatprep.subr.bf16.mxu0 0
      %839 = vmatpush2.bf16.msra.mxu0 0
      %840 = vmatprep.subr.bf16.mxu0 0
      %841 = vmatpush2.bf16.msra.mxu0 0
      %842 = vmatprep.subr.bf16.mxu0 0
      %843 = vmatpush2.bf16.msra.mxu0 0
      %844 = vmatprep.subr.bf16.mxu0 0
      %845 = vmatpush2.bf16.msra.mxu0 0
      %846 = vmatprep.subr.bf16.mxu0 0
      %847 = vmatpush2.bf16.msra.mxu0 0
      %848 = vmatprep.subr.bf16.mxu0 0
      %849 = vmatpush2.bf16.msra.mxu0 0
      %850 = vmatprep.mubr.bf16.mxu0 0
      %851 = vmatmul.mubr.bf16.gmra.mxu0 %v809
      %v852 = vpop.f32.mrf.mxu0
      %v853 = vadd.f32 0.0, %v852
      %v854 = vpop.f32.mrf.mxu0
      %v855 = vpop.f32.mrf.mxu0
      %v856 = vpop.f32.mrf.mxu0
      %857 = vdwg.mxu0
      %v858 = vmul.f32 %v853, %v805
      %v859 = vpack.c.bf16 %v858, %v858
      %861 = vrot.lane.b32.xlu0 %v744, 96
      %v862 = vpop.permute.xlu0 %861
      %864 = vrot.lane.b32.xlu0 %v745, 96
      %v865 = vpop.permute.xlu0 %864
      %v867 = vsel %vm747, %v862, 0
      %v870 = vsel %vm747, %v865, 0
      %872 = vmatprep.subr.bf16.mxu0 0
      %873 = vmatpush1.bf16.xpose.msra.mxu0 0
      %874 = vmatprep.subr.bf16.mxu0 0
      %875 = vmatpush1.bf16.xpose.msra.mxu0 0
      %876 = vmatprep.subr.bf16.mxu0 0
      %877 = vmatpush1.bf16.xpose.msra.mxu0 0
      %878 = vmatprep.subr.bf16.mxu0 0
      %879 = vmatpush1.bf16.xpose.msra.mxu0 0
      %880 = vmatprep.subr.bf16.mxu0 0
      %881 = vmatpush1.bf16.xpose.msra.mxu0 0
      %882 = vmatprep.subr.bf16.mxu0 0
      %883 = vmatpush1.bf16.xpose.msra.mxu0 0
      %884 = vmatprep.subr.bf16.mxu0 0
      %885 = vmatpush1.bf16.xpose.msra.mxu0 0
      %886 = vmatprep.subr.bf16.mxu0 0
      %887 = vmatpush1.bf16.xpose.msra.mxu0 %v870
      %888 = vmatprep.subr.bf16.mxu0 0
      %889 = vmatpush2.bf16.xpose.msra.mxu0 0
      %890 = vmatprep.subr.bf16.mxu0 0
      %891 = vmatpush2.bf16.xpose.msra.mxu0 0
      %892 = vmatprep.subr.bf16.mxu0 0
      %893 = vmatpush2.bf16.xpose.msra.mxu0 0
      %894 = vmatprep.subr.bf16.mxu0 0
      %895 = vmatpush2.bf16.xpose.msra.mxu0 0
      %896 = vmatprep.subr.bf16.mxu0 0
      %897 = vmatpush2.bf16.xpose.msra.mxu0 0
      %898 = vmatprep.subr.bf16.mxu0 0
      %899 = vmatpush2.bf16.xpose.msra.mxu0 0
      %900 = vmatprep.subr.bf16.mxu0 0
      %901 = vmatpush2.bf16.xpose.msra.mxu0 0
      %902 = vmatprep.subr.bf16.mxu0 0
      %903 = vmatpush2.bf16.xpose.msra.mxu0 0
      %904 = vmatprep.mubr.bf16.mxu0 0
      %905 = vmatmul.mubr.bf16.gmra.mxu0 %v867
      %v906 = vpop.f32.mrf.mxu0
      %v907 = vadd.f32 0.0, %v906
      %v908 = vpop.f32.mrf.mxu0
      %v909 = vpop.f32.mrf.mxu0
      %v910 = vpop.f32.mrf.mxu0
      %911 = vdwg.mxu0
      %v912 = vmul.f32 %v907, 0.17677669
      %v913 = vsel %vm795, %v912, -inf
      %914 = vmax.xlane.f32.xlu0 %v913
      %v915 = vpop.xlane.xlu0 %914
      %v916 = vsub.f32 %v912, %v915
      %v917 = vmul.f32 %v916, 1.442695
      %v918 = vpow.pop %v917
      %v919 = vsel %vm795, %v918, 0.0
      %920 = vadd.xlane.f32.xlu0 %v919
      %v921 = vpop.xlane.xlu0 %920
      %v922 = vrcp.pop %v921
      %v923 = vpack.c.bf16 %v918, %v918
      %925 = vrot.lane.b32.xlu0 %v746, 96
      %v926 = vpop.permute.xlu0 %925
      %v928 = vsel %vm807, %v923, 0
      %v931 = vand.u32 %v926, %v814
      %933 = vmatprep.subr.bf16.mxu0 0
      %934 = vmatpush1.bf16.msra.mxu0 0
      %935 = vmatprep.subr.bf16.mxu0 0
      %936 = vmatpush1.bf16.msra.mxu0 0
      %937 = vmatprep.subr.bf16.mxu0 0
      %938 = vmatpush1.bf16.msra.mxu0 0
      %939 = vmatprep.subr.bf16.mxu0 0
      %940 = vmatpush1.bf16.msra.mxu0 0
      %941 = vmatprep.subr.bf16.mxu0 0
      %942 = vmatpush1.bf16.msra.mxu0 0
      %943 = vmatprep.subr.bf16.mxu0 0
      %944 = vmatpush1.bf16.msra.mxu0 0
      %945 = vmatprep.subr.bf16.mxu0 0
      %946 = vmatpush1.bf16.msra.mxu0 0
      %947 = vmatprep.subr.bf16.mxu0 0
      %948 = vmatpush1.bf16.msra.mxu0 %v931
      %949 = vmatprep.subr.bf16.mxu0 0
      %950 = vmatpush2.bf16.msra.mxu0 0
      %951 = vmatprep.subr.bf16.mxu0 0
      %952 = vmatpush2.bf16.msra.mxu0 0
      %953 = vmatprep.subr.bf16.mxu0 0
      %954 = vmatpush2.bf16.msra.mxu0 0
      %955 = vmatprep.subr.bf16.mxu0 0
      %956 = vmatpush2.bf16.msra.mxu0 0
      %957 = vmatprep.subr.bf16.mxu0 0
      %958 = vmatpush2.bf16.msra.mxu0 0
      %959 = vmatprep.subr.bf16.mxu0 0
      %960 = vmatpush2.bf16.msra.mxu0 0
      %961 = vmatprep.subr.bf16.mxu0 0
      %962 = vmatpush2.bf16.msra.mxu0 0
      %963 = vmatprep.subr.bf16.mxu0 0
      %964 = vmatpush2.bf16.msra.mxu0 0
      %965 = vmatprep.mubr.bf16.mxu0 0
      %966 = vmatmul.mubr.bf16.gmra.mxu0 %v928
      %v967 = vpop.f32.mrf.mxu0
      %v968 = vadd.f32 0.0, %v967
      %v969 = vpop.f32.mrf.mxu0
      %v970 = vpop.f32.mrf.mxu0
      %v971 = vpop.f32.mrf.mxu0
      %972 = vdwg.mxu0
      %v973 = vmul.f32 %v968, %v922
      %v974 = vpack.c.bf16 %v973, %v973
      %v979 = vunpack.c.l.b16 %v732
      %v980 = vunpack.c.l.b16 %v733
      %v981 = vunpack.c.l.b16 %v734
      %v982 = vunpack.c.l.b16 %v735
      %v983 = vpack.c.b16 %v980, %v979
      %v984 = vpack.c.b16 %v982, %v981
      %v988 = vsel %vm747, %v974, 0
      %990 = vmatprep.subr.bf16.mxu0 0
      %991 = vmatpush1.bf16.msra.mxu0 0
      %992 = vmatprep.subr.bf16.mxu0 0
      %993 = vmatpush1.bf16.msra.mxu0 0
      %994 = vmatprep.subr.bf16.mxu0 0
      %995 = vmatpush1.bf16.msra.mxu0 0
      %996 = vmatprep.subr.bf16.mxu0 0
      %997 = vmatpush1.bf16.msra.mxu0 0
      %998 = vmatprep.subr.bf16.mxu0 0
      %999 = vmatpush1.bf16.msra.mxu0 0
      %1000 = vmatprep.subr.bf16.mxu0 0
      %1001 = vmatpush1.bf16.msra.mxu0 0
      %1002 = vmatprep.subr.bf16.mxu0 0
      %1003 = vmatpush1.bf16.msra.mxu0 %v984
      %1004 = vmatprep.subr.bf16.mxu0 0
      %1005 = vmatpush1.bf16.msra.mxu0 %v983
      %1006 = vmatprep.subr.bf16.mxu0 0
      %1007 = vmatpush2.bf16.msra.mxu0 0
      %1008 = vmatprep.subr.bf16.mxu0 0
      %1009 = vmatpush2.bf16.msra.mxu0 0
      %1010 = vmatprep.subr.bf16.mxu0 0
      %1011 = vmatpush2.bf16.msra.mxu0 0
      %1012 = vmatprep.subr.bf16.mxu0 0
      %1013 = vmatpush2.bf16.msra.mxu0 0
      %1014 = vmatprep.subr.bf16.mxu0 0
      %1015 = vmatpush2.bf16.msra.mxu0 0
      %1016 = vmatprep.subr.bf16.mxu0 0
      %1017 = vmatpush2.bf16.msra.mxu0 0
      %1018 = vmatprep.subr.bf16.mxu0 0
      %1019 = vmatpush2.bf16.msra.mxu0 0
      %1020 = vmatprep.subr.bf16.mxu0 0
      %1021 = vmatpush2.bf16.msra.mxu0 0
      %1022 = vmatprep.mubr.bf16.mxu0 0
      %1023 = vmatmul.mubr.bf16.gmra.mxu0 %v988
      %v1024 = vpop.f32.mrf.mxu0
      %v1025 = vadd.f32 0.0, %v1024
      %v1026 = vpop.f32.mrf.mxu0
      %v1027 = vpop.f32.mrf.mxu0
      %v1028 = vpop.f32.mrf.mxu0
      %1029 = vdwg.mxu0
      %v1034 = vunpack.c.l.b16 %v728
      %v1035 = vunpack.c.l.b16 %v729
      %v1036 = vunpack.c.l.b16 %v730
      %v1037 = vunpack.c.l.b16 %v731
      %v1038 = vpack.c.b16 %v1035, %v1034
      %v1039 = vpack.c.b16 %v1037, %v1036
      %v1043 = vsel %vm747, %v859, 0
      %1045 = vmatprep.subr.bf16.mxu0 0
      %1046 = vmatpush1.bf16.msra.mxu0 0
      %1047 = vmatprep.subr.bf16.mxu0 0
      %1048 = vmatpush1.bf16.msra.mxu0 0
      %1049 = vmatprep.subr.bf16.mxu0 0
      %1050 = vmatpush1.bf16.msra.mxu0 0
      %1051 = vmatprep.subr.bf16.mxu0 0
      %1052 = vmatpush1.bf16.msra.mxu0 0
      %1053 = vmatprep.subr.bf16.mxu0 0
      %1054 = vmatpush1.bf16.msra.mxu0 0
      %1055 = vmatprep.subr.bf16.mxu0 0
      %1056 = vmatpush1.bf16.msra.mxu0 0
      %1057 = vmatprep.subr.bf16.mxu0 0
      %1058 = vmatpush1.bf16.msra.mxu0 %v1039
      %1059 = vmatprep.subr.bf16.mxu0 0
      %1060 = vmatpush1.bf16.msra.mxu0 %v1038
      %1061 = vmatprep.subr.bf16.mxu0 0
      %1062 = vmatpush2.bf16.msra.mxu0 0
      %1063 = vmatprep.subr.bf16.mxu0 0
      %1064 = vmatpush2.bf16.msra.mxu0 0
      %1065 = vmatprep.subr.bf16.mxu0 0
      %1066 = vmatpush2.bf16.msra.mxu0 0
      %1067 = vmatprep.subr.bf16.mxu0 0
      %1068 = vmatpush2.bf16.msra.mxu0 0
      %1069 = vmatprep.subr.bf16.mxu0 0
      %1070 = vmatpush2.bf16.msra.mxu0 0
      %1071 = vmatprep.subr.bf16.mxu0 0
      %1072 = vmatpush2.bf16.msra.mxu0 0
      %1073 = vmatprep.subr.bf16.mxu0 0
      %1074 = vmatpush2.bf16.msra.mxu0 0
      %1075 = vmatprep.subr.bf16.mxu0 0
      %1076 = vmatpush2.bf16.msra.mxu0 0
      %1077 = vmatprep.mubr.bf16.mxu0 0
      %1078 = vmatmul.mubr.bf16.gmra.mxu0 %v1043
      %v1079 = vpop.f32.mrf.mxu0
      %v1080 = vadd.f32 %v1025, %v1079
      %v1081 = vpop.f32.mrf.mxu0
      %v1082 = vpop.f32.mrf.mxu0
      %v1083 = vpop.f32.mrf.mxu0
      %1084 = vdwg.mxu0
      %1085 = vrot.lane.b32.xlu0 %v744, 64
      %v1086 = vpop.permute.xlu0 %1085
      %1087 = vrot.lane.b32.xlu0 %v745, 64
      %v1088 = vpop.permute.xlu0 %1087
      %v1090 = vsel %vm747, %v1086, 0
      %v1093 = vsel %vm747, %v1088, 0
      %1095 = vmatprep.subr.bf16.mxu0 0
      %1096 = vmatpush1.bf16.xpose.msra.mxu0 0
      %1097 = vmatprep.subr.bf16.mxu0 0
      %1098 = vmatpush1.bf16.xpose.msra.mxu0 0
      %1099 = vmatprep.subr.bf16.mxu0 0
      %1100 = vmatpush1.bf16.xpose.msra.mxu0 0
      %1101 = vmatprep.subr.bf16.mxu0 0
      %1102 = vmatpush1.bf16.xpose.msra.mxu0 0
      %1103 = vmatprep.subr.bf16.mxu0 0
      %1104 = vmatpush1.bf16.xpose.msra.mxu0 0
      %1105 = vmatprep.subr.bf16.mxu0 0
      %1106 = vmatpush1.bf16.xpose.msra.mxu0 0
      %1107 = vmatprep.subr.bf16.mxu0 0
      %1108 = vmatpush1.bf16.xpose.msra.mxu0 0
      %1109 = vmatprep.subr.bf16.mxu0 0
      %1110 = vmatpush1.bf16.xpose.msra.mxu0 %v1093
      %1111 = vmatprep.subr.bf16.mxu0 0
      %1112 = vmatpush2.bf16.xpose.msra.mxu0 0
      %1113 = vmatprep.subr.bf16.mxu0 0
      %1114 = vmatpush2.bf16.xpose.msra.mxu0 0
      %1115 = vmatprep.subr.bf16.mxu0 0
      %1116 = vmatpush2.bf16.xpose.msra.mxu0 0
      %1117 = vmatprep.subr.bf16.mxu0 0
      %1118 = vmatpush2.bf16.xpose.msra.mxu0 0
      %1119 = vmatprep.subr.bf16.mxu0 0
      %1120 = vmatpush2.bf16.xpose.msra.mxu0 0
      %1121 = vmatprep.subr.bf16.mxu0 0
      %1122 = vmatpush2.bf16.xpose.msra.mxu0 0
      %1123 = vmatprep.subr.bf16.mxu0 0
      %1124 = vmatpush2.bf16.xpose.msra.mxu0 0
      %1125 = vmatprep.subr.bf16.mxu0 0
      %1126 = vmatpush2.bf16.xpose.msra.mxu0 0
      %1127 = vmatprep.mubr.bf16.mxu0 0
      %1128 = vmatmul.mubr.bf16.gmra.mxu0 %v1090
      %v1129 = vpop.f32.mrf.mxu0
      %v1130 = vadd.f32 0.0, %v1129
      %v1131 = vpop.f32.mrf.mxu0
      %v1132 = vpop.f32.mrf.mxu0
      %v1133 = vpop.f32.mrf.mxu0
      %1134 = vdwg.mxu0
      %v1135 = vmul.f32 %v1130, 0.17677669
      %v1136 = vsel %vm795, %v1135, -inf
      %1137 = vmax.xlane.f32.xlu0 %v1136
      %v1138 = vpop.xlane.xlu0 %1137
      %v1139 = vsub.f32 %v1135, %v1138
      %v1140 = vmul.f32 %v1139, 1.442695
      %v1141 = vpow.pop %v1140
      %v1142 = vsel %vm795, %v1141, 0.0
      %1143 = vadd.xlane.f32.xlu0 %v1142
      %v1144 = vpop.xlane.xlu0 %1143
      %v1145 = vrcp.pop %v1144
      %v1146 = vpack.c.bf16 %v1141, %v1141
      %1147 = vrot.lane.b32.xlu0 %v746, 64
      %v1148 = vpop.permute.xlu0 %1147
      %v1150 = vsel %vm807, %v1146, 0
      %v1153 = vand.u32 %v1148, %v814
      %1155 = vmatprep.subr.bf16.mxu0 0
      %1156 = vmatpush1.bf16.msra.mxu0 0
      %1157 = vmatprep.subr.bf16.mxu0 0
      %1158 = vmatpush1.bf16.msra.mxu0 0
      %1159 = vmatprep.subr.bf16.mxu0 0
      %1160 = vmatpush1.bf16.msra.mxu0 0
      %1161 = vmatprep.subr.bf16.mxu0 0
      %1162 = vmatpush1.bf16.msra.mxu0 0
      %1163 = vmatprep.subr.bf16.mxu0 0
      %1164 = vmatpush1.bf16.msra.mxu0 0
      %1165 = vmatprep.subr.bf16.mxu0 0
      %1166 = vmatpush1.bf16.msra.mxu0 0
      %1167 = vmatprep.subr.bf16.mxu0 0
      %1168 = vmatpush1.bf16.msra.mxu0 0
      %1169 = vmatprep.subr.bf16.mxu0 0
      %1170 = vmatpush1.bf16.msra.mxu0 %v1153
      %1171 = vmatprep.subr.bf16.mxu0 0
      %1172 = vmatpush2.bf16.msra.mxu0 0
      %1173 = vmatprep.subr.bf16.mxu0 0
      %1174 = vmatpush2.bf16.msra.mxu0 0
      %1175 = vmatprep.subr.bf16.mxu0 0
      %1176 = vmatpush2.bf16.msra.mxu0 0
      %1177 = vmatprep.subr.bf16.mxu0 0
      %1178 = vmatpush2.bf16.msra.mxu0 0
      %1179 = vmatprep.subr.bf16.mxu0 0
      %1180 = vmatpush2.bf16.msra.mxu0 0
      %1181 = vmatprep.subr.bf16.mxu0 0
      %1182 = vmatpush2.bf16.msra.mxu0 0
      %1183 = vmatprep.subr.bf16.mxu0 0
      %1184 = vmatpush2.bf16.msra.mxu0 0
      %1185 = vmatprep.subr.bf16.mxu0 0
      %1186 = vmatpush2.bf16.msra.mxu0 0
      %1187 = vmatprep.mubr.bf16.mxu0 0
      %1188 = vmatmul.mubr.bf16.gmra.mxu0 %v1150
      %v1189 = vpop.f32.mrf.mxu0
      %v1190 = vadd.f32 0.0, %v1189
      %v1191 = vpop.f32.mrf.mxu0
      %v1192 = vpop.f32.mrf.mxu0
      %v1193 = vpop.f32.mrf.mxu0
      %1194 = vdwg.mxu0
      %v1195 = vmul.f32 %v1190, %v1145
      %v1196 = vpack.c.bf16 %v1195, %v1195
      %v1201 = vunpack.c.l.b16 %v736
      %v1202 = vunpack.c.l.b16 %v737
      %v1203 = vunpack.c.l.b16 %v738
      %v1204 = vunpack.c.l.b16 %v739
      %v1205 = vpack.c.b16 %v1202, %v1201
      %v1206 = vpack.c.b16 %v1204, %v1203
      %v1210 = vsel %vm747, %v1196, 0
      %1212 = vmatprep.subr.bf16.mxu0 0
      %1213 = vmatpush1.bf16.msra.mxu0 0
      %1214 = vmatprep.subr.bf16.mxu0 0
      %1215 = vmatpush1.bf16.msra.mxu0 0
      %1216 = vmatprep.subr.bf16.mxu0 0
      %1217 = vmatpush1.bf16.msra.mxu0 0
      %1218 = vmatprep.subr.bf16.mxu0 0
      %1219 = vmatpush1.bf16.msra.mxu0 0
      %1220 = vmatprep.subr.bf16.mxu0 0
      %1221 = vmatpush1.bf16.msra.mxu0 0
      %1222 = vmatprep.subr.bf16.mxu0 0
      %1223 = vmatpush1.bf16.msra.mxu0 0
      %1224 = vmatprep.subr.bf16.mxu0 0
      %1225 = vmatpush1.bf16.msra.mxu0 %v1206
      %1226 = vmatprep.subr.bf16.mxu0 0
      %1227 = vmatpush1.bf16.msra.mxu0 %v1205
      %1228 = vmatprep.subr.bf16.mxu0 0
      %1229 = vmatpush2.bf16.msra.mxu0 0
      %1230 = vmatprep.subr.bf16.mxu0 0
      %1231 = vmatpush2.bf16.msra.mxu0 0
      %1232 = vmatprep.subr.bf16.mxu0 0
      %1233 = vmatpush2.bf16.msra.mxu0 0
      %1234 = vmatprep.subr.bf16.mxu0 0
      %1235 = vmatpush2.bf16.msra.mxu0 0
      %1236 = vmatprep.subr.bf16.mxu0 0
      %1237 = vmatpush2.bf16.msra.mxu0 0
      %1238 = vmatprep.subr.bf16.mxu0 0
      %1239 = vmatpush2.bf16.msra.mxu0 0
      %1240 = vmatprep.subr.bf16.mxu0 0
      %1241 = vmatpush2.bf16.msra.mxu0 0
      %1242 = vmatprep.subr.bf16.mxu0 0
      %1243 = vmatpush2.bf16.msra.mxu0 0
      %1244 = vmatprep.mubr.bf16.mxu0 0
      %1245 = vmatmul.mubr.bf16.gmra.mxu0 %v1210
      %v1246 = vpop.f32.mrf.mxu0
      %v1247 = vadd.f32 0.0, %v1246
      %v1248 = vpop.f32.mrf.mxu0
      %v1249 = vpop.f32.mrf.mxu0
      %v1250 = vpop.f32.mrf.mxu0
      %1251 = vdwg.mxu0
      %v1252 = vadd.f32 %v1080, %v1247
      %1253 = vrot.lane.b32.xlu0 %v744, 32
      %v1254 = vpop.permute.xlu0 %1253
      %1255 = vrot.lane.b32.xlu0 %v745, 32
      %v1256 = vpop.permute.xlu0 %1255
      %v1258 = vsel %vm747, %v1254, 0
      %v1261 = vsel %vm747, %v1256, 0
      %1263 = vmatprep.subr.bf16.mxu0 0
      %1264 = vmatpush1.bf16.xpose.msra.mxu0 0
      %1265 = vmatprep.subr.bf16.mxu0 0
      %1266 = vmatpush1.bf16.xpose.msra.mxu0 0
      %1267 = vmatprep.subr.bf16.mxu0 0
      %1268 = vmatpush1.bf16.xpose.msra.mxu0 0
      %1269 = vmatprep.subr.bf16.mxu0 0
      %1270 = vmatpush1.bf16.xpose.msra.mxu0 0
      %1271 = vmatprep.subr.bf16.mxu0 0
      %1272 = vmatpush1.bf16.xpose.msra.mxu0 0
      %1273 = vmatprep.subr.bf16.mxu0 0
      %1274 = vmatpush1.bf16.xpose.msra.mxu0 0
      %1275 = vmatprep.subr.bf16.mxu0 0
      %1276 = vmatpush1.bf16.xpose.msra.mxu0 0
      %1277 = vmatprep.subr.bf16.mxu0 0
      %1278 = vmatpush1.bf16.xpose.msra.mxu0 %v1261
      %1279 = vmatprep.subr.bf16.mxu0 0
      %1280 = vmatpush2.bf16.xpose.msra.mxu0 0
      %1281 = vmatprep.subr.bf16.mxu0 0
      %1282 = vmatpush2.bf16.xpose.msra.mxu0 0
      %1283 = vmatprep.subr.bf16.mxu0 0
      %1284 = vmatpush2.bf16.xpose.msra.mxu0 0
      %1285 = vmatprep.subr.bf16.mxu0 0
      %1286 = vmatpush2.bf16.xpose.msra.mxu0 0
      %1287 = vmatprep.subr.bf16.mxu0 0
      %1288 = vmatpush2.bf16.xpose.msra.mxu0 0
      %1289 = vmatprep.subr.bf16.mxu0 0
      %1290 = vmatpush2.bf16.xpose.msra.mxu0 0
      %1291 = vmatprep.subr.bf16.mxu0 0
      %1292 = vmatpush2.bf16.xpose.msra.mxu0 0
      %1293 = vmatprep.subr.bf16.mxu0 0
      %1294 = vmatpush2.bf16.xpose.msra.mxu0 0
      %1295 = vmatprep.mubr.bf16.mxu0 0
      %1296 = vmatmul.mubr.bf16.gmra.mxu0 %v1258
      %v1297 = vpop.f32.mrf.mxu0
      %v1298 = vadd.f32 0.0, %v1297
      %v1299 = vpop.f32.mrf.mxu0
      %v1300 = vpop.f32.mrf.mxu0
      %v1301 = vpop.f32.mrf.mxu0
      %1302 = vdwg.mxu0
      %v1303 = vmul.f32 %v1298, 0.17677669
      %v1304 = vsel %vm795, %v1303, -inf
      %1305 = vmax.xlane.f32.xlu0 %v1304
      %v1306 = vpop.xlane.xlu0 %1305
      %v1307 = vsub.f32 %v1303, %v1306
      %v1308 = vmul.f32 %v1307, 1.442695
      %v1309 = vpow.pop %v1308
      %v1310 = vsel %vm795, %v1309, 0.0
      %1311 = vadd.xlane.f32.xlu0 %v1310
      %v1312 = vpop.xlane.xlu0 %1311
      %v1313 = vrcp.pop %v1312
      %v1314 = vpack.c.bf16 %v1309, %v1309
      %1315 = vrot.lane.b32.xlu0 %v746, 32
      %v1316 = vpop.permute.xlu0 %1315
      %v1318 = vsel %vm807, %v1314, 0
      %v1321 = vand.u32 %v1316, %v814
      %1323 = vmatprep.subr.bf16.mxu0 0
      %1324 = vmatpush1.bf16.msra.mxu0 0
      %1325 = vmatprep.subr.bf16.mxu0 0
      %1326 = vmatpush1.bf16.msra.mxu0 0
      %1327 = vmatprep.subr.bf16.mxu0 0
      %1328 = vmatpush1.bf16.msra.mxu0 0
      %1329 = vmatprep.subr.bf16.mxu0 0
      %1330 = vmatpush1.bf16.msra.mxu0 0
      %1331 = vmatprep.subr.bf16.mxu0 0
      %1332 = vmatpush1.bf16.msra.mxu0 0
      %1333 = vmatprep.subr.bf16.mxu0 0
      %1334 = vmatpush1.bf16.msra.mxu0 0
      %1335 = vmatprep.subr.bf16.mxu0 0
      %1336 = vmatpush1.bf16.msra.mxu0 0
      %1337 = vmatprep.subr.bf16.mxu0 0
      %1338 = vmatpush1.bf16.msra.mxu0 %v1321
      %1339 = vmatprep.subr.bf16.mxu0 0
      %1340 = vmatpush2.bf16.msra.mxu0 0
      %1341 = vmatprep.subr.bf16.mxu0 0
      %1342 = vmatpush2.bf16.msra.mxu0 0
      %1343 = vmatprep.subr.bf16.mxu0 0
      %1344 = vmatpush2.bf16.msra.mxu0 0
      %1345 = vmatprep.subr.bf16.mxu0 0
      %1346 = vmatpush2.bf16.msra.mxu0 0
      %1347 = vmatprep.subr.bf16.mxu0 0
      %1348 = vmatpush2.bf16.msra.mxu0 0
      %1349 = vmatprep.subr.bf16.mxu0 0
      %1350 = vmatpush2.bf16.msra.mxu0 0
      %1351 = vmatprep.subr.bf16.mxu0 0
      %1352 = vmatpush2.bf16.msra.mxu0 0
      %1353 = vmatprep.subr.bf16.mxu0 0
      %1354 = vmatpush2.bf16.msra.mxu0 0
      %1355 = vmatprep.mubr.bf16.mxu0 0
      %1356 = vmatmul.mubr.bf16.gmra.mxu0 %v1318
      %v1357 = vpop.f32.mrf.mxu0
      %v1358 = vadd.f32 0.0, %v1357
      %v1359 = vpop.f32.mrf.mxu0
      %v1360 = vpop.f32.mrf.mxu0
      %v1361 = vpop.f32.mrf.mxu0
      %1362 = vdwg.mxu0
      %v1363 = vmul.f32 %v1358, %v1313
      %v1364 = vpack.c.bf16 %v1363, %v1363
      %v1369 = vunpack.c.l.b16 %v740
      %v1370 = vunpack.c.l.b16 %v741
      %v1371 = vunpack.c.l.b16 %v742
      %v1372 = vunpack.c.l.b16 %v743
      %v1373 = vpack.c.b16 %v1370, %v1369
      %v1374 = vpack.c.b16 %v1372, %v1371
      %v1378 = vsel %vm747, %v1364, 0
      %1380 = vmatprep.subr.bf16.mxu0 0
      %1381 = vmatpush1.bf16.msra.mxu0 0
      %1382 = vmatprep.subr.bf16.mxu0 0
      %1383 = vmatpush1.bf16.msra.mxu0 0
      %1384 = vmatprep.subr.bf16.mxu0 0
      %1385 = vmatpush1.bf16.msra.mxu0 0
      %1386 = vmatprep.subr.bf16.mxu0 0
      %1387 = vmatpush1.bf16.msra.mxu0 0
      %1388 = vmatprep.subr.bf16.mxu0 0
      %1389 = vmatpush1.bf16.msra.mxu0 0
      %1390 = vmatprep.subr.bf16.mxu0 0
      %1391 = vmatpush1.bf16.msra.mxu0 0
      %1392 = vmatprep.subr.bf16.mxu0 0
      %1393 = vmatpush1.bf16.msra.mxu0 %v1374
      %1394 = vmatprep.subr.bf16.mxu0 0
      %1395 = vmatpush1.bf16.msra.mxu0 %v1373
      %1396 = vmatprep.subr.bf16.mxu0 0
      %1397 = vmatpush2.bf16.msra.mxu0 0
      %1398 = vmatprep.subr.bf16.mxu0 0
      %1399 = vmatpush2.bf16.msra.mxu0 0
      %1400 = vmatprep.subr.bf16.mxu0 0
      %1401 = vmatpush2.bf16.msra.mxu0 0
      %1402 = vmatprep.subr.bf16.mxu0 0
      %1403 = vmatpush2.bf16.msra.mxu0 0
      %1404 = vmatprep.subr.bf16.mxu0 0
      %1405 = vmatpush2.bf16.msra.mxu0 0
      %1406 = vmatprep.subr.bf16.mxu0 0
      %1407 = vmatpush2.bf16.msra.mxu0 0
      %1408 = vmatprep.subr.bf16.mxu0 0
      %1409 = vmatpush2.bf16.msra.mxu0 0
      %1410 = vmatprep.subr.bf16.mxu0 0
      %1411 = vmatpush2.bf16.msra.mxu0 0
      %1412 = vmatprep.mubr.bf16.mxu0 0
      %1413 = vmatmul.mubr.bf16.gmra.mxu0 %v1378
      %v1414 = vpop.f32.mrf.mxu0
      %v1415 = vadd.f32 0.0, %v1414
      %v1416 = vpop.f32.mrf.mxu0
      %v1417 = vpop.f32.mrf.mxu0
      %v1418 = vpop.f32.mrf.mxu0
      %1419 = vdwg.mxu0
      %v1420 = vadd.f32 %v1252, %v1415
      %v1421 = vld [vmem:[%s6] sm:$0x1]
      %v1423 = vlaneseq
      %v1424 = vshrl.u32 %v1423, 7
      %v1425 = vsub.s32 0, %v1424
      %v1426 = vrot.slane %v1421, %v1425
      %v1428 = vadd.f32 %v1420, %v1426
      %v1429 = vadd.f32 %v437, %v1428
      %v1430 = vld [vmem:[%s7] sm:$0x1]
      %v1431 = vld [vmem:[%s8] sm:$0x1]
      %v1432 = vsel %vm440, %v1429, 0.0
      %1433 = vadd.xlane.f32.xlu0 %v1432
      %v1434 = vpop.xlane.xlu0 %1433
      %v1435 = vmul.f32 %v1434, %v444
      %v1436 = vsub.f32 %v1429, %v1435
      %v1437 = vmul.f32 %v1436, %v1436
      %v1438 = vsel %vm440, %v1437, 0.0
      %1439 = vadd.xlane.f32.xlu0 %v1438
      %v1440 = vpop.xlane.xlu0 %1439
      %v1441 = vmul.f32 %v1440, %v444
      %v1442 = vadd.f32 %v1441, 1e-06
      %v1443 = vrsqrt.pop %v1442
      %v1444 = vmul.f32 %v1436, %v1443
      %v1446 = vlaneseq
      %v1447 = vshrl.u32 %v1446, 7
      %v1448 = vsub.s32 0, %v1447
      %v1449 = vrot.slane %v1430, %v1448
      %v1451 = vmul.f32 %v1444, %v1449
      %v1453 = vlaneseq
      %v1454 = vshrl.u32 %v1453, 7
      %v1455 = vsub.s32 0, %v1454
      %v1456 = vrot.slane %v1431, %v1455
      %v1458 = vadd.f32 %v1451, %v1456
      %v1459 = vld [vmem:[%s9] sm:$0xff]
      %v1460 = vld [vmem:[%s9 + $0x8] sm:$0xff]
      %v1461 = vld [vmem:[%s9 + $0x10] sm:$0xff]
      %v1462 = vld [vmem:[%s9 + $0x18] sm:$0xff]
      %v1463 = vld [vmem:[%s9 + $0x20] sm:$0xff]
      %v1464 = vld [vmem:[%s9 + $0x28] sm:$0xff]
      %v1465 = vld [vmem:[%s9 + $0x30] sm:$0xff]
      %v1466 = vld [vmem:[%s9 + $0x38] sm:$0xff]
      %v1467 = vld [vmem:[%s9 + $0x40] sm:$0xff]
      %v1468 = vld [vmem:[%s9 + $0x48] sm:$0xff]
      %v1469 = vld [vmem:[%s9 + $0x50] sm:$0xff]
      %v1470 = vld [vmem:[%s9 + $0x58] sm:$0xff]
      %v1471 = vld [vmem:[%s9 + $0x60] sm:$0xff]
      %v1472 = vld [vmem:[%s9 + $0x68] sm:$0xff]
      %v1473 = vld [vmem:[%s9 + $0x70] sm:$0xff]
      %v1474 = vld [vmem:[%s9 + $0x78] sm:$0xff]
      %v1475 = vld [vmem:[%s9 + $0x80] sm:$0xff]
      %v1476 = vld [vmem:[%s9 + $0x88] sm:$0xff]
      %v1477 = vld [vmem:[%s9 + $0x90] sm:$0xff]
      %v1478 = vld [vmem:[%s9 + $0x98] sm:$0xff]
      %v1479 = vld [vmem:[%s9 + $0xa0] sm:$0xff]
      %v1480 = vld [vmem:[%s9 + $0xa8] sm:$0xff]
      %v1481 = vld [vmem:[%s9 + $0xb0] sm:$0xff]
      %v1482 = vld [vmem:[%s9 + $0xb8] sm:$0xff]
      %v1483 = vld [vmem:[%s9 + $0xc0] sm:$0xff]
      %v1484 = vld [vmem:[%s9 + $0xc8] sm:$0xff]
      %v1485 = vld [vmem:[%s9 + $0xd0] sm:$0xff]
      %v1486 = vld [vmem:[%s9 + $0xd8] sm:$0xff]
      %v1487 = vld [vmem:[%s9 + $0xe0] sm:$0xff]
      %v1488 = vld [vmem:[%s9 + $0xe8] sm:$0xff]
      %v1489 = vld [vmem:[%s9 + $0xf0] sm:$0xff]
      %v1490 = vld [vmem:[%s9 + $0xf8] sm:$0xff]
      %v1491 = vld [vmem:[%s10] sm:$0xf]
      %v1492 = vpack.c.bf16 %v1458, %v1458
      %v1494 = vlaneseq
      %v1495 = vshrl.u32 %v1494, 7
      %v1496 = vsub.s32 0, %v1495
      %v1497 = vrot.slane %v1491, %v1496
      %v1498 = vlaneseq
      %v1499 = vshrl.u32 %v1498, 7
      %v1500 = vsub.s32 1, %v1499
      %v1501 = vrot.slane %v1491, %v1500
      %v1502 = vlaneseq
      %v1503 = vshrl.u32 %v1502, 7
      %v1504 = vsub.s32 2, %v1503
      %v1505 = vrot.slane %v1491, %v1504
      %v1506 = vlaneseq
      %v1507 = vshrl.u32 %v1506, 7
      %v1508 = vsub.s32 3, %v1507
      %v1509 = vrot.slane %v1491, %v1508
      %v1546 = vunpack.c.l.b16 %v1459
      %v1547 = vunpack.c.h.b16 %v1459
      %v1548 = vunpack.c.l.b16 %v1460
      %v1549 = vunpack.c.h.b16 %v1460
      %v1550 = vunpack.c.l.b16 %v1461
      %v1551 = vunpack.c.h.b16 %v1461
      %v1552 = vunpack.c.l.b16 %v1462
      %v1553 = vunpack.c.h.b16 %v1462
      %v1554 = vunpack.c.l.b16 %v1463
      %v1555 = vunpack.c.h.b16 %v1463
      %v1556 = vunpack.c.l.b16 %v1464
      %v1557 = vunpack.c.h.b16 %v1464
      %v1558 = vunpack.c.l.b16 %v1465
      %v1559 = vunpack.c.h.b16 %v1465
      %v1560 = vunpack.c.l.b16 %v1466
      %v1561 = vunpack.c.h.b16 %v1466
      %v1562 = vunpack.c.l.b16 %v1467
      %v1563 = vunpack.c.h.b16 %v1467
      %v1564 = vunpack.c.l.b16 %v1468
      %v1565 = vunpack.c.h.b16 %v1468
      %v1566 = vunpack.c.l.b16 %v1469
      %v1567 = vunpack.c.h.b16 %v1469
      %v1568 = vunpack.c.l.b16 %v1470
      %v1569 = vunpack.c.h.b16 %v1470
      %v1570 = vunpack.c.l.b16 %v1471
      %v1571 = vunpack.c.h.b16 %v1471
      %v1572 = vunpack.c.l.b16 %v1472
      %v1573 = vunpack.c.h.b16 %v1472
      %v1574 = vunpack.c.l.b16 %v1473
      %v1575 = vunpack.c.h.b16 %v1473
      %v1576 = vunpack.c.l.b16 %v1474
      %v1577 = vunpack.c.h.b16 %v1474
      %v1578 = vunpack.c.l.b16 %v1475
      %v1579 = vunpack.c.h.b16 %v1475
      %v1580 = vunpack.c.l.b16 %v1476
      %v1581 = vunpack.c.h.b16 %v1476
      %v1582 = vunpack.c.l.b16 %v1477
      %v1583 = vunpack.c.h.b16 %v1477
      %v1584 = vunpack.c.l.b16 %v1478
      %v1585 = vunpack.c.h.b16 %v1478
      %v1586 = vunpack.c.l.b16 %v1479
      %v1587 = vunpack.c.h.b16 %v1479
      %v1588 = vunpack.c.l.b16 %v1480
      %v1589 = vunpack.c.h.b16 %v1480
      %v1590 = vunpack.c.l.b16 %v1481
      %v1591 = vunpack.c.h.b16 %v1481
      %v1592 = vunpack.c.l.b16 %v1482
      %v1593 = vunpack.c.h.b16 %v1482
      %v1594 = vunpack.c.l.b16 %v1483
      %v1595 = vunpack.c.h.b16 %v1483
      %v1596 = vunpack.c.l.b16 %v1484
      %v1597 = vunpack.c.h.b16 %v1484
      %v1598 = vunpack.c.l.b16 %v1485
      %v1599 = vunpack.c.h.b16 %v1485
      %v1600 = vunpack.c.l.b16 %v1486
      %v1601 = vunpack.c.h.b16 %v1486
      %v1602 = vunpack.c.l.b16 %v1487
      %v1603 = vunpack.c.h.b16 %v1487
      %v1604 = vunpack.c.l.b16 %v1488
      %v1605 = vunpack.c.h.b16 %v1488
      %v1606 = vunpack.c.l.b16 %v1489
      %v1607 = vunpack.c.h.b16 %v1489
      %v1608 = vunpack.c.l.b16 %v1490
      %v1609 = vunpack.c.h.b16 %v1490
      %v1610 = vpack.c.b16 %v1550, %v1546
      %v1611 = vpack.c.b16 %v1551, %v1547
      %v1612 = vpack.c.b16 %v1552, %v1548
      %v1613 = vpack.c.b16 %v1553, %v1549
      %v1614 = vpack.c.b16 %v1558, %v1554
      %v1615 = vpack.c.b16 %v1559, %v1555
      %v1616 = vpack.c.b16 %v1560, %v1556
      %v1617 = vpack.c.b16 %v1561, %v1557
      %v1618 = vpack.c.b16 %v1566, %v1562
      %v1619 = vpack.c.b16 %v1567, %v1563
      %v1620 = vpack.c.b16 %v1568, %v1564
      %v1621 = vpack.c.b16 %v1569, %v1565
      %v1622 = vpack.c.b16 %v1574, %v1570
      %v1623 = vpack.c.b16 %v1575, %v1571
      %v1624 = vpack.c.b16 %v1576, %v1572
      %v1625 = vpack.c.b16 %v1577, %v1573
      %v1626 = vpack.c.b16 %v1582, %v1578
      %v1627 = vpack.c.b16 %v1583, %v1579
      %v1628 = vpack.c.b16 %v1584, %v1580
      %v1629 = vpack.c.b16 %v1585, %v1581
      %v1630 = vpack.c.b16 %v1590, %v1586
      %v1631 = vpack.c.b16 %v1591, %v1587
      %v1632 = vpack.c.b16 %v1592, %v1588
      %v1633 = vpack.c.b16 %v1593, %v1589
      %v1634 = vpack.c.b16 %v1598, %v1594
      %v1635 = vpack.c.b16 %v1599, %v1595
      %v1636 = vpack.c.b16 %v1600, %v1596
      %v1637 = vpack.c.b16 %v1601, %v1597
      %v1638 = vpack.c.b16 %v1606, %v1602
      %v1639 = vpack.c.b16 %v1607, %v1603
      %v1640 = vpack.c.b16 %v1608, %v1604
      %v1641 = vpack.c.b16 %v1609, %v1605
      %1674 = vmatprep.subr.bf16.mxu0 %v1639
      %1675 = vmatpush1.bf16.msra.mxu0 %v1638
      %1676 = vmatprep.subr.bf16.mxu0 %v1635
      %1677 = vmatpush1.bf16.msra.mxu0 %v1634
      %1678 = vmatprep.subr.bf16.mxu0 %v1631
      %1679 = vmatpush1.bf16.msra.mxu0 %v1630
      %1680 = vmatprep.subr.bf16.mxu0 %v1627
      %1681 = vmatpush1.bf16.msra.mxu0 %v1626
      %1682 = vmatprep.subr.bf16.mxu0 %v1623
      %1683 = vmatpush1.bf16.msra.mxu0 %v1622
      %1684 = vmatprep.subr.bf16.mxu0 %v1619
      %1685 = vmatpush1.bf16.msra.mxu0 %v1618
      %1686 = vmatprep.subr.bf16.mxu0 %v1615
      %1687 = vmatpush1.bf16.msra.mxu0 %v1614
      %1688 = vmatprep.subr.bf16.mxu0 %v1611
      %1689 = vmatpush1.bf16.msra.mxu0 %v1610
      %1690 = vmatprep.subr.bf16.mxu0 0
      %1691 = vmatpush2.bf16.msra.mxu0 0
      %1692 = vmatprep.subr.bf16.mxu0 0
      %1693 = vmatpush2.bf16.msra.mxu0 0
      %1694 = vmatprep.subr.bf16.mxu0 0
      %1695 = vmatpush2.bf16.msra.mxu0 0
      %1696 = vmatprep.subr.bf16.mxu0 0
      %1697 = vmatpush2.bf16.msra.mxu0 0
      %1698 = vmatprep.subr.bf16.mxu0 0
      %1699 = vmatpush2.bf16.msra.mxu0 0
      %1700 = vmatprep.subr.bf16.mxu0 0
      %1701 = vmatpush2.bf16.msra.mxu0 0
      %1702 = vmatprep.subr.bf16.mxu0 0
      %1703 = vmatpush2.bf16.msra.mxu0 0
      %1704 = vmatprep.subr.bf16.mxu0 0
      %1705 = vmatpush2.bf16.msra.mxu0 0
      %1706 = vmatprep.mubr.bf16.mxu0 0
      %1707 = vmatmul.mubr.bf16.gmra.mxu0 %v1492
      %v1708 = vpop.f32.mrf.mxu0
      %v1709 = vadd.f32 %v1497, %v1708
      %v1710 = vpop.f32.mrf.mxu0
      %v1711 = vadd.f32 %v1501, %v1710
      %v1712 = vpop.f32.mrf.mxu0
      %v1713 = vpop.f32.mrf.mxu0
      %1714 = vdwg.mxu0
      %1715 = vmatprep.subr.bf16.mxu0 %v1641
      %1716 = vmatpush1.bf16.msra.mxu0 %v1640
      %1717 = vmatprep.subr.bf16.mxu0 %v1637
      %1718 = vmatpush1.bf16.msra.mxu0 %v1636
      %1719 = vmatprep.subr.bf16.mxu0 %v1633
      %1720 = vmatpush1.bf16.msra.mxu0 %v1632
      %1721 = vmatprep.subr.bf16.mxu0 %v1629
      %1722 = vmatpush1.bf16.msra.mxu0 %v1628
      %1723 = vmatprep.subr.bf16.mxu0 %v1625
      %1724 = vmatpush1.bf16.msra.mxu0 %v1624
      %1725 = vmatprep.subr.bf16.mxu0 %v1621
      %1726 = vmatpush1.bf16.msra.mxu0 %v1620
      %1727 = vmatprep.subr.bf16.mxu0 %v1617
      %1728 = vmatpush1.bf16.msra.mxu0 %v1616
      %1729 = vmatprep.subr.bf16.mxu0 %v1613
      %1730 = vmatpush1.bf16.msra.mxu0 %v1612
      %1731 = vmatprep.subr.bf16.mxu0 0
      %1732 = vmatpush2.bf16.msra.mxu0 0
      %1733 = vmatprep.subr.bf16.mxu0 0
      %1734 = vmatpush2.bf16.msra.mxu0 0
      %1735 = vmatprep.subr.bf16.mxu0 0
      %1736 = vmatpush2.bf16.msra.mxu0 0
      %1737 = vmatprep.subr.bf16.mxu0 0
      %1738 = vmatpush2.bf16.msra.mxu0 0
      %1739 = vmatprep.subr.bf16.mxu0 0
      %1740 = vmatpush2.bf16.msra.mxu0 0
      %1741 = vmatprep.subr.bf16.mxu0 0
      %1742 = vmatpush2.bf16.msra.mxu0 0
      %1743 = vmatprep.subr.bf16.mxu0 0
      %1744 = vmatpush2.bf16.msra.mxu0 0
      %1745 = vmatprep.subr.bf16.mxu0 0
      %1746 = vmatpush2.bf16.msra.mxu0 0
      %1747 = vmatprep.mubr.bf16.mxu0 0
      %1748 = vmatmul.mubr.bf16.gmra.mxu0 %v1492
      %v1749 = vpop.f32.mrf.mxu0
      %v1750 = vadd.f32 %v1505, %v1749
      %v1751 = vpop.f32.mrf.mxu0
      %v1752 = vadd.f32 %v1509, %v1751
      %v1753 = vpop.f32.mrf.mxu0
      %v1754 = vpop.f32.mrf.mxu0
      %1755 = vdwg.mxu0
      %v1756 = vmul.f32 %v1709, 0.5
      %v1757 = vmul.f32 %v1711, 0.5
      %v1758 = vmul.f32 %v1750, 0.5
      %v1759 = vmul.f32 %v1752, 0.5
      %v1760 = vmul.f32 %v1709, 0.044715
      %v1761 = vmul.f32 %v1711, 0.044715
      %v1762 = vmul.f32 %v1750, 0.044715
      %v1763 = vmul.f32 %v1752, 0.044715
      %v1764 = vmul.f32 %v1760, %v1709
      %v1765 = vmul.f32 %v1761, %v1711
      %v1766 = vmul.f32 %v1762, %v1750
      %v1767 = vmul.f32 %v1763, %v1752
      %v1768 = vmul.f32 %v1764, %v1709
      %v1769 = vmul.f32 %v1765, %v1711
      %v1770 = vmul.f32 %v1766, %v1750
      %v1771 = vmul.f32 %v1767, %v1752
      %v1772 = vadd.f32 %v1709, %v1768
      %v1773 = vadd.f32 %v1711, %v1769
      %v1774 = vadd.f32 %v1750, %v1770
      %v1775 = vadd.f32 %v1752, %v1771
      %v1776 = vmul.f32 %v1772, 0.7978846
      %v1777 = vmul.f32 %v1773, 0.7978846
      %v1778 = vmul.f32 %v1774, 0.7978846
      %v1779 = vmul.f32 %v1775, 0.7978846
      %v1780 = vtanh.pop %v1776
      %v1781 = vtanh.pop %v1777
      %v1782 = vtanh.pop %v1778
      %v1783 = vtanh.pop %v1779
      %v1784 = vadd.f32 %v1780, 1.0
      %v1785 = vadd.f32 %v1781, 1.0
      %v1786 = vadd.f32 %v1782, 1.0
      %v1787 = vadd.f32 %v1783, 1.0
      %v1788 = vmul.f32 %v1756, %v1784
      %v1789 = vmul.f32 %v1757, %v1785
      %v1790 = vmul.f32 %v1758, %v1786
      %v1791 = vmul.f32 %v1759, %v1787
      %v1792 = vld [vmem:[%s11] sm:$0xf]
      %v1793 = vld [vmem:[%s11 + $0x4] sm:$0xf]
      %v1794 = vld [vmem:[%s11 + $0x8] sm:$0xf]
      %v1795 = vld [vmem:[%s11 + $0xc] sm:$0xf]
      %v1796 = vld [vmem:[%s11 + $0x10] sm:$0xf]
      %v1797 = vld [vmem:[%s11 + $0x14] sm:$0xf]
      %v1798 = vld [vmem:[%s11 + $0x18] sm:$0xf]
      %v1799 = vld [vmem:[%s11 + $0x1c] sm:$0xf]
      %v1800 = vld [vmem:[%s11 + $0x20] sm:$0xf]
      %v1801 = vld [vmem:[%s11 + $0x24] sm:$0xf]
      %v1802 = vld [vmem:[%s11 + $0x28] sm:$0xf]
      %v1803 = vld [vmem:[%s11 + $0x2c] sm:$0xf]
      %v1804 = vld [vmem:[%s11 + $0x30] sm:$0xf]
      %v1805 = vld [vmem:[%s11 + $0x34] sm:$0xf]
      %v1806 = vld [vmem:[%s11 + $0x38] sm:$0xf]
      %v1807 = vld [vmem:[%s11 + $0x3c] sm:$0xf]
      %v1808 = vld [vmem:[%s11 + $0x40] sm:$0xf]
      %v1809 = vld [vmem:[%s11 + $0x44] sm:$0xf]
      %v1810 = vld [vmem:[%s11 + $0x48] sm:$0xf]
      %v1811 = vld [vmem:[%s11 + $0x4c] sm:$0xf]
      %v1812 = vld [vmem:[%s11 + $0x50] sm:$0xf]
      %v1813 = vld [vmem:[%s11 + $0x54] sm:$0xf]
      %v1814 = vld [vmem:[%s11 + $0x58] sm:$0xf]
      %v1815 = vld [vmem:[%s11 + $0x5c] sm:$0xf]
      %v1816 = vld [vmem:[%s11 + $0x60] sm:$0xf]
      %v1817 = vld [vmem:[%s11 + $0x64] sm:$0xf]
      %v1818 = vld [vmem:[%s11 + $0x68] sm:$0xf]
      %v1819 = vld [vmem:[%s11 + $0x6c] sm:$0xf]
      %v1820 = vld [vmem:[%s11 + $0x70] sm:$0xf]
      %v1821 = vld [vmem:[%s11 + $0x74] sm:$0xf]
      %v1822 = vld [vmem:[%s11 + $0x78] sm:$0xf]
      %v1823 = vld [vmem:[%s11 + $0x7c] sm:$0xf]
      %v1824 = vld [vmem:[%s11 + $0x80] sm:$0xf]
      %v1825 = vld [vmem:[%s11 + $0x84] sm:$0xf]
      %v1826 = vld [vmem:[%s11 + $0x88] sm:$0xf]
      %v1827 = vld [vmem:[%s11 + $0x8c] sm:$0xf]
      %v1828 = vld [vmem:[%s11 + $0x90] sm:$0xf]
      %v1829 = vld [vmem:[%s11 + $0x94] sm:$0xf]
      %v1830 = vld [vmem:[%s11 + $0x98] sm:$0xf]
      %v1831 = vld [vmem:[%s11 + $0x9c] sm:$0xf]
      %v1832 = vld [vmem:[%s11 + $0xa0] sm:$0xf]
      %v1833 = vld [vmem:[%s11 + $0xa4] sm:$0xf]
      %v1834 = vld [vmem:[%s11 + $0xa8] sm:$0xf]
      %v1835 = vld [vmem:[%s11 + $0xac] sm:$0xf]
      %v1836 = vld [vmem:[%s11 + $0xb0] sm:$0xf]
      %v1837 = vld [vmem:[%s11 + $0xb4] sm:$0xf]
      %v1838 = vld [vmem:[%s11 + $0xb8] sm:$0xf]
      %v1839 = vld [vmem:[%s11 + $0xbc] sm:$0xf]
      %v1840 = vld [vmem:[%s11 + $0xc0] sm:$0xf]
      %v1841 = vld [vmem:[%s11 + $0xc4] sm:$0xf]
      %v1842 = vld [vmem:[%s11 + $0xc8] sm:$0xf]
      %v1843 = vld [vmem:[%s11 + $0xcc] sm:$0xf]
      %v1844 = vld [vmem:[%s11 + $0xd0] sm:$0xf]
      %v1845 = vld [vmem:[%s11 + $0xd4] sm:$0xf]
      %v1846 = vld [vmem:[%s11 + $0xd8] sm:$0xf]
      %v1847 = vld [vmem:[%s11 + $0xdc] sm:$0xf]
      %v1848 = vld [vmem:[%s11 + $0xe0] sm:$0xf]
      %v1849 = vld [vmem:[%s11 + $0xe4] sm:$0xf]
      %v1850 = vld [vmem:[%s11 + $0xe8] sm:$0xf]
      %v1851 = vld [vmem:[%s11 + $0xec] sm:$0xf]
      %v1852 = vld [vmem:[%s11 + $0xf0] sm:$0xf]
      %v1853 = vld [vmem:[%s11 + $0xf4] sm:$0xf]
      %v1854 = vld [vmem:[%s11 + $0xf8] sm:$0xf]
      %v1855 = vld [vmem:[%s11 + $0xfc] sm:$0xf]
      %v1856 = vld [vmem:[%s12] sm:$0x1]
      %v1857 = vpack.c.bf16 %v1788, %v1788
      %v1858 = vpack.c.bf16 %v1789, %v1789
      %v1859 = vpack.c.bf16 %v1790, %v1790
      %v1860 = vpack.c.bf16 %v1791, %v1791
      %v1862 = vlaneseq
      %v1863 = vshrl.u32 %v1862, 7
      %v1864 = vsub.s32 0, %v1863
      %v1865 = vrot.slane %v1856, %v1864
      %v1931 = vunpack.c.l.b16 %v1792
      %v1932 = vunpack.c.l.b16 %v1793
      %v1933 = vunpack.c.l.b16 %v1794
      %v1934 = vunpack.c.l.b16 %v1795
      %v1935 = vunpack.c.l.b16 %v1796
      %v1936 = vunpack.c.l.b16 %v1797
      %v1937 = vunpack.c.l.b16 %v1798
      %v1938 = vunpack.c.l.b16 %v1799
      %v1939 = vunpack.c.l.b16 %v1800
      %v1940 = vunpack.c.l.b16 %v1801
      %v1941 = vunpack.c.l.b16 %v1802
      %v1942 = vunpack.c.l.b16 %v1803
      %v1943 = vunpack.c.l.b16 %v1804
      %v1944 = vunpack.c.l.b16 %v1805
      %v1945 = vunpack.c.l.b16 %v1806
      %v1946 = vunpack.c.l.b16 %v1807
      %v1947 = vunpack.c.l.b16 %v1808
      %v1948 = vunpack.c.l.b16 %v1809
      %v1949 = vunpack.c.l.b16 %v1810
      %v1950 = vunpack.c.l.b16 %v1811
      %v1951 = vunpack.c.l.b16 %v1812
      %v1952 = vunpack.c.l.b16 %v1813
      %v1953 = vunpack.c.l.b16 %v1814
      %v1954 = vunpack.c.l.b16 %v1815
      %v1955 = vunpack.c.l.b16 %v1816
      %v1956 = vunpack.c.l.b16 %v1817
      %v1957 = vunpack.c.l.b16 %v1818
      %v1958 = vunpack.c.l.b16 %v1819
      %v1959 = vunpack.c.l.b16 %v1820
      %v1960 = vunpack.c.l.b16 %v1821
      %v1961 = vunpack.c.l.b16 %v1822
      %v1962 = vunpack.c.l.b16 %v1823
      %v1963 = vunpack.c.l.b16 %v1824
      %v1964 = vunpack.c.l.b16 %v1825
      %v1965 = vunpack.c.l.b16 %v1826
      %v1966 = vunpack.c.l.b16 %v1827
      %v1967 = vunpack.c.l.b16 %v1828
      %v1968 = vunpack.c.l.b16 %v1829
      %v1969 = vunpack.c.l.b16 %v1830
      %v1970 = vunpack.c.l.b16 %v1831
      %v1971 = vunpack.c.l.b16 %v1832
      %v1972 = vunpack.c.l.b16 %v1833
      %v1973 = vunpack.c.l.b16 %v1834
      %v1974 = vunpack.c.l.b16 %v1835
      %v1975 = vunpack.c.l.b16 %v1836
      %v1976 = vunpack.c.l.b16 %v1837
      %v1977 = vunpack.c.l.b16 %v1838
      %v1978 = vunpack.c.l.b16 %v1839
      %v1979 = vunpack.c.l.b16 %v1840
      %v1980 = vunpack.c.l.b16 %v1841
      %v1981 = vunpack.c.l.b16 %v1842
      %v1982 = vunpack.c.l.b16 %v1843
      %v1983 = vunpack.c.l.b16 %v1844
      %v1984 = vunpack.c.l.b16 %v1845
      %v1985 = vunpack.c.l.b16 %v1846
      %v1986 = vunpack.c.l.b16 %v1847
      %v1987 = vunpack.c.l.b16 %v1848
      %v1988 = vunpack.c.l.b16 %v1849
      %v1989 = vunpack.c.l.b16 %v1850
      %v1990 = vunpack.c.l.b16 %v1851
      %v1991 = vunpack.c.l.b16 %v1852
      %v1992 = vunpack.c.l.b16 %v1853
      %v1993 = vunpack.c.l.b16 %v1854
      %v1994 = vunpack.c.l.b16 %v1855
      %v1995 = vpack.c.b16 %v1932, %v1931
      %v1996 = vpack.c.b16 %v1934, %v1933
      %v1997 = vpack.c.b16 %v1936, %v1935
      %v1998 = vpack.c.b16 %v1938, %v1937
      %v1999 = vpack.c.b16 %v1940, %v1939
      %v2000 = vpack.c.b16 %v1942, %v1941
      %v2001 = vpack.c.b16 %v1944, %v1943
      %v2002 = vpack.c.b16 %v1946, %v1945
      %v2003 = vpack.c.b16 %v1948, %v1947
      %v2004 = vpack.c.b16 %v1950, %v1949
      %v2005 = vpack.c.b16 %v1952, %v1951
      %v2006 = vpack.c.b16 %v1954, %v1953
      %v2007 = vpack.c.b16 %v1956, %v1955
      %v2008 = vpack.c.b16 %v1958, %v1957
      %v2009 = vpack.c.b16 %v1960, %v1959
      %v2010 = vpack.c.b16 %v1962, %v1961
      %v2011 = vpack.c.b16 %v1964, %v1963
      %v2012 = vpack.c.b16 %v1966, %v1965
      %v2013 = vpack.c.b16 %v1968, %v1967
      %v2014 = vpack.c.b16 %v1970, %v1969
      %v2015 = vpack.c.b16 %v1972, %v1971
      %v2016 = vpack.c.b16 %v1974, %v1973
      %v2017 = vpack.c.b16 %v1976, %v1975
      %v2018 = vpack.c.b16 %v1978, %v1977
      %v2019 = vpack.c.b16 %v1980, %v1979
      %v2020 = vpack.c.b16 %v1982, %v1981
      %v2021 = vpack.c.b16 %v1984, %v1983
      %v2022 = vpack.c.b16 %v1986, %v1985
      %v2023 = vpack.c.b16 %v1988, %v1987
      %v2024 = vpack.c.b16 %v1990, %v1989
      %v2025 = vpack.c.b16 %v1992, %v1991
      %v2026 = vpack.c.b16 %v1994, %v1993
      %2059 = vmatprep.subr.bf16.mxu0 0
      %2060 = vmatpush1.bf16.msra.mxu0 %v2002
      %2061 = vmatprep.subr.bf16.mxu0 0
      %2062 = vmatpush1.bf16.msra.mxu0 %v2001
      %2063 = vmatprep.subr.bf16.mxu0 0
      %2064 = vmatpush1.bf16.msra.mxu0 %v2000
      %2065 = vmatprep.subr.bf16.mxu0 0
      %2066 = vmatpush1.bf16.msra.mxu0 %v1999
      %2067 = vmatprep.subr.bf16.mxu0 0
      %2068 = vmatpush1.bf16.msra.mxu0 %v1998
      %2069 = vmatprep.subr.bf16.mxu0 0
      %2070 = vmatpush1.bf16.msra.mxu0 %v1997
      %2071 = vmatprep.subr.bf16.mxu0 0
      %2072 = vmatpush1.bf16.msra.mxu0 %v1996
      %2073 = vmatprep.subr.bf16.mxu0 0
      %2074 = vmatpush1.bf16.msra.mxu0 %v1995
      %2075 = vmatprep.subr.bf16.mxu0 0
      %2076 = vmatpush2.bf16.msra.mxu0 %v2010
      %2077 = vmatprep.subr.bf16.mxu0 0
      %2078 = vmatpush2.bf16.msra.mxu0 %v2009
      %2079 = vmatprep.subr.bf16.mxu0 0
      %2080 = vmatpush2.bf16.msra.mxu0 %v2008
      %2081 = vmatprep.subr.bf16.mxu0 0
      %2082 = vmatpush2.bf16.msra.mxu0 %v2007
      %2083 = vmatprep.subr.bf16.mxu0 0
      %2084 = vmatpush2.bf16.msra.mxu0 %v2006
      %2085 = vmatprep.subr.bf16.mxu0 0
      %2086 = vmatpush2.bf16.msra.mxu0 %v2005
      %2087 = vmatprep.subr.bf16.mxu0 0
      %2088 = vmatpush2.bf16.msra.mxu0 %v2004
      %2089 = vmatprep.subr.bf16.mxu0 0
      %2090 = vmatpush2.bf16.msra.mxu0 %v2003
      %2091 = vmatprep.mubr.bf16.mxu0 %v1858
      %2092 = vmatmul.mubr.bf16.gmra.mxu0 %v1857
      %v2093 = vpop.f32.mrf.mxu0
      %v2094 = vadd.f32 %v1865, %v2093
      %v2095 = vpop.f32.mrf.mxu0
      %v2096 = vpop.f32.mrf.mxu0
      %v2097 = vpop.f32.mrf.mxu0
      %2098 = vdwg.mxu0
      %2099 = vmatprep.subr.bf16.mxu0 0
      %2100 = vmatpush1.bf16.msra.mxu0 %v2018
      %2101 = vmatprep.subr.bf16.mxu0 0
      %2102 = vmatpush1.bf16.msra.mxu0 %v2017
      %2103 = vmatprep.subr.bf16.mxu0 0
      %2104 = vmatpush1.bf16.msra.mxu0 %v2016
      %2105 = vmatprep.subr.bf16.mxu0 0
      %2106 = vmatpush1.bf16.msra.mxu0 %v2015
      %2107 = vmatprep.subr.bf16.mxu0 0
      %2108 = vmatpush1.bf16.msra.mxu0 %v2014
      %2109 = vmatprep.subr.bf16.mxu0 0
      %2110 = vmatpush1.bf16.msra.mxu0 %v2013
      %2111 = vmatprep.subr.bf16.mxu0 0
      %2112 = vmatpush1.bf16.msra.mxu0 %v2012
      %2113 = vmatprep.subr.bf16.mxu0 0
      %2114 = vmatpush1.bf16.msra.mxu0 %v2011
      %2115 = vmatprep.subr.bf16.mxu0 0
      %2116 = vmatpush2.bf16.msra.mxu0 %v2026
      %2117 = vmatprep.subr.bf16.mxu0 0
      %2118 = vmatpush2.bf16.msra.mxu0 %v2025
      %2119 = vmatprep.subr.bf16.mxu0 0
      %2120 = vmatpush2.bf16.msra.mxu0 %v2024
      %2121 = vmatprep.subr.bf16.mxu0 0
      %2122 = vmatpush2.bf16.msra.mxu0 %v2023
      %2123 = vmatprep.subr.bf16.mxu0 0
      %2124 = vmatpush2.bf16.msra.mxu0 %v2022
      %2125 = vmatprep.subr.bf16.mxu0 0
      %2126 = vmatpush2.bf16.msra.mxu0 %v2021
      %2127 = vmatprep.subr.bf16.mxu0 0
      %2128 = vmatpush2.bf16.msra.mxu0 %v2020
      %2129 = vmatprep.subr.bf16.mxu0 0
      %2130 = vmatpush2.bf16.msra.mxu0 %v2019
      %2131 = vmatprep.mubr.bf16.mxu0 %v1860
      %2132 = vmatmul.mubr.bf16.gmra.mxu0 %v1859
      %v2133 = vpop.f32.mrf.mxu0
      %v2134 = vadd.f32 %v2094, %v2133
      %v2135 = vpop.f32.mrf.mxu0
      %v2136 = vpop.f32.mrf.mxu0
      %v2137 = vpop.f32.mrf.mxu0
      %2138 = vdwg.mxu0
      %v2139 = vadd.f32 %v1429, %v2134
      %2140 = vst [vmem:[%s435] sm:$0x1f] %v2139
      %p2141 = scmp.lt.s32.totalorder %s24, 1
      %s2142 = scalar_select %p2141, %s24, 1
      %s2143 = smul.addr %s2142, 8
      %s2144 = scalar_lea.vmem %s13, %s2143
      // Predicated region
      $region73: #{vl_transformer_itm_forward.8} parent=71 // pred_check
        %p2145 = pneg %p320
      $region74: #{vl_transformer_itm_forward.8} parent=71 // pred_check_branch
        %2147 = sbr.rel (%p2145) target = $region76
      $region75: #{vl_transformer_itm_forward.8} parent=71 // pred_region
        _
      $region76: #{vl_transformer_itm_forward.8} parent=71 // pred_fallthru
        _
    $region72: #{vl_transformer_itm_forward.8} parent=5 // pred_fallthru
      _
    %p2148 = scmp.le.s32.totalorder 2, %s19
    // Predicated region
    $region77: #{vl_transformer_itm_forward.8} parent=5 // pred_check
      %p2149 = pneg %p2148
    $region78: #{vl_transformer_itm_forward.8} parent=5 // pred_check_branch
      %2151 = sbr.rel (%p2149) target = $region80
    $region79: #{vl_transformer_itm_forward.8} parent=5 // pred_region
      %s2152 = ssub.s32 %s19, 2
      // Predicated region
      $region81: #{vl_transformer_itm_forward.8} parent=79 // pred_check
        %p2153 = pneg %p326
      $region82: #{vl_transformer_itm_forward.8} parent=79 // pred_check_branch
        %2155 = sbr.rel (%p2153) target = $region84
      $region83: #{vl_transformer_itm_forward.8} parent=79 // pred_region
        %p2156 = scmp.lt.s32.totalorder %s25, 1
        %s2157 = scalar_select %p2156, %s25, 1
        %s2158 = smul.addr %s2157, 8
        %s2159 = scalar_lea.vmem %s13, %s2158
      $region84: #{vl_transformer_itm_forward.8} parent=79 // pred_fallthru
        _
    $region80: #{vl_transformer_itm_forward.8} parent=5 // pred_fallthru
      _
  $region6: #{vl_transformer_itm_forward.8} parent=0 // loop_footer
    %s23 = sadd.s32 1, %s19
  $region7: #{vl_transformer_itm_forward.8} parent=0 // loop_footer_branch
    %18 = sbr.rel target = $region3
  $region8: #{vl_transformer_itm_forward.8} parent=0 // loop_exit
    _

// kernel: vl_transformer_itm_forward.12
$region0: #{vl_transformer_itm_forward.12}
  #allocation0 [shape = 'u32[]', space=smem, size = 0x4, offset = 0x4, fixed_abs, tag = 'smem constant byte address 0x4 - core index']
  #allocation1 [shape = 'u32[144,128]{1,0:T(1,128)}', space=vmem, size = 0x12000, scoped, tag = 'internal scratch']
  %s0 = inlined_call_operand.vmem [shape: f32[2,8,128], index: 0, kind: input, shape index: {}]
  %s1 = inlined_call_operand.vmem [shape: f32[2,5,128], index: 1, kind: input, shape index: {}]
  %s2 = inlined_call_operand.vmem [shape: f32[2,1,8], index: 2, kind: input, shape index: {}]
  %s3 = inlined_call_operand.vmem [shape: bf16[128,384], index: 3, kind: input, shape index: {}]
  %s4 = inlined_call_operand.vmem [shape: f32[1,384], index: 4, kind: input, shape index: {}]
  %s5 = inlined_call_operand.vmem [shape: bf16[128,128], index: 5, kind: input, shape index: {}]
  %s6 = inlined_call_operand.vmem [shape: f32[1,128], index: 6, kind: input, shape index: {}]
  %s7 = inlined_call_operand.vmem [shape: f32[1,128], index: 7, kind: input, shape index: {}]
  %s8 = inlined_call_operand.vmem [shape: f32[1,128], index: 8, kind: input, shape index: {}]
  %s9 = inlined_call_operand.vmem [shape: bf16[128,128], index: 9, kind: input, shape index: {}]
  %s10 = inlined_call_operand.vmem [shape: f32[1,128], index: 10, kind: input, shape index: {}]
  %s11 = inlined_call_operand.vmem [shape: bf16[128,256], index: 11, kind: input, shape index: {}]
  %s12 = inlined_call_operand.vmem [shape: f32[1,256], index: 12, kind: input, shape index: {}]
  %s13 = inlined_call_operand.vmem [shape: bf16[128,128], index: 13, kind: input, shape index: {}]
  %s14 = inlined_call_operand.vmem [shape: f32[1,128], index: 14, kind: input, shape index: {}]
  %s15 = inlined_call_operand.vmem [shape: f32[1,128], index: 15, kind: input, shape index: {}]
  %s16 = inlined_call_operand.vmem [shape: f32[1,128], index: 16, kind: input, shape index: {}]
  %s17 = inlined_call_operand.vmem [shape: bf16[128,512], index: 17, kind: input, shape index: {}]
  %s18 = inlined_call_operand.vmem [shape: f32[1,512], index: 18, kind: input, shape index: {}]
  %s19 = inlined_call_operand.vmem [shape: bf16[512,128], index: 19, kind: input, shape index: {}]
  %s20 = inlined_call_operand.vmem [shape: f32[1,128], index: 20, kind: input, shape index: {}]
  %s21 = inlined_call_operand.vmem [shape: f32[1,128], index: 21, kind: input, shape index: {}]
  %s22 = inlined_call_operand.vmem [shape: f32[1,128], index: 22, kind: input, shape index: {}]
  %s23 = inlined_call_operand.vmem [shape: f32[2,8,128], index: 23, kind: output, shape index: {}]
  %s24 = sld [smem:[#allocation0]]
  $region125: #{vl_transformer_itm_forward.12} parent=0
    _
  %s26 = ssub.s32 1, %s24
  %s27 = scalar_select 0, %s26, %s24
  loop: start=0, step=1, limit=4
  $region2: #{vl_transformer_itm_forward.12} parent=0 // loop_pre_header
    _
  $region3: #{vl_transformer_itm_forward.12} parent=0 // loop_header
    %s29 = sphi 0, %s33
    %p30 = scmp.ge.s32.totalorder %s29, 4
    %s39 = sphi 0, %s41
    %s42 = sphi 0, %s39
    %s43 = sphi 0, %s42
    %s59 = sphi 0, %s43
    %s65 = sphi 0, %s67
    %s68 = sphi 0, %s65
    %s69 = sphi 0, %s68
    %s85 = sphi 0, %s69
    %s91 = sphi 0, %s93
    %s94 = sphi 0, %s91
    %s95 = sphi 0, %s94
    %s111 = sphi 0, %s95
    %s115 = sphi 0, %s115
    %s117 = sphi 0, %s115
    %s118 = sphi 0, %s117
    %s132 = sphi 0, %s118
    %s136 = sphi 0, %s136
    %s138 = sphi 0, %s136
    %s139 = sphi 0, %s138
    %s153 = sphi 0, %s139
    %s157 = sphi 0, %s157
    %s159 = sphi 0, %s157
    %s160 = sphi 0, %s159
    %s174 = sphi 0, %s160
    %s178 = sphi 0, %s178
    %s180 = sphi 0, %s178
    %s181 = sphi 0, %s180
    %s195 = sphi 0, %s181
    %s199 = sphi 0, %s199
    %s201 = sphi 0, %s199
    %s202 = sphi 0, %s201
    %s216 = sphi 0, %s202
    %s220 = sphi 0, %s220
    %s222 = sphi 0, %s220
    %s223 = sphi 0, %s222
    %s237 = sphi 0, %s223
    %s241 = sphi 0, %s241
    %s243 = sphi 0, %s241
    %s244 = sphi 0, %s243
    %s258 = sphi 0, %s244
    %s262 = sphi 0, %s262
    %s264 = sphi 0, %s262
    %s265 = sphi 0, %s264
    %s279 = sphi 0, %s265
    %s283 = sphi 0, %s283
    %s285 = sphi 0, %s283
    %s286 = sphi 0, %s285
    %s300 = sphi 0, %s286
    %s304 = sphi 0, %s304
    %s306 = sphi 0, %s304
    %s307 = sphi 0, %s306
    %s321 = sphi 0, %s307
    %s325 = sphi 0, %s325
    %s327 = sphi 0, %s325
    %s328 = sphi 0, %s327
    %s342 = sphi 0, %s328
    %s346 = sphi 0, %s346
    %s348 = sphi 0, %s346
    %s349 = sphi 0, %s348
    %s363 = sphi 0, %s349
    %s367 = sphi 0, %s367
    %s369 = sphi 0, %s367
    %s370 = sphi 0, %s369
    %s384 = sphi 0, %s370
    %s388 = sphi 0, %s388
    %s390 = sphi 0, %s388
    %s391 = sphi 0, %s390
    %s405 = sphi 0, %s391
    %s409 = sphi 0, %s409
    %s411 = sphi 0, %s409
    %s412 = sphi 0, %s411
    %s426 = sphi 0, %s412
    %s430 = sphi 0, %s430
    %s432 = sphi 0, %s430
    %s433 = sphi 0, %s432
    %s447 = sphi 0, %s433
    %s451 = sphi 0, %s451
    %s453 = sphi 0, %s451
    %s454 = sphi 0, %s453
    %s468 = sphi 0, %s454
    %s472 = sphi 0, %s472
    %s474 = sphi 0, %s472
    %s475 = sphi 0, %s474
    %s489 = sphi 0, %s475
    %s493 = sphi 0, %s493
    %s495 = sphi 0, %s493
    %s496 = sphi 0, %s495
    %s510 = sphi 0, %s496
    %s514 = sphi 0, %s514
    %s516 = sphi 0, %s514
    %s517 = sphi 0, %s516
    %s531 = sphi 0, %s517
    %s537 = sphi 0, %s539
    %s540 = sphi 0, %s537
    %s541 = sphi 0, %s540
    %s557 = sphi 0, %s541
  $region4: #{vl_transformer_itm_forward.12} parent=0 // loop_header_branch
    %32 = sbr.rel (%p30) target = $region8
  $region5: #{vl_transformer_itm_forward.12} parent=0 // loop_body
    %s34 = ssub.s32 %s29, 1
    %s35 = ssub.s32 %s29, 2
    %s36 = sadd.s32 %s29, 1
    %s37 = ssub.s32 %s29, %s36
    %p38 = scmp.eq.s32.totalorder %s37, 0
    %s40 = sadd.s32 %s39, 1
    %s41 = scalar_select %p38, %s39, %s40
    %p44 = pneg %p38
    %p45 = scmp.eq.s32.totalorder %s29, 1
    %p46 = por %p44, %p45
    %p47 = scmp.ne.s32.totalorder %s39, %s42
    %p48 = scmp.eq.s32.totalorder %s29, 0
    %p49 = por %p47, %p48
    %p50 = scmp.ne.s32.totalorder %s39, %s42
    %p51 = scmp.eq.s32.totalorder %s34, 1
    %p52 = por %p50, %p51
    %p53 = scmp.ne.s32.totalorder %s42, %s43
    %p54 = scmp.eq.s32.totalorder %s34, 0
    %p55 = por %p53, %p54
    %p56 = scmp.ne.s32.totalorder %s42, %s43
    %p57 = scmp.eq.s32.totalorder %s35, 1
    %p58 = por %p56, %p57
    %p60 = scmp.ne.s32.totalorder %s43, %s59
    %p61 = scmp.eq.s32.totalorder %s35, 0
    %p62 = por %p60, %p61
    %s63 = ssub.s32 %s29, %s36
    %p64 = scmp.eq.s32.totalorder %s63, 0
    %s66 = sadd.s32 %s65, 1
    %s67 = scalar_select %p64, %s65, %s66
    %p70 = pneg %p64
    %p71 = scmp.eq.s32.totalorder %s29, 1
    %p72 = por %p70, %p71
    %p73 = scmp.ne.s32.totalorder %s65, %s68
    %p74 = scmp.eq.s32.totalorder %s29, 0
    %p75 = por %p73, %p74
    %p76 = scmp.ne.s32.totalorder %s65, %s68
    %p77 = scmp.eq.s32.totalorder %s34, 1
    %p78 = por %p76, %p77
    %p79 = scmp.ne.s32.totalorder %s68, %s69
    %p80 = scmp.eq.s32.totalorder %s34, 0
    %p81 = por %p79, %p80
    %p82 = scmp.ne.s32.totalorder %s68, %s69
    %p83 = scmp.eq.s32.totalorder %s35, 1
    %p84 = por %p82, %p83
    %p86 = scmp.ne.s32.totalorder %s69, %s85
    %p87 = scmp.eq.s32.totalorder %s35, 0
    %p88 = por %p86, %p87
    %s89 = ssub.s32 %s29, %s36
    %p90 = scmp.eq.s32.totalorder %s89, 0
    %s92 = sadd.s32 %s91, 1
    %s93 = scalar_select %p90, %s91, %s92
    %p96 = pneg %p90
    %p97 = scmp.eq.s32.totalorder %s29, 1
    %p98 = por %p96, %p97
    %p99 = scmp.ne.s32.totalorder %s91, %s94
    %p100 = scmp.eq.s32.totalorder %s29, 0
    %p101 = por %p99, %p100
    %p102 = scmp.ne.s32.totalorder %s91, %s94
    %p103 = scmp.eq.s32.totalorder %s34, 1
    %p104 = por %p102, %p103
    %p105 = scmp.ne.s32.totalorder %s94, %s95
    %p106 = scmp.eq.s32.totalorder %s34, 0
    %p107 = por %p105, %p106
    %p108 = scmp.ne.s32.totalorder %s94, %s95
    %p109 = scmp.eq.s32.totalorder %s35, 1
    %p110 = por %p108, %p109
    %p112 = scmp.ne.s32.totalorder %s95, %s111
    %p113 = scmp.eq.s32.totalorder %s35, 0
    %p114 = por %p112, %p113
    %s116 = sadd.s32 %s115, 1
    %p119 = scmp.eq.s32.totalorder %s29, 1
    %p120 = scmp.ne.s32.totalorder %s115, %s117
    %p121 = scmp.eq.s32.totalorder %s29, 0
    %p122 = por %p120, %p121
    %p123 = scmp.ne.s32.totalorder %s115, %s117
    %p124 = scmp.eq.s32.totalorder %s34, 1
    %p125 = por %p123, %p124
    %p126 = scmp.ne.s32.totalorder %s117, %s118
    %p127 = scmp.eq.s32.totalorder %s34, 0
    %p128 = por %p126, %p127
    %p129 = scmp.ne.s32.totalorder %s117, %s118
    %p130 = scmp.eq.s32.totalorder %s35, 1
    %p131 = por %p129, %p130
    %p133 = scmp.ne.s32.totalorder %s118, %s132
    %p134 = scmp.eq.s32.totalorder %s35, 0
    %p135 = por %p133, %p134
    %s137 = sadd.s32 %s136, 1
    %p140 = scmp.eq.s32.totalorder %s29, 1
    %p141 = scmp.ne.s32.totalorder %s136, %s138
    %p142 = scmp.eq.s32.totalorder %s29, 0
    %p143 = por %p141, %p142
    %p144 = scmp.ne.s32.totalorder %s136, %s138
    %p145 = scmp.eq.s32.totalorder %s34, 1
    %p146 = por %p144, %p145
    %p147 = scmp.ne.s32.totalorder %s138, %s139
    %p148 = scmp.eq.s32.totalorder %s34, 0
    %p149 = por %p147, %p148
    %p150 = scmp.ne.s32.totalorder %s138, %s139
    %p151 = scmp.eq.s32.totalorder %s35, 1
    %p152 = por %p150, %p151
    %p154 = scmp.ne.s32.totalorder %s139, %s153
    %p155 = scmp.eq.s32.totalorder %s35, 0
    %p156 = por %p154, %p155
    %s158 = sadd.s32 %s157, 1
    %p161 = scmp.eq.s32.totalorder %s29, 1
    %p162 = scmp.ne.s32.totalorder %s157, %s159
    %p163 = scmp.eq.s32.totalorder %s29, 0
    %p164 = por %p162, %p163
    %p165 = scmp.ne.s32.totalorder %s157, %s159
    %p166 = scmp.eq.s32.totalorder %s34, 1
    %p167 = por %p165, %p166
    %p168 = scmp.ne.s32.totalorder %s159, %s160
    %p169 = scmp.eq.s32.totalorder %s34, 0
    %p170 = por %p168, %p169
    %p171 = scmp.ne.s32.totalorder %s159, %s160
    %p172 = scmp.eq.s32.totalorder %s35, 1
    %p173 = por %p171, %p172
    %p175 = scmp.ne.s32.totalorder %s160, %s174
    %p176 = scmp.eq.s32.totalorder %s35, 0
    %p177 = por %p175, %p176
    %s179 = sadd.s32 %s178, 1
    %p182 = scmp.eq.s32.totalorder %s29, 1
    %p183 = scmp.ne.s32.totalorder %s178, %s180
    %p184 = scmp.eq.s32.totalorder %s29, 0
    %p185 = por %p183, %p184
    %p186 = scmp.ne.s32.totalorder %s178, %s180
    %p187 = scmp.eq.s32.totalorder %s34, 1
    %p188 = por %p186, %p187
    %p189 = scmp.ne.s32.totalorder %s180, %s181
    %p190 = scmp.eq.s32.totalorder %s34, 0
    %p191 = por %p189, %p190
    %p192 = scmp.ne.s32.totalorder %s180, %s181
    %p193 = scmp.eq.s32.totalorder %s35, 1
    %p194 = por %p192, %p193
    %p196 = scmp.ne.s32.totalorder %s181, %s195
    %p197 = scmp.eq.s32.totalorder %s35, 0
    %p198 = por %p196, %p197
    %s200 = sadd.s32 %s199, 1
    %p203 = scmp.eq.s32.totalorder %s29, 1
    %p204 = scmp.ne.s32.totalorder %s199, %s201
    %p205 = scmp.eq.s32.totalorder %s29, 0
    %p206 = por %p204, %p205
    %p207 = scmp.ne.s32.totalorder %s199, %s201
    %p208 = scmp.eq.s32.totalorder %s34, 1
    %p209 = por %p207, %p208
    %p210 = scmp.ne.s32.totalorder %s201, %s202
    %p211 = scmp.eq.s32.totalorder %s34, 0
    %p212 = por %p210, %p211
    %p213 = scmp.ne.s32.totalorder %s201, %s202
    %p214 = scmp.eq.s32.totalorder %s35, 1
    %p215 = por %p213, %p214
    %p217 = scmp.ne.s32.totalorder %s202, %s216
    %p218 = scmp.eq.s32.totalorder %s35, 0
    %p219 = por %p217, %p218
    %s221 = sadd.s32 %s220, 1
    %p224 = scmp.eq.s32.totalorder %s29, 1
    %p225 = scmp.ne.s32.totalorder %s220, %s222
    %p226 = scmp.eq.s32.totalorder %s29, 0
    %p227 = por %p225, %p226
    %p228 = scmp.ne.s32.totalorder %s220, %s222
    %p229 = scmp.eq.s32.totalorder %s34, 1
    %p230 = por %p228, %p229
    %p231 = scmp.ne.s32.totalorder %s222, %s223
    %p232 = scmp.eq.s32.totalorder %s34, 0
    %p233 = por %p231, %p232
    %p234 = scmp.ne.s32.totalorder %s222, %s223
    %p235 = scmp.eq.s32.totalorder %s35, 1
    %p236 = por %p234, %p235
    %p238 = scmp.ne.s32.totalorder %s223, %s237
    %p239 = scmp.eq.s32.totalorder %s35, 0
    %p240 = por %p238, %p239
    %s242 = sadd.s32 %s241, 1
    %p245 = scmp.eq.s32.totalorder %s29, 1
    %p246 = scmp.ne.s32.totalorder %s241, %s243
    %p247 = scmp.eq.s32.totalorder %s29, 0
    %p248 = por %p246, %p247
    %p249 = scmp.ne.s32.totalorder %s241, %s243
    %p250 = scmp.eq.s32.totalorder %s34, 1
    %p251 = por %p249, %p250
    %p252 = scmp.ne.s32.totalorder %s243, %s244
    %p253 = scmp.eq.s32.totalorder %s34, 0
    %p254 = por %p252, %p253
    %p255 = scmp.ne.s32.totalorder %s243, %s244
    %p256 = scmp.eq.s32.totalorder %s35, 1
    %p257 = por %p255, %p256
    %p259 = scmp.ne.s32.totalorder %s244, %s258
    %p260 = scmp.eq.s32.totalorder %s35, 0
    %p261 = por %p259, %p260
    %s263 = sadd.s32 %s262, 1
    %p266 = scmp.eq.s32.totalorder %s29, 1
    %p267 = scmp.ne.s32.totalorder %s262, %s264
    %p268 = scmp.eq.s32.totalorder %s29, 0
    %p269 = por %p267, %p268
    %p270 = scmp.ne.s32.totalorder %s262, %s264
    %p271 = scmp.eq.s32.totalorder %s34, 1
    %p272 = por %p270, %p271
    %p273 = scmp.ne.s32.totalorder %s264, %s265
    %p274 = scmp.eq.s32.totalorder %s34, 0
    %p275 = por %p273, %p274
    %p276 = scmp.ne.s32.totalorder %s264, %s265
    %p277 = scmp.eq.s32.totalorder %s35, 1
    %p278 = por %p276, %p277
    %p280 = scmp.ne.s32.totalorder %s265, %s279
    %p281 = scmp.eq.s32.totalorder %s35, 0
    %p282 = por %p280, %p281
    %s284 = sadd.s32 %s283, 1
    %p287 = scmp.eq.s32.totalorder %s29, 1
    %p288 = scmp.ne.s32.totalorder %s283, %s285
    %p289 = scmp.eq.s32.totalorder %s29, 0
    %p290 = por %p288, %p289
    %p291 = scmp.ne.s32.totalorder %s283, %s285
    %p292 = scmp.eq.s32.totalorder %s34, 1
    %p293 = por %p291, %p292
    %p294 = scmp.ne.s32.totalorder %s285, %s286
    %p295 = scmp.eq.s32.totalorder %s34, 0
    %p296 = por %p294, %p295
    %p297 = scmp.ne.s32.totalorder %s285, %s286
    %p298 = scmp.eq.s32.totalorder %s35, 1
    %p299 = por %p297, %p298
    %p301 = scmp.ne.s32.totalorder %s286, %s300
    %p302 = scmp.eq.s32.totalorder %s35, 0
    %p303 = por %p301, %p302
    %s305 = sadd.s32 %s304, 1
    %p308 = scmp.eq.s32.totalorder %s29, 1
    %p309 = scmp.ne.s32.totalorder %s304, %s306
    %p310 = scmp.eq.s32.totalorder %s29, 0
    %p311 = por %p309, %p310
    %p312 = scmp.ne.s32.totalorder %s304, %s306
    %p313 = scmp.eq.s32.totalorder %s34, 1
    %p314 = por %p312, %p313
    %p315 = scmp.ne.s32.totalorder %s306, %s307
    %p316 = scmp.eq.s32.totalorder %s34, 0
    %p317 = por %p315, %p316
    %p318 = scmp.ne.s32.totalorder %s306, %s307
    %p319 = scmp.eq.s32.totalorder %s35, 1
    %p320 = por %p318, %p319
    %p322 = scmp.ne.s32.totalorder %s307, %s321
    %p323 = scmp.eq.s32.totalorder %s35, 0
    %p324 = por %p322, %p323
    %s326 = sadd.s32 %s325, 1
    %p329 = scmp.eq.s32.totalorder %s29, 1
    %p330 = scmp.ne.s32.totalorder %s325, %s327
    %p331 = scmp.eq.s32.totalorder %s29, 0
    %p332 = por %p330, %p331
    %p333 = scmp.ne.s32.totalorder %s325, %s327
    %p334 = scmp.eq.s32.totalorder %s34, 1
    %p335 = por %p333, %p334
    %p336 = scmp.ne.s32.totalorder %s327, %s328
    %p337 = scmp.eq.s32.totalorder %s34, 0
    %p338 = por %p336, %p337
    %p339 = scmp.ne.s32.totalorder %s327, %s328
    %p340 = scmp.eq.s32.totalorder %s35, 1
    %p341 = por %p339, %p340
    %p343 = scmp.ne.s32.totalorder %s328, %s342
    %p344 = scmp.eq.s32.totalorder %s35, 0
    %p345 = por %p343, %p344
    %s347 = sadd.s32 %s346, 1
    %p350 = scmp.eq.s32.totalorder %s29, 1
    %p351 = scmp.ne.s32.totalorder %s346, %s348
    %p352 = scmp.eq.s32.totalorder %s29, 0
    %p353 = por %p351, %p352
    %p354 = scmp.ne.s32.totalorder %s346, %s348
    %p355 = scmp.eq.s32.totalorder %s34, 1
    %p356 = por %p354, %p355
    %p357 = scmp.ne.s32.totalorder %s348, %s349
    %p358 = scmp.eq.s32.totalorder %s34, 0
    %p359 = por %p357, %p358
    %p360 = scmp.ne.s32.totalorder %s348, %s349
    %p361 = scmp.eq.s32.totalorder %s35, 1
    %p362 = por %p360, %p361
    %p364 = scmp.ne.s32.totalorder %s349, %s363
    %p365 = scmp.eq.s32.totalorder %s35, 0
    %p366 = por %p364, %p365
    %s368 = sadd.s32 %s367, 1
    %p371 = scmp.eq.s32.totalorder %s29, 1
    %p372 = scmp.ne.s32.totalorder %s367, %s369
    %p373 = scmp.eq.s32.totalorder %s29, 0
    %p374 = por %p372, %p373
    %p375 = scmp.ne.s32.totalorder %s367, %s369
    %p376 = scmp.eq.s32.totalorder %s34, 1
    %p377 = por %p375, %p376
    %p378 = scmp.ne.s32.totalorder %s369, %s370
    %p379 = scmp.eq.s32.totalorder %s34, 0
    %p380 = por %p378, %p379
    %p381 = scmp.ne.s32.totalorder %s369, %s370
    %p382 = scmp.eq.s32.totalorder %s35, 1
    %p383 = por %p381, %p382
    %p385 = scmp.ne.s32.totalorder %s370, %s384
    %p386 = scmp.eq.s32.totalorder %s35, 0
    %p387 = por %p385, %p386
    %s389 = sadd.s32 %s388, 1
    %p392 = scmp.eq.s32.totalorder %s29, 1
    %p393 = scmp.ne.s32.totalorder %s388, %s390
    %p394 = scmp.eq.s32.totalorder %s29, 0
    %p395 = por %p393, %p394
    %p396 = scmp.ne.s32.totalorder %s388, %s390
    %p397 = scmp.eq.s32.totalorder %s34, 1
    %p398 = por %p396, %p397
    %p399 = scmp.ne.s32.totalorder %s390, %s391
    %p400 = scmp.eq.s32.totalorder %s34, 0
    %p401 = por %p399, %p400
    %p402 = scmp.ne.s32.totalorder %s390, %s391
    %p403 = scmp.eq.s32.totalorder %s35, 1
    %p404 = por %p402, %p403
    %p406 = scmp.ne.s32.totalorder %s391, %s405
    %p407 = scmp.eq.s32.totalorder %s35, 0
    %p408 = por %p406, %p407
    %s410 = sadd.s32 %s409, 1
    %p413 = scmp.eq.s32.totalorder %s29, 1
    %p414 = scmp.ne.s32.totalorder %s409, %s411
    %p415 = scmp.eq.s32.totalorder %s29, 0
    %p416 = por %p414, %p415
    %p417 = scmp.ne.s32.totalorder %s409, %s411
    %p418 = scmp.eq.s32.totalorder %s34, 1
    %p419 = por %p417, %p418
    %p420 = scmp.ne.s32.totalorder %s411, %s412
    %p421 = scmp.eq.s32.totalorder %s34, 0
    %p422 = por %p420, %p421
    %p423 = scmp.ne.s32.totalorder %s411, %s412
    %p424 = scmp.eq.s32.totalorder %s35, 1
    %p425 = por %p423, %p424
    %p427 = scmp.ne.s32.totalorder %s412, %s426
    %p428 = scmp.eq.s32.totalorder %s35, 0
    %p429 = por %p427, %p428
    %s431 = sadd.s32 %s430, 1
    %p434 = scmp.eq.s32.totalorder %s29, 1
    %p435 = scmp.ne.s32.totalorder %s430, %s432
    %p436 = scmp.eq.s32.totalorder %s29, 0
    %p437 = por %p435, %p436
    %p438 = scmp.ne.s32.totalorder %s430, %s432
    %p439 = scmp.eq.s32.totalorder %s34, 1
    %p440 = por %p438, %p439
    %p441 = scmp.ne.s32.totalorder %s432, %s433
    %p442 = scmp.eq.s32.totalorder %s34, 0
    %p443 = por %p441, %p442
    %p444 = scmp.ne.s32.totalorder %s432, %s433
    %p445 = scmp.eq.s32.totalorder %s35, 1
    %p446 = por %p444, %p445
    %p448 = scmp.ne.s32.totalorder %s433, %s447
    %p449 = scmp.eq.s32.totalorder %s35, 0
    %p450 = por %p448, %p449
    %s452 = sadd.s32 %s451, 1
    %p455 = scmp.eq.s32.totalorder %s29, 1
    %p456 = scmp.ne.s32.totalorder %s451, %s453
    %p457 = scmp.eq.s32.totalorder %s29, 0
    %p458 = por %p456, %p457
    %p459 = scmp.ne.s32.totalorder %s451, %s453
    %p460 = scmp.eq.s32.totalorder %s34, 1
    %p461 = por %p459, %p460
    %p462 = scmp.ne.s32.totalorder %s453, %s454
    %p463 = scmp.eq.s32.totalorder %s34, 0
    %p464 = por %p462, %p463
    %p465 = scmp.ne.s32.totalorder %s453, %s454
    %p466 = scmp.eq.s32.totalorder %s35, 1
    %p467 = por %p465, %p466
    %p469 = scmp.ne.s32.totalorder %s454, %s468
    %p470 = scmp.eq.s32.totalorder %s35, 0
    %p471 = por %p469, %p470
    %s473 = sadd.s32 %s472, 1
    %p476 = scmp.eq.s32.totalorder %s29, 1
    %p477 = scmp.ne.s32.totalorder %s472, %s474
    %p478 = scmp.eq.s32.totalorder %s29, 0
    %p479 = por %p477, %p478
    %p480 = scmp.ne.s32.totalorder %s472, %s474
    %p481 = scmp.eq.s32.totalorder %s34, 1
    %p482 = por %p480, %p481
    %p483 = scmp.ne.s32.totalorder %s474, %s475
    %p484 = scmp.eq.s32.totalorder %s34, 0
    %p485 = por %p483, %p484
    %p486 = scmp.ne.s32.totalorder %s474, %s475
    %p487 = scmp.eq.s32.totalorder %s35, 1
    %p488 = por %p486, %p487
    %p490 = scmp.ne.s32.totalorder %s475, %s489
    %p491 = scmp.eq.s32.totalorder %s35, 0
    %p492 = por %p490, %p491
    %s494 = sadd.s32 %s493, 1
    %p497 = scmp.eq.s32.totalorder %s29, 1
    %p498 = scmp.ne.s32.totalorder %s493, %s495
    %p499 = scmp.eq.s32.totalorder %s29, 0
    %p500 = por %p498, %p499
    %p501 = scmp.ne.s32.totalorder %s493, %s495
    %p502 = scmp.eq.s32.totalorder %s34, 1
    %p503 = por %p501, %p502
    %p504 = scmp.ne.s32.totalorder %s495, %s496
    %p505 = scmp.eq.s32.totalorder %s34, 0
    %p506 = por %p504, %p505
    %p507 = scmp.ne.s32.totalorder %s495, %s496
    %p508 = scmp.eq.s32.totalorder %s35, 1
    %p509 = por %p507, %p508
    %p511 = scmp.ne.s32.totalorder %s496, %s510
    %p512 = scmp.eq.s32.totalorder %s35, 0
    %p513 = por %p511, %p512
    %s515 = sadd.s32 %s514, 1
    %p518 = scmp.eq.s32.totalorder %s29, 1
    %p519 = scmp.ne.s32.totalorder %s514, %s516
    %p520 = scmp.eq.s32.totalorder %s29, 0
    %p521 = por %p519, %p520
    %p522 = scmp.ne.s32.totalorder %s514, %s516
    %p523 = scmp.eq.s32.totalorder %s34, 1
    %p524 = por %p522, %p523
    %p525 = scmp.ne.s32.totalorder %s516, %s517
    %p526 = scmp.eq.s32.totalorder %s34, 0
    %p527 = por %p525, %p526
    %p528 = scmp.ne.s32.totalorder %s516, %s517
    %p529 = scmp.eq.s32.totalorder %s35, 1
    %p530 = por %p528, %p529
    %p532 = scmp.ne.s32.totalorder %s517, %s531
    %p533 = scmp.eq.s32.totalorder %s35, 0
    %p534 = por %p532, %p533
    %s535 = ssub.s32 %s29, %s36
    %p536 = scmp.eq.s32.totalorder %s535, 0
    %s538 = sadd.s32 %s537, 1
    %s539 = scalar_select %p536, %s537, %s538
    %p542 = pneg %p536
    %p543 = scmp.eq.s32.totalorder %s29, 1
    %p544 = por %p542, %p543
    %p545 = scmp.ne.s32.totalorder %s537, %s540
    %p546 = scmp.eq.s32.totalorder %s29, 0
    %p547 = por %p545, %p546
    %p548 = scmp.ne.s32.totalorder %s537, %s540
    %p549 = scmp.eq.s32.totalorder %s34, 1
    %p550 = por %p548, %p549
    %p551 = scmp.ne.s32.totalorder %s540, %s541
    %p552 = scmp.eq.s32.totalorder %s34, 0
    %p553 = por %p551, %p552
    %p554 = scmp.ne.s32.totalorder %s540, %s541
    %p555 = scmp.eq.s32.totalorder %s35, 1
    %p556 = por %p554, %p555
    %p558 = scmp.ne.s32.totalorder %s541, %s557
    %p559 = scmp.eq.s32.totalorder %s35, 0
    %p560 = por %p558, %p559
    %p561 = scmp.le.s32.totalorder 1, %s29
    %p562 = scmp.lt.s32.totalorder %s29, 3
    %p563 = pnand %p561, %p562
    %p564 = pneg %p563
    // Predicated region
    $region9: #{vl_transformer_itm_forward.12} parent=5 // pred_check
      _
    $region10: #{vl_transformer_itm_forward.12} parent=5 // pred_check_branch
      %566 = sbr.rel (%p563) target = $region12
    $region11: #{vl_transformer_itm_forward.12} parent=5 // pred_region
      %s567 = ssub.s32 %s29, 1
      // Predicated region
      $region13: #{vl_transformer_itm_forward.12} parent=11 // pred_check
        %p568 = pneg %p128
      $region14: #{vl_transformer_itm_forward.12} parent=11 // pred_check_branch
        %570 = sbr.rel (%p568) target = $region16
      $region15: #{vl_transformer_itm_forward.12} parent=11 // pred_region
        _
      $region16: #{vl_transformer_itm_forward.12} parent=11 // pred_fallthru
        _
      // Predicated region
      $region17: #{vl_transformer_itm_forward.12} parent=11 // pred_check
        %p571 = pneg %p149
      $region18: #{vl_transformer_itm_forward.12} parent=11 // pred_check_branch
        %573 = sbr.rel (%p571) target = $region20
      $region19: #{vl_transformer_itm_forward.12} parent=11 // pred_region
        _
      $region20: #{vl_transformer_itm_forward.12} parent=11 // pred_fallthru
        _
      // Predicated region
      $region21: #{vl_transformer_itm_forward.12} parent=11 // pred_check
        %p574 = pneg %p170
      $region22: #{vl_transformer_itm_forward.12} parent=11 // pred_check_branch
        %576 = sbr.rel (%p574) target = $region24
      $region23: #{vl_transformer_itm_forward.12} parent=11 // pred_region
        _
      $region24: #{vl_transformer_itm_forward.12} parent=11 // pred_fallthru
        _
      // Predicated region
      $region25: #{vl_transformer_itm_forward.12} parent=11 // pred_check
        %p577 = pneg %p191
      $region26: #{vl_transformer_itm_forward.12} parent=11 // pred_check_branch
        %579 = sbr.rel (%p577) target = $region28
      $region27: #{vl_transformer_itm_forward.12} parent=11 // pred_region
        _
      $region28: #{vl_transformer_itm_forward.12} parent=11 // pred_fallthru
        _
      // Predicated region
      $region29: #{vl_transformer_itm_forward.12} parent=11 // pred_check
        %p580 = pneg %p212
      $region30: #{vl_transformer_itm_forward.12} parent=11 // pred_check_branch
        %582 = sbr.rel (%p580) target = $region32
      $region31: #{vl_transformer_itm_forward.12} parent=11 // pred_region
        _
      $region32: #{vl_transformer_itm_forward.12} parent=11 // pred_fallthru
        _
      // Predicated region
      $region33: #{vl_transformer_itm_forward.12} parent=11 // pred_check
        %p583 = pneg %p233
      $region34: #{vl_transformer_itm_forward.12} parent=11 // pred_check_branch
        %585 = sbr.rel (%p583) target = $region36
      $region35: #{vl_transformer_itm_forward.12} parent=11 // pred_region
        _
      $region36: #{vl_transformer_itm_forward.12} parent=11 // pred_fallthru
        _
      // Predicated region
      $region37: #{vl_transformer_itm_forward.12} parent=11 // pred_check
        %p586 = pneg %p254
      $region38: #{vl_transformer_itm_forward.12} parent=11 // pred_check_branch
        %588 = sbr.rel (%p586) target = $region40
      $region39: #{vl_transformer_itm_forward.12} parent=11 // pred_region
        _
      $region40: #{vl_transformer_itm_forward.12} parent=11 // pred_fallthru
        _
      // Predicated region
      $region41: #{vl_transformer_itm_forward.12} parent=11 // pred_check
        %p589 = pneg %p275
      $region42: #{vl_transformer_itm_forward.12} parent=11 // pred_check_branch
        %591 = sbr.rel (%p589) target = $region44
      $region43: #{vl_transformer_itm_forward.12} parent=11 // pred_region
        _
      $region44: #{vl_transformer_itm_forward.12} parent=11 // pred_fallthru
        _
      // Predicated region
      $region45: #{vl_transformer_itm_forward.12} parent=11 // pred_check
        %p592 = pneg %p296
      $region46: #{vl_transformer_itm_forward.12} parent=11 // pred_check_branch
        %594 = sbr.rel (%p592) target = $region48
      $region47: #{vl_transformer_itm_forward.12} parent=11 // pred_region
        _
      $region48: #{vl_transformer_itm_forward.12} parent=11 // pred_fallthru
        _
      // Predicated region
      $region49: #{vl_transformer_itm_forward.12} parent=11 // pred_check
        %p595 = pneg %p317
      $region50: #{vl_transformer_itm_forward.12} parent=11 // pred_check_branch
        %597 = sbr.rel (%p595) target = $region52
      $region51: #{vl_transformer_itm_forward.12} parent=11 // pred_region
        _
      $region52: #{vl_transformer_itm_forward.12} parent=11 // pred_fallthru
        _
      // Predicated region
      $region53: #{vl_transformer_itm_forward.12} parent=11 // pred_check
        %p598 = pneg %p338
      $region54: #{vl_transformer_itm_forward.12} parent=11 // pred_check_branch
        %600 = sbr.rel (%p598) target = $region56
      $region55: #{vl_transformer_itm_forward.12} parent=11 // pred_region
        _
      $region56: #{vl_transformer_itm_forward.12} parent=11 // pred_fallthru
        _
      // Predicated region
      $region57: #{vl_transformer_itm_forward.12} parent=11 // pred_check
        %p601 = pneg %p359
      $region58: #{vl_transformer_itm_forward.12} parent=11 // pred_check_branch
        %603 = sbr.rel (%p601) target = $region60
      $region59: #{vl_transformer_itm_forward.12} parent=11 // pred_region
        _
      $region60: #{vl_transformer_itm_forward.12} parent=11 // pred_fallthru
        _
      // Predicated region
      $region61: #{vl_transformer_itm_forward.12} parent=11 // pred_check
        %p604 = pneg %p380
      $region62: #{vl_transformer_itm_forward.12} parent=11 // pred_check_branch
        %606 = sbr.rel (%p604) target = $region64
      $region63: #{vl_transformer_itm_forward.12} parent=11 // pred_region
        _
      $region64: #{vl_transformer_itm_forward.12} parent=11 // pred_fallthru
        _
      // Predicated region
      $region65: #{vl_transformer_itm_forward.12} parent=11 // pred_check
        %p607 = pneg %p401
      $region66: #{vl_transformer_itm_forward.12} parent=11 // pred_check_branch
        %609 = sbr.rel (%p607) target = $region68
      $region67: #{vl_transformer_itm_forward.12} parent=11 // pred_region
        _
      $region68: #{vl_transformer_itm_forward.12} parent=11 // pred_fallthru
        _
      // Predicated region
      $region69: #{vl_transformer_itm_forward.12} parent=11 // pred_check
        %p610 = pneg %p422
      $region70: #{vl_transformer_itm_forward.12} parent=11 // pred_check_branch
        %612 = sbr.rel (%p610) target = $region72
      $region71: #{vl_transformer_itm_forward.12} parent=11 // pred_region
        _
      $region72: #{vl_transformer_itm_forward.12} parent=11 // pred_fallthru
        _
      // Predicated region
      $region73: #{vl_transformer_itm_forward.12} parent=11 // pred_check
        %p613 = pneg %p443
      $region74: #{vl_transformer_itm_forward.12} parent=11 // pred_check_branch
        %615 = sbr.rel (%p613) target = $region76
      $region75: #{vl_transformer_itm_forward.12} parent=11 // pred_region
        _
      $region76: #{vl_transformer_itm_forward.12} parent=11 // pred_fallthru
        _
      // Predicated region
      $region77: #{vl_transformer_itm_forward.12} parent=11 // pred_check
        %p616 = pneg %p464
      $region78: #{vl_transformer_itm_forward.12} parent=11 // pred_check_branch
        %618 = sbr.rel (%p616) target = $region80
      $region79: #{vl_transformer_itm_forward.12} parent=11 // pred_region
        _
      $region80: #{vl_transformer_itm_forward.12} parent=11 // pred_fallthru
        _
      // Predicated region
      $region81: #{vl_transformer_itm_forward.12} parent=11 // pred_check
        %p619 = pneg %p485
      $region82: #{vl_transformer_itm_forward.12} parent=11 // pred_check_branch
        %621 = sbr.rel (%p619) target = $region84
      $region83: #{vl_transformer_itm_forward.12} parent=11 // pred_region
        _
      $region84: #{vl_transformer_itm_forward.12} parent=11 // pred_fallthru
        _
      // Predicated region
      $region85: #{vl_transformer_itm_forward.12} parent=11 // pred_check
        %p622 = pneg %p506
      $region86: #{vl_transformer_itm_forward.12} parent=11 // pred_check_branch
        %624 = sbr.rel (%p622) target = $region88
      $region87: #{vl_transformer_itm_forward.12} parent=11 // pred_region
        _
      $region88: #{vl_transformer_itm_forward.12} parent=11 // pred_fallthru
        _
      // Predicated region
      $region89: #{vl_transformer_itm_forward.12} parent=11 // pred_check
        %p625 = pneg %p527
      $region90: #{vl_transformer_itm_forward.12} parent=11 // pred_check_branch
        %627 = sbr.rel (%p625) target = $region92
      $region91: #{vl_transformer_itm_forward.12} parent=11 // pred_region
        _
      $region92: #{vl_transformer_itm_forward.12} parent=11 // pred_fallthru
        _
    $region12: #{vl_transformer_itm_forward.12} parent=5 // pred_fallthru
      _
    %p628 = scmp.lt.s32.totalorder %s29, 2
    // Predicated region
    $region93: #{vl_transformer_itm_forward.12} parent=5 // pred_check
      %p629 = pneg %p628
    $region94: #{vl_transformer_itm_forward.12} parent=5 // pred_check_branch
      %631 = sbr.rel (%p629) target = $region96
    $region95: #{vl_transformer_itm_forward.12} parent=5 // pred_region
      // Predicated region
      $region97: #{vl_transformer_itm_forward.12} parent=95 // pred_check
        %p632 = pneg %p49
      $region98: #{vl_transformer_itm_forward.12} parent=95 // pred_check_branch
        %634 = sbr.rel (%p632) target = $region100
      $region99: #{vl_transformer_itm_forward.12} parent=95 // pred_region
        %p635 = scmp.lt.s32.totalorder %s29, 1
        %s636 = scalar_select %p635, %s29, 1
        %s637 = smul.addr %s636, 8
        %s638 = scalar_lea.vmem %s0, %s637
      $region100: #{vl_transformer_itm_forward.12} parent=95 // pred_fallthru
        _
      // Predicated region
      $region101: #{vl_transformer_itm_forward.12} parent=95 // pred_check
        %p639 = pneg %p75
      $region102: #{vl_transformer_itm_forward.12} parent=95 // pred_check_branch
        %641 = sbr.rel (%p639) target = $region104
      $region103: #{vl_transformer_itm_forward.12} parent=95 // pred_region
        %p642 = scmp.lt.s32.totalorder %s29, 1
        %s643 = scalar_select %p642, %s29, 1
        %s644 = smul.addr %s643, 8
        %s645 = scalar_lea.vmem %s1, %s644
      $region104: #{vl_transformer_itm_forward.12} parent=95 // pred_fallthru
        _
      // Predicated region
      $region105: #{vl_transformer_itm_forward.12} parent=95 // pred_check
        %p646 = pneg %p101
      $region106: #{vl_transformer_itm_forward.12} parent=95 // pred_check_branch
        %648 = sbr.rel (%p646) target = $region108
      $region107: #{vl_transformer_itm_forward.12} parent=95 // pred_region
        %p649 = scmp.lt.s32.totalorder %s29, 1
        %s650 = scalar_select %p649, %s29, 1
        %s651 = scalar_lea.vmem %s2, %s650
      $region108: #{vl_transformer_itm_forward.12} parent=95 // pred_fallthru
        _
    $region96: #{vl_transformer_itm_forward.12} parent=5 // pred_fallthru
      _
    %p652 = scmp.le.s32.totalorder 1, %s29
    %p653 = scmp.lt.s32.totalorder %s29, 3
    %p654 = pnand %p652, %p653
    %p655 = pneg %p654
    // Predicated region
    $region109: #{vl_transformer_itm_forward.12} parent=5 // pred_check
      _
    $region110: #{vl_transformer_itm_forward.12} parent=5 // pred_check_branch
      %657 = sbr.rel (%p654) target = $region112
    $region111: #{vl_transformer_itm_forward.12} parent=5 // pred_region
      %s658 = ssub.s32 %s29, 1
      %p659 = scmp.lt.s32.totalorder %s34, 1
      %s660 = scalar_select %p659, %s34, 1
      %s661 = smul.addr %s660, 8
      %s662 = scalar_lea.vmem %s0, %s661
      %p663 = pneg %p55
      %p664 = pneg %p52
      %p665 = scmp.lt.s32.totalorder %s34, 1
      %s666 = scalar_select %p665, %s34, 1
      %s667 = smul.addr %s666, 8
      %s668 = scalar_lea.vmem %s1, %s667
      %p669 = pneg %p81
      %p670 = pneg %p78
      %p671 = scmp.lt.s32.totalorder %s34, 1
      %s672 = scalar_select %p671, %s34, 1
      %s673 = scalar_lea.vmem %s2, %s672
      %p674 = pneg %p107
      %p675 = pneg %p104
      %p676 = pneg %p128
      %p677 = pneg %p125
      %p678 = pneg %p149
      %p679 = pneg %p146
      %p680 = pneg %p170
      %p681 = pneg %p167
      %p682 = pneg %p191
      %p683 = pneg %p188
      %p684 = pneg %p212
      %p685 = pneg %p209
      %p686 = pneg %p233
      %p687 = pneg %p230
      %p688 = pneg %p254
      %p689 = pneg %p251
      %p690 = pneg %p275
      %p691 = pneg %p272
      %p692 = pneg %p296
      %p693 = pneg %p293
      %p694 = pneg %p317
      %p695 = pneg %p314
      %p696 = pneg %p338
      %p697 = pneg %p335
      %p698 = pneg %p359
      %p699 = pneg %p356
      %p700 = pneg %p380
      %p701 = pneg %p377
      %p702 = pneg %p401
      %p703 = pneg %p398
      %p704 = pneg %p422
      %p705 = pneg %p419
      %p706 = pneg %p443
      %p707 = pneg %p440
      %p708 = pneg %p464
      %p709 = pneg %p461
      %p710 = pneg %p485
      %p711 = pneg %p482
      %p712 = pneg %p506
      %p713 = pneg %p503
      %p714 = pneg %p527
      %p715 = pneg %p524
      %p716 = pneg %p553
      %p717 = pneg %p550
      %p718 = scmp.lt.s32.totalorder %s34, 1
      %s719 = scalar_select %p718, %s34, 1
      %s720 = smul.addr %s719, 8
      %s721 = scalar_lea.vmem %s23, %s720
      %p722 = scmp.lt.s32.totalorder %s34, 1
      %s723 = scalar_select %p722, %s34, 1
      %s724 = smul.addr %s723, 8
      %s725 = scalar_lea.vmem %s0, %s724
      %p726 = scmp.lt.s32.totalorder %s34, 1
      %s727 = scalar_select %p726, %s34, 1
      %s728 = smul.addr %s727, 8
      %s729 = scalar_lea.vmem %s1, %s728
      %p730 = scmp.lt.s32.totalorder %s34, 1
      %s731 = scalar_select %p730, %s34, 1
      %s732 = scalar_lea.vmem %s2, %s731
      %p733 = scmp.lt.s32.totalorder %s34, 1
      %s734 = scalar_select %p733, %s34, 1
      %s735 = smul.addr %s734, 8
      %s736 = scalar_lea.vmem %s23, %s735
      %v738 = vld [vmem:[%s725] sm:$0xff]
      %v739 = vld [vmem:[%s729] sm:$0x1f]
      %v740 = vld [vmem:[%s732] sm:$0x1]
      %v741 = vsub.f32 1.0, %v740
      %v742 = vmul.f32 %v741, -10000.0
      %v743 = vld [vmem:[%s3] sm:$0xff]
      %v744 = vld [vmem:[%s3 + $0x8] sm:$0xf]
      %v745 = vld [vmem:[%s3 + $0xc] sm:$0xff]
      %v746 = vld [vmem:[%s3 + $0x14] sm:$0xf]
      %v747 = vld [vmem:[%s3 + $0x18] sm:$0xff]
      %v748 = vld [vmem:[%s3 + $0x20] sm:$0xf]
      %v749 = vld [vmem:[%s3 + $0x24] sm:$0xff]
      %v750 = vld [vmem:[%s3 + $0x2c] sm:$0xf]
      %v751 = vld [vmem:[%s3 + $0x30] sm:$0xff]
      %v752 = vld [vmem:[%s3 + $0x38] sm:$0xf]
      %v753 = vld [vmem:[%s3 + $0x3c] sm:$0xff]
      %v754 = vld [vmem:[%s3 + $0x44] sm:$0xf]
      %v755 = vld [vmem:[%s3 + $0x48] sm:$0xff]
      %v756 = vld [vmem:[%s3 + $0x50] sm:$0xf]
      %v757 = vld [vmem:[%s3 + $0x54] sm:$0xff]
      %v758 = vld [vmem:[%s3 + $0x5c] sm:$0xf]
      %v759 = vld [vmem:[%s3 + $0x60] sm:$0xff]
      %v760 = vld [vmem:[%s3 + $0x68] sm:$0xf]
      %v761 = vld [vmem:[%s3 + $0x6c] sm:$0xff]
      %v762 = vld [vmem:[%s3 + $0x74] sm:$0xf]
      %v763 = vld [vmem:[%s3 + $0x78] sm:$0xff]
      %v764 = vld [vmem:[%s3 + $0x80] sm:$0xf]
      %v765 = vld [vmem:[%s3 + $0x84] sm:$0xff]
      %v766 = vld [vmem:[%s3 + $0x8c] sm:$0xf]
      %v767 = vld [vmem:[%s3 + $0x90] sm:$0xff]
      %v768 = vld [vmem:[%s3 + $0x98] sm:$0xf]
      %v769 = vld [vmem:[%s3 + $0x9c] sm:$0xff]
      %v770 = vld [vmem:[%s3 + $0xa4] sm:$0xf]
      %v771 = vld [vmem:[%s3 + $0xa8] sm:$0xff]
      %v772 = vld [vmem:[%s3 + $0xb0] sm:$0xf]
      %v773 = vld [vmem:[%s3 + $0xb4] sm:$0xff]
      %v774 = vld [vmem:[%s3 + $0xbc] sm:$0xf]
      %v775 = vld [vmem:[%s4] sm:$0x7]
      %v776 = vpack.c.bf16 %v738, %v738
      %v778 = vlaneseq
      %v779 = vshrl.u32 %v778, 7
      %v780 = vsub.s32 0, %v779
      %v781 = vrot.slane %v775, %v780
      %v782 = vlaneseq
      %v783 = vshrl.u32 %v782, 7
      %v784 = vsub.s32 1, %v783
      %v785 = vrot.slane %v775, %v784
      %v786 = vlaneseq
      %v787 = vshrl.u32 %v786, 7
      %v788 = vsub.s32 2, %v787
      %v789 = vrot.slane %v775, %v788
      %v825 = vunpack.c.l.b16 %v743
      %v826 = vunpack.c.h.b16 %v743
      %v827 = vunpack.c.l.b16 %v744
      %v828 = vunpack.c.l.b16 %v745
      %v829 = vunpack.c.h.b16 %v745
      %v830 = vunpack.c.l.b16 %v746
      %v831 = vunpack.c.l.b16 %v747
      %v832 = vunpack.c.h.b16 %v747
      %v833 = vunpack.c.l.b16 %v748
      %v834 = vunpack.c.l.b16 %v749
      %v835 = vunpack.c.h.b16 %v749
      %v836 = vunpack.c.l.b16 %v750
      %v837 = vunpack.c.l.b16 %v751
      %v838 = vunpack.c.h.b16 %v751
      %v839 = vunpack.c.l.b16 %v752
      %v840 = vunpack.c.l.b16 %v753
      %v841 = vunpack.c.h.b16 %v753
      %v842 = vunpack.c.l.b16 %v754
      %v843 = vunpack.c.l.b16 %v755
      %v844 = vunpack.c.h.b16 %v755
      %v845 = vunpack.c.l.b16 %v756
      %v846 = vunpack.c.l.b16 %v757
      %v847 = vunpack.c.h.b16 %v757
      %v848 = vunpack.c.l.b16 %v758
      %v849 = vunpack.c.l.b16 %v759
      %v850 = vunpack.c.h.b16 %v759
      %v851 = vunpack.c.l.b16 %v760
      %v852 = vunpack.c.l.b16 %v761
      %v853 = vunpack.c.h.b16 %v761
      %v854 = vunpack.c.l.b16 %v762
      %v855 = vunpack.c.l.b16 %v763
      %v856 = vunpack.c.h.b16 %v763
      %v857 = vunpack.c.l.b16 %v764
      %v858 = vunpack.c.l.b16 %v765
      %v859 = vunpack.c.h.b16 %v765
      %v860 = vunpack.c.l.b16 %v766
      %v861 = vunpack.c.l.b16 %v767
      %v862 = vunpack.c.h.b16 %v767
      %v863 = vunpack.c.l.b16 %v768
      %v864 = vunpack.c.l.b16 %v769
      %v865 = vunpack.c.h.b16 %v769
      %v866 = vunpack.c.l.b16 %v770
      %v867 = vunpack.c.l.b16 %v771
      %v868 = vunpack.c.h.b16 %v771
      %v869 = vunpack.c.l.b16 %v772
      %v870 = vunpack.c.l.b16 %v773
      %v871 = vunpack.c.h.b16 %v773
      %v872 = vunpack.c.l.b16 %v774
      %v873 = vpack.c.b16 %v828, %v825
      %v874 = vpack.c.b16 %v829, %v826
      %v875 = vpack.c.b16 %v830, %v827
      %v876 = vpack.c.b16 %v834, %v831
      %v877 = vpack.c.b16 %v835, %v832
      %v878 = vpack.c.b16 %v836, %v833
      %v879 = vpack.c.b16 %v840, %v837
      %v880 = vpack.c.b16 %v841, %v838
      %v881 = vpack.c.b16 %v842, %v839
      %v882 = vpack.c.b16 %v846, %v843
      %v883 = vpack.c.b16 %v847, %v844
      %v884 = vpack.c.b16 %v848, %v845
      %v885 = vpack.c.b16 %v852, %v849
      %v886 = vpack.c.b16 %v853, %v850
      %v887 = vpack.c.b16 %v854, %v851
      %v888 = vpack.c.b16 %v858, %v855
      %v889 = vpack.c.b16 %v859, %v856
      %v890 = vpack.c.b16 %v860, %v857
      %v891 = vpack.c.b16 %v864, %v861
      %v892 = vpack.c.b16 %v865, %v862
      %v893 = vpack.c.b16 %v866, %v863
      %v894 = vpack.c.b16 %v870, %v867
      %v895 = vpack.c.b16 %v871, %v868
      %v896 = vpack.c.b16 %v872, %v869
      %921 = vmatprep.subr.bf16.mxu0 %v895
      %922 = vmatpush1.bf16.msra.mxu0 %v894
      %923 = vmatprep.subr.bf16.mxu0 %v892
      %924 = vmatpush1.bf16.msra.mxu0 %v891
      %925 = vmatprep.subr.bf16.mxu0 %v889
      %926 = vmatpush1.bf16.msra.mxu0 %v888
      %927 = vmatprep.subr.bf16.mxu0 %v886
      %928 = vmatpush1.bf16.msra.mxu0 %v885
      %929 = vmatprep.subr.bf16.mxu0 %v883
      %930 = vmatpush1.bf16.msra.mxu0 %v882
      %931 = vmatprep.subr.bf16.mxu0 %v880
      %932 = vmatpush1.bf16.msra.mxu0 %v879
      %933 = vmatprep.subr.bf16.mxu0 %v877
      %934 = vmatpush1.bf16.msra.mxu0 %v876
      %935 = vmatprep.subr.bf16.mxu0 %v874
      %936 = vmatpush1.bf16.msra.mxu0 %v873
      %937 = vmatprep.subr.bf16.mxu0 0
      %938 = vmatpush2.bf16.msra.mxu0 0
      %939 = vmatprep.subr.bf16.mxu0 0
      %940 = vmatpush2.bf16.msra.mxu0 0
      %941 = vmatprep.subr.bf16.mxu0 0
      %942 = vmatpush2.bf16.msra.mxu0 0
      %943 = vmatprep.subr.bf16.mxu0 0
      %944 = vmatpush2.bf16.msra.mxu0 0
      %945 = vmatprep.subr.bf16.mxu0 0
      %946 = vmatpush2.bf16.msra.mxu0 0
      %947 = vmatprep.subr.bf16.mxu0 0
      %948 = vmatpush2.bf16.msra.mxu0 0
      %949 = vmatprep.subr.bf16.mxu0 0
      %950 = vmatpush2.bf16.msra.mxu0 0
      %951 = vmatprep.subr.bf16.mxu0 0
      %952 = vmatpush2.bf16.msra.mxu0 0
      %953 = vmatprep.mubr.bf16.mxu0 0
      %954 = vmatmul.mubr.bf16.gmra.mxu0 %v776
      %v955 = vpop.f32.mrf.mxu0
      %v956 = vadd.f32 %v781, %v955
      %v957 = vpop.f32.mrf.mxu0
      %v958 = vadd.f32 %v785, %v957
      %v959 = vpop.f32.mrf.mxu0
      %v960 = vpop.f32.mrf.mxu0
      %961 = vdwg.mxu0
      %962 = vmatprep.subr.bf16.mxu0 0
      %963 = vmatpush1.bf16.msra.mxu0 %v896
      %964 = vmatprep.subr.bf16.mxu0 0
      %965 = vmatpush1.bf16.msra.mxu0 %v893
      %966 = vmatprep.subr.bf16.mxu0 0
      %967 = vmatpush1.bf16.msra.mxu0 %v890
      %968 = vmatprep.subr.bf16.mxu0 0
      %969 = vmatpush1.bf16.msra.mxu0 %v887
      %970 = vmatprep.subr.bf16.mxu0 0
      %971 = vmatpush1.bf16.msra.mxu0 %v884
      %972 = vmatprep.subr.bf16.mxu0 0
      %973 = vmatpush1.bf16.msra.mxu0 %v881
      %974 = vmatprep.subr.bf16.mxu0 0
      %975 = vmatpush1.bf16.msra.mxu0 %v878
      %976 = vmatprep.subr.bf16.mxu0 0
      %977 = vmatpush1.bf16.msra.mxu0 %v875
      %978 = vmatprep.subr.bf16.mxu0 0
      %979 = vmatpush2.bf16.msra.mxu0 0
      %980 = vmatprep.subr.bf16.mxu0 0
      %981 = vmatpush2.bf16.msra.mxu0 0
      %982 = vmatprep.subr.bf16.mxu0 0
      %983 = vmatpush2.bf16.msra.mxu0 0
      %984 = vmatprep.subr.bf16.mxu0 0
      %985 = vmatpush2.bf16.msra.mxu0 0
      %986 = vmatprep.subr.bf16.mxu0 0
      %987 = vmatpush2.bf16.msra.mxu0 0
      %988 = vmatprep.subr.bf16.mxu0 0
      %989 = vmatpush2.bf16.msra.mxu0 0
      %990 = vmatprep.subr.bf16.mxu0 0
      %991 = vmatpush2.bf16.msra.mxu0 0
      %992 = vmatprep.subr.bf16.mxu0 0
      %993 = vmatpush2.bf16.msra.mxu0 0
      %994 = vmatprep.mubr.bf16.mxu0 0
      %995 = vmatmul.mubr.bf16.gmra.mxu0 %v776
      %v996 = vpop.f32.mrf.mxu0
      %v997 = vadd.f32 %v789, %v996
      %v998 = vpop.f32.mrf.mxu0
      %v999 = vpop.f32.mrf.mxu0
      %v1000 = vpop.f32.mrf.mxu0
      %1001 = vdwg.mxu0
      %v1002 = vld [vmem:[%s5] sm:$0xf]
      %v1003 = vld [vmem:[%s5 + $0x4] sm:$0xf]
      %v1004 = vld [vmem:[%s5 + $0x8] sm:$0xf]
      %v1005 = vld [vmem:[%s5 + $0xc] sm:$0xf]
      %v1006 = vld [vmem:[%s5 + $0x10] sm:$0xf]
      %v1007 = vld [vmem:[%s5 + $0x14] sm:$0xf]
      %v1008 = vld [vmem:[%s5 + $0x18] sm:$0xf]
      %v1009 = vld [vmem:[%s5 + $0x1c] sm:$0xf]
      %v1010 = vld [vmem:[%s5 + $0x20] sm:$0xf]
      %v1011 = vld [vmem:[%s5 + $0x24] sm:$0xf]
      %v1012 = vld [vmem:[%s5 + $0x28] sm:$0xf]
      %v1013 = vld [vmem:[%s5 + $0x2c] sm:$0xf]
      %v1014 = vld [vmem:[%s5 + $0x30] sm:$0xf]
      %v1015 = vld [vmem:[%s5 + $0x34] sm:$0xf]
      %v1016 = vld [vmem:[%s5 + $0x38] sm:$0xf]
      %v1017 = vld [vmem:[%s5 + $0x3c] sm:$0xf]
      %v1018 = vpack.c.bf16 %v956, %v956
      %v1019 = vpack.c.bf16 %v958, %v958
      %v1020 = vpack.c.bf16 %v997, %v997
      %vm1021 = vcmask 261120
      %v1023 = vsel %vm1021, %v1018, 0
      %v1026 = vsel %vm1021, %v1019, 0
      %1028 = vmatprep.subr.bf16.mxu0 0
      %1029 = vmatpush1.bf16.xpose.msra.mxu0 0
      %1030 = vmatprep.subr.bf16.mxu0 0
      %1031 = vmatpush1.bf16.xpose.msra.mxu0 0
      %1032 = vmatprep.subr.bf16.mxu0 0
      %1033 = vmatpush1.bf16.xpose.msra.mxu0 0
      %1034 = vmatprep.subr.bf16.mxu0 0
      %1035 = vmatpush1.bf16.xpose.msra.mxu0 0
      %1036 = vmatprep.subr.bf16.mxu0 0
      %1037 = vmatpush1.bf16.xpose.msra.mxu0 0
      %1038 = vmatprep.subr.bf16.mxu0 0
      %1039 = vmatpush1.bf16.xpose.msra.mxu0 0
      %1040 = vmatprep.subr.bf16.mxu0 0
      %1041 = vmatpush1.bf16.xpose.msra.mxu0 0
      %1042 = vmatprep.subr.bf16.mxu0 0
      %1043 = vmatpush1.bf16.xpose.msra.mxu0 %v1026
      %1044 = vmatprep.subr.bf16.mxu0 0
      %1045 = vmatpush2.bf16.xpose.msra.mxu0 0
      %1046 = vmatprep.subr.bf16.mxu0 0
      %1047 = vmatpush2.bf16.xpose.msra.mxu0 0
      %1048 = vmatprep.subr.bf16.mxu0 0
      %1049 = vmatpush2.bf16.xpose.msra.mxu0 0
      %1050 = vmatprep.subr.bf16.mxu0 0
      %1051 = vmatpush2.bf16.xpose.msra.mxu0 0
      %1052 = vmatprep.subr.bf16.mxu0 0
      %1053 = vmatpush2.bf16.xpose.msra.mxu0 0
      %1054 = vmatprep.subr.bf16.mxu0 0
      %1055 = vmatpush2.bf16.xpose.msra.mxu0 0
      %1056 = vmatprep.subr.bf16.mxu0 0
      %1057 = vmatpush2.bf16.xpose.msra.mxu0 0
      %1058 = vmatprep.subr.bf16.mxu0 0
      %1059 = vmatpush2.bf16.xpose.msra.mxu0 0
      %1060 = vmatprep.mubr.bf16.mxu0 0
      %1061 = vmatmul.mubr.bf16.gmra.mxu0 %v1023
      %v1062 = vpop.f32.mrf.mxu0
      %v1063 = vadd.f32 0.0, %v1062
      %v1064 = vpop.f32.mrf.mxu0
      %v1065 = vpop.f32.mrf.mxu0
      %v1066 = vpop.f32.mrf.mxu0
      %1067 = vdwg.mxu0
      %v1068 = vmul.f32 %v1063, 0.17677669
      %v1070 = vlaneseq
      %v1071 = vshrl.u32 %v1070, 7
      %v1072 = vsub.s32 0, %v1071
      %v1073 = vrot.slane %v742, %v1072
      %v1075 = vadd.f32 %v1068, %v1073
      %vm1076 = vcmask 64512
      %v1077 = vsel %vm1076, %v1075, -inf
      %1078 = vmax.xlane.f32.xlu0 %v1077
      %v1079 = vpop.xlane.xlu0 %1078
      %v1080 = vsub.f32 %v1075, %v1079
      %v1081 = vmul.f32 %v1080, 1.442695
      %v1082 = vpow.pop %v1081
      %v1083 = vsel %vm1076, %v1082, 0.0
      %1084 = vadd.xlane.f32.xlu0 %v1083
      %v1085 = vpop.xlane.xlu0 %1084
      %v1086 = vrcp.pop %v1085
      %v1087 = vpack.c.bf16 %v1082, %v1082
      %v1089 = vsel %vm1076, %v1087, 0
      %vm1091 = vcmask 1043456
      %v1093 = vsel %vm1091, %v1020, 0
      %1095 = vmatprep.subr.bf16.mxu0 0
      %1096 = vmatpush1.bf16.msra.mxu0 0
      %1097 = vmatprep.subr.bf16.mxu0 0
      %1098 = vmatpush1.bf16.msra.mxu0 0
      %1099 = vmatprep.subr.bf16.mxu0 0
      %1100 = vmatpush1.bf16.msra.mxu0 0
      %1101 = vmatprep.subr.bf16.mxu0 0
      %1102 = vmatpush1.bf16.msra.mxu0 0
      %1103 = vmatprep.subr.bf16.mxu0 0
      %1104 = vmatpush1.bf16.msra.mxu0 0
      %1105 = vmatprep.subr.bf16.mxu0 0
      %1106 = vmatpush1.bf16.msra.mxu0 0
      %1107 = vmatprep.subr.bf16.mxu0 0
      %1108 = vmatpush1.bf16.msra.mxu0 0
      %1109 = vmatprep.subr.bf16.mxu0 0
      %1110 = vmatpush1.bf16.msra.mxu0 %v1093
      %1111 = vmatprep.subr.bf16.mxu0 0
      %1112 = vmatpush2.bf16.msra.mxu0 0
      %1113 = vmatprep.subr.bf16.mxu0 0
      %1114 = vmatpush2.bf16.msra.mxu0 0
      %1115 = vmatprep.subr.bf16.mxu0 0
      %1116 = vmatpush2.bf16.msra.mxu0 0
      %1117 = vmatprep.subr.bf16.mxu0 0
      %1118 = vmatpush2.bf16.msra.mxu0 0
      %1119 = vmatprep.subr.bf16.mxu0 0
      %1120 = vmatpush2.bf16.msra.mxu0 0
      %1121 = vmatprep.subr.bf16.mxu0 0
      %1122 = vmatpush2.bf16.msra.mxu0 0
      %1123 = vmatprep.subr.bf16.mxu0 0
      %1124 = vmatpush2.bf16.msra.mxu0 0
      %1125 = vmatprep.subr.bf16.mxu0 0
      %1126 = vmatpush2.bf16.msra.mxu0 0
      %1127 = vmatprep.mubr.bf16.mxu0 0
      %1128 = vmatmul.mubr.bf16.gmra.mxu0 %v1089
      %v1129 = vpop.f32.mrf.mxu0
      %v1130 = vadd.f32 0.0, %v1129
      %v1131 = vpop.f32.mrf.mxu0
      %v1132 = vpop.f32.mrf.mxu0
      %v1133 = vpop.f32.mrf.mxu0
      %1134 = vdwg.mxu0
      %v1135 = vmul.f32 %v1130, %v1086
      %v1136 = vpack.c.bf16 %v1135, %v1135
      %1138 = vrot.lane.b32.xlu0 %v1018, 96
      %v1139 = vpop.permute.xlu0 %1138
      %1141 = vrot.lane.b32.xlu0 %v1019, 96
      %v1142 = vpop.permute.xlu0 %1141
      %v1144 = vsel %vm1021, %v1139, 0
      %v1147 = vsel %vm1021, %v1142, 0
      %1149 = vmatprep.subr.bf16.mxu0 0
      %1150 = vmatpush1.bf16.xpose.msra.mxu0 0
      %1151 = vmatprep.subr.bf16.mxu0 0
      %1152 = vmatpush1.bf16.xpose.msra.mxu0 0
      %1153 = vmatprep.subr.bf16.mxu0 0
      %1154 = vmatpush1.bf16.xpose.msra.mxu0 0
      %1155 = vmatprep.subr.bf16.mxu0 0
      %1156 = vmatpush1.bf16.xpose.msra.mxu0 0
      %1157 = vmatprep.subr.bf16.mxu0 0
      %1158 = vmatpush1.bf16.xpose.msra.mxu0 0
      %1159 = vmatprep.subr.bf16.mxu0 0
      %1160 = vmatpush1.bf16.xpose.msra.mxu0 0
      %1161 = vmatprep.subr.bf16.mxu0 0
      %1162 = vmatpush1.bf16.xpose.msra.mxu0 0
      %1163 = vmatprep.subr.bf16.mxu0 0
      %1164 = vmatpush1.bf16.xpose.msra.mxu0 %v1147
      %1165 = vmatprep.subr.bf16.mxu0 0
      %1166 = vmatpush2.bf16.xpose.msra.mxu0 0
      %1167 = vmatprep.subr.bf16.mxu0 0
      %1168 = vmatpush2.bf16.xpose.msra.mxu0 0
      %1169 = vmatprep.subr.bf16.mxu0 0
      %1170 = vmatpush2.bf16.xpose.msra.mxu0 0
      %1171 = vmatprep.subr.bf16.mxu0 0
      %1172 = vmatpush2.bf16.xpose.msra.mxu0 0
      %1173 = vmatprep.subr.bf16.mxu0 0
      %1174 = vmatpush2.bf16.xpose.msra.mxu0 0
      %1175 = vmatprep.subr.bf16.mxu0 0
      %1176 = vmatpush2.bf16.xpose.msra.mxu0 0
      %1177 = vmatprep.subr.bf16.mxu0 0
      %1178 = vmatpush2.bf16.xpose.msra.mxu0 0
      %1179 = vmatprep.subr.bf16.mxu0 0
      %1180 = vmatpush2.bf16.xpose.msra.mxu0 0
      %1181 = vmatprep.mubr.bf16.mxu0 0
      %1182 = vmatmul.mubr.bf16.gmra.mxu0 %v1144
      %v1183 = vpop.f32.mrf.mxu0
      %v1184 = vadd.f32 0.0, %v1183
      %v1185 = vpop.f32.mrf.mxu0
      %v1186 = vpop.f32.mrf.mxu0
      %v1187 = vpop.f32.mrf.mxu0
      %1188 = vdwg.mxu0
      %v1189 = vmul.f32 %v1184, 0.17677669
      %v1190 = vadd.f32 %v1189, %v1073
      %v1191 = vsel %vm1076, %v1190, -inf
      %1192 = vmax.xlane.f32.xlu0 %v1191
      %v1193 = vpop.xlane.xlu0 %1192
      %v1194 = vsub.f32 %v1190, %v1193
      %v1195 = vmul.f32 %v1194, 1.442695
      %v1196 = vpow.pop %v1195
      %v1197 = vsel %vm1076, %v1196, 0.0
      %1198 = vadd.xlane.f32.xlu0 %v1197
      %v1199 = vpop.xlane.xlu0 %1198
      %v1200 = vrcp.pop %v1199
      %v1201 = vpack.c.bf16 %v1196, %v1196
      %1203 = vrot.lane.b32.xlu0 %v1020, 96
      %v1204 = vpop.permute.xlu0 %1203
      %v1206 = vsel %vm1076, %v1201, 0
      %v1209 = vsel %vm1091, %v1204, 0
      %1211 = vmatprep.subr.bf16.mxu0 0
      %1212 = vmatpush1.bf16.msra.mxu0 0
      %1213 = vmatprep.subr.bf16.mxu0 0
      %1214 = vmatpush1.bf16.msra.mxu0 0
      %1215 = vmatprep.subr.bf16.mxu0 0
      %1216 = vmatpush1.bf16.msra.mxu0 0
      %1217 = vmatprep.subr.bf16.mxu0 0
      %1218 = vmatpush1.bf16.msra.mxu0 0
      %1219 = vmatprep.subr.bf16.mxu0 0
      %1220 = vmatpush1.bf16.msra.mxu0 0
      %1221 = vmatprep.subr.bf16.mxu0 0
      %1222 = vmatpush1.bf16.msra.mxu0 0
      %1223 = vmatprep.subr.bf16.mxu0 0
      %1224 = vmatpush1.bf16.msra.mxu0 0
      %1225 = vmatprep.subr.bf16.mxu0 0
      %1226 = vmatpush1.bf16.msra.mxu0 %v1209
      %1227 = vmatprep.subr.bf16.mxu0 0
      %1228 = vmatpush2.bf16.msra.mxu0 0
      %1229 = vmatprep.subr.bf16.mxu0 0
      %1230 = vmatpush2.bf16.msra.mxu0 0
      %1231 = vmatprep.subr.bf16.mxu0 0
      %1232 = vmatpush2.bf16.msra.mxu0 0
      %1233 = vmatprep.subr.bf16.mxu0 0
      %1234 = vmatpush2.bf16.msra.mxu0 0
      %1235 = vmatprep.subr.bf16.mxu0 0
      %1236 = vmatpush2.bf16.msra.mxu0 0
      %1237 = vmatprep.subr.bf16.mxu0 0
      %1238 = vmatpush2.bf16.msra.mxu0 0
      %1239 = vmatprep.subr.bf16.mxu0 0
      %1240 = vmatpush2.bf16.msra.mxu0 0
      %1241 = vmatprep.subr.bf16.mxu0 0
      %1242 = vmatpush2.bf16.msra.mxu0 0
      %1243 = vmatprep.mubr.bf16.mxu0 0
      %1244 = vmatmul.mubr.bf16.gmra.mxu0 %v1206
      %v1245 = vpop.f32.mrf.mxu0
      %v1246 = vadd.f32 0.0, %v1245
      %v1247 = vpop.f32.mrf.mxu0
      %v1248 = vpop.f32.mrf.mxu0
      %v1249 = vpop.f32.mrf.mxu0
      %1250 = vdwg.mxu0
      %v1251 = vmul.f32 %v1246, %v1200
      %v1252 = vpack.c.bf16 %v1251, %v1251
      %v1257 = vunpack.c.l.b16 %v1006
      %v1258 = vunpack.c.l.b16 %v1007
      %v1259 = vunpack.c.l.b16 %v1008
      %v1260 = vunpack.c.l.b16 %v1009
      %v1261 = vpack.c.b16 %v1258, %v1257
      %v1262 = vpack.c.b16 %v1260, %v1259
      %v1266 = vsel %vm1021, %v1252, 0
      %1268 = vmatprep.subr.bf16.mxu0 0
      %1269 = vmatpush1.bf16.msra.mxu0 0
      %1270 = vmatprep.subr.bf16.mxu0 0
      %1271 = vmatpush1.bf16.msra.mxu0 0
      %1272 = vmatprep.subr.bf16.mxu0 0
      %1273 = vmatpush1.bf16.msra.mxu0 0
      %1274 = vmatprep.subr.bf16.mxu0 0
      %1275 = vmatpush1.bf16.msra.mxu0 0
      %1276 = vmatprep.subr.bf16.mxu0 0
      %1277 = vmatpush1.bf16.msra.mxu0 0
      %1278 = vmatprep.subr.bf16.mxu0 0
      %1279 = vmatpush1.bf16.msra.mxu0 0
      %1280 = vmatprep.subr.bf16.mxu0 0
      %1281 = vmatpush1.bf16.msra.mxu0 %v1262
      %1282 = vmatprep.subr.bf16.mxu0 0
      %1283 = vmatpush1.bf16.msra.mxu0 %v1261
      %1284 = vmatprep.subr.bf16.mxu0 0
      %1285 = vmatpush2.bf16.msra.mxu0 0
      %1286 = vmatprep.subr.bf16.mxu0 0
      %1287 = vmatpush2.bf16.msra.mxu0 0
      %1288 = vmatprep.subr.bf16.mxu0 0
      %1289 = vmatpush2.bf16.msra.mxu0 0
      %1290 = vmatprep.subr.bf16.mxu0 0
      %1291 = vmatpush2.bf16.msra.mxu0 0
      %1292 = vmatprep.subr.bf16.mxu0 0
      %1293 = vmatpush2.bf16.msra.mxu0 0
      %1294 = vmatprep.subr.bf16.mxu0 0
      %1295 = vmatpush2.bf16.msra.mxu0 0
      %1296 = vmatprep.subr.bf16.mxu0 0
      %1297 = vmatpush2.bf16.msra.mxu0 0
      %1298 = vmatprep.subr.bf16.mxu0 0
      %1299 = vmatpush2.bf16.msra.mxu0 0
      %1300 = vmatprep.mubr.bf16.mxu0 0
      %1301 = vmatmul.mubr.bf16.gmra.mxu0 %v1266
      %v1302 = vpop.f32.mrf.mxu0
      %v1303 = vadd.f32 0.0, %v1302
      %v1304 = vpop.f32.mrf.mxu0
      %v1305 = vpop.f32.mrf.mxu0
      %v1306 = vpop.f32.mrf.mxu0
      %1307 = vdwg.mxu0
      %v1312 = vunpack.c.l.b16 %v1002
      %v1313 = vunpack.c.l.b16 %v1003
      %v1314 = vunpack.c.l.b16 %v1004
      %v1315 = vunpack.c.l.b16 %v1005
      %v1316 = vpack.c.b16 %v1313, %v1312
      %v1317 = vpack.c.b16 %v1315, %v1314
      %v1321 = vsel %vm1021, %v1136, 0
      %1323 = vmatprep.subr.bf16.mxu0 0
      %1324 = vmatpush1.bf16.msra.mxu0 0
      %1325 = vmatprep.subr.bf16.mxu0 0
      %1326 = vmatpush1.bf16.msra.mxu0 0
      %1327 = vmatprep.subr.bf16.mxu0 0
      %1328 = vmatpush1.bf16.msra.mxu0 0
      %1329 = vmatprep.subr.bf16.mxu0 0
      %1330 = vmatpush1.bf16.msra.mxu0 0
      %1331 = vmatprep.subr.bf16.mxu0 0
      %1332 = vmatpush1.bf16.msra.mxu0 0
      %1333 = vmatprep.subr.bf16.mxu0 0
      %1334 = vmatpush1.bf16.msra.mxu0 0
      %1335 = vmatprep.subr.bf16.mxu0 0
      %1336 = vmatpush1.bf16.msra.mxu0 %v1317
      %1337 = vmatprep.subr.bf16.mxu0 0
      %1338 = vmatpush1.bf16.msra.mxu0 %v1316
      %1339 = vmatprep.subr.bf16.mxu0 0
      %1340 = vmatpush2.bf16.msra.mxu0 0
      %1341 = vmatprep.subr.bf16.mxu0 0
      %1342 = vmatpush2.bf16.msra.mxu0 0
      %1343 = vmatprep.subr.bf16.mxu0 0
      %1344 = vmatpush2.bf16.msra.mxu0 0
      %1345 = vmatprep.subr.bf16.mxu0 0
      %1346 = vmatpush2.bf16.msra.mxu0 0
      %1347 = vmatprep.subr.bf16.mxu0 0
      %1348 = vmatpush2.bf16.msra.mxu0 0
      %1349 = vmatprep.subr.bf16.mxu0 0
      %1350 = vmatpush2.bf16.msra.mxu0 0
      %1351 = vmatprep.subr.bf16.mxu0 0
      %1352 = vmatpush2.bf16.msra.mxu0 0
      %1353 = vmatprep.subr.bf16.mxu0 0
      %1354 = vmatpush2.bf16.msra.mxu0 0
      %1355 = vmatprep.mubr.bf16.mxu0 0
      %1356 = vmatmul.mubr.bf16.gmra.mxu0 %v1321
      %v1357 = vpop.f32.mrf.mxu0
      %v1358 = vadd.f32 %v1303, %v1357
      %v1359 = vpop.f32.mrf.mxu0
      %v1360 = vpop.f32.mrf.mxu0
      %v1361 = vpop.f32.mrf.mxu0
      %1362 = vdwg.mxu0
      %1363 = vrot.lane.b32.xlu0 %v1018, 64
      %v1364 = vpop.permute.xlu0 %1363
      %1365 = vrot.lane.b32.xlu0 %v1019, 64
      %v1366 = vpop.permute.xlu0 %1365
      %v1368 = vsel %vm1021, %v1364, 0
      %v1371 = vsel %vm1021, %v1366, 0
      %1373 = vmatprep.subr.bf16.mxu0 0
      %1374 = vmatpush1.bf16.xpose.msra.mxu0 0
      %1375 = vmatprep.subr.bf16.mxu0 0
      %1376 = vmatpush1.bf16.xpose.msra.mxu0 0
      %1377 = vmatprep.subr.bf16.mxu0 0
      %1378 = vmatpush1.bf16.xpose.msra.mxu0 0
      %1379 = vmatprep.subr.bf16.mxu0 0
      %1380 = vmatpush1.bf16.xpose.msra.mxu0 0
      %1381 = vmatprep.subr.bf16.mxu0 0
      %1382 = vmatpush1.bf16.xpose.msra.mxu0 0
      %1383 = vmatprep.subr.bf16.mxu0 0
      %1384 = vmatpush1.bf16.xpose.msra.mxu0 0
      %1385 = vmatprep.subr.bf16.mxu0 0
      %1386 = vmatpush1.bf16.xpose.msra.mxu0 0
      %1387 = vmatprep.subr.bf16.mxu0 0
      %1388 = vmatpush1.bf16.xpose.msra.mxu0 %v1371
      %1389 = vmatprep.subr.bf16.mxu0 0
      %1390 = vmatpush2.bf16.xpose.msra.mxu0 0
      %1391 = vmatprep.subr.bf16.mxu0 0
      %1392 = vmatpush2.bf16.xpose.msra.mxu0 0
      %1393 = vmatprep.subr.bf16.mxu0 0
      %1394 = vmatpush2.bf16.xpose.msra.mxu0 0
      %1395 = vmatprep.subr.bf16.mxu0 0
      %1396 = vmatpush2.bf16.xpose.msra.mxu0 0
      %1397 = vmatprep.subr.bf16.mxu0 0
      %1398 = vmatpush2.bf16.xpose.msra.mxu0 0
      %1399 = vmatprep.subr.bf16.mxu0 0
      %1400 = vmatpush2.bf16.xpose.msra.mxu0 0
      %1401 = vmatprep.subr.bf16.mxu0 0
      %1402 = vmatpush2.bf16.xpose.msra.mxu0 0
      %1403 = vmatprep.subr.bf16.mxu0 0
      %1404 = vmatpush2.bf16.xpose.msra.mxu0 0
      %1405 = vmatprep.mubr.bf16.mxu0 0
      %1406 = vmatmul.mubr.bf16.gmra.mxu0 %v1368
      %v1407 = vpop.f32.mrf.mxu0
      %v1408 = vadd.f32 0.0, %v1407
      %v1409 = vpop.f32.mrf.mxu0
      %v1410 = vpop.f32.mrf.mxu0
      %v1411 = vpop.f32.mrf.mxu0
      %1412 = vdwg.mxu0
      %v1413 = vmul.f32 %v1408, 0.17677669
      %v1414 = vadd.f32 %v1413, %v1073
      %v1415 = vsel %vm1076, %v1414, -inf
      %1416 = vmax.xlane.f32.xlu0 %v1415
      %v1417 = vpop.xlane.xlu0 %1416
      %v1418 = vsub.f32 %v1414, %v1417
      %v1419 = vmul.f32 %v1418, 1.442695
      %v1420 = vpow.pop %v1419
      %v1421 = vsel %vm1076, %v1420, 0.0
      %1422 = vadd.xlane.f32.xlu0 %v1421
      %v1423 = vpop.xlane.xlu0 %1422
      %v1424 = vrcp.pop %v1423
      %v1425 = vpack.c.bf16 %v1420, %v1420
      %1426 = vrot.lane.b32.xlu0 %v1020, 64
      %v1427 = vpop.permute.xlu0 %1426
      %v1429 = vsel %vm1076, %v1425, 0
      %v1432 = vsel %vm1091, %v1427, 0
      %1434 = vmatprep.subr.bf16.mxu0 0
      %1435 = vmatpush1.bf16.msra.mxu0 0
      %1436 = vmatprep.subr.bf16.mxu0 0
      %1437 = vmatpush1.bf16.msra.mxu0 0
      %1438 = vmatprep.subr.bf16.mxu0 0
      %1439 = vmatpush1.bf16.msra.mxu0 0
      %1440 = vmatprep.subr.bf16.mxu0 0
      %1441 = vmatpush1.bf16.msra.mxu0 0
      %1442 = vmatprep.subr.bf16.mxu0 0
      %1443 = vmatpush1.bf16.msra.mxu0 0
      %1444 = vmatprep.subr.bf16.mxu0 0
      %1445 = vmatpush1.bf16.msra.mxu0 0
      %1446 = vmatprep.subr.bf16.mxu0 0
      %1447 = vmatpush1.bf16.msra.mxu0 0
      %1448 = vmatprep.subr.bf16.mxu0 0
      %1449 = vmatpush1.bf16.msra.mxu0 %v1432
      %1450 = vmatprep.subr.bf16.mxu0 0
      %1451 = vmatpush2.bf16.msra.mxu0 0
      %1452 = vmatprep.subr.bf16.mxu0 0
      %1453 = vmatpush2.bf16.msra.mxu0 0
      %1454 = vmatprep.subr.bf16.mxu0 0
      %1455 = vmatpush2.bf16.msra.mxu0 0
      %1456 = vmatprep.subr.bf16.mxu0 0
      %1457 = vmatpush2.bf16.msra.mxu0 0
      %1458 = vmatprep.subr.bf16.mxu0 0
      %1459 = vmatpush2.bf16.msra.mxu0 0
      %1460 = vmatprep.subr.bf16.mxu0 0
      %1461 = vmatpush2.bf16.msra.mxu0 0
      %1462 = vmatprep.subr.bf16.mxu0 0
      %1463 = vmatpush2.bf16.msra.mxu0 0
      %1464 = vmatprep.subr.bf16.mxu0 0
      %1465 = vmatpush2.bf16.msra.mxu0 0
      %1466 = vmatprep.mubr.bf16.mxu0 0
      %1467 = vmatmul.mubr.bf16.gmra.mxu0 %v1429
      %v1468 = vpop.f32.mrf.mxu0
      %v1469 = vadd.f32 0.0, %v1468
      %v1470 = vpop.f32.mrf.mxu0
      %v1471 = vpop.f32.mrf.mxu0
      %v1472 = vpop.f32.mrf.mxu0
      %1473 = vdwg.mxu0
      %v1474 = vmul.f32 %v1469, %v1424
      %v1475 = vpack.c.bf16 %v1474, %v1474
      %v1480 = vunpack.c.l.b16 %v1010
      %v1481 = vunpack.c.l.b16 %v1011
      %v1482 = vunpack.c.l.b16 %v1012
      %v1483 = vunpack.c.l.b16 %v1013
      %v1484 = vpack.c.b16 %v1481, %v1480
      %v1485 = vpack.c.b16 %v1483, %v1482
      %v1489 = vsel %vm1021, %v1475, 0
      %1491 = vmatprep.subr.bf16.mxu0 0
      %1492 = vmatpush1.bf16.msra.mxu0 0
      %1493 = vmatprep.subr.bf16.mxu0 0
      %1494 = vmatpush1.bf16.msra.mxu0 0
      %1495 = vmatprep.subr.bf16.mxu0 0
      %1496 = vmatpush1.bf16.msra.mxu0 0
      %1497 = vmatprep.subr.bf16.mxu0 0
      %1498 = vmatpush1.bf16.msra.mxu0 0
      %1499 = vmatprep.subr.bf16.mxu0 0
      %1500 = vmatpush1.bf16.msra.mxu0 0
      %1501 = vmatprep.subr.bf16.mxu0 0
      %1502 = vmatpush1.bf16.msra.mxu0 0
      %1503 = vmatprep.subr.bf16.mxu0 0
      %1504 = vmatpush1.bf16.msra.mxu0 %v1485
      %1505 = vmatprep.subr.bf16.mxu0 0
      %1506 = vmatpush1.bf16.msra.mxu0 %v1484
      %1507 = vmatprep.subr.bf16.mxu0 0
      %1508 = vmatpush2.bf16.msra.mxu0 0
      %1509 = vmatprep.subr.bf16.mxu0 0
      %1510 = vmatpush2.bf16.msra.mxu0 0
      %1511 = vmatprep.subr.bf16.mxu0 0
      %1512 = vmatpush2.bf16.msra.mxu0 0
      %1513 = vmatprep.subr.bf16.mxu0 0
      %1514 = vmatpush2.bf16.msra.mxu0 0
      %1515 = vmatprep.subr.bf16.mxu0 0
      %1516 = vmatpush2.bf16.msra.mxu0 0
      %1517 = vmatprep.subr.bf16.mxu0 0
      %1518 = vmatpush2.bf16.msra.mxu0 0
      %1519 = vmatprep.subr.bf16.mxu0 0
      %1520 = vmatpush2.bf16.msra.mxu0 0
      %1521 = vmatprep.subr.bf16.mxu0 0
      %1522 = vmatpush2.bf16.msra.mxu0 0
      %1523 = vmatprep.mubr.bf16.mxu0 0
      %1524 = vmatmul.mubr.bf16.gmra.mxu0 %v1489
      %v1525 = vpop.f32.mrf.mxu0
      %v1526 = vadd.f32 0.0, %v1525
      %v1527 = vpop.f32.mrf.mxu0
      %v1528 = vpop.f32.mrf.mxu0
      %v1529 = vpop.f32.mrf.mxu0
      %1530 = vdwg.mxu0
      %v1531 = vadd.f32 %v1358, %v1526
      %1532 = vrot.lane.b32.xlu0 %v1018, 32
      %v1533 = vpop.permute.xlu0 %1532
      %1534 = vrot.lane.b32.xlu0 %v1019, 32
      %v1535 = vpop.permute.xlu0 %1534
      %v1537 = vsel %vm1021, %v1533, 0
      %v1540 = vsel %vm1021, %v1535, 0
      %1542 = vmatprep.subr.bf16.mxu0 0
      %1543 = vmatpush1.bf16.xpose.msra.mxu0 0
      %1544 = vmatprep.subr.bf16.mxu0 0
      %1545 = vmatpush1.bf16.xpose.msra.mxu0 0
      %1546 = vmatprep.subr.bf16.mxu0 0
      %1547 = vmatpush1.bf16.xpose.msra.mxu0 0
      %1548 = vmatprep.subr.bf16.mxu0 0
      %1549 = vmatpush1.bf16.xpose.msra.mxu0 0
      %1550 = vmatprep.subr.bf16.mxu0 0
      %1551 = vmatpush1.bf16.xpose.msra.mxu0 0
      %1552 = vmatprep.subr.bf16.mxu0 0
      %1553 = vmatpush1.bf16.xpose.msra.mxu0 0
      %1554 = vmatprep.subr.bf16.mxu0 0
      %1555 = vmatpush1.bf16.xpose.msra.mxu0 0
      %1556 = vmatprep.subr.bf16.mxu0 0
      %1557 = vmatpush1.bf16.xpose.msra.mxu0 %v1540
      %1558 = vmatprep.subr.bf16.mxu0 0
      %1559 = vmatpush2.bf16.xpose.msra.mxu0 0
      %1560 = vmatprep.subr.bf16.mxu0 0
      %1561 = vmatpush2.bf16.xpose.msra.mxu0 0
      %1562 = vmatprep.subr.bf16.mxu0 0
      %1563 = vmatpush2.bf16.xpose.msra.mxu0 0
      %1564 = vmatprep.subr.bf16.mxu0 0
      %1565 = vmatpush2.bf16.xpose.msra.mxu0 0
      %1566 = vmatprep.subr.bf16.mxu0 0
      %1567 = vmatpush2.bf16.xpose.msra.mxu0 0
      %1568 = vmatprep.subr.bf16.mxu0 0
      %1569 = vmatpush2.bf16.xpose.msra.mxu0 0
      %1570 = vmatprep.subr.bf16.mxu0 0
      %1571 = vmatpush2.bf16.xpose.msra.mxu0 0
      %1572 = vmatprep.subr.bf16.mxu0 0
      %1573 = vmatpush2.bf16.xpose.msra.mxu0 0
      %1574 = vmatprep.mubr.bf16.mxu0 0
      %1575 = vmatmul.mubr.bf16.gmra.mxu0 %v1537
      %v1576 = vpop.f32.mrf.mxu0
      %v1577 = vadd.f32 0.0, %v1576
      %v1578 = vpop.f32.mrf.mxu0
      %v1579 = vpop.f32.mrf.mxu0
      %v1580 = vpop.f32.mrf.mxu0
      %1581 = vdwg.mxu0
      %v1582 = vmul.f32 %v1577, 0.17677669
      %v1583 = vadd.f32 %v1582, %v1073
      %v1584 = vsel %vm1076, %v1583, -inf
      %1585 = vmax.xlane.f32.xlu0 %v1584
      %v1586 = vpop.xlane.xlu0 %1585
      %v1587 = vsub.f32 %v1583, %v1586
      %v1588 = vmul.f32 %v1587, 1.442695
      %v1589 = vpow.pop %v1588
      %v1590 = vsel %vm1076, %v1589, 0.0
      %1591 = vadd.xlane.f32.xlu0 %v1590
      %v1592 = vpop.xlane.xlu0 %1591
      %v1593 = vrcp.pop %v1592
      %v1594 = vpack.c.bf16 %v1589, %v1589
      %1595 = vrot.lane.b32.xlu0 %v1020, 32
      %v1596 = vpop.permute.xlu0 %1595
      %v1598 = vsel %vm1076, %v1594, 0
      %v1601 = vsel %vm1091, %v1596, 0
      %1603 = vmatprep.subr.bf16.mxu0 0
      %1604 = vmatpush1.bf16.msra.mxu0 0
      %1605 = vmatprep.subr.bf16.mxu0 0
      %1606 = vmatpush1.bf16.msra.mxu0 0
      %1607 = vmatprep.subr.bf16.mxu0 0
      %1608 = vmatpush1.bf16.msra.mxu0 0
      %1609 = vmatprep.subr.bf16.mxu0 0
      %1610 = vmatpush1.bf16.msra.mxu0 0
      %1611 = vmatprep.subr.bf16.mxu0 0
      %1612 = vmatpush1.bf16.msra.mxu0 0
      %1613 = vmatprep.subr.bf16.mxu0 0
      %1614 = vmatpush1.bf16.msra.mxu0 0
      %1615 = vmatprep.subr.bf16.mxu0 0
      %1616 = vmatpush1.bf16.msra.mxu0 0
      %1617 = vmatprep.subr.bf16.mxu0 0
      %1618 = vmatpush1.bf16.msra.mxu0 %v1601
      %1619 = vmatprep.subr.bf16.mxu0 0
      %1620 = vmatpush2.bf16.msra.mxu0 0
      %1621 = vmatprep.subr.bf16.mxu0 0
      %1622 = vmatpush2.bf16.msra.mxu0 0
      %1623 = vmatprep.subr.bf16.mxu0 0
      %1624 = vmatpush2.bf16.msra.mxu0 0
      %1625 = vmatprep.subr.bf16.mxu0 0
      %1626 = vmatpush2.bf16.msra.mxu0 0
      %1627 = vmatprep.subr.bf16.mxu0 0
      %1628 = vmatpush2.bf16.msra.mxu0 0
      %1629 = vmatprep.subr.bf16.mxu0 0
      %1630 = vmatpush2.bf16.msra.mxu0 0
      %1631 = vmatprep.subr.bf16.mxu0 0
      %1632 = vmatpush2.bf16.msra.mxu0 0
      %1633 = vmatprep.subr.bf16.mxu0 0
      %1634 = vmatpush2.bf16.msra.mxu0 0
      %1635 = vmatprep.mubr.bf16.mxu0 0
      %1636 = vmatmul.mubr.bf16.gmra.mxu0 %v1598
      %v1637 = vpop.f32.mrf.mxu0
      %v1638 = vadd.f32 0.0, %v1637
      %v1639 = vpop.f32.mrf.mxu0
      %v1640 = vpop.f32.mrf.mxu0
      %v1641 = vpop.f32.mrf.mxu0
      %1642 = vdwg.mxu0
      %v1643 = vmul.f32 %v1638, %v1593
      %v1644 = vpack.c.bf16 %v1643, %v1643
      %v1649 = vunpack.c.l.b16 %v1014
      %v1650 = vunpack.c.l.b16 %v1015
      %v1651 = vunpack.c.l.b16 %v1016
      %v1652 = vunpack.c.l.b16 %v1017
      %v1653 = vpack.c.b16 %v1650, %v1649
      %v1654 = vpack.c.b16 %v1652, %v1651
      %v1658 = vsel %vm1021, %v1644, 0
      %1660 = vmatprep.subr.bf16.mxu0 0
      %1661 = vmatpush1.bf16.msra.mxu0 0
      %1662 = vmatprep.subr.bf16.mxu0 0
      %1663 = vmatpush1.bf16.msra.mxu0 0
      %1664 = vmatprep.subr.bf16.mxu0 0
      %1665 = vmatpush1.bf16.msra.mxu0 0
      %1666 = vmatprep.subr.bf16.mxu0 0
      %1667 = vmatpush1.bf16.msra.mxu0 0
      %1668 = vmatprep.subr.bf16.mxu0 0
      %1669 = vmatpush1.bf16.msra.mxu0 0
      %1670 = vmatprep.subr.bf16.mxu0 0
      %1671 = vmatpush1.bf16.msra.mxu0 0
      %1672 = vmatprep.subr.bf16.mxu0 0
      %1673 = vmatpush1.bf16.msra.mxu0 %v1654
      %1674 = vmatprep.subr.bf16.mxu0 0
      %1675 = vmatpush1.bf16.msra.mxu0 %v1653
      %1676 = vmatprep.subr.bf16.mxu0 0
      %1677 = vmatpush2.bf16.msra.mxu0 0
      %1678 = vmatprep.subr.bf16.mxu0 0
      %1679 = vmatpush2.bf16.msra.mxu0 0
      %1680 = vmatprep.subr.bf16.mxu0 0
      %1681 = vmatpush2.bf16.msra.mxu0 0
      %1682 = vmatprep.subr.bf16.mxu0 0
      %1683 = vmatpush2.bf16.msra.mxu0 0
      %1684 = vmatprep.subr.bf16.mxu0 0
      %1685 = vmatpush2.bf16.msra.mxu0 0
      %1686 = vmatprep.subr.bf16.mxu0 0
      %1687 = vmatpush2.bf16.msra.mxu0 0
      %1688 = vmatprep.subr.bf16.mxu0 0
      %1689 = vmatpush2.bf16.msra.mxu0 0
      %1690 = vmatprep.subr.bf16.mxu0 0
      %1691 = vmatpush2.bf16.msra.mxu0 0
      %1692 = vmatprep.mubr.bf16.mxu0 0
      %1693 = vmatmul.mubr.bf16.gmra.mxu0 %v1658
      %v1694 = vpop.f32.mrf.mxu0
      %v1695 = vadd.f32 0.0, %v1694
      %v1696 = vpop.f32.mrf.mxu0
      %v1697 = vpop.f32.mrf.mxu0
      %v1698 = vpop.f32.mrf.mxu0
      %1699 = vdwg.mxu0
      %v1700 = vadd.f32 %v1531, %v1695
      %v1701 = vld [vmem:[%s6] sm:$0x1]
      %v1703 = vlaneseq
      %v1704 = vshrl.u32 %v1703, 7
      %v1705 = vsub.s32 0, %v1704
      %v1706 = vrot.slane %v1701, %v1705
      %v1708 = vadd.f32 %v1700, %v1706
      %v1709 = vadd.f32 %v1708, %v738
      %v1710 = vld [vmem:[%s7] sm:$0x1]
      %v1711 = vld [vmem:[%s8] sm:$0x1]
      %1712 = vadd.xlane.f32.xlu0 %v1709
      %v1713 = vpop.xlane.xlu0 %1712
      %v1714 = vrcp.pop 128.0
      %v1715 = vmul.f32 %v1713, %v1714
      %v1716 = vsub.f32 %v1709, %v1715
      %v1717 = vmul.f32 %v1716, %v1716
      %1718 = vadd.xlane.f32.xlu0 %v1717
      %v1719 = vpop.xlane.xlu0 %1718
      %v1720 = vmul.f32 %v1719, %v1714
      %v1721 = vadd.f32 %v1720, 1e-12
      %v1722 = vrsqrt.pop %v1721
      %v1723 = vmul.f32 %v1716, %v1722
      %v1725 = vlaneseq
      %v1726 = vshrl.u32 %v1725, 7
      %v1727 = vsub.s32 0, %v1726
      %v1728 = vrot.slane %v1710, %v1727
      %v1730 = vmul.f32 %v1723, %v1728
      %v1732 = vlaneseq
      %v1733 = vshrl.u32 %v1732, 7
      %v1734 = vsub.s32 0, %v1733
      %v1735 = vrot.slane %v1711, %v1734
      %v1737 = vadd.f32 %v1730, %v1735
      %v1738 = vld [vmem:[%s9] sm:$0xf]
      %v1739 = vld [vmem:[%s9 + $0x4] sm:$0xf]
      %v1740 = vld [vmem:[%s9 + $0x8] sm:$0xf]
      %v1741 = vld [vmem:[%s9 + $0xc] sm:$0xf]
      %v1742 = vld [vmem:[%s9 + $0x10] sm:$0xf]
      %v1743 = vld [vmem:[%s9 + $0x14] sm:$0xf]
      %v1744 = vld [vmem:[%s9 + $0x18] sm:$0xf]
      %v1745 = vld [vmem:[%s9 + $0x1c] sm:$0xf]
      %v1746 = vld [vmem:[%s9 + $0x20] sm:$0xf]
      %v1747 = vld [vmem:[%s9 + $0x24] sm:$0xf]
      %v1748 = vld [vmem:[%s9 + $0x28] sm:$0xf]
      %v1749 = vld [vmem:[%s9 + $0x2c] sm:$0xf]
      %v1750 = vld [vmem:[%s9 + $0x30] sm:$0xf]
      %v1751 = vld [vmem:[%s9 + $0x34] sm:$0xf]
      %v1752 = vld [vmem:[%s9 + $0x38] sm:$0xf]
      %v1753 = vld [vmem:[%s9 + $0x3c] sm:$0xf]
      %v1754 = vld [vmem:[%s10] sm:$0x1]
      %v1755 = vpack.c.bf16 %v1737, %v1737
      %v1757 = vlaneseq
      %v1758 = vshrl.u32 %v1757, 7
      %v1759 = vsub.s32 0, %v1758
      %v1760 = vrot.slane %v1754, %v1759
      %v1778 = vunpack.c.l.b16 %v1738
      %v1779 = vunpack.c.l.b16 %v1739
      %v1780 = vunpack.c.l.b16 %v1740
      %v1781 = vunpack.c.l.b16 %v1741
      %v1782 = vunpack.c.l.b16 %v1742
      %v1783 = vunpack.c.l.b16 %v1743
      %v1784 = vunpack.c.l.b16 %v1744
      %v1785 = vunpack.c.l.b16 %v1745
      %v1786 = vunpack.c.l.b16 %v1746
      %v1787 = vunpack.c.l.b16 %v1747
      %v1788 = vunpack.c.l.b16 %v1748
      %v1789 = vunpack.c.l.b16 %v1749
      %v1790 = vunpack.c.l.b16 %v1750
      %v1791 = vunpack.c.l.b16 %v1751
      %v1792 = vunpack.c.l.b16 %v1752
      %v1793 = vunpack.c.l.b16 %v1753
      %v1794 = vpack.c.b16 %v1779, %v1778
      %v1795 = vpack.c.b16 %v1781, %v1780
      %v1796 = vpack.c.b16 %v1783, %v1782
      %v1797 = vpack.c.b16 %v1785, %v1784
      %v1798 = vpack.c.b16 %v1787, %v1786
      %v1799 = vpack.c.b16 %v1789, %v1788
      %v1800 = vpack.c.b16 %v1791, %v1790
      %v1801 = vpack.c.b16 %v1793, %v1792
      %1810 = vmatprep.subr.bf16.mxu0 0
      %1811 = vmatpush1.bf16.msra.mxu0 %v1801
      %1812 = vmatprep.subr.bf16.mxu0 0
      %1813 = vmatpush1.bf16.msra.mxu0 %v1800
      %1814 = vmatprep.subr.bf16.mxu0 0
      %1815 = vmatpush1.bf16.msra.mxu0 %v1799
      %1816 = vmatprep.subr.bf16.mxu0 0
      %1817 = vmatpush1.bf16.msra.mxu0 %v1798
      %1818 = vmatprep.subr.bf16.mxu0 0
      %1819 = vmatpush1.bf16.msra.mxu0 %v1797
      %1820 = vmatprep.subr.bf16.mxu0 0
      %1821 = vmatpush1.bf16.msra.mxu0 %v1796
      %1822 = vmatprep.subr.bf16.mxu0 0
      %1823 = vmatpush1.bf16.msra.mxu0 %v1795
      %1824 = vmatprep.subr.bf16.mxu0 0
      %1825 = vmatpush1.bf16.msra.mxu0 %v1794
      %1826 = vmatprep.subr.bf16.mxu0 0
      %1827 = vmatpush2.bf16.msra.mxu0 0
      %1828 = vmatprep.subr.bf16.mxu0 0
      %1829 = vmatpush2.bf16.msra.mxu0 0
      %1830 = vmatprep.subr.bf16.mxu0 0
      %1831 = vmatpush2.bf16.msra.mxu0 0
      %1832 = vmatprep.subr.bf16.mxu0 0
      %1833 = vmatpush2.bf16.msra.mxu0 0
      %1834 = vmatprep.subr.bf16.mxu0 0
      %1835 = vmatpush2.bf16.msra.mxu0 0
      %1836 = vmatprep.subr.bf16.mxu0 0
      %1837 = vmatpush2.bf16.msra.mxu0 0
      %1838 = vmatprep.subr.bf16.mxu0 0
      %1839 = vmatpush2.bf16.msra.mxu0 0
      %1840 = vmatprep.subr.bf16.mxu0 0
      %1841 = vmatpush2.bf16.msra.mxu0 0
      %1842 = vmatprep.mubr.bf16.mxu0 0
      %1843 = vmatmul.mubr.bf16.gmra.mxu0 %v1755
      %v1844 = vpop.f32.mrf.mxu0
      %v1845 = vadd.f32 %v1760, %v1844
      %v1846 = vpop.f32.mrf.mxu0
      %v1847 = vpop.f32.mrf.mxu0
      %v1848 = vpop.f32.mrf.mxu0
      %1849 = vdwg.mxu0
      %v1850 = vld [vmem:[%s11] sm:$0xff]
      %v1851 = vld [vmem:[%s11 + $0x8] sm:$0xff]
      %v1852 = vld [vmem:[%s11 + $0x10] sm:$0xff]
      %v1853 = vld [vmem:[%s11 + $0x18] sm:$0xff]
      %v1854 = vld [vmem:[%s11 + $0x20] sm:$0xff]
      %v1855 = vld [vmem:[%s11 + $0x28] sm:$0xff]
      %v1856 = vld [vmem:[%s11 + $0x30] sm:$0xff]
      %v1857 = vld [vmem:[%s11 + $0x38] sm:$0xff]
      %v1858 = vld [vmem:[%s11 + $0x40] sm:$0xff]
      %v1859 = vld [vmem:[%s11 + $0x48] sm:$0xff]
      %v1860 = vld [vmem:[%s11 + $0x50] sm:$0xff]
      %v1861 = vld [vmem:[%s11 + $0x58] sm:$0xff]
      %v1862 = vld [vmem:[%s11 + $0x60] sm:$0xff]
      %v1863 = vld [vmem:[%s11 + $0x68] sm:$0xff]
      %v1864 = vld [vmem:[%s11 + $0x70] sm:$0xff]
      %v1865 = vld [vmem:[%s11 + $0x78] sm:$0xff]
      %v1866 = vld [vmem:[%s12] sm:$0x3]
      %v1867 = vpack.c.bf16 %v739, %v739
      %v1869 = vlaneseq
      %v1870 = vshrl.u32 %v1869, 7
      %v1871 = vsub.s32 0, %v1870
      %v1872 = vrot.slane %v1866, %v1871
      %v1873 = vlaneseq
      %v1874 = vshrl.u32 %v1873, 7
      %v1875 = vsub.s32 1, %v1874
      %v1876 = vrot.slane %v1866, %v1875
      %v1895 = vunpack.c.l.b16 %v1850
      %v1896 = vunpack.c.h.b16 %v1850
      %v1897 = vunpack.c.l.b16 %v1851
      %v1898 = vunpack.c.h.b16 %v1851
      %v1899 = vunpack.c.l.b16 %v1852
      %v1900 = vunpack.c.h.b16 %v1852
      %v1901 = vunpack.c.l.b16 %v1853
      %v1902 = vunpack.c.h.b16 %v1853
      %v1903 = vunpack.c.l.b16 %v1854
      %v1904 = vunpack.c.h.b16 %v1854
      %v1905 = vunpack.c.l.b16 %v1855
      %v1906 = vunpack.c.h.b16 %v1855
      %v1907 = vunpack.c.l.b16 %v1856
      %v1908 = vunpack.c.h.b16 %v1856
      %v1909 = vunpack.c.l.b16 %v1857
      %v1910 = vunpack.c.h.b16 %v1857
      %v1911 = vunpack.c.l.b16 %v1858
      %v1912 = vunpack.c.h.b16 %v1858
      %v1913 = vunpack.c.l.b16 %v1859
      %v1914 = vunpack.c.h.b16 %v1859
      %v1915 = vunpack.c.l.b16 %v1860
      %v1916 = vunpack.c.h.b16 %v1860
      %v1917 = vunpack.c.l.b16 %v1861
      %v1918 = vunpack.c.h.b16 %v1861
      %v1919 = vunpack.c.l.b16 %v1862
      %v1920 = vunpack.c.h.b16 %v1862
      %v1921 = vunpack.c.l.b16 %v1863
      %v1922 = vunpack.c.h.b16 %v1863
      %v1923 = vunpack.c.l.b16 %v1864
      %v1924 = vunpack.c.h.b16 %v1864
      %v1925 = vunpack.c.l.b16 %v1865
      %v1926 = vunpack.c.h.b16 %v1865
      %v1927 = vpack.c.b16 %v1897, %v1895
      %v1928 = vpack.c.b16 %v1898, %v1896
      %v1929 = vpack.c.b16 %v1901, %v1899
      %v1930 = vpack.c.b16 %v1902, %v1900
      %v1931 = vpack.c.b16 %v1905, %v1903
      %v1932 = vpack.c.b16 %v1906, %v1904
      %v1933 = vpack.c.b16 %v1909, %v1907
      %v1934 = vpack.c.b16 %v1910, %v1908
      %v1935 = vpack.c.b16 %v1913, %v1911
      %v1936 = vpack.c.b16 %v1914, %v1912
      %v1937 = vpack.c.b16 %v1917, %v1915
      %v1938 = vpack.c.b16 %v1918, %v1916
      %v1939 = vpack.c.b16 %v1921, %v1919
      %v1940 = vpack.c.b16 %v1922, %v1920
      %v1941 = vpack.c.b16 %v1925, %v1923
      %v1942 = vpack.c.b16 %v1926, %v1924
      %1959 = vmatprep.subr.bf16.mxu0 %v1942
      %1960 = vmatpush1.bf16.msra.mxu0 %v1941
      %1961 = vmatprep.subr.bf16.mxu0 %v1940
      %1962 = vmatpush1.bf16.msra.mxu0 %v1939
      %1963 = vmatprep.subr.bf16.mxu0 %v1938
      %1964 = vmatpush1.bf16.msra.mxu0 %v1937
      %1965 = vmatprep.subr.bf16.mxu0 %v1936
      %1966 = vmatpush1.bf16.msra.mxu0 %v1935
      %1967 = vmatprep.subr.bf16.mxu0 %v1934
      %1968 = vmatpush1.bf16.msra.mxu0 %v1933
      %1969 = vmatprep.subr.bf16.mxu0 %v1932
      %1970 = vmatpush1.bf16.msra.mxu0 %v1931
      %1971 = vmatprep.subr.bf16.mxu0 %v1930
      %1972 = vmatpush1.bf16.msra.mxu0 %v1929
      %1973 = vmatprep.subr.bf16.mxu0 %v1928
      %1974 = vmatpush1.bf16.msra.mxu0 %v1927
      %1975 = vmatprep.subr.bf16.mxu0 0
      %1976 = vmatpush2.bf16.msra.mxu0 0
      %1977 = vmatprep.subr.bf16.mxu0 0
      %1978 = vmatpush2.bf16.msra.mxu0 0
      %1979 = vmatprep.subr.bf16.mxu0 0
      %1980 = vmatpush2.bf16.msra.mxu0 0
      %1981 = vmatprep.subr.bf16.mxu0 0
      %1982 = vmatpush2.bf16.msra.mxu0 0
      %1983 = vmatprep.subr.bf16.mxu0 0
      %1984 = vmatpush2.bf16.msra.mxu0 0
      %1985 = vmatprep.subr.bf16.mxu0 0
      %1986 = vmatpush2.bf16.msra.mxu0 0
      %1987 = vmatprep.subr.bf16.mxu0 0
      %1988 = vmatpush2.bf16.msra.mxu0 0
      %1989 = vmatprep.subr.bf16.mxu0 0
      %1990 = vmatpush2.bf16.msra.mxu0 0
      %1991 = vmatprep.mubr.bf16.mxu0 0
      %1992 = vmatmul.mubr.bf16.gmra.mxu0 %v1867
      %v1993 = vpop.f32.mrf.mxu0
      %v1994 = vadd.f32 %v1872, %v1993
      %v1995 = vpop.f32.mrf.mxu0
      %v1996 = vadd.f32 %v1876, %v1995
      %v1997 = vpop.f32.mrf.mxu0
      %v1998 = vpop.f32.mrf.mxu0
      %1999 = vdwg.mxu0
      %v2000 = vld [vmem:[%s13] sm:$0xf]
      %v2001 = vld [vmem:[%s13 + $0x4] sm:$0xf]
      %v2002 = vld [vmem:[%s13 + $0x8] sm:$0xf]
      %v2003 = vld [vmem:[%s13 + $0xc] sm:$0xf]
      %v2004 = vld [vmem:[%s13 + $0x10] sm:$0xf]
      %v2005 = vld [vmem:[%s13 + $0x14] sm:$0xf]
      %v2006 = vld [vmem:[%s13 + $0x18] sm:$0xf]
      %v2007 = vld [vmem:[%s13 + $0x1c] sm:$0xf]
      %v2008 = vld [vmem:[%s13 + $0x20] sm:$0xf]
      %v2009 = vld [vmem:[%s13 + $0x24] sm:$0xf]
      %v2010 = vld [vmem:[%s13 + $0x28] sm:$0xf]
      %v2011 = vld [vmem:[%s13 + $0x2c] sm:$0xf]
      %v2012 = vld [vmem:[%s13 + $0x30] sm:$0xf]
      %v2013 = vld [vmem:[%s13 + $0x34] sm:$0xf]
      %v2014 = vld [vmem:[%s13 + $0x38] sm:$0xf]
      %v2015 = vld [vmem:[%s13 + $0x3c] sm:$0xf]
      %v2016 = vpack.c.bf16 %v1845, %v1845
      %v2017 = vpack.c.bf16 %v1994, %v1994
      %v2018 = vpack.c.bf16 %v1996, %v1996
      %v2020 = vsel %vm1021, %v2016, 0
      %v2023 = vsel %vm1021, %v2017, 0
      %2025 = vmatprep.subr.bf16.mxu0 0
      %2026 = vmatpush1.bf16.xpose.msra.mxu0 0
      %2027 = vmatprep.subr.bf16.mxu0 0
      %2028 = vmatpush1.bf16.xpose.msra.mxu0 0
      %2029 = vmatprep.subr.bf16.mxu0 0
      %2030 = vmatpush1.bf16.xpose.msra.mxu0 0
      %2031 = vmatprep.subr.bf16.mxu0 0
      %2032 = vmatpush1.bf16.xpose.msra.mxu0 0
      %2033 = vmatprep.subr.bf16.mxu0 0
      %2034 = vmatpush1.bf16.xpose.msra.mxu0 0
      %2035 = vmatprep.subr.bf16.mxu0 0
      %2036 = vmatpush1.bf16.xpose.msra.mxu0 0
      %2037 = vmatprep.subr.bf16.mxu0 0
      %2038 = vmatpush1.bf16.xpose.msra.mxu0 0
      %2039 = vmatprep.subr.bf16.mxu0 0
      %2040 = vmatpush1.bf16.xpose.msra.mxu0 %v2023
      %2041 = vmatprep.subr.bf16.mxu0 0
      %2042 = vmatpush2.bf16.xpose.msra.mxu0 0
      %2043 = vmatprep.subr.bf16.mxu0 0
      %2044 = vmatpush2.bf16.xpose.msra.mxu0 0
      %2045 = vmatprep.subr.bf16.mxu0 0
      %2046 = vmatpush2.bf16.xpose.msra.mxu0 0
      %2047 = vmatprep.subr.bf16.mxu0 0
      %2048 = vmatpush2.bf16.xpose.msra.mxu0 0
      %2049 = vmatprep.subr.bf16.mxu0 0
      %2050 = vmatpush2.bf16.xpose.msra.mxu0 0
      %2051 = vmatprep.subr.bf16.mxu0 0
      %2052 = vmatpush2.bf16.xpose.msra.mxu0 0
      %2053 = vmatprep.subr.bf16.mxu0 0
      %2054 = vmatpush2.bf16.xpose.msra.mxu0 0
      %2055 = vmatprep.subr.bf16.mxu0 0
      %2056 = vmatpush2.bf16.xpose.msra.mxu0 0
      %2057 = vmatprep.mubr.bf16.mxu0 0
      %2058 = vmatmul.mubr.bf16.gmra.mxu0 %v2020
      %v2059 = vpop.f32.mrf.mxu0
      %v2060 = vadd.f32 0.0, %v2059
      %v2061 = vpop.f32.mrf.mxu0
      %v2062 = vpop.f32.mrf.mxu0
      %v2063 = vpop.f32.mrf.mxu0
      %2064 = vdwg.mxu0
      %v2065 = vmul.f32 %v2060, 0.17677669
      %vm2066 = vcmask 39936
      %v2067 = vsel %vm2066, %v2065, -inf
      %2068 = vmax.xlane.f32.xlu0 %v2067
      %v2069 = vpop.xlane.xlu0 %2068
      %v2070 = vsub.f32 %v2065, %v2069
      %v2071 = vmul.f32 %v2070, 1.442695
      %v2072 = vpow.pop %v2071
      %v2073 = vsel %vm2066, %v2072, 0.0
      %2074 = vadd.xlane.f32.xlu0 %v2073
      %v2075 = vpop.xlane.xlu0 %2074
      %v2076 = vrcp.pop %v2075
      %v2077 = vpack.c.bf16 %v2072, %v2072
      %v2079 = vsel %vm2066, %v2077, 0
      %vm2081 = vcmask 1041408
      %vm2082 = vcmask 1042432
      %v2083 = vsel %vm2081, 4294967295, 65535
      %v2084 = vsel %vm2082, %v2083, 0
      %v2086 = vand.u32 %v2018, %v2084
      %2088 = vmatprep.subr.bf16.mxu0 0
      %2089 = vmatpush1.bf16.msra.mxu0 0
      %2090 = vmatprep.subr.bf16.mxu0 0
      %2091 = vmatpush1.bf16.msra.mxu0 0
      %2092 = vmatprep.subr.bf16.mxu0 0
      %2093 = vmatpush1.bf16.msra.mxu0 0
      %2094 = vmatprep.subr.bf16.mxu0 0
      %2095 = vmatpush1.bf16.msra.mxu0 0
      %2096 = vmatprep.subr.bf16.mxu0 0
      %2097 = vmatpush1.bf16.msra.mxu0 0
      %2098 = vmatprep.subr.bf16.mxu0 0
      %2099 = vmatpush1.bf16.msra.mxu0 0
      %2100 = vmatprep.subr.bf16.mxu0 0
      %2101 = vmatpush1.bf16.msra.mxu0 0
      %2102 = vmatprep.subr.bf16.mxu0 0
      %2103 = vmatpush1.bf16.msra.mxu0 %v2086
      %2104 = vmatprep.subr.bf16.mxu0 0
      %2105 = vmatpush2.bf16.msra.mxu0 0
      %2106 = vmatprep.subr.bf16.mxu0 0
      %2107 = vmatpush2.bf16.msra.mxu0 0
      %2108 = vmatprep.subr.bf16.mxu0 0
      %2109 = vmatpush2.bf16.msra.mxu0 0
      %2110 = vmatprep.subr.bf16.mxu0 0
      %2111 = vmatpush2.bf16.msra.mxu0 0
      %2112 = vmatprep.subr.bf16.mxu0 0
      %2113 = vmatpush2.bf16.msra.mxu0 0
      %2114 = vmatprep.subr.bf16.mxu0 0
      %2115 = vmatpush2.bf16.msra.mxu0 0
      %2116 = vmatprep.subr.bf16.mxu0 0
      %2117 = vmatpush2.bf16.msra.mxu0 0
      %2118 = vmatprep.subr.bf16.mxu0 0
      %2119 = vmatpush2.bf16.msra.mxu0 0
      %2120 = vmatprep.mubr.bf16.mxu0 0
      %2121 = vmatmul.mubr.bf16.gmra.mxu0 %v2079
      %v2122 = vpop.f32.mrf.mxu0
      %v2123 = vadd.f32 0.0, %v2122
      %v2124 = vpop.f32.mrf.mxu0
      %v2125 = vpop.f32.mrf.mxu0
      %v2126 = vpop.f32.mrf.mxu0
      %2127 = vdwg.mxu0
      %v2128 = vmul.f32 %v2123, %v2076
      %v2129 = vpack.c.bf16 %v2128, %v2128
      %2131 = vrot.lane.b32.xlu0 %v2016, 96
      %v2132 = vpop.permute.xlu0 %2131
      %2134 = vrot.lane.b32.xlu0 %v2017, 96
      %v2135 = vpop.permute.xlu0 %2134
      %v2137 = vsel %vm1021, %v2132, 0
      %v2140 = vsel %vm1021, %v2135, 0
      %2142 = vmatprep.subr.bf16.mxu0 0
      %2143 = vmatpush1.bf16.xpose.msra.mxu0 0
      %2144 = vmatprep.subr.bf16.mxu0 0
      %2145 = vmatpush1.bf16.xpose.msra.mxu0 0
      %2146 = vmatprep.subr.bf16.mxu0 0
      %2147 = vmatpush1.bf16.xpose.msra.mxu0 0
      %2148 = vmatprep.subr.bf16.mxu0 0
      %2149 = vmatpush1.bf16.xpose.msra.mxu0 0
      %2150 = vmatprep.subr.bf16.mxu0 0
      %2151 = vmatpush1.bf16.xpose.msra.mxu0 0
      %2152 = vmatprep.subr.bf16.mxu0 0
      %2153 = vmatpush1.bf16.xpose.msra.mxu0 0
      %2154 = vmatprep.subr.bf16.mxu0 0
      %2155 = vmatpush1.bf16.xpose.msra.mxu0 0
      %2156 = vmatprep.subr.bf16.mxu0 0
      %2157 = vmatpush1.bf16.xpose.msra.mxu0 %v2140
      %2158 = vmatprep.subr.bf16.mxu0 0
      %2159 = vmatpush2.bf16.xpose.msra.mxu0 0
      %2160 = vmatprep.subr.bf16.mxu0 0
      %2161 = vmatpush2.bf16.xpose.msra.mxu0 0
      %2162 = vmatprep.subr.bf16.mxu0 0
      %2163 = vmatpush2.bf16.xpose.msra.mxu0 0
      %2164 = vmatprep.subr.bf16.mxu0 0
      %2165 = vmatpush2.bf16.xpose.msra.mxu0 0
      %2166 = vmatprep.subr.bf16.mxu0 0
      %2167 = vmatpush2.bf16.xpose.msra.mxu0 0
      %2168 = vmatprep.subr.bf16.mxu0 0
      %2169 = vmatpush2.bf16.xpose.msra.mxu0 0
      %2170 = vmatprep.subr.bf16.mxu0 0
      %2171 = vmatpush2.bf16.xpose.msra.mxu0 0
      %2172 = vmatprep.subr.bf16.mxu0 0
      %2173 = vmatpush2.bf16.xpose.msra.mxu0 0
      %2174 = vmatprep.mubr.bf16.mxu0 0
      %2175 = vmatmul.mubr.bf16.gmra.mxu0 %v2137
      %v2176 = vpop.f32.mrf.mxu0
      %v2177 = vadd.f32 0.0, %v2176
      %v2178 = vpop.f32.mrf.mxu0
      %v2179 = vpop.f32.mrf.mxu0
      %v2180 = vpop.f32.mrf.mxu0
      %2181 = vdwg.mxu0
      %v2182 = vmul.f32 %v2177, 0.17677669
      %v2183 = vsel %vm2066, %v2182, -inf
      %2184 = vmax.xlane.f32.xlu0 %v2183
      %v2185 = vpop.xlane.xlu0 %2184
      %v2186 = vsub.f32 %v2182, %v2185
      %v2187 = vmul.f32 %v2186, 1.442695
      %v2188 = vpow.pop %v2187
      %v2189 = vsel %vm2066, %v2188, 0.0
      %2190 = vadd.xlane.f32.xlu0 %v2189
      %v2191 = vpop.xlane.xlu0 %2190
      %v2192 = vrcp.pop %v2191
      %v2193 = vpack.c.bf16 %v2188, %v2188
      %2195 = vrot.lane.b32.xlu0 %v2018, 96
      %v2196 = vpop.permute.xlu0 %2195
      %v2198 = vsel %vm2066, %v2193, 0
      %v2201 = vand.u32 %v2196, %v2084
      %2203 = vmatprep.subr.bf16.mxu0 0
      %2204 = vmatpush1.bf16.msra.mxu0 0
      %2205 = vmatprep.subr.bf16.mxu0 0
      %2206 = vmatpush1.bf16.msra.mxu0 0
      %2207 = vmatprep.subr.bf16.mxu0 0
      %2208 = vmatpush1.bf16.msra.mxu0 0
      %2209 = vmatprep.subr.bf16.mxu0 0
      %2210 = vmatpush1.bf16.msra.mxu0 0
      %2211 = vmatprep.subr.bf16.mxu0 0
      %2212 = vmatpush1.bf16.msra.mxu0 0
      %2213 = vmatprep.subr.bf16.mxu0 0
      %2214 = vmatpush1.bf16.msra.mxu0 0
      %2215 = vmatprep.subr.bf16.mxu0 0
      %2216 = vmatpush1.bf16.msra.mxu0 0
      %2217 = vmatprep.subr.bf16.mxu0 0
      %2218 = vmatpush1.bf16.msra.mxu0 %v2201
      %2219 = vmatprep.subr.bf16.mxu0 0
      %2220 = vmatpush2.bf16.msra.mxu0 0
      %2221 = vmatprep.subr.bf16.mxu0 0
      %2222 = vmatpush2.bf16.msra.mxu0 0
      %2223 = vmatprep.subr.bf16.mxu0 0
      %2224 = vmatpush2.bf16.msra.mxu0 0
      %2225 = vmatprep.subr.bf16.mxu0 0
      %2226 = vmatpush2.bf16.msra.mxu0 0
      %2227 = vmatprep.subr.bf16.mxu0 0
      %2228 = vmatpush2.bf16.msra.mxu0 0
      %2229 = vmatprep.subr.bf16.mxu0 0
      %2230 = vmatpush2.bf16.msra.mxu0 0
      %2231 = vmatprep.subr.bf16.mxu0 0
      %2232 = vmatpush2.bf16.msra.mxu0 0
      %2233 = vmatprep.subr.bf16.mxu0 0
      %2234 = vmatpush2.bf16.msra.mxu0 0
      %2235 = vmatprep.mubr.bf16.mxu0 0
      %2236 = vmatmul.mubr.bf16.gmra.mxu0 %v2198
      %v2237 = vpop.f32.mrf.mxu0
      %v2238 = vadd.f32 0.0, %v2237
      %v2239 = vpop.f32.mrf.mxu0
      %v2240 = vpop.f32.mrf.mxu0
      %v2241 = vpop.f32.mrf.mxu0
      %2242 = vdwg.mxu0
      %v2243 = vmul.f32 %v2238, %v2192
      %v2244 = vpack.c.bf16 %v2243, %v2243
      %v2249 = vunpack.c.l.b16 %v2004
      %v2250 = vunpack.c.l.b16 %v2005
      %v2251 = vunpack.c.l.b16 %v2006
      %v2252 = vunpack.c.l.b16 %v2007
      %v2253 = vpack.c.b16 %v2250, %v2249
      %v2254 = vpack.c.b16 %v2252, %v2251
      %v2258 = vsel %vm1021, %v2244, 0
      %2260 = vmatprep.subr.bf16.mxu0 0
      %2261 = vmatpush1.bf16.msra.mxu0 0
      %2262 = vmatprep.subr.bf16.mxu0 0
      %2263 = vmatpush1.bf16.msra.mxu0 0
      %2264 = vmatprep.subr.bf16.mxu0 0
      %2265 = vmatpush1.bf16.msra.mxu0 0
      %2266 = vmatprep.subr.bf16.mxu0 0
      %2267 = vmatpush1.bf16.msra.mxu0 0
      %2268 = vmatprep.subr.bf16.mxu0 0
      %2269 = vmatpush1.bf16.msra.mxu0 0
      %2270 = vmatprep.subr.bf16.mxu0 0
      %2271 = vmatpush1.bf16.msra.mxu0 0
      %2272 = vmatprep.subr.bf16.mxu0 0
      %2273 = vmatpush1.bf16.msra.mxu0 %v2254
      %2274 = vmatprep.subr.bf16.mxu0 0
      %2275 = vmatpush1.bf16.msra.mxu0 %v2253
      %2276 = vmatprep.subr.bf16.mxu0 0
      %2277 = vmatpush2.bf16.msra.mxu0 0
      %2278 = vmatprep.subr.bf16.mxu0 0
      %2279 = vmatpush2.bf16.msra.mxu0 0
      %2280 = vmatprep.subr.bf16.mxu0 0
      %2281 = vmatpush2.bf16.msra.mxu0 0
      %2282 = vmatprep.subr.bf16.mxu0 0
      %2283 = vmatpush2.bf16.msra.mxu0 0
      %2284 = vmatprep.subr.bf16.mxu0 0
      %2285 = vmatpush2.bf16.msra.mxu0 0
      %2286 = vmatprep.subr.bf16.mxu0 0
      %2287 = vmatpush2.bf16.msra.mxu0 0
      %2288 = vmatprep.subr.bf16.mxu0 0
      %2289 = vmatpush2.bf16.msra.mxu0 0
      %2290 = vmatprep.subr.bf16.mxu0 0
      %2291 = vmatpush2.bf16.msra.mxu0 0
      %2292 = vmatprep.mubr.bf16.mxu0 0
      %2293 = vmatmul.mubr.bf16.gmra.mxu0 %v2258
      %v2294 = vpop.f32.mrf.mxu0
      %v2295 = vadd.f32 0.0, %v2294
      %v2296 = vpop.f32.mrf.mxu0
      %v2297 = vpop.f32.mrf.mxu0
      %v2298 = vpop.f32.mrf.mxu0
      %2299 = vdwg.mxu0
      %v2304 = vunpack.c.l.b16 %v2000
      %v2305 = vunpack.c.l.b16 %v2001
      %v2306 = vunpack.c.l.b16 %v2002
      %v2307 = vunpack.c.l.b16 %v2003
      %v2308 = vpack.c.b16 %v2305, %v2304
      %v2309 = vpack.c.b16 %v2307, %v2306
      %v2313 = vsel %vm1021, %v2129, 0
      %2315 = vmatprep.subr.bf16.mxu0 0
      %2316 = vmatpush1.bf16.msra.mxu0 0
      %2317 = vmatprep.subr.bf16.mxu0 0
      %2318 = vmatpush1.bf16.msra.mxu0 0
      %2319 = vmatprep.subr.bf16.mxu0 0
      %2320 = vmatpush1.bf16.msra.mxu0 0
      %2321 = vmatprep.subr.bf16.mxu0 0
      %2322 = vmatpush1.bf16.msra.mxu0 0
      %2323 = vmatprep.subr.bf16.mxu0 0
      %2324 = vmatpush1.bf16.msra.mxu0 0
      %2325 = vmatprep.subr.bf16.mxu0 0
      %2326 = vmatpush1.bf16.msra.mxu0 0
      %2327 = vmatprep.subr.bf16.mxu0 0
      %2328 = vmatpush1.bf16.msra.mxu0 %v2309
      %2329 = vmatprep.subr.bf16.mxu0 0
      %2330 = vmatpush1.bf16.msra.mxu0 %v2308
      %2331 = vmatprep.subr.bf16.mxu0 0
      %2332 = vmatpush2.bf16.msra.mxu0 0
      %2333 = vmatprep.subr.bf16.mxu0 0
      %2334 = vmatpush2.bf16.msra.mxu0 0
      %2335 = vmatprep.subr.bf16.mxu0 0
      %2336 = vmatpush2.bf16.msra.mxu0 0
      %2337 = vmatprep.subr.bf16.mxu0 0
      %2338 = vmatpush2.bf16.msra.mxu0 0
      %2339 = vmatprep.subr.bf16.mxu0 0
      %2340 = vmatpush2.bf16.msra.mxu0 0
      %2341 = vmatprep.subr.bf16.mxu0 0
      %2342 = vmatpush2.bf16.msra.mxu0 0
      %2343 = vmatprep.subr.bf16.mxu0 0
      %2344 = vmatpush2.bf16.msra.mxu0 0
      %2345 = vmatprep.subr.bf16.mxu0 0
      %2346 = vmatpush2.bf16.msra.mxu0 0
      %2347 = vmatprep.mubr.bf16.mxu0 0
      %2348 = vmatmul.mubr.bf16.gmra.mxu0 %v2313
      %v2349 = vpop.f32.mrf.mxu0
      %v2350 = vadd.f32 %v2295, %v2349
      %v2351 = vpop.f32.mrf.mxu0
      %v2352 = vpop.f32.mrf.mxu0
      %v2353 = vpop.f32.mrf.mxu0
      %2354 = vdwg.mxu0
      %2355 = vrot.lane.b32.xlu0 %v2016, 64
      %v2356 = vpop.permute.xlu0 %2355
      %2357 = vrot.lane.b32.xlu0 %v2017, 64
      %v2358 = vpop.permute.xlu0 %2357
      %v2360 = vsel %vm1021, %v2356, 0
      %v2363 = vsel %vm1021, %v2358, 0
      %2365 = vmatprep.subr.bf16.mxu0 0
      %2366 = vmatpush1.bf16.xpose.msra.mxu0 0
      %2367 = vmatprep.subr.bf16.mxu0 0
      %2368 = vmatpush1.bf16.xpose.msra.mxu0 0
      %2369 = vmatprep.subr.bf16.mxu0 0
      %2370 = vmatpush1.bf16.xpose.msra.mxu0 0
      %2371 = vmatprep.subr.bf16.mxu0 0
      %2372 = vmatpush1.bf16.xpose.msra.mxu0 0
      %2373 = vmatprep.subr.bf16.mxu0 0
      %2374 = vmatpush1.bf16.xpose.msra.mxu0 0
      %2375 = vmatprep.subr.bf16.mxu0 0
      %2376 = vmatpush1.bf16.xpose.msra.mxu0 0
      %2377 = vmatprep.subr.bf16.mxu0 0
      %2378 = vmatpush1.bf16.xpose.msra.mxu0 0
      %2379 = vmatprep.subr.bf16.mxu0 0
      %2380 = vmatpush1.bf16.xpose.msra.mxu0 %v2363
      %2381 = vmatprep.subr.bf16.mxu0 0
      %2382 = vmatpush2.bf16.xpose.msra.mxu0 0
      %2383 = vmatprep.subr.bf16.mxu0 0
      %2384 = vmatpush2.bf16.xpose.msra.mxu0 0
      %2385 = vmatprep.subr.bf16.mxu0 0
      %2386 = vmatpush2.bf16.xpose.msra.mxu0 0
      %2387 = vmatprep.subr.bf16.mxu0 0
      %2388 = vmatpush2.bf16.xpose.msra.mxu0 0
      %2389 = vmatprep.subr.bf16.mxu0 0
      %2390 = vmatpush2.bf16.xpose.msra.mxu0 0
      %2391 = vmatprep.subr.bf16.mxu0 0
      %2392 = vmatpush2.bf16.xpose.msra.mxu0 0
      %2393 = vmatprep.subr.bf16.mxu0 0
      %2394 = vmatpush2.bf16.xpose.msra.mxu0 0
      %2395 = vmatprep.subr.bf16.mxu0 0
      %2396 = vmatpush2.bf16.xpose.msra.mxu0 0
      %2397 = vmatprep.mubr.bf16.mxu0 0
      %2398 = vmatmul.mubr.bf16.gmra.mxu0 %v2360
      %v2399 = vpop.f32.mrf.mxu0
      %v2400 = vadd.f32 0.0, %v2399
      %v2401 = vpop.f32.mrf.mxu0
      %v2402 = vpop.f32.mrf.mxu0
      %v2403 = vpop.f32.mrf.mxu0
      %2404 = vdwg.mxu0
      %v2405 = vmul.f32 %v2400, 0.17677669
      %v2406 = vsel %vm2066, %v2405, -inf
      %2407 = vmax.xlane.f32.xlu0 %v2406
      %v2408 = vpop.xlane.xlu0 %2407
      %v2409 = vsub.f32 %v2405, %v2408
      %v2410 = vmul.f32 %v2409, 1.442695
      %v2411 = vpow.pop %v2410
      %v2412 = vsel %vm2066, %v2411, 0.0
      %2413 = vadd.xlane.f32.xlu0 %v2412
      %v2414 = vpop.xlane.xlu0 %2413
      %v2415 = vrcp.pop %v2414
      %v2416 = vpack.c.bf16 %v2411, %v2411
      %2417 = vrot.lane.b32.xlu0 %v2018, 64
      %v2418 = vpop.permute.xlu0 %2417
      %v2420 = vsel %vm2066, %v2416, 0
      %v2423 = vand.u32 %v2418, %v2084
      %2425 = vmatprep.subr.bf16.mxu0 0
      %2426 = vmatpush1.bf16.msra.mxu0 0
      %2427 = vmatprep.subr.bf16.mxu0 0
      %2428 = vmatpush1.bf16.msra.mxu0 0
      %2429 = vmatprep.subr.bf16.mxu0 0
      %2430 = vmatpush1.bf16.msra.mxu0 0
      %2431 = vmatprep.subr.bf16.mxu0 0
      %2432 = vmatpush1.bf16.msra.mxu0 0
      %2433 = vmatprep.subr.bf16.mxu0 0
      %2434 = vmatpush1.bf16.msra.mxu0 0
      %2435 = vmatprep.subr.bf16.mxu0 0
      %2436 = vmatpush1.bf16.msra.mxu0 0
      %2437 = vmatprep.subr.bf16.mxu0 0
      %2438 = vmatpush1.bf16.msra.mxu0 0
      %2439 = vmatprep.subr.bf16.mxu0 0
      %2440 = vmatpush1.bf16.msra.mxu0 %v2423
      %2441 = vmatprep.subr.bf16.mxu0 0
      %2442 = vmatpush2.bf16.msra.mxu0 0
      %2443 = vmatprep.subr.bf16.mxu0 0
      %2444 = vmatpush2.bf16.msra.mxu0 0
      %2445 = vmatprep.subr.bf16.mxu0 0
      %2446 = vmatpush2.bf16.msra.mxu0 0
      %2447 = vmatprep.subr.bf16.mxu0 0
      %2448 = vmatpush2.bf16.msra.mxu0 0
      %2449 = vmatprep.subr.bf16.mxu0 0
      %2450 = vmatpush2.bf16.msra.mxu0 0
      %2451 = vmatprep.subr.bf16.mxu0 0
      %2452 = vmatpush2.bf16.msra.mxu0 0
      %2453 = vmatprep.subr.bf16.mxu0 0
      %2454 = vmatpush2.bf16.msra.mxu0 0
      %2455 = vmatprep.subr.bf16.mxu0 0
      %2456 = vmatpush2.bf16.msra.mxu0 0
      %2457 = vmatprep.mubr.bf16.mxu0 0
      %2458 = vmatmul.mubr.bf16.gmra.mxu0 %v2420
      %v2459 = vpop.f32.mrf.mxu0
      %v2460 = vadd.f32 0.0, %v2459
      %v2461 = vpop.f32.mrf.mxu0
      %v2462 = vpop.f32.mrf.mxu0
      %v2463 = vpop.f32.mrf.mxu0
      %2464 = vdwg.mxu0
      %v2465 = vmul.f32 %v2460, %v2415
      %v2466 = vpack.c.bf16 %v2465, %v2465
      %v2471 = vunpack.c.l.b16 %v2008
      %v2472 = vunpack.c.l.b16 %v2009
      %v2473 = vunpack.c.l.b16 %v2010
      %v2474 = vunpack.c.l.b16 %v2011
      %v2475 = vpack.c.b16 %v2472, %v2471
      %v2476 = vpack.c.b16 %v2474, %v2473
      %v2480 = vsel %vm1021, %v2466, 0
      %2482 = vmatprep.subr.bf16.mxu0 0
      %2483 = vmatpush1.bf16.msra.mxu0 0
      %2484 = vmatprep.subr.bf16.mxu0 0
      %2485 = vmatpush1.bf16.msra.mxu0 0
      %2486 = vmatprep.subr.bf16.mxu0 0
      %2487 = vmatpush1.bf16.msra.mxu0 0
      %2488 = vmatprep.subr.bf16.mxu0 0
      %2489 = vmatpush1.bf16.msra.mxu0 0
      %2490 = vmatprep.subr.bf16.mxu0 0
      %2491 = vmatpush1.bf16.msra.mxu0 0
      %2492 = vmatprep.subr.bf16.mxu0 0
      %2493 = vmatpush1.bf16.msra.mxu0 0
      %2494 = vmatprep.subr.bf16.mxu0 0
      %2495 = vmatpush1.bf16.msra.mxu0 %v2476
      %2496 = vmatprep.subr.bf16.mxu0 0
      %2497 = vmatpush1.bf16.msra.mxu0 %v2475
      %2498 = vmatprep.subr.bf16.mxu0 0
      %2499 = vmatpush2.bf16.msra.mxu0 0
      %2500 = vmatprep.subr.bf16.mxu0 0
      %2501 = vmatpush2.bf16.msra.mxu0 0
      %2502 = vmatprep.subr.bf16.mxu0 0
      %2503 = vmatpush2.bf16.msra.mxu0 0
      %2504 = vmatprep.subr.bf16.mxu0 0
      %2505 = vmatpush2.bf16.msra.mxu0 0
      %2506 = vmatprep.subr.bf16.mxu0 0
      %2507 = vmatpush2.bf16.msra.mxu0 0
      %2508 = vmatprep.subr.bf16.mxu0 0
      %2509 = vmatpush2.bf16.msra.mxu0 0
      %2510 = vmatprep.subr.bf16.mxu0 0
      %2511 = vmatpush2.bf16.msra.mxu0 0
      %2512 = vmatprep.subr.bf16.mxu0 0
      %2513 = vmatpush2.bf16.msra.mxu0 0
      %2514 = vmatprep.mubr.bf16.mxu0 0
      %2515 = vmatmul.mubr.bf16.gmra.mxu0 %v2480
      %v2516 = vpop.f32.mrf.mxu0
      %v2517 = vadd.f32 0.0, %v2516
      %v2518 = vpop.f32.mrf.mxu0
      %v2519 = vpop.f32.mrf.mxu0
      %v2520 = vpop.f32.mrf.mxu0
      %2521 = vdwg.mxu0
      %v2522 = vadd.f32 %v2350, %v2517
      %2523 = vrot.lane.b32.xlu0 %v2016, 32
      %v2524 = vpop.permute.xlu0 %2523
      %2525 = vrot.lane.b32.xlu0 %v2017, 32
      %v2526 = vpop.permute.xlu0 %2525
      %v2528 = vsel %vm1021, %v2524, 0
      %v2531 = vsel %vm1021, %v2526, 0
      %2533 = vmatprep.subr.bf16.mxu0 0
      %2534 = vmatpush1.bf16.xpose.msra.mxu0 0
      %2535 = vmatprep.subr.bf16.mxu0 0
      %2536 = vmatpush1.bf16.xpose.msra.mxu0 0
      %2537 = vmatprep.subr.bf16.mxu0 0
      %2538 = vmatpush1.bf16.xpose.msra.mxu0 0
      %2539 = vmatprep.subr.bf16.mxu0 0
      %2540 = vmatpush1.bf16.xpose.msra.mxu0 0
      %2541 = vmatprep.subr.bf16.mxu0 0
      %2542 = vmatpush1.bf16.xpose.msra.mxu0 0
      %2543 = vmatprep.subr.bf16.mxu0 0
      %2544 = vmatpush1.bf16.xpose.msra.mxu0 0
      %2545 = vmatprep.subr.bf16.mxu0 0
      %2546 = vmatpush1.bf16.xpose.msra.mxu0 0
      %2547 = vmatprep.subr.bf16.mxu0 0
      %2548 = vmatpush1.bf16.xpose.msra.mxu0 %v2531
      %2549 = vmatprep.subr.bf16.mxu0 0
      %2550 = vmatpush2.bf16.xpose.msra.mxu0 0
      %2551 = vmatprep.subr.bf16.mxu0 0
      %2552 = vmatpush2.bf16.xpose.msra.mxu0 0
      %2553 = vmatprep.subr.bf16.mxu0 0
      %2554 = vmatpush2.bf16.xpose.msra.mxu0 0
      %2555 = vmatprep.subr.bf16.mxu0 0
      %2556 = vmatpush2.bf16.xpose.msra.mxu0 0
      %2557 = vmatprep.subr.bf16.mxu0 0
      %2558 = vmatpush2.bf16.xpose.msra.mxu0 0
      %2559 = vmatprep.subr.bf16.mxu0 0
      %2560 = vmatpush2.bf16.xpose.msra.mxu0 0
      %2561 = vmatprep.subr.bf16.mxu0 0
      %2562 = vmatpush2.bf16.xpose.msra.mxu0 0
      %2563 = vmatprep.subr.bf16.mxu0 0
      %2564 = vmatpush2.bf16.xpose.msra.mxu0 0
      %2565 = vmatprep.mubr.bf16.mxu0 0
      %2566 = vmatmul.mubr.bf16.gmra.mxu0 %v2528
      %v2567 = vpop.f32.mrf.mxu0
      %v2568 = vadd.f32 0.0, %v2567
      %v2569 = vpop.f32.mrf.mxu0
      %v2570 = vpop.f32.mrf.mxu0
      %v2571 = vpop.f32.mrf.mxu0
      %2572 = vdwg.mxu0
      %v2573 = vmul.f32 %v2568, 0.17677669
      %v2574 = vsel %vm2066, %v2573, -inf
      %2575 = vmax.xlane.f32.xlu0 %v2574
      %v2576 = vpop.xlane.xlu0 %2575
      %v2577 = vsub.f32 %v2573, %v2576
      %v2578 = vmul.f32 %v2577, 1.442695
      %v2579 = vpow.pop %v2578
      %v2580 = vsel %vm2066, %v2579, 0.0
      %2581 = vadd.xlane.f32.xlu0 %v2580
      %v2582 = vpop.xlane.xlu0 %2581
      %v2583 = vrcp.pop %v2582
      %v2584 = vpack.c.bf16 %v2579, %v2579
      %2585 = vrot.lane.b32.xlu0 %v2018, 32
      %v2586 = vpop.permute.xlu0 %2585
      %v2588 = vsel %vm2066, %v2584, 0
      %v2591 = vand.u32 %v2586, %v2084
      %2593 = vmatprep.subr.bf16.mxu0 0
      %2594 = vmatpush1.bf16.msra.mxu0 0
      %2595 = vmatprep.subr.bf16.mxu0 0
      %2596 = vmatpush1.bf16.msra.mxu0 0
      %2597 = vmatprep.subr.bf16.mxu0 0
      %2598 = vmatpush1.bf16.msra.mxu0 0
      %2599 = vmatprep.subr.bf16.mxu0 0
      %2600 = vmatpush1.bf16.msra.mxu0 0
      %2601 = vmatprep.subr.bf16.mxu0 0
      %2602 = vmatpush1.bf16.msra.mxu0 0
      %2603 = vmatprep.subr.bf16.mxu0 0
      %2604 = vmatpush1.bf16.msra.mxu0 0
      %2605 = vmatprep.subr.bf16.mxu0 0
      %2606 = vmatpush1.bf16.msra.mxu0 0
      %2607 = vmatprep.subr.bf16.mxu0 0
      %2608 = vmatpush1.bf16.msra.mxu0 %v2591
      %2609 = vmatprep.subr.bf16.mxu0 0
      %2610 = vmatpush2.bf16.msra.mxu0 0
      %2611 = vmatprep.subr.bf16.mxu0 0
      %2612 = vmatpush2.bf16.msra.mxu0 0
      %2613 = vmatprep.subr.bf16.mxu0 0
      %2614 = vmatpush2.bf16.msra.mxu0 0
      %2615 = vmatprep.subr.bf16.mxu0 0
      %2616 = vmatpush2.bf16.msra.mxu0 0
      %2617 = vmatprep.subr.bf16.mxu0 0
      %2618 = vmatpush2.bf16.msra.mxu0 0
      %2619 = vmatprep.subr.bf16.mxu0 0
      %2620 = vmatpush2.bf16.msra.mxu0 0
      %2621 = vmatprep.subr.bf16.mxu0 0
      %2622 = vmatpush2.bf16.msra.mxu0 0
      %2623 = vmatprep.subr.bf16.mxu0 0
      %2624 = vmatpush2.bf16.msra.mxu0 0
      %2625 = vmatprep.mubr.bf16.mxu0 0
      %2626 = vmatmul.mubr.bf16.gmra.mxu0 %v2588
      %v2627 = vpop.f32.mrf.mxu0
      %v2628 = vadd.f32 0.0, %v2627
      %v2629 = vpop.f32.mrf.mxu0
      %v2630 = vpop.f32.mrf.mxu0
      %v2631 = vpop.f32.mrf.mxu0
      %2632 = vdwg.mxu0
      %v2633 = vmul.f32 %v2628, %v2583
      %v2634 = vpack.c.bf16 %v2633, %v2633
      %v2639 = vunpack.c.l.b16 %v2012
      %v2640 = vunpack.c.l.b16 %v2013
      %v2641 = vunpack.c.l.b16 %v2014
      %v2642 = vunpack.c.l.b16 %v2015
      %v2643 = vpack.c.b16 %v2640, %v2639
      %v2644 = vpack.c.b16 %v2642, %v2641
      %v2648 = vsel %vm1021, %v2634, 0
      %2650 = vmatprep.subr.bf16.mxu0 0
      %2651 = vmatpush1.bf16.msra.mxu0 0
      %2652 = vmatprep.subr.bf16.mxu0 0
      %2653 = vmatpush1.bf16.msra.mxu0 0
      %2654 = vmatprep.subr.bf16.mxu0 0
      %2655 = vmatpush1.bf16.msra.mxu0 0
      %2656 = vmatprep.subr.bf16.mxu0 0
      %2657 = vmatpush1.bf16.msra.mxu0 0
      %2658 = vmatprep.subr.bf16.mxu0 0
      %2659 = vmatpush1.bf16.msra.mxu0 0
      %2660 = vmatprep.subr.bf16.mxu0 0
      %2661 = vmatpush1.bf16.msra.mxu0 0
      %2662 = vmatprep.subr.bf16.mxu0 0
      %2663 = vmatpush1.bf16.msra.mxu0 %v2644
      %2664 = vmatprep.subr.bf16.mxu0 0
      %2665 = vmatpush1.bf16.msra.mxu0 %v2643
      %2666 = vmatprep.subr.bf16.mxu0 0
      %2667 = vmatpush2.bf16.msra.mxu0 0
      %2668 = vmatprep.subr.bf16.mxu0 0
      %2669 = vmatpush2.bf16.msra.mxu0 0
      %2670 = vmatprep.subr.bf16.mxu0 0
      %2671 = vmatpush2.bf16.msra.mxu0 0
      %2672 = vmatprep.subr.bf16.mxu0 0
      %2673 = vmatpush2.bf16.msra.mxu0 0
      %2674 = vmatprep.subr.bf16.mxu0 0
      %2675 = vmatpush2.bf16.msra.mxu0 0
      %2676 = vmatprep.subr.bf16.mxu0 0
      %2677 = vmatpush2.bf16.msra.mxu0 0
      %2678 = vmatprep.subr.bf16.mxu0 0
      %2679 = vmatpush2.bf16.msra.mxu0 0
      %2680 = vmatprep.subr.bf16.mxu0 0
      %2681 = vmatpush2.bf16.msra.mxu0 0
      %2682 = vmatprep.mubr.bf16.mxu0 0
      %2683 = vmatmul.mubr.bf16.gmra.mxu0 %v2648
      %v2684 = vpop.f32.mrf.mxu0
      %v2685 = vadd.f32 0.0, %v2684
      %v2686 = vpop.f32.mrf.mxu0
      %v2687 = vpop.f32.mrf.mxu0
      %v2688 = vpop.f32.mrf.mxu0
      %2689 = vdwg.mxu0
      %v2690 = vadd.f32 %v2522, %v2685
      %v2691 = vld [vmem:[%s14] sm:$0x1]
      %v2693 = vlaneseq
      %v2694 = vshrl.u32 %v2693, 7
      %v2695 = vsub.s32 0, %v2694
      %v2696 = vrot.slane %v2691, %v2695
      %v2698 = vadd.f32 %v2690, %v2696
      %v2699 = vadd.f32 %v2698, %v1737
      %v2700 = vld [vmem:[%s15] sm:$0x1]
      %v2701 = vld [vmem:[%s16] sm:$0x1]
      %2702 = vadd.xlane.f32.xlu0 %v2699
      %v2703 = vpop.xlane.xlu0 %2702
      %v2704 = vmul.f32 %v2703, %v1714
      %v2705 = vsub.f32 %v2699, %v2704
      %v2706 = vmul.f32 %v2705, %v2705
      %2707 = vadd.xlane.f32.xlu0 %v2706
      %v2708 = vpop.xlane.xlu0 %2707
      %v2709 = vmul.f32 %v2708, %v1714
      %v2710 = vadd.f32 %v2709, 1e-12
      %v2711 = vrsqrt.pop %v2710
      %v2712 = vmul.f32 %v2705, %v2711
      %v2714 = vlaneseq
      %v2715 = vshrl.u32 %v2714, 7
      %v2716 = vsub.s32 0, %v2715
      %v2717 = vrot.slane %v2700, %v2716
      %v2719 = vmul.f32 %v2712, %v2717
      %v2721 = vlaneseq
      %v2722 = vshrl.u32 %v2721, 7
      %v2723 = vsub.s32 0, %v2722
      %v2724 = vrot.slane %v2701, %v2723
      %v2726 = vadd.f32 %v2719, %v2724
      %v2727 = vld [vmem:[%s17] sm:$0xff]
      %v2728 = vld [vmem:[%s17 + $0x8] sm:$0xff]
      %v2729 = vld [vmem:[%s17 + $0x10] sm:$0xff]
      %v2730 = vld [vmem:[%s17 + $0x18] sm:$0xff]
      %v2731 = vld [vmem:[%s17 + $0x20] sm:$0xff]
      %v2732 = vld [vmem:[%s17 + $0x28] sm:$0xff]
      %v2733 = vld [vmem:[%s17 + $0x30] sm:$0xff]
      %v2734 = vld [vmem:[%s17 + $0x38] sm:$0xff]
      %v2735 = vld [vmem:[%s17 + $0x40] sm:$0xff]
      %v2736 = vld [vmem:[%s17 + $0x48] sm:$0xff]
      %v2737 = vld [vmem:[%s17 + $0x50] sm:$0xff]
      %v2738 = vld [vmem:[%s17 + $0x58] sm:$0xff]
      %v2739 = vld [vmem:[%s17 + $0x60] sm:$0xff]
      %v2740 = vld [vmem:[%s17 + $0x68] sm:$0xff]
      %v2741 = vld [vmem:[%s17 + $0x70] sm:$0xff]
      %v2742 = vld [vmem:[%s17 + $0x78] sm:$0xff]
      %v2743 = vld [vmem:[%s17 + $0x80] sm:$0xff]
      %v2744 = vld [vmem:[%s17 + $0x88] sm:$0xff]
      %v2745 = vld [vmem:[%s17 + $0x90] sm:$0xff]
      %v2746 = vld [vmem:[%s17 + $0x98] sm:$0xff]
      %v2747 = vld [vmem:[%s17 + $0xa0] sm:$0xff]
      %v2748 = vld [vmem:[%s17 + $0xa8] sm:$0xff]
      %v2749 = vld [vmem:[%s17 + $0xb0] sm:$0xff]
      %v2750 = vld [vmem:[%s17 + $0xb8] sm:$0xff]
      %v2751 = vld [vmem:[%s17 + $0xc0] sm:$0xff]
      %v2752 = vld [vmem:[%s17 + $0xc8] sm:$0xff]
      %v2753 = vld [vmem:[%s17 + $0xd0] sm:$0xff]
      %v2754 = vld [vmem:[%s17 + $0xd8] sm:$0xff]
      %v2755 = vld [vmem:[%s17 + $0xe0] sm:$0xff]
      %v2756 = vld [vmem:[%s17 + $0xe8] sm:$0xff]
      %v2757 = vld [vmem:[%s17 + $0xf0] sm:$0xff]
      %v2758 = vld [vmem:[%s17 + $0xf8] sm:$0xff]
      %v2759 = vld [vmem:[%s18] sm:$0xf]
      %v2760 = vpack.c.bf16 %v2726, %v2726
      %v2762 = vlaneseq
      %v2763 = vshrl.u32 %v2762, 7
      %v2764 = vsub.s32 0, %v2763
      %v2765 = vrot.slane %v2759, %v2764
      %v2766 = vlaneseq
      %v2767 = vshrl.u32 %v2766, 7
      %v2768 = vsub.s32 1, %v2767
      %v2769 = vrot.slane %v2759, %v2768
      %v2770 = vlaneseq
      %v2771 = vshrl.u32 %v2770, 7
      %v2772 = vsub.s32 2, %v2771
      %v2773 = vrot.slane %v2759, %v2772
      %v2774 = vlaneseq
      %v2775 = vshrl.u32 %v2774, 7
      %v2776 = vsub.s32 3, %v2775
      %v2777 = vrot.slane %v2759, %v2776
      %v2814 = vunpack.c.l.b16 %v2727
      %v2815 = vunpack.c.h.b16 %v2727
      %v2816 = vunpack.c.l.b16 %v2728
      %v2817 = vunpack.c.h.b16 %v2728
      %v2818 = vunpack.c.l.b16 %v2729
      %v2819 = vunpack.c.h.b16 %v2729
      %v2820 = vunpack.c.l.b16 %v2730
      %v2821 = vunpack.c.h.b16 %v2730
      %v2822 = vunpack.c.l.b16 %v2731
      %v2823 = vunpack.c.h.b16 %v2731
      %v2824 = vunpack.c.l.b16 %v2732
      %v2825 = vunpack.c.h.b16 %v2732
      %v2826 = vunpack.c.l.b16 %v2733
      %v2827 = vunpack.c.h.b16 %v2733
      %v2828 = vunpack.c.l.b16 %v2734
      %v2829 = vunpack.c.h.b16 %v2734
      %v2830 = vunpack.c.l.b16 %v2735
      %v2831 = vunpack.c.h.b16 %v2735
      %v2832 = vunpack.c.l.b16 %v2736
      %v2833 = vunpack.c.h.b16 %v2736
      %v2834 = vunpack.c.l.b16 %v2737
      %v2835 = vunpack.c.h.b16 %v2737
      %v2836 = vunpack.c.l.b16 %v2738
      %v2837 = vunpack.c.h.b16 %v2738
      %v2838 = vunpack.c.l.b16 %v2739
      %v2839 = vunpack.c.h.b16 %v2739
      %v2840 = vunpack.c.l.b16 %v2740
      %v2841 = vunpack.c.h.b16 %v2740
      %v2842 = vunpack.c.l.b16 %v2741
      %v2843 = vunpack.c.h.b16 %v2741
      %v2844 = vunpack.c.l.b16 %v2742
      %v2845 = vunpack.c.h.b16 %v2742
      %v2846 = vunpack.c.l.b16 %v2743
      %v2847 = vunpack.c.h.b16 %v2743
      %v2848 = vunpack.c.l.b16 %v2744
      %v2849 = vunpack.c.h.b16 %v2744
      %v2850 = vunpack.c.l.b16 %v2745
      %v2851 = vunpack.c.h.b16 %v2745
      %v2852 = vunpack.c.l.b16 %v2746
      %v2853 = vunpack.c.h.b16 %v2746
      %v2854 = vunpack.c.l.b16 %v2747
      %v2855 = vunpack.c.h.b16 %v2747
      %v2856 = vunpack.c.l.b16 %v2748
      %v2857 = vunpack.c.h.b16 %v2748
      %v2858 = vunpack.c.l.b16 %v2749
      %v2859 = vunpack.c.h.b16 %v2749
      %v2860 = vunpack.c.l.b16 %v2750
      %v2861 = vunpack.c.h.b16 %v2750
      %v2862 = vunpack.c.l.b16 %v2751
      %v2863 = vunpack.c.h.b16 %v2751
      %v2864 = vunpack.c.l.b16 %v2752
      %v2865 = vunpack.c.h.b16 %v2752
      %v2866 = vunpack.c.l.b16 %v2753
      %v2867 = vunpack.c.h.b16 %v2753
      %v2868 = vunpack.c.l.b16 %v2754
      %v2869 = vunpack.c.h.b16 %v2754
      %v2870 = vunpack.c.l.b16 %v2755
      %v2871 = vunpack.c.h.b16 %v2755
      %v2872 = vunpack.c.l.b16 %v2756
      %v2873 = vunpack.c.h.b16 %v2756
      %v2874 = vunpack.c.l.b16 %v2757
      %v2875 = vunpack.c.h.b16 %v2757
      %v2876 = vunpack.c.l.b16 %v2758
      %v2877 = vunpack.c.h.b16 %v2758
      %v2878 = vpack.c.b16 %v2818, %v2814
      %v2879 = vpack.c.b16 %v2819, %v2815
      %v2880 = vpack.c.b16 %v2820, %v2816
      %v2881 = vpack.c.b16 %v2821, %v2817
      %v2882 = vpack.c.b16 %v2826, %v2822
      %v2883 = vpack.c.b16 %v2827, %v2823
      %v2884 = vpack.c.b16 %v2828, %v2824
      %v2885 = vpack.c.b16 %v2829, %v2825
      %v2886 = vpack.c.b16 %v2834, %v2830
      %v2887 = vpack.c.b16 %v2835, %v2831
      %v2888 = vpack.c.b16 %v2836, %v2832
      %v2889 = vpack.c.b16 %v2837, %v2833
      %v2890 = vpack.c.b16 %v2842, %v2838
      %v2891 = vpack.c.b16 %v2843, %v2839
      %v2892 = vpack.c.b16 %v2844, %v2840
      %v2893 = vpack.c.b16 %v2845, %v2841
      %v2894 = vpack.c.b16 %v2850, %v2846
      %v2895 = vpack.c.b16 %v2851, %v2847
      %v2896 = vpack.c.b16 %v2852, %v2848
      %v2897 = vpack.c.b16 %v2853, %v2849
      %v2898 = vpack.c.b16 %v2858, %v2854
      %v2899 = vpack.c.b16 %v2859, %v2855
      %v2900 = vpack.c.b16 %v2860, %v2856
      %v2901 = vpack.c.b16 %v2861, %v2857
      %v2902 = vpack.c.b16 %v2866, %v2862
      %v2903 = vpack.c.b16 %v2867, %v2863
      %v2904 = vpack.c.b16 %v2868, %v2864
      %v2905 = vpack.c.b16 %v2869, %v2865
      %v2906 = vpack.c.b16 %v2874, %v2870
      %v2907 = vpack.c.b16 %v2875, %v2871
      %v2908 = vpack.c.b16 %v2876, %v2872
      %v2909 = vpack.c.b16 %v2877, %v2873
      %2942 = vmatprep.subr.bf16.mxu0 %v2907
      %2943 = vmatpush1.bf16.msra.mxu0 %v2906
      %2944 = vmatprep.subr.bf16.mxu0 %v2903
      %2945 = vmatpush1.bf16.msra.mxu0 %v2902
      %2946 = vmatprep.subr.bf16.mxu0 %v2899
      %2947 = vmatpush1.bf16.msra.mxu0 %v2898
      %2948 = vmatprep.subr.bf16.mxu0 %v2895
      %2949 = vmatpush1.bf16.msra.mxu0 %v2894
      %2950 = vmatprep.subr.bf16.mxu0 %v2891
      %2951 = vmatpush1.bf16.msra.mxu0 %v2890
      %2952 = vmatprep.subr.bf16.mxu0 %v2887
      %2953 = vmatpush1.bf16.msra.mxu0 %v2886
      %2954 = vmatprep.subr.bf16.mxu0 %v2883
      %2955 = vmatpush1.bf16.msra.mxu0 %v2882
      %2956 = vmatprep.subr.bf16.mxu0 %v2879
      %2957 = vmatpush1.bf16.msra.mxu0 %v2878
      %2958 = vmatprep.subr.bf16.mxu0 0
      %2959 = vmatpush2.bf16.msra.mxu0 0
      %2960 = vmatprep.subr.bf16.mxu0 0
      %2961 = vmatpush2.bf16.msra.mxu0 0
      %2962 = vmatprep.subr.bf16.mxu0 0
      %2963 = vmatpush2.bf16.msra.mxu0 0
      %2964 = vmatprep.subr.bf16.mxu0 0
      %2965 = vmatpush2.bf16.msra.mxu0 0
      %2966 = vmatprep.subr.bf16.mxu0 0
      %2967 = vmatpush2.bf16.msra.mxu0 0
      %2968 = vmatprep.subr.bf16.mxu0 0
      %2969 = vmatpush2.bf16.msra.mxu0 0
      %2970 = vmatprep.subr.bf16.mxu0 0
      %2971 = vmatpush2.bf16.msra.mxu0 0
      %2972 = vmatprep.subr.bf16.mxu0 0
      %2973 = vmatpush2.bf16.msra.mxu0 0
      %2974 = vmatprep.mubr.bf16.mxu0 0
      %2975 = vmatmul.mubr.bf16.gmra.mxu0 %v2760
      %v2976 = vpop.f32.mrf.mxu0
      %v2977 = vadd.f32 %v2765, %v2976
      %v2978 = vpop.f32.mrf.mxu0
      %v2979 = vadd.f32 %v2769, %v2978
      %v2980 = vpop.f32.mrf.mxu0
      %v2981 = vpop.f32.mrf.mxu0
      %2982 = vdwg.mxu0
      %2983 = vmatprep.subr.bf16.mxu0 %v2909
      %2984 = vmatpush1.bf16.msra.mxu0 %v2908
      %2985 = vmatprep.subr.bf16.mxu0 %v2905
      %2986 = vmatpush1.bf16.msra.mxu0 %v2904
      %2987 = vmatprep.subr.bf16.mxu0 %v2901
      %2988 = vmatpush1.bf16.msra.mxu0 %v2900
      %2989 = vmatprep.subr.bf16.mxu0 %v2897
      %2990 = vmatpush1.bf16.msra.mxu0 %v2896
      %2991 = vmatprep.subr.bf16.mxu0 %v2893
      %2992 = vmatpush1.bf16.msra.mxu0 %v2892
      %2993 = vmatprep.subr.bf16.mxu0 %v2889
      %2994 = vmatpush1.bf16.msra.mxu0 %v2888
      %2995 = vmatprep.subr.bf16.mxu0 %v2885
      %2996 = vmatpush1.bf16.msra.mxu0 %v2884
      %2997 = vmatprep.subr.bf16.mxu0 %v2881
      %2998 = vmatpush1.bf16.msra.mxu0 %v2880
      %2999 = vmatprep.subr.bf16.mxu0 0
      %3000 = vmatpush2.bf16.msra.mxu0 0
      %3001 = vmatprep.subr.bf16.mxu0 0
      %3002 = vmatpush2.bf16.msra.mxu0 0
      %3003 = vmatprep.subr.bf16.mxu0 0
      %3004 = vmatpush2.bf16.msra.mxu0 0
      %3005 = vmatprep.subr.bf16.mxu0 0
      %3006 = vmatpush2.bf16.msra.mxu0 0
      %3007 = vmatprep.subr.bf16.mxu0 0
      %3008 = vmatpush2.bf16.msra.mxu0 0
      %3009 = vmatprep.subr.bf16.mxu0 0
      %3010 = vmatpush2.bf16.msra.mxu0 0
      %3011 = vmatprep.subr.bf16.mxu0 0
      %3012 = vmatpush2.bf16.msra.mxu0 0
      %3013 = vmatprep.subr.bf16.mxu0 0
      %3014 = vmatpush2.bf16.msra.mxu0 0
      %3015 = vmatprep.mubr.bf16.mxu0 0
      %3016 = vmatmul.mubr.bf16.gmra.mxu0 %v2760
      %v3017 = vpop.f32.mrf.mxu0
      %v3018 = vadd.f32 %v2773, %v3017
      %v3019 = vpop.f32.mrf.mxu0
      %v3020 = vadd.f32 %v2777, %v3019
      %v3021 = vpop.f32.mrf.mxu0
      %v3022 = vpop.f32.mrf.mxu0
      %3023 = vdwg.mxu0
      %v3024 = vmul.f32 %v2977, 0.5
      %v3025 = vmul.f32 %v2979, 0.5
      %v3026 = vmul.f32 %v3018, 0.5
      %v3027 = vmul.f32 %v3020, 0.5
      %v3028 = vmul.f32 %v2977, 0.044715
      %v3029 = vmul.f32 %v2979, 0.044715
      %v3030 = vmul.f32 %v3018, 0.044715
      %v3031 = vmul.f32 %v3020, 0.044715
      %v3032 = vmul.f32 %v3028, %v2977
      %v3033 = vmul.f32 %v3029, %v2979
      %v3034 = vmul.f32 %v3030, %v3018
      %v3035 = vmul.f32 %v3031, %v3020
      %v3036 = vmul.f32 %v3032, %v2977
      %v3037 = vmul.f32 %v3033, %v2979
      %v3038 = vmul.f32 %v3034, %v3018
      %v3039 = vmul.f32 %v3035, %v3020
      %v3040 = vadd.f32 %v2977, %v3036
      %v3041 = vadd.f32 %v2979, %v3037
      %v3042 = vadd.f32 %v3018, %v3038
      %v3043 = vadd.f32 %v3020, %v3039
      %v3044 = vmul.f32 %v3040, 0.7978846
      %v3045 = vmul.f32 %v3041, 0.7978846
      %v3046 = vmul.f32 %v3042, 0.7978846
      %v3047 = vmul.f32 %v3043, 0.7978846
      %v3048 = vtanh.pop %v3044
      %v3049 = vtanh.pop %v3045
      %v3050 = vtanh.pop %v3046
      %v3051 = vtanh.pop %v3047
      %v3052 = vadd.f32 %v3048, 1.0
      %v3053 = vadd.f32 %v3049, 1.0
      %v3054 = vadd.f32 %v3050, 1.0
      %v3055 = vadd.f32 %v3051, 1.0
      %v3056 = vmul.f32 %v3024, %v3052
      %v3057 = vmul.f32 %v3025, %v3053
      %v3058 = vmul.f32 %v3026, %v3054
      %v3059 = vmul.f32 %v3027, %v3055
      %v3060 = vld [vmem:[%s19] sm:$0xf]
      %v3061 = vld [vmem:[%s19 + $0x4] sm:$0xf]
      %v3062 = vld [vmem:[%s19 + $0x8] sm:$0xf]
      %v3063 = vld [vmem:[%s19 + $0xc] sm:$0xf]
      %v3064 = vld [vmem:[%s19 + $0x10] sm:$0xf]
      %v3065 = vld [vmem:[%s19 + $0x14] sm:$0xf]
      %v3066 = vld [vmem:[%s19 + $0x18] sm:$0xf]
      %v3067 = vld [vmem:[%s19 + $0x1c] sm:$0xf]
      %v3068 = vld [vmem:[%s19 + $0x20] sm:$0xf]
      %v3069 = vld [vmem:[%s19 + $0x24] sm:$0xf]
      %v3070 = vld [vmem:[%s19 + $0x28] sm:$0xf]
      %v3071 = vld [vmem:[%s19 + $0x2c] sm:$0xf]
      %v3072 = vld [vmem:[%s19 + $0x30] sm:$0xf]
      %v3073 = vld [vmem:[%s19 + $0x34] sm:$0xf]
      %v3074 = vld [vmem:[%s19 + $0x38] sm:$0xf]
      %v3075 = vld [vmem:[%s19 + $0x3c] sm:$0xf]
      %v3076 = vld [vmem:[%s19 + $0x40] sm:$0xf]
      %v3077 = vld [vmem:[%s19 + $0x44] sm:$0xf]
      %v3078 = vld [vmem:[%s19 + $0x48] sm:$0xf]
      %v3079 = vld [vmem:[%s19 + $0x4c] sm:$0xf]
      %v3080 = vld [vmem:[%s19 + $0x50] sm:$0xf]
      %v3081 = vld [vmem:[%s19 + $0x54] sm:$0xf]
      %v3082 = vld [vmem:[%s19 + $0x58] sm:$0xf]
      %v3083 = vld [vmem:[%s19 + $0x5c] sm:$0xf]
      %v3084 = vld [vmem:[%s19 + $0x60] sm:$0xf]
      %v3085 = vld [vmem:[%s19 + $0x64] sm:$0xf]
      %v3086 = vld [vmem:[%s19 + $0x68] sm:$0xf]
      %v3087 = vld [vmem:[%s19 + $0x6c] sm:$0xf]
      %v3088 = vld [vmem:[%s19 + $0x70] sm:$0xf]
      %v3089 = vld [vmem:[%s19 + $0x74] sm:$0xf]
      %v3090 = vld [vmem:[%s19 + $0x78] sm:$0xf]
      %v3091 = vld [vmem:[%s19 + $0x7c] sm:$0xf]
      %v3092 = vld [vmem:[%s19 + $0x80] sm:$0xf]
      %v3093 = vld [vmem:[%s19 + $0x84] sm:$0xf]
      %v3094 = vld [vmem:[%s19 + $0x88] sm:$0xf]
      %v3095 = vld [vmem:[%s19 + $0x8c] sm:$0xf]
      %v3096 = vld [vmem:[%s19 + $0x90] sm:$0xf]
      %v3097 = vld [vmem:[%s19 + $0x94] sm:$0xf]
      %v3098 = vld [vmem:[%s19 + $0x98] sm:$0xf]
      %v3099 = vld [vmem:[%s19 + $0x9c] sm:$0xf]
      %v3100 = vld [vmem:[%s19 + $0xa0] sm:$0xf]
      %v3101 = vld [vmem:[%s19 + $0xa4] sm:$0xf]
      %v3102 = vld [vmem:[%s19 + $0xa8] sm:$0xf]
      %v3103 = vld [vmem:[%s19 + $0xac] sm:$0xf]
      %v3104 = vld [vmem:[%s19 + $0xb0] sm:$0xf]
      %v3105 = vld [vmem:[%s19 + $0xb4] sm:$0xf]
      %v3106 = vld [vmem:[%s19 + $0xb8] sm:$0xf]
      %v3107 = vld [vmem:[%s19 + $0xbc] sm:$0xf]
      %v3108 = vld [vmem:[%s19 + $0xc0] sm:$0xf]
      %v3109 = vld [vmem:[%s19 + $0xc4] sm:$0xf]
      %v3110 = vld [vmem:[%s19 + $0xc8] sm:$0xf]
      %v3111 = vld [vmem:[%s19 + $0xcc] sm:$0xf]
      %v3112 = vld [vmem:[%s19 + $0xd0] sm:$0xf]
      %v3113 = vld [vmem:[%s19 + $0xd4] sm:$0xf]
      %v3114 = vld [vmem:[%s19 + $0xd8] sm:$0xf]
      %v3115 = vld [vmem:[%s19 + $0xdc] sm:$0xf]
      %v3116 = vld [vmem:[%s19 + $0xe0] sm:$0xf]
      %v3117 = vld [vmem:[%s19 + $0xe4] sm:$0xf]
      %v3118 = vld [vmem:[%s19 + $0xe8] sm:$0xf]
      %v3119 = vld [vmem:[%s19 + $0xec] sm:$0xf]
      %v3120 = vld [vmem:[%s19 + $0xf0] sm:$0xf]
      %v3121 = vld [vmem:[%s19 + $0xf4] sm:$0xf]
      %v3122 = vld [vmem:[%s19 + $0xf8] sm:$0xf]
      %v3123 = vld [vmem:[%s19 + $0xfc] sm:$0xf]
      %v3124 = vld [vmem:[%s20] sm:$0x1]
      %v3125 = vpack.c.bf16 %v3056, %v3056
      %v3126 = vpack.c.bf16 %v3057, %v3057
      %v3127 = vpack.c.bf16 %v3058, %v3058
      %v3128 = vpack.c.bf16 %v3059, %v3059
      %v3130 = vlaneseq
      %v3131 = vshrl.u32 %v3130, 7
      %v3132 = vsub.s32 0, %v3131
      %v3133 = vrot.slane %v3124, %v3132
      %v3199 = vunpack.c.l.b16 %v3060
      %v3200 = vunpack.c.l.b16 %v3061
      %v3201 = vunpack.c.l.b16 %v3062
      %v3202 = vunpack.c.l.b16 %v3063
      %v3203 = vunpack.c.l.b16 %v3064
      %v3204 = vunpack.c.l.b16 %v3065
      %v3205 = vunpack.c.l.b16 %v3066
      %v3206 = vunpack.c.l.b16 %v3067
      %v3207 = vunpack.c.l.b16 %v3068
      %v3208 = vunpack.c.l.b16 %v3069
      %v3209 = vunpack.c.l.b16 %v3070
      %v3210 = vunpack.c.l.b16 %v3071
      %v3211 = vunpack.c.l.b16 %v3072
      %v3212 = vunpack.c.l.b16 %v3073
      %v3213 = vunpack.c.l.b16 %v3074
      %v3214 = vunpack.c.l.b16 %v3075
      %v3215 = vunpack.c.l.b16 %v3076
      %v3216 = vunpack.c.l.b16 %v3077
      %v3217 = vunpack.c.l.b16 %v3078
      %v3218 = vunpack.c.l.b16 %v3079
      %v3219 = vunpack.c.l.b16 %v3080
      %v3220 = vunpack.c.l.b16 %v3081
      %v3221 = vunpack.c.l.b16 %v3082
      %v3222 = vunpack.c.l.b16 %v3083
      %v3223 = vunpack.c.l.b16 %v3084
      %v3224 = vunpack.c.l.b16 %v3085
      %v3225 = vunpack.c.l.b16 %v3086
      %v3226 = vunpack.c.l.b16 %v3087
      %v3227 = vunpack.c.l.b16 %v3088
      %v3228 = vunpack.c.l.b16 %v3089
      %v3229 = vunpack.c.l.b16 %v3090
      %v3230 = vunpack.c.l.b16 %v3091
      %v3231 = vunpack.c.l.b16 %v3092
      %v3232 = vunpack.c.l.b16 %v3093
      %v3233 = vunpack.c.l.b16 %v3094
      %v3234 = vunpack.c.l.b16 %v3095
      %v3235 = vunpack.c.l.b16 %v3096
      %v3236 = vunpack.c.l.b16 %v3097
      %v3237 = vunpack.c.l.b16 %v3098
      %v3238 = vunpack.c.l.b16 %v3099
      %v3239 = vunpack.c.l.b16 %v3100
      %v3240 = vunpack.c.l.b16 %v3101
      %v3241 = vunpack.c.l.b16 %v3102
      %v3242 = vunpack.c.l.b16 %v3103
      %v3243 = vunpack.c.l.b16 %v3104
      %v3244 = vunpack.c.l.b16 %v3105
      %v3245 = vunpack.c.l.b16 %v3106
      %v3246 = vunpack.c.l.b16 %v3107
      %v3247 = vunpack.c.l.b16 %v3108
      %v3248 = vunpack.c.l.b16 %v3109
      %v3249 = vunpack.c.l.b16 %v3110
      %v3250 = vunpack.c.l.b16 %v3111
      %v3251 = vunpack.c.l.b16 %v3112
      %v3252 = vunpack.c.l.b16 %v3113
      %v3253 = vunpack.c.l.b16 %v3114
      %v3254 = vunpack.c.l.b16 %v3115
      %v3255 = vunpack.c.l.b16 %v3116
      %v3256 = vunpack.c.l.b16 %v3117
      %v3257 = vunpack.c.l.b16 %v3118
      %v3258 = vunpack.c.l.b16 %v3119
      %v3259 = vunpack.c.l.b16 %v3120
      %v3260 = vunpack.c.l.b16 %v3121
      %v3261 = vunpack.c.l.b16 %v3122
      %v3262 = vunpack.c.l.b16 %v3123
      %v3263 = vpack.c.b16 %v3200, %v3199
      %v3264 = vpack.c.b16 %v3202, %v3201
      %v3265 = vpack.c.b16 %v3204, %v3203
      %v3266 = vpack.c.b16 %v3206, %v3205
      %v3267 = vpack.c.b16 %v3208, %v3207
      %v3268 = vpack.c.b16 %v3210, %v3209
      %v3269 = vpack.c.b16 %v3212, %v3211
      %v3270 = vpack.c.b16 %v3214, %v3213
      %v3271 = vpack.c.b16 %v3216, %v3215
      %v3272 = vpack.c.b16 %v3218, %v3217
      %v3273 = vpack.c.b16 %v3220, %v3219
      %v3274 = vpack.c.b16 %v3222, %v3221
      %v3275 = vpack.c.b16 %v3224, %v3223
      %v3276 = vpack.c.b16 %v3226, %v3225
      %v3277 = vpack.c.b16 %v3228, %v3227
      %v3278 = vpack.c.b16 %v3230, %v3229
      %v3279 = vpack.c.b16 %v3232, %v3231
      %v3280 = vpack.c.b16 %v3234, %v3233
      %v3281 = vpack.c.b16 %v3236, %v3235
      %v3282 = vpack.c.b16 %v3238, %v3237
      %v3283 = vpack.c.b16 %v3240, %v3239
      %v3284 = vpack.c.b16 %v3242, %v3241
      %v3285 = vpack.c.b16 %v3244, %v3243
      %v3286 = vpack.c.b16 %v3246, %v3245
      %v3287 = vpack.c.b16 %v3248, %v3247
      %v3288 = vpack.c.b16 %v3250, %v3249
      %v3289 = vpack.c.b16 %v3252, %v3251
      %v3290 = vpack.c.b16 %v3254, %v3253
      %v3291 = vpack.c.b16 %v3256, %v3255
      %v3292 = vpack.c.b16 %v3258, %v3257
      %v3293 = vpack.c.b16 %v3260, %v3259
      %v3294 = vpack.c.b16 %v3262, %v3261
      %3327 = vmatprep.subr.bf16.mxu0 0
      %3328 = vmatpush1.bf16.msra.mxu0 %v3270
      %3329 = vmatprep.subr.bf16.mxu0 0
      %3330 = vmatpush1.bf16.msra.mxu0 %v3269
      %3331 = vmatprep.subr.bf16.mxu0 0
      %3332 = vmatpush1.bf16.msra.mxu0 %v3268
      %3333 = vmatprep.subr.bf16.mxu0 0
      %3334 = vmatpush1.bf16.msra.mxu0 %v3267
      %3335 = vmatprep.subr.bf16.mxu0 0
      %3336 = vmatpush1.bf16.msra.mxu0 %v3266
      %3337 = vmatprep.subr.bf16.mxu0 0
      %3338 = vmatpush1.bf16.msra.mxu0 %v3265
      %3339 = vmatprep.subr.bf16.mxu0 0
      %3340 = vmatpush1.bf16.msra.mxu0 %v3264
      %3341 = vmatprep.subr.bf16.mxu0 0
      %3342 = vmatpush1.bf16.msra.mxu0 %v3263
      %3343 = vmatprep.subr.bf16.mxu0 0
      %3344 = vmatpush2.bf16.msra.mxu0 %v3278
      %3345 = vmatprep.subr.bf16.mxu0 0
      %3346 = vmatpush2.bf16.msra.mxu0 %v3277
      %3347 = vmatprep.subr.bf16.mxu0 0
      %3348 = vmatpush2.bf16.msra.mxu0 %v3276
      %3349 = vmatprep.subr.bf16.mxu0 0
      %3350 = vmatpush2.bf16.msra.mxu0 %v3275
      %3351 = vmatprep.subr.bf16.mxu0 0
      %3352 = vmatpush2.bf16.msra.mxu0 %v3274
      %3353 = vmatprep.subr.bf16.mxu0 0
      %3354 = vmatpush2.bf16.msra.mxu0 %v3273
      %3355 = vmatprep.subr.bf16.mxu0 0
      %3356 = vmatpush2.bf16.msra.mxu0 %v3272
      %3357 = vmatprep.subr.bf16.mxu0 0
      %3358 = vmatpush2.bf16.msra.mxu0 %v3271
      %3359 = vmatprep.mubr.bf16.mxu0 %v3126
      %3360 = vmatmul.mubr.bf16.gmra.mxu0 %v3125
      %v3361 = vpop.f32.mrf.mxu0
      %v3362 = vadd.f32 %v3133, %v3361
      %v3363 = vpop.f32.mrf.mxu0
      %v3364 = vpop.f32.mrf.mxu0
      %v3365 = vpop.f32.mrf.mxu0
      %3366 = vdwg.mxu0
      %3367 = vmatprep.subr.bf16.mxu0 0
      %3368 = vmatpush1.bf16.msra.mxu0 %v3286
      %3369 = vmatprep.subr.bf16.mxu0 0
      %3370 = vmatpush1.bf16.msra.mxu0 %v3285
      %3371 = vmatprep.subr.bf16.mxu0 0
      %3372 = vmatpush1.bf16.msra.mxu0 %v3284
      %3373 = vmatprep.subr.bf16.mxu0 0
      %3374 = vmatpush1.bf16.msra.mxu0 %v3283
      %3375 = vmatprep.subr.bf16.mxu0 0
      %3376 = vmatpush1.bf16.msra.mxu0 %v3282
      %3377 = vmatprep.subr.bf16.mxu0 0
      %3378 = vmatpush1.bf16.msra.mxu0 %v3281
      %3379 = vmatprep.subr.bf16.mxu0 0
      %3380 = vmatpush1.bf16.msra.mxu0 %v3280
      %3381 = vmatprep.subr.bf16.mxu0 0
      %3382 = vmatpush1.bf16.msra.mxu0 %v3279
      %3383 = vmatprep.subr.bf16.mxu0 0
      %3384 = vmatpush2.bf16.msra.mxu0 %v3294
      %3385 = vmatprep.subr.bf16.mxu0 0
      %3386 = vmatpush2.bf16.msra.mxu0 %v3293
      %3387 = vmatprep.subr.bf16.mxu0 0
      %3388 = vmatpush2.bf16.msra.mxu0 %v3292
      %3389 = vmatprep.subr.bf16.mxu0 0
      %3390 = vmatpush2.bf16.msra.mxu0 %v3291
      %3391 = vmatprep.subr.bf16.mxu0 0
      %3392 = vmatpush2.bf16.msra.mxu0 %v3290
      %3393 = vmatprep.subr.bf16.mxu0 0
      %3394 = vmatpush2.bf16.msra.mxu0 %v3289
      %3395 = vmatprep.subr.bf16.mxu0 0
      %3396 = vmatpush2.bf16.msra.mxu0 %v3288
      %3397 = vmatprep.subr.bf16.mxu0 0
      %3398 = vmatpush2.bf16.msra.mxu0 %v3287
      %3399 = vmatprep.mubr.bf16.mxu0 %v3128
      %3400 = vmatmul.mubr.bf16.gmra.mxu0 %v3127
      %v3401 = vpop.f32.mrf.mxu0
      %v3402 = vadd.f32 %v3362, %v3401
      %v3403 = vpop.f32.mrf.mxu0
      %v3404 = vpop.f32.mrf.mxu0
      %v3405 = vpop.f32.mrf.mxu0
      %3406 = vdwg.mxu0
      %v3407 = vadd.f32 %v3402, %v2726
      %v3408 = vld [vmem:[%s21] sm:$0x1]
      %v3409 = vld [vmem:[%s22] sm:$0x1]
      %3410 = vadd.xlane.f32.xlu0 %v3407
      %v3411 = vpop.xlane.xlu0 %3410
      %v3412 = vmul.f32 %v3411, %v1714
      %v3413 = vsub.f32 %v3407, %v3412
      %v3414 = vmul.f32 %v3413, %v3413
      %3415 = vadd.xlane.f32.xlu0 %v3414
      %v3416 = vpop.xlane.xlu0 %3415
      %v3417 = vmul.f32 %v3416, %v1714
      %v3418 = vadd.f32 %v3417, 1e-12
      %v3419 = vrsqrt.pop %v3418
      %v3420 = vmul.f32 %v3413, %v3419
      %v3422 = vlaneseq
      %v3423 = vshrl.u32 %v3422, 7
      %v3424 = vsub.s32 0, %v3423
      %v3425 = vrot.slane %v3408, %v3424
      %v3427 = vmul.f32 %v3420, %v3425
      %v3429 = vlaneseq
      %v3430 = vshrl.u32 %v3429, 7
      %v3431 = vsub.s32 0, %v3430
      %v3432 = vrot.slane %v3409, %v3431
      %v3434 = vadd.f32 %v3427, %v3432
      %3435 = vst [vmem:[%s736] sm:$0xff] %v3434
      %p3436 = scmp.lt.s32.totalorder %s34, 1
      %s3437 = scalar_select %p3436, %s34, 1
      %s3438 = smul.addr %s3437, 8
      %s3439 = scalar_lea.vmem %s23, %s3438
      // Predicated region
      $region113: #{vl_transformer_itm_forward.12} parent=111 // pred_check
        %p3440 = pneg %p550
      $region114: #{vl_transformer_itm_forward.12} parent=111 // pred_check_branch
        %3442 = sbr.rel (%p3440) target = $region116
      $region115: #{vl_transformer_itm_forward.12} parent=111 // pred_region
        _
      $region116: #{vl_transformer_itm_forward.12} parent=111 // pred_fallthru
        _
    $region112: #{vl_transformer_itm_forward.12} parent=5 // pred_fallthru
      _
    %p3443 = scmp.le.s32.totalorder 2, %s29
    // Predicated region
    $region117: #{vl_transformer_itm_forward.12} parent=5 // pred_check
      %p3444 = pneg %p3443
    $region118: #{vl_transformer_itm_forward.12} parent=5 // pred_check_branch
      %3446 = sbr.rel (%p3444) target = $region120
    $region119: #{vl_transformer_itm_forward.12} parent=5 // pred_region
      %s3447 = ssub.s32 %s29, 2
      // Predicated region
      $region121: #{vl_transformer_itm_forward.12} parent=119 // pred_check
        %p3448 = pneg %p556
      $region122: #{vl_transformer_itm_forward.12} parent=119 // pred_check_branch
        %3450 = sbr.rel (%p3448) target = $region124
      $region123: #{vl_transformer_itm_forward.12} parent=119 // pred_region
        %p3451 = scmp.lt.s32.totalorder %s35, 1
        %s3452 = scalar_select %p3451, %s35, 1
        %s3453 = smul.addr %s3452, 8
        %s3454 = scalar_lea.vmem %s23, %s3453
      $region124: #{vl_transformer_itm_forward.12} parent=119 // pred_fallthru
        _
    $region120: #{vl_transformer_itm_forward.12} parent=5 // pred_fallthru
      _
  $region6: #{vl_transformer_itm_forward.12} parent=0 // loop_footer
    %s33 = sadd.s32 1, %s29
  $region7: #{vl_transformer_itm_forward.12} parent=0 // loop_footer_branch
    %28 = sbr.rel target = $region3
  $region8: #{vl_transformer_itm_forward.12} parent=0 // loop_exit
    _

</llo_original>
